<compile_context>
chip_gen: v7x
topology: tpu7x:2x2x1
jax: 0.10.0
libtpu: 0.0.40
codegen_flags: <defaults>
</compile_context>

<pallas_src>
import functools
import math

import jax
import jax.numpy as jnp
from jax import lax
from jax.experimental import pallas as pl
from jax.experimental.pallas import tpu as pltpu

C_PAD = 128  # lane-dense channel padding (all real channel counts must be <= 128)


def _round_up(x, m):
    return ((x + m - 1) // m) * m


# --------------------------------------------------------------------------- #
# Kernel
# --------------------------------------------------------------------------- #
def _synthesis_block_kernel(ws_ref, x_ref, cw_ref, cwsq_ref, aw_ref, ab_ref,
                            cb_ref, noise_ref, rgbw_ref,
                            x_out_ref, img_ref, a_pad_ref,
                            *, H, W, affine_gain, rgb_weight_gain, act_gain,
                            conv_clamp):
    """Whole SynthesisBlock forward for one batch element.

    ws_ref   : (1, 3, W_PAD)        latents (conv0, conv1, torgb)
    x_ref    : (1, H+2, W+2, C_PAD) spatially zero-padded NHWC input
    cw_ref   : (2, 9, C_PAD, C_PAD) conv taps, [layer, ky*3+kx, in, out], bf16
    cwsq_ref : (2, C_PAD, C_PAD)    sum over taps of conv weight^2 (f32)
    aw_ref   : (3, W_PAD, C_PAD)    affine weights (w_dim -> in_c), f32
    ab_ref   : (3, 1, C_PAD)        affine biases (init 1.0), f32
    cb_ref   : (3, 1, C_PAD)        conv0/conv1/torgb biases, f32
    noise_ref: (2, H*W, 1)          noise_const * noise_strength, f32
    rgbw_ref : (C_PAD, C_PAD)       toRGB weight [in, out], bf16
    x_out_ref: (1, H*W, C_PAD)      conv1 output (block's x)
    img_ref  : (1, H*W, C_PAD)      toRGB output (block's img)
    a_pad_ref: (H+2, W+2, C_PAD)    VMEM scratch: style-modulated padded map
    """
    HW = H * W
    wsb = ws_ref[0]                                        # (3, W_PAD) f32

    def affine(l):
        # FullyConnectedLayer (linear, bias_init=1): w @ A.T / sqrt(w_dim) + b
        return (jnp.dot(wsb[l:l + 1, :], aw_ref[l],
                        preferred_element_type=jnp.float32) * affine_gain
                + ab_ref[l])                               # (1, C_PAD)

    def demod_coef(styles, layer):
        # rsqrt( sum_{i,ky,kx} (W[o,i,ky,kx] * s[i])^2 + 1e-8 )  -> (1, C_PAD)
        dsum = jnp.dot(styles * styles, cwsq_ref[layer],
                       preferred_element_type=jnp.float32)
        return lax.rsqrt(dsum + 1e-8)

    def conv3x3(layer):
        # 3x3 cross-correlation over the style-modulated, zero-padded map held
        # in a_pad_ref: 9 lane-dense (HW,128)@(128,128) MXU matmuls, f32 acc.
        acc = None
        for ky in range(3):
            for kx in range(3):
                lhs = a_pad_ref[ky:ky + H, kx:kx + W, :]   # (H, W, C) f32
                lhs = lhs.reshape(HW, C_PAD).astype(jnp.bfloat16)
                y = jnp.dot(lhs, cw_ref[layer, ky * 3 + kx],
                            preferred_element_type=jnp.float32)
                acc = y if acc is None else acc + y
        return acc                                         # (HW, C_PAD) f32

    def bias_act_lrelu(y, layer):
        # bias_act(..., act='lrelu', gain=sqrt(2), clamp=conv_clamp)
        y = y + cb_ref[layer]
        y = jnp.where(y >= 0.0, y, 0.2 * y) * act_gain
        if conv_clamp is not None:
            y = jnp.clip(y, -conv_clamp, conv_clamp)
        return y

    # ---- conv0: modulate input, 3x3 conv, demodulate, + noise, bias_act ------
    s0 = affine(0)
    a_pad_ref[...] = x_ref[0] * s0       # modulated input; zero border stays 0
    y0 = conv3x3(0) * demod_coef(s0, 0) + noise_ref[0]
    y0 = bias_act_lrelu(y0, 0)                             # (HW, C_PAD) f32

    # ---- conv1: re-pad intermediate (pre-modulated by s1), same pipeline -----
    s1 = affine(1)
    a_pad_ref[1:H + 1, 1:W + 1, :] = (y0 * s1).reshape(H, W, C_PAD)
    y1 = conv3x3(1) * demod_coef(s1, 1) + noise_ref[1]
    y1 = bias_act_lrelu(y1, 1)                             # (HW, C_PAD) f32
    x_out_ref[0] = y1

    # ---- toRGB: 1x1 modulated conv (no demod), bias, clamp -------------------
    s_rgb = affine(2) * rgb_weight_gain
    rgb = jnp.dot((y1 * s_rgb).astype(jnp.bfloat16), rgbw_ref[...],
                  preferred_element_type=jnp.float32) + cb_ref[2]
    if conv_clamp is not None:
        rgb = jnp.clip(rgb, -conv_clamp, conv_clamp)
    img_ref[0] = rgb


# --------------------------------------------------------------------------- #
# Wrapper
# --------------------------------------------------------------------------- #
def synthesis_block_forward(params, x, ws, img=None, *, noise_mode="const",
                            conv_clamp=256.0):
    """SynthesisBlock.forward (skip/orig arch, first_layer, img=None, fp32).

    x : [B, in_c, H, W] (NCHW, torch layout), ws: [B, 3, w_dim]
    returns (x_out [B, out_c, H, W], img [B, img_c, H, W]) like the module.
    """
    assert img is None  # TODO(synk): img upsample2d + accumulate not implemented
    assert noise_mode in ("const", "none")
    B, in_c, H, W = x.shape
    out_c = params["conv0"]["weight"].shape[0]
    img_c = params["torgb"]["weight"].shape[0]
    w_dim = params["conv0"]["affine_W"].shape[1]
    assert ws.shape == (B, 3, w_dim)
    assert max(in_c, out_c, img_c) <= C_PAD
    assert H % 8 == 0 and W % 8 == 0, "resolution must be a multiple of 8"
    # whole padded map per step must fit VMEM comfortably
    assert (H + 2) * (W + 2) * C_PAD * 4 < 8 * 1024 * 1024
    W_PAD = _round_up(w_dim, 128)
    HW = H * W

    # ---- pack parameters into lane-dense, zero-padded slabs ------------------
    conv_w = jnp.zeros((2, 9, C_PAD, C_PAD), jnp.float32)
    w0t = jnp.transpose(params["conv0"]["weight"], (2, 3, 1, 0)).reshape(9, in_c, out_c)
    w1t = jnp.transpose(params["conv1"]["weight"], (2, 3, 1, 0)).reshape(9, out_c, out_c)
    conv_w = conv_w.at[0, :, :in_c, :out_c].set(w0t)
    conv_w = conv_w.at[1, :, :out_c, :out_c].set(w1t)
    conv_wsq = jnp.sum(conv_w * conv_w, axis=1)            # (2, C, C) f32
    conv_w = conv_w.astype(jnp.bfloat16)

    affine_w = jnp.zeros((3, W_PAD, C_PAD), jnp.float32)
    affine_b = jnp.zeros((3, 1, C_PAD), jnp.float32)
    for l, (layer, nc) in enumerate((("conv0", in_c), ("conv1", out_c),
                                     ("torgb", out_c))):
        affine_w = affine_w.at[l, :w_dim, :nc].set(params[layer]["affine_W"].T)
        affine_b = affine_b.at[l, 0, :nc].set(params[layer]["affine_b"])

    conv_b = jnp.zeros((3, 1, C_PAD), jnp.float32)
    conv_b = conv_b.at[0, 0, :out_c].set(params["conv0"]["bias"])
    conv_b = conv_b.at[1, 0, :out_c].set(params["conv1"]["bias"])
    conv_b = conv_b.at[2, 0, :img_c].set(params["torgb"]["bias"])

    if noise_mode == "const":
        noise = jnp.stack([
            (params["conv0"]["noise_const"] *
             params["conv0"]["noise_strength"]).reshape(HW, 1),
            (params["conv1"]["noise_const"] *
             params["conv1"]["noise_strength"]).reshape(HW, 1),
        ]).astype(jnp.float32)
    else:
        noise = jnp.zeros((2, HW, 1), jnp.float32)

    rgb_w = jnp.zeros((C_PAD, C_PAD), jnp.float32)
    rgb_w = rgb_w.at[:out_c, :img_c].set(params["torgb"]["weight"][:, :, 0, 0].T)
    rgb_w = rgb_w.astype(jnp.bfloat16)

    ws_p = jnp.zeros((B, 3, W_PAD), jnp.float32).at[:, :, :w_dim].set(
        ws.astype(jnp.float32))

    x_nhwc = jnp.transpose(x.astype(jnp.float32), (0, 2, 3, 1))
    x_pad = jnp.zeros((B, H + 2, W + 2, C_PAD), jnp.float32)
    x_pad = x_pad.at[:, 1:H + 1, 1:W + 1, :in_c].set(x_nhwc)

    kernel = functools.partial(
        _synthesis_block_kernel, H=H, W=W,
        affine_gain=1.0 / math.sqrt(w_dim),        # FullyConnectedLayer gain
        rgb_weight_gain=1.0 / math.sqrt(out_c),    # ToRGBLayer weight_gain
        act_gain=math.sqrt(2.0),                   # lrelu def_gain
        conv_clamp=float(conv_clamp) if conv_clamp is not None else None)

    x_out_p, img_p = pl.pallas_call(
        kernel,
        out_shape=(jax.ShapeDtypeStruct((B, HW, C_PAD), jnp.float32),
                   jax.ShapeDtypeStruct((B, HW, C_PAD), jnp.float32)),
        grid_spec=pltpu.PrefetchScalarGridSpec(
            num_scalar_prefetch=0,
            grid=(B,),
            in_specs=[
                pl.BlockSpec((1, 3, W_PAD), lambda b: (b, 0, 0)),                 # ws
                pl.BlockSpec((1, H + 2, W + 2, C_PAD), lambda b: (b, 0, 0, 0)),   # x
                pl.BlockSpec((2, 9, C_PAD, C_PAD), lambda b: (0, 0, 0, 0)),       # conv taps
                pl.BlockSpec((2, C_PAD, C_PAD), lambda b: (0, 0, 0)),             # conv w^2 sums
                pl.BlockSpec((3, W_PAD, C_PAD), lambda b: (0, 0, 0)),             # affine W
                pl.BlockSpec((3, 1, C_PAD), lambda b: (0, 0, 0)),                 # affine b
                pl.BlockSpec((3, 1, C_PAD), lambda b: (0, 0, 0)),                 # conv biases
                pl.BlockSpec((2, HW, 1), lambda b: (0, 0, 0)),                    # noise
                pl.BlockSpec((C_PAD, C_PAD), lambda b: (0, 0)),                   # toRGB W
            ],
            out_specs=[pl.BlockSpec((1, HW, C_PAD), lambda b: (b, 0, 0)),
                       pl.BlockSpec((1, HW, C_PAD), lambda b: (b, 0, 0))],
            scratch_shapes=[pltpu.VMEM((H + 2, W + 2, C_PAD), jnp.float32)],
        ),
        compiler_params=pltpu.CompilerParams(
            dimension_semantics=("parallel",),
            vmem_limit_bytes=32 * 1024 * 1024,
        ),
    )(ws_p, x_pad, conv_w, conv_wsq, affine_w, affine_b, conv_b, noise, rgb_w)

    x_out = x_out_p[:, :, :out_c].reshape(B, H, W, out_c).transpose(0, 3, 1, 2)
    img_out = img_p[:, :, :img_c].reshape(B, H, W, img_c).transpose(0, 3, 1, 2)
    return x_out, img_out


# --------------------------------------------------------------------------- #
# Parameter init mirroring the PyTorch __init__
# --------------------------------------------------------------------------- #
def init_synthesis_block_params(key, *, in_channels, out_channels, w_dim,
                                resolution, img_channels):
    ks = jax.random.split(key, 8)
    return dict(
        conv0=dict(
            affine_W=jax.random.normal(ks[0], (in_channels, w_dim), jnp.float32),
            affine_b=jnp.ones((in_channels,), jnp.float32),                 # bias_init=1
            weight=jax.random.normal(ks[1], (out_channels, in_channels, 3, 3), jnp.float32),
            bias=jnp.zeros((out_channels,), jnp.float32),
            noise_const=jax.random.normal(ks[2], (resolution, resolution), jnp.float32),
            noise_strength=jnp.zeros((), jnp.float32),
        ),
        conv1=dict(
            affine_W=jax.random.normal(ks[3], (out_channels, w_dim), jnp.float32),
            affine_b=jnp.ones((out_channels,), jnp.float32),
            weight=jax.random.normal(ks[4], (out_channels, out_channels, 3, 3), jnp.float32),
            bias=jnp.zeros((out_channels,), jnp.float32),
            noise_const=jax.random.normal(ks[5], (resolution, resolution), jnp.float32),
            noise_strength=jnp.zeros((), jnp.float32),
        ),
        torgb=dict(
            affine_W=jax.random.normal(ks[6], (out_channels, w_dim), jnp.float32),
            affine_b=jnp.ones((out_channels,), jnp.float32),
            weight=jax.random.normal(ks[7], (img_channels, out_channels, 1, 1), jnp.float32),
            bias=jnp.zeros((img_channels,), jnp.float32),
        ),
    )


# --------------------------------------------------------------------------- #
# Pure-JAX reference (torch semantics; conv operands cast to bf16 at the same
# points as the kernel, since the MXU matmuls run in bf16 with f32 accumulate)
# --------------------------------------------------------------------------- #
def _affine_ref(w, A, b):
    return w @ (A * (1.0 / math.sqrt(A.shape[1]))).T + b[None, :]


def _modulated_conv2d_ref(x, weight, styles, noise=None, demodulate=True, padding=0):
    dcoefs = None
    if demodulate:
        wmod = weight[None, :, :, :, :] * styles[:, None, :, None, None]
        dcoefs = lax.rsqrt(jnp.sum(wmod * wmod, axis=(2, 3, 4)) + 1e-8)  # [B, out]
    xm = (x * styles[:, :, None, None]).astype(jnp.bfloat16)
    y = lax.conv_general_dilated(
        xm, weight.astype(jnp.bfloat16), window_strides=(1, 1),
        padding=[(padding, padding), (padding, padding)],
        dimension_numbers=("NCHW", "OIHW", "NCHW"),
        preferred_element_type=jnp.float32)
    if demodulate:
        y = y * dcoefs[:, :, None, None]
    if noise is not None:
        y = y + noise
    return y


def _bias_act_ref(x, b, act, gain, clamp):
    x = x + b[None, :, None, None]
    if act == "lrelu":
        x = jnp.where(x >= 0, x, 0.2 * x)
    x = x * gain
    if clamp is not None:
        x = jnp.clip(x, -clamp, clamp)
    return x


def synthesis_block_ref(params, x, ws, *, noise_mode="const", conv_clamp=256.0):
    out_c = params["conv0"]["weight"].shape[0]
    # conv0
    s = _affine_ref(ws[:, 0], params["conv0"]["affine_W"], params["conv0"]["affine_b"])
    n = ((params["conv0"]["noise_const"] * params["conv0"]["noise_strength"])[None, None]
         if noise_mode == "const" else None)
    y = _modulated_conv2d_ref(x, params["conv0"]["weight"], s, n, True, 1)
    y = _bias_act_ref(y, params["conv0"]["bias"], "lrelu", math.sqrt(2.0), conv_clamp)
    # conv1
    s = _affine_ref(ws[:, 1], params["conv1"]["affine_W"], params["conv1"]["affine_b"])
    n = ((params["conv1"]["noise_const"] * params["conv1"]["noise_strength"])[None, None]
         if noise_mode == "const" else None)
    y = _modulated_conv2d_ref(y, params["conv1"]["weight"], s, n, True, 1)
    x_out = _bias_act_ref(y, params["conv1"]["bias"], "lrelu", math.sqrt(2.0), conv_clamp)
    # toRGB
    s = _affine_ref(ws[:, 2], params["torgb"]["affine_W"], params["torgb"]["affine_b"])
    s = s * (1.0 / math.sqrt(out_c))
    img = _modulated_conv2d_ref(x_out, params["torgb"]["weight"], s, None, False, 0)
    img = _bias_act_ref(img, params["torgb"]["bias"], "linear", 1.0, conv_clamp)
    return x_out, img


if __name__ == "__main__":
    B = 2
    IN_CHANNELS = 8
    OUT_CHANNELS = 16
    W_DIM = 16
    RESOLUTION = 16
    IMG_CHANNELS = 3

    key = jax.random.PRNGKey(0)
    key, kp, kx, kw = jax.random.split(key, 4)
    params = init_synthesis_block_params(
        kp, in_channels=IN_CHANNELS, out_channels=OUT_CHANNELS, w_dim=W_DIM,
        resolution=RESOLUTION, img_channels=IMG_CHANNELS)
    # torch inits noise_strength to 0 (no-op); use nonzero to exercise the path
    params["conv0"]["noise_strength"] = jnp.asarray(0.1, jnp.float32)
    params["conv1"]["noise_strength"] = jnp.asarray(0.05, jnp.float32)

    x = jax.random.normal(kx, (B, IN_CHANNELS, RESOLUTION, RESOLUTION), jnp.float32)
    ws = jax.random.normal(kw, (B, 3, W_DIM), jnp.float32)

    x_out, img = synthesis_block_forward(params, x, ws, noise_mode="const")
    x_out, img = jax.block_until_ready((x_out, img))

    x_ref, img_ref = synthesis_block_ref(params, x, ws, noise_mode="const")
    x_ref, img_ref = jax.block_until_ready((x_ref, img_ref))

    assert x_out.shape == (B, OUT_CHANNELS, RESOLUTION, RESOLUTION), x_out.shape
    assert img.shape == (B, IMG_CHANNELS, RESOLUTION, RESOLUTION), img.shape
    err_x = float(jnp.max(jnp.abs(x_out - x_ref)))
    err_img = float(jnp.max(jnp.abs(img - img_ref)))
    # bf16 MXU operands in both kernel and reference; residual diff is only
    # f32 accumulation order + rounding at the bf16 cast boundaries.
    assert err_x < 1e-2, err_x
    assert err_img < 1e-2, err_img
    print("KERNEL_OK")
</pallas_src>

<mosaic_0001>
module attributes {stable_mosaic.version = 11 : i64} {
  func.func @_synthesis_block_kernel(%arg0: i32, %arg1: memref<1x3x128xf32, #tpu.memory_space<vmem>>, %arg2: memref<1x18x18x128xf32, #tpu.memory_space<vmem>>, %arg3: memref<2x9x128x128xbf16, #tpu.memory_space<vmem>>, %arg4: memref<2x128x128xf32, #tpu.memory_space<vmem>>, %arg5: memref<3x128x128xf32, #tpu.memory_space<vmem>>, %arg6: memref<3x1x128xf32, #tpu.memory_space<vmem>>, %arg7: memref<3x1x128xf32, #tpu.memory_space<vmem>>, %arg8: memref<2x256x1xf32, #tpu.memory_space<vmem>>, %arg9: memref<128x128xbf16, #tpu.memory_space<vmem>>, %arg10: memref<1x256x128xf32, #tpu.memory_space<vmem>>, %arg11: memref<1x256x128xf32, #tpu.memory_space<vmem>>, %arg12: memref<18x18x128xf32, #tpu.memory_space<vmem>>) attributes {dimension_semantics = [#tpu.dimension_semantics<parallel>], iteration_bounds = array<i64: 2>, scalar_prefetch = 0 : i64, scratch_operands = 1 : i64, tpu.core_type = #tpu.core_type<tc>, window_params = [{transform_indices = @transform_0, window_bounds = array<i64: 1, 3, 128>}, {transform_indices = @transform_1, window_bounds = array<i64: 1, 18, 18, 128>}, {pipeline_mode = #tpu.pipeline_mode<synchronous>, transform_indices = @transform_2, window_bounds = array<i64: 2, 9, 128, 128>}, {pipeline_mode = #tpu.pipeline_mode<synchronous>, transform_indices = @transform_3, window_bounds = array<i64: 2, 128, 128>}, {pipeline_mode = #tpu.pipeline_mode<synchronous>, transform_indices = @transform_4, window_bounds = array<i64: 3, 128, 128>}, {pipeline_mode = #tpu.pipeline_mode<synchronous>, transform_indices = @transform_5, window_bounds = array<i64: 3, 1, 128>}, {pipeline_mode = #tpu.pipeline_mode<synchronous>, transform_indices = @transform_6, window_bounds = array<i64: 3, 1, 128>}, {pipeline_mode = #tpu.pipeline_mode<synchronous>, transform_indices = @transform_7, window_bounds = array<i64: 2, 256, 1>}, {pipeline_mode = #tpu.pipeline_mode<synchronous>, transform_indices = @transform_8, window_bounds = array<i64: 128, 128>}, {transform_indices = @transform_9, window_bounds = array<i64: 1, 256, 128>}, {transform_indices = @transform_10, window_bounds = array<i64: 1, 256, 128>}]} {
    %c0 = arith.constant 0 : index
    %c0_0 = arith.constant 0 : index
    %c0_1 = arith.constant 0 : index
    %0 = vector.load %arg1[%c0, %c0_0, %c0_1] : memref<1x3x128xf32, #tpu.memory_space<vmem>>, vector<1x3x128xf32>
    %1 = vector.shape_cast %0 : vector<1x3x128xf32> to vector<3x128xf32>
    %2 = vector.extract_strided_slice %1 {offsets = [0, 0], sizes = [1, 128], strides = [1, 1]} : vector<3x128xf32> to vector<1x128xf32>
    %c0_2 = arith.constant 0 : index
    %c0_3 = arith.constant 0 : index
    %c0_4 = arith.constant 0 : index
    %3 = vector.load %arg5[%c0_2, %c0_3, %c0_4] : memref<3x128x128xf32, #tpu.memory_space<vmem>>, vector<1x128x128xf32>
    %4 = vector.shape_cast %3 : vector<1x128x128xf32> to vector<128x128xf32>
    %cst = arith.constant dense<0.000000e+00> : vector<1x128xf32>
    %5 = tpu.matmul %2, %4, %cst {dimension_numbers = #tpu.dot_dimension_numbers<[1], [0], [0], [1], [0, 0, 1, 1], [], []>} : vector<1x128xf32>, vector<128x128xf32>, vector<1x128xf32> -> vector<1x128xf32>
    %cst_5 = arith.constant 2.500000e-01 : f32
    %6 = vector.broadcast %cst_5 : f32 to vector<1x128xf32>
    %7 = arith.mulf %5, %6 : vector<1x128xf32>
    %c0_6 = arith.constant 0 : index
    %c0_7 = arith.constant 0 : index
    %c0_8 = arith.constant 0 : index
    %8 = vector.load %arg6[%c0_6, %c0_7, %c0_8] : memref<3x1x128xf32, #tpu.memory_space<vmem>>, vector<1x1x128xf32>
    %9 = vector.shape_cast %8 : vector<1x1x128xf32> to vector<1x128xf32>
    %10 = arith.addf %7, %9 : vector<1x128xf32>
    %c0_9 = arith.constant 0 : index
    %c0_10 = arith.constant 0 : index
    %c0_11 = arith.constant 0 : index
    %c0_12 = arith.constant 0 : index
    %11 = vector.load %arg2[%c0_9, %c0_10, %c0_11, %c0_12] : memref<1x18x18x128xf32, #tpu.memory_space<vmem>>, vector<1x18x18x128xf32>
    %12 = vector.shape_cast %11 : vector<1x18x18x128xf32> to vector<18x18x128xf32>
    %13 = vector.shape_cast %10 : vector<1x128xf32> to vector<1x1x128xf32>
    %14 = vector.broadcast %13 : vector<1x1x128xf32> to vector<18x18x128xf32>
    %15 = arith.mulf %12, %14 : vector<18x18x128xf32>
    %c0_13 = arith.constant 0 : index
    %c0_14 = arith.constant 0 : index
    %c0_15 = arith.constant 0 : index
    %16 = vector.load %arg12[%c0_13, %c0_14, %c0_15] : memref<18x18x128xf32, #tpu.memory_space<vmem>>, vector<18x18x128xf32>
    tpu.vector_store %arg12[%c0_13, %c0_14, %c0_15], %15 {strides = array<i32>} : memref<18x18x128xf32, #tpu.memory_space<vmem>>, vector<18x18x128xf32>,
    %c0_16 = arith.constant 0 : index
    %c0_17 = arith.constant 0 : index
    %c0_18 = arith.constant 0 : index
    %17 = vector.load %arg12[%c0_16, %c0_17, %c0_18] : memref<18x18x128xf32, #tpu.memory_space<vmem>>, vector<16x16x128xf32>
    %18 = vector.shape_cast %17 : vector<16x16x128xf32> to vector<256x128xf32>
    %19 = arith.truncf %18 : vector<256x128xf32> to vector<256x128xbf16>
    %c0_19 = arith.constant 0 : index
    %c0_20 = arith.constant 0 : index
    %c0_21 = arith.constant 0 : index
    %c0_22 = arith.constant 0 : index
    %20 = vector.load %arg3[%c0_19, %c0_20, %c0_21, %c0_22] : memref<2x9x128x128xbf16, #tpu.memory_space<vmem>>, vector<1x1x128x128xbf16>
    %21 = vector.shape_cast %20 : vector<1x1x128x128xbf16> to vector<128x128xbf16>
    %cst_23 = arith.constant dense<0.000000e+00> : vector<256x128xf32>
    %22 = tpu.matmul %19, %21, %cst_23 {dimension_numbers = #tpu.dot_dimension_numbers<[1], [0], [0], [1], [0, 0, 1, 1], [], []>} : vector<256x128xbf16>, vector<128x128xbf16>, vector<256x128xf32> -> vector<256x128xf32>
    %c0_24 = arith.constant 0 : index
    %c1 = arith.constant 1 : index
    %c0_25 = arith.constant 0 : index
    %23 = vector.load %arg12[%c0_24, %c1, %c0_25] : memref<18x18x128xf32, #tpu.memory_space<vmem>>, vector<16x16x128xf32>
    %24 = vector.shape_cast %23 : vector<16x16x128xf32> to vector<256x128xf32>
    %25 = arith.truncf %24 : vector<256x128xf32> to vector<256x128xbf16>
    %c0_26 = arith.constant 0 : index
    %c1_27 = arith.constant 1 : index
    %c0_28 = arith.constant 0 : index
    %c0_29 = arith.constant 0 : index
    %26 = vector.load %arg3[%c0_26, %c1_27, %c0_28, %c0_29] : memref<2x9x128x128xbf16, #tpu.memory_space<vmem>>, vector<1x1x128x128xbf16>
    %27 = vector.shape_cast %26 : vector<1x1x128x128xbf16> to vector<128x128xbf16>
    %cst_30 = arith.constant dense<0.000000e+00> : vector<256x128xf32>
    %28 = tpu.matmul %25, %27, %cst_30 {dimension_numbers = #tpu.dot_dimension_numbers<[1], [0], [0], [1], [0, 0, 1, 1], [], []>} : vector<256x128xbf16>, vector<128x128xbf16>, vector<256x128xf32> -> vector<256x128xf32>
    %29 = arith.addf %22, %28 : vector<256x128xf32>
    %c0_31 = arith.constant 0 : index
    %c2 = arith.constant 2 : index
    %c0_32 = arith.constant 0 : index
    %30 = vector.load %arg12[%c0_31, %c2, %c0_32] : memref<18x18x128xf32, #tpu.memory_space<vmem>>, vector<16x16x128xf32>
    %31 = vector.shape_cast %30 : vector<16x16x128xf32> to vector<256x128xf32>
    %32 = arith.truncf %31 : vector<256x128xf32> to vector<256x128xbf16>
    %c0_33 = arith.constant 0 : index
    %c2_34 = arith.constant 2 : index
    %c0_35 = arith.constant 0 : index
    %c0_36 = arith.constant 0 : index
    %33 = vector.load %arg3[%c0_33, %c2_34, %c0_35, %c0_36] : memref<2x9x128x128xbf16, #tpu.memory_space<vmem>>, vector<1x1x128x128xbf16>
    %34 = vector.shape_cast %33 : vector<1x1x128x128xbf16> to vector<128x128xbf16>
    %cst_37 = arith.constant dense<0.000000e+00> : vector<256x128xf32>
    %35 = tpu.matmul %32, %34, %cst_37 {dimension_numbers = #tpu.dot_dimension_numbers<[1], [0], [0], [1], [0, 0, 1, 1], [], []>} : vector<256x128xbf16>, vector<128x128xbf16>, vector<256x128xf32> -> vector<256x128xf32>
    %36 = arith.addf %29, %35 : vector<256x128xf32>
    %c1_38 = arith.constant 1 : index
    %c0_39 = arith.constant 0 : index
    %c0_40 = arith.constant 0 : index
    %37 = vector.load %arg12[%c1_38, %c0_39, %c0_40] : memref<18x18x128xf32, #tpu.memory_space<vmem>>, vector<16x16x128xf32>
    %38 = vector.shape_cast %37 : vector<16x16x128xf32> to vector<256x128xf32>
    %39 = arith.truncf %38 : vector<256x128xf32> to vector<256x128xbf16>
    %c0_41 = arith.constant 0 : index
    %c3 = arith.constant 3 : index
    %c0_42 = arith.constant 0 : index
    %c0_43 = arith.constant 0 : index
    %40 = vector.load %arg3[%c0_41, %c3, %c0_42, %c0_43] : memref<2x9x128x128xbf16, #tpu.memory_space<vmem>>, vector<1x1x128x128xbf16>
    %41 = vector.shape_cast %40 : vector<1x1x128x128xbf16> to vector<128x128xbf16>
    %cst_44 = arith.constant dense<0.000000e+00> : vector<256x128xf32>
    %42 = tpu.matmul %39, %41, %cst_44 {dimension_numbers = #tpu.dot_dimension_numbers<[1], [0], [0], [1], [0, 0, 1, 1], [], []>} : vector<256x128xbf16>, vector<128x128xbf16>, vector<256x128xf32> -> vector<256x128xf32>
    %43 = arith.addf %36, %42 : vector<256x128xf32>
    %c1_45 = arith.constant 1 : index
    %c1_46 = arith.constant 1 : index
    %c0_47 = arith.constant 0 : index
    %44 = vector.load %arg12[%c1_45, %c1_46, %c0_47] : memref<18x18x128xf32, #tpu.memory_space<vmem>>, vector<16x16x128xf32>
    %45 = vector.shape_cast %44 : vector<16x16x128xf32> to vector<256x128xf32>
    %46 = arith.truncf %45 : vector<256x128xf32> to vector<256x128xbf16>
    %c0_48 = arith.constant 0 : index
    %c4 = arith.constant 4 : index
    %c0_49 = arith.constant 0 : index
    %c0_50 = arith.constant 0 : index
    %47 = vector.load %arg3[%c0_48, %c4, %c0_49, %c0_50] : memref<2x9x128x128xbf16, #tpu.memory_space<vmem>>, vector<1x1x128x128xbf16>
    %48 = vector.shape_cast %47 : vector<1x1x128x128xbf16> to vector<128x128xbf16>
    %cst_51 = arith.constant dense<0.000000e+00> : vector<256x128xf32>
    %49 = tpu.matmul %46, %48, %cst_51 {dimension_numbers = #tpu.dot_dimension_numbers<[1], [0], [0], [1], [0, 0, 1, 1], [], []>} : vector<256x128xbf16>, vector<128x128xbf16>, vector<256x128xf32> -> vector<256x128xf32>
    %50 = arith.addf %43, %49 : vector<256x128xf32>
    %c1_52 = arith.constant 1 : index
    %c2_53 = arith.constant 2 : index
    %c0_54 = arith.constant 0 : index
    %51 = vector.load %arg12[%c1_52, %c2_53, %c0_54] : memref<18x18x128xf32, #tpu.memory_space<vmem>>, vector<16x16x128xf32>
    %52 = vector.shape_cast %51 : vector<16x16x128xf32> to vector<256x128xf32>
    %53 = arith.truncf %52 : vector<256x128xf32> to vector<256x128xbf16>
    %c0_55 = arith.constant 0 : index
    %c5 = arith.constant 5 : index
    %c0_56 = arith.constant 0 : index
    %c0_57 = arith.constant 0 : index
    %54 = vector.load %arg3[%c0_55, %c5, %c0_56, %c0_57] : memref<2x9x128x128xbf16, #tpu.memory_space<vmem>>, vector<1x1x128x128xbf16>
    %55 = vector.shape_cast %54 : vector<1x1x128x128xbf16> to vector<128x128xbf16>
    %cst_58 = arith.constant dense<0.000000e+00> : vector<256x128xf32>
    %56 = tpu.matmul %53, %55, %cst_58 {dimension_numbers = #tpu.dot_dimension_numbers<[1], [0], [0], [1], [0, 0, 1, 1], [], []>} : vector<256x128xbf16>, vector<128x128xbf16>, vector<256x128xf32> -> vector<256x128xf32>
    %57 = arith.addf %50, %56 : vector<256x128xf32>
    %c2_59 = arith.constant 2 : index
    %c0_60 = arith.constant 0 : index
    %c0_61 = arith.constant 0 : index
    %58 = vector.load %arg12[%c2_59, %c0_60, %c0_61] : memref<18x18x128xf32, #tpu.memory_space<vmem>>, vector<16x16x128xf32>
    %59 = vector.shape_cast %58 : vector<16x16x128xf32> to vector<256x128xf32>
    %60 = arith.truncf %59 : vector<256x128xf32> to vector<256x128xbf16>
    %c0_62 = arith.constant 0 : index
    %c6 = arith.constant 6 : index
    %c0_63 = arith.constant 0 : index
    %c0_64 = arith.constant 0 : index
    %61 = vector.load %arg3[%c0_62, %c6, %c0_63, %c0_64] : memref<2x9x128x128xbf16, #tpu.memory_space<vmem>>, vector<1x1x128x128xbf16>
    %62 = vector.shape_cast %61 : vector<1x1x128x128xbf16> to vector<128x128xbf16>
    %cst_65 = arith.constant dense<0.000000e+00> : vector<256x128xf32>
    %63 = tpu.matmul %60, %62, %cst_65 {dimension_numbers = #tpu.dot_dimension_numbers<[1], [0], [0], [1], [0, 0, 1, 1], [], []>} : vector<256x128xbf16>, vector<128x128xbf16>, vector<256x128xf32> -> vector<256x128xf32>
    %64 = arith.addf %57, %63 : vector<256x128xf32>
    %c2_66 = arith.constant 2 : index
    %c1_67 = arith.constant 1 : index
    %c0_68 = arith.constant 0 : index
    %65 = vector.load %arg12[%c2_66, %c1_67, %c0_68] : memref<18x18x128xf32, #tpu.memory_space<vmem>>, vector<16x16x128xf32>
    %66 = vector.shape_cast %65 : vector<16x16x128xf32> to vector<256x128xf32>
    %67 = arith.truncf %66 : vector<256x128xf32> to vector<256x128xbf16>
    %c0_69 = arith.constant 0 : index
    %c7 = arith.constant 7 : index
    %c0_70 = arith.constant 0 : index
    %c0_71 = arith.constant 0 : index
    %68 = vector.load %arg3[%c0_69, %c7, %c0_70, %c0_71] : memref<2x9x128x128xbf16, #tpu.memory_space<vmem>>, vector<1x1x128x128xbf16>
    %69 = vector.shape_cast %68 : vector<1x1x128x128xbf16> to vector<128x128xbf16>
    %cst_72 = arith.constant dense<0.000000e+00> : vector<256x128xf32>
    %70 = tpu.matmul %67, %69, %cst_72 {dimension_numbers = #tpu.dot_dimension_numbers<[1], [0], [0], [1], [0, 0, 1, 1], [], []>} : vector<256x128xbf16>, vector<128x128xbf16>, vector<256x128xf32> -> vector<256x128xf32>
    %71 = arith.addf %64, %70 : vector<256x128xf32>
    %c2_73 = arith.constant 2 : index
    %c2_74 = arith.constant 2 : index
    %c0_75 = arith.constant 0 : index
    %72 = vector.load %arg12[%c2_73, %c2_74, %c0_75] : memref<18x18x128xf32, #tpu.memory_space<vmem>>, vector<16x16x128xf32>
    %73 = vector.shape_cast %72 : vector<16x16x128xf32> to vector<256x128xf32>
    %74 = arith.truncf %73 : vector<256x128xf32> to vector<256x128xbf16>
    %c0_76 = arith.constant 0 : index
    %c8 = arith.constant 8 : index
    %c0_77 = arith.constant 0 : index
    %c0_78 = arith.constant 0 : index
    %75 = vector.load %arg3[%c0_76, %c8, %c0_77, %c0_78] : memref<2x9x128x128xbf16, #tpu.memory_space<vmem>>, vector<1x1x128x128xbf16>
    %76 = vector.shape_cast %75 : vector<1x1x128x128xbf16> to vector<128x128xbf16>
    %cst_79 = arith.constant dense<0.000000e+00> : vector<256x128xf32>
    %77 = tpu.matmul %74, %76, %cst_79 {dimension_numbers = #tpu.dot_dimension_numbers<[1], [0], [0], [1], [0, 0, 1, 1], [], []>} : vector<256x128xbf16>, vector<128x128xbf16>, vector<256x128xf32> -> vector<256x128xf32>
    %78 = arith.addf %71, %77 : vector<256x128xf32>
    %79 = arith.mulf %10, %10 : vector<1x128xf32>
    %c0_80 = arith.constant 0 : index
    %c0_81 = arith.constant 0 : index
    %c0_82 = arith.constant 0 : index
    %80 = vector.load %arg4[%c0_80, %c0_81, %c0_82] : memref<2x128x128xf32, #tpu.memory_space<vmem>>, vector<1x128x128xf32>
    %81 = vector.shape_cast %80 : vector<1x128x128xf32> to vector<128x128xf32>
    %cst_83 = arith.constant dense<0.000000e+00> : vector<1x128xf32>
    %82 = tpu.matmul %79, %81, %cst_83 {dimension_numbers = #tpu.dot_dimension_numbers<[1], [0], [0], [1], [0, 0, 1, 1], [], []>} : vector<1x128xf32>, vector<128x128xf32>, vector<1x128xf32> -> vector<1x128xf32>
    %cst_84 = arith.constant 9.99999993E-9 : f32
    %83 = vector.broadcast %cst_84 : f32 to vector<1x128xf32>
    %84 = arith.addf %82, %83 : vector<1x128xf32>
    %85 = math.rsqrt %84 : vector<1x128xf32>
    %86 = vector.broadcast %85 : vector<1x128xf32> to vector<256x128xf32>
    %87 = arith.mulf %78, %86 : vector<256x128xf32>
    %c0_85 = arith.constant 0 : index
    %c0_86 = arith.constant 0 : index
    %c0_87 = arith.constant 0 : index
    %88 = vector.load %arg8[%c0_85, %c0_86, %c0_87] : memref<2x256x1xf32, #tpu.memory_space<vmem>>, vector<1x256x1xf32>
    %89 = vector.shape_cast %88 : vector<1x256x1xf32> to vector<256x1xf32>
    %90 = vector.broadcast %89 : vector<256x1xf32> to vector<256x128xf32>
    %91 = arith.addf %87, %90 : vector<256x128xf32>
    %c0_88 = arith.constant 0 : index
    %c0_89 = arith.constant 0 : index
    %c0_90 = arith.constant 0 : index
    %92 = vector.load %arg7[%c0_88, %c0_89, %c0_90] : memref<3x1x128xf32, #tpu.memory_space<vmem>>, vector<1x1x128xf32>
    %93 = vector.shape_cast %92 : vector<1x1x128xf32> to vector<1x128xf32>
    %94 = vector.broadcast %93 : vector<1x128xf32> to vector<256x128xf32>
    %95 = arith.addf %91, %94 : vector<256x128xf32>
    %cst_91 = arith.constant 0.000000e+00 : f32
    %96 = vector.broadcast %cst_91 : f32 to vector<256x128xf32>
    %97 = arith.cmpf oge, %95, %96 : vector<256x128xf32>
    %cst_92 = arith.constant 2.000000e-01 : f32
    %98 = vector.broadcast %cst_92 : f32 to vector<256x128xf32>
    %99 = arith.mulf %98, %95 : vector<256x128xf32>
    %100 = arith.select %97, %95, %99 : vector<256x128xi1>, vector<256x128xf32>
    %cst_93 = arith.constant 1.41421354 : f32
    %101 = vector.broadcast %cst_93 : f32 to vector<256x128xf32>
    %102 = arith.mulf %100, %101 : vector<256x128xf32>
    %cst_94 = arith.constant -2.560000e+02 : f32
    %cst_95 = arith.constant 2.560000e+02 : f32
    %103 = vector.broadcast %cst_94 : f32 to vector<256x128xf32>
    %104 = arith.maximumf %103, %102 : vector<256x128xf32>
    %105 = vector.broadcast %cst_95 : f32 to vector<256x128xf32>
    %106 = arith.minimumf %105, %104 : vector<256x128xf32>
    %107 = vector.extract_strided_slice %1 {offsets = [1, 0], sizes = [1, 128], strides = [1, 1]} : vector<3x128xf32> to vector<1x128xf32>
    %c1_96 = arith.constant 1 : index
    %c0_97 = arith.constant 0 : index
    %c0_98 = arith.constant 0 : index
    %108 = vector.load %arg5[%c1_96, %c0_97, %c0_98] : memref<3x128x128xf32, #tpu.memory_space<vmem>>, vector<1x128x128xf32>
    %109 = vector.shape_cast %108 : vector<1x128x128xf32> to vector<128x128xf32>
    %cst_99 = arith.constant dense<0.000000e+00> : vector<1x128xf32>
    %110 = tpu.matmul %107, %109, %cst_99 {dimension_numbers = #tpu.dot_dimension_numbers<[1], [0], [0], [1], [0, 0, 1, 1], [], []>} : vector<1x128xf32>, vector<128x128xf32>, vector<1x128xf32> -> vector<1x128xf32>
    %cst_100 = arith.constant 2.500000e-01 : f32
    %111 = vector.broadcast %cst_100 : f32 to vector<1x128xf32>
    %112 = arith.mulf %110, %111 : vector<1x128xf32>
    %c1_101 = arith.constant 1 : index
    %c0_102 = arith.constant 0 : index
    %c0_103 = arith.constant 0 : index
    %113 = vector.load %arg6[%c1_101, %c0_102, %c0_103] : memref<3x1x128xf32, #tpu.memory_space<vmem>>, vector<1x1x128xf32>
    %114 = vector.shape_cast %113 : vector<1x1x128xf32> to vector<1x128xf32>
    %115 = arith.addf %112, %114 : vector<1x128xf32>
    %116 = vector.broadcast %115 : vector<1x128xf32> to vector<256x128xf32>
    %117 = arith.mulf %106, %116 : vector<256x128xf32>
    %118 = vector.shape_cast %117 : vector<256x128xf32> to vector<16x16x128xf32>
    %c1_104 = arith.constant 1 : index
    %c1_105 = arith.constant 1 : index
    %c0_106 = arith.constant 0 : index
    %119 = vector.load %arg12[%c1_104, %c1_105, %c0_106] : memref<18x18x128xf32, #tpu.memory_space<vmem>>, vector<16x16x128xf32>
    tpu.vector_store %arg12[%c1_104, %c1_105, %c0_106], %118 {strides = array<i32>} : memref<18x18x128xf32, #tpu.memory_space<vmem>>, vector<16x16x128xf32>,
    %c0_107 = arith.constant 0 : index
    %c0_108 = arith.constant 0 : index
    %c0_109 = arith.constant 0 : index
    %120 = vector.load %arg12[%c0_107, %c0_108, %c0_109] : memref<18x18x128xf32, #tpu.memory_space<vmem>>, vector<16x16x128xf32>
    %121 = vector.shape_cast %120 : vector<16x16x128xf32> to vector<256x128xf32>
    %122 = arith.truncf %121 : vector<256x128xf32> to vector<256x128xbf16>
    %c1_110 = arith.constant 1 : index
    %c0_111 = arith.constant 0 : index
    %c0_112 = arith.constant 0 : index
    %c0_113 = arith.constant 0 : index
    %123 = vector.load %arg3[%c1_110, %c0_111, %c0_112, %c0_113] : memref<2x9x128x128xbf16, #tpu.memory_space<vmem>>, vector<1x1x128x128xbf16>
    %124 = vector.shape_cast %123 : vector<1x1x128x128xbf16> to vector<128x128xbf16>
    %cst_114 = arith.constant dense<0.000000e+00> : vector<256x128xf32>
    %125 = tpu.matmul %122, %124, %cst_114 {dimension_numbers = #tpu.dot_dimension_numbers<[1], [0], [0], [1], [0, 0, 1, 1], [], []>} : vector<256x128xbf16>, vector<128x128xbf16>, vector<256x128xf32> -> vector<256x128xf32>
    %c0_115 = arith.constant 0 : index
    %c1_116 = arith.constant 1 : index
    %c0_117 = arith.constant 0 : index
    %126 = vector.load %arg12[%c0_115, %c1_116, %c0_117] : memref<18x18x128xf32, #tpu.memory_space<vmem>>, vector<16x16x128xf32>
    %127 = vector.shape_cast %126 : vector<16x16x128xf32> to vector<256x128xf32>
    %128 = arith.truncf %127 : vector<256x128xf32> to vector<256x128xbf16>
    %c1_118 = arith.constant 1 : index
    %c1_119 = arith.constant 1 : index
    %c0_120 = arith.constant 0 : index
    %c0_121 = arith.constant 0 : index
    %129 = vector.load %arg3[%c1_118, %c1_119, %c0_120, %c0_121] : memref<2x9x128x128xbf16, #tpu.memory_space<vmem>>, vector<1x1x128x128xbf16>
    %130 = vector.shape_cast %129 : vector<1x1x128x128xbf16> to vector<128x128xbf16>
    %cst_122 = arith.constant dense<0.000000e+00> : vector<256x128xf32>
    %131 = tpu.matmul %128, %130, %cst_122 {dimension_numbers = #tpu.dot_dimension_numbers<[1], [0], [0], [1], [0, 0, 1, 1], [], []>} : vector<256x128xbf16>, vector<128x128xbf16>, vector<256x128xf32> -> vector<256x128xf32>
    %132 = arith.addf %125, %131 : vector<256x128xf32>
    %c0_123 = arith.constant 0 : index
    %c2_124 = arith.constant 2 : index
    %c0_125 = arith.constant 0 : index
    %133 = vector.load %arg12[%c0_123, %c2_124, %c0_125] : memref<18x18x128xf32, #tpu.memory_space<vmem>>, vector<16x16x128xf32>
    %134 = vector.shape_cast %133 : vector<16x16x128xf32> to vector<256x128xf32>
    %135 = arith.truncf %134 : vector<256x128xf32> to vector<256x128xbf16>
    %c1_126 = arith.constant 1 : index
    %c2_127 = arith.constant 2 : index
    %c0_128 = arith.constant 0 : index
    %c0_129 = arith.constant 0 : index
    %136 = vector.load %arg3[%c1_126, %c2_127, %c0_128, %c0_129] : memref<2x9x128x128xbf16, #tpu.memory_space<vmem>>, vector<1x1x128x128xbf16>
    %137 = vector.shape_cast %136 : vector<1x1x128x128xbf16> to vector<128x128xbf16>
    %cst_130 = arith.constant dense<0.000000e+00> : vector<256x128xf32>
    %138 = tpu.matmul %135, %137, %cst_130 {dimension_numbers = #tpu.dot_dimension_numbers<[1], [0], [0], [1], [0, 0, 1, 1], [], []>} : vector<256x128xbf16>, vector<128x128xbf16>, vector<256x128xf32> -> vector<256x128xf32>
    %139 = arith.addf %132, %138 : vector<256x128xf32>
    %c1_131 = arith.constant 1 : index
    %c0_132 = arith.constant 0 : index
    %c0_133 = arith.constant 0 : index
    %140 = vector.load %arg12[%c1_131, %c0_132, %c0_133] : memref<18x18x128xf32, #tpu.memory_space<vmem>>, vector<16x16x128xf32>
    %141 = vector.shape_cast %140 : vector<16x16x128xf32> to vector<256x128xf32>
    %142 = arith.truncf %141 : vector<256x128xf32> to vector<256x128xbf16>
    %c1_134 = arith.constant 1 : index
    %c3_135 = arith.constant 3 : index
    %c0_136 = arith.constant 0 : index
    %c0_137 = arith.constant 0 : index
    %143 = vector.load %arg3[%c1_134, %c3_135, %c0_136, %c0_137] : memref<2x9x128x128xbf16, #tpu.memory_space<vmem>>, vector<1x1x128x128xbf16>
    %144 = vector.shape_cast %143 : vector<1x1x128x128xbf16> to vector<128x128xbf16>
    %cst_138 = arith.constant dense<0.000000e+00> : vector<256x128xf32>
    %145 = tpu.matmul %142, %144, %cst_138 {dimension_numbers = #tpu.dot_dimension_numbers<[1], [0], [0], [1], [0, 0, 1, 1], [], []>} : vector<256x128xbf16>, vector<128x128xbf16>, vector<256x128xf32> -> vector<256x128xf32>
    %146 = arith.addf %139, %145 : vector<256x128xf32>
    %c1_139 = arith.constant 1 : index
    %c1_140 = arith.constant 1 : index
    %c0_141 = arith.constant 0 : index
    %147 = vector.load %arg12[%c1_139, %c1_140, %c0_141] : memref<18x18x128xf32, #tpu.memory_space<vmem>>, vector<16x16x128xf32>
    %148 = vector.shape_cast %147 : vector<16x16x128xf32> to vector<256x128xf32>
    %149 = arith.truncf %148 : vector<256x128xf32> to vector<256x128xbf16>
    %c1_142 = arith.constant 1 : index
    %c4_143 = arith.constant 4 : index
    %c0_144 = arith.constant 0 : index
    %c0_145 = arith.constant 0 : index
    %150 = vector.load %arg3[%c1_142, %c4_143, %c0_144, %c0_145] : memref<2x9x128x128xbf16, #tpu.memory_space<vmem>>, vector<1x1x128x128xbf16>
    %151 = vector.shape_cast %150 : vector<1x1x128x128xbf16> to vector<128x128xbf16>
    %cst_146 = arith.constant dense<0.000000e+00> : vector<256x128xf32>
    %152 = tpu.matmul %149, %151, %cst_146 {dimension_numbers = #tpu.dot_dimension_numbers<[1], [0], [0], [1], [0, 0, 1, 1], [], []>} : vector<256x128xbf16>, vector<128x128xbf16>, vector<256x128xf32> -> vector<256x128xf32>
    %153 = arith.addf %146, %152 : vector<256x128xf32>
    %c1_147 = arith.constant 1 : index
    %c2_148 = arith.constant 2 : index
    %c0_149 = arith.constant 0 : index
    %154 = vector.load %arg12[%c1_147, %c2_148, %c0_149] : memref<18x18x128xf32, #tpu.memory_space<vmem>>, vector<16x16x128xf32>
    %155 = vector.shape_cast %154 : vector<16x16x128xf32> to vector<256x128xf32>
    %156 = arith.truncf %155 : vector<256x128xf32> to vector<256x128xbf16>
    %c1_150 = arith.constant 1 : index
    %c5_151 = arith.constant 5 : index
    %c0_152 = arith.constant 0 : index
    %c0_153 = arith.constant 0 : index
    %157 = vector.load %arg3[%c1_150, %c5_151, %c0_152, %c0_153] : memref<2x9x128x128xbf16, #tpu.memory_space<vmem>>, vector<1x1x128x128xbf16>
    %158 = vector.shape_cast %157 : vector<1x1x128x128xbf16> to vector<128x128xbf16>
    %cst_154 = arith.constant dense<0.000000e+00> : vector<256x128xf32>
    %159 = tpu.matmul %156, %158, %cst_154 {dimension_numbers = #tpu.dot_dimension_numbers<[1], [0], [0], [1], [0, 0, 1, 1], [], []>} : vector<256x128xbf16>, vector<128x128xbf16>, vector<256x128xf32> -> vector<256x128xf32>
    %160 = arith.addf %153, %159 : vector<256x128xf32>
    %c2_155 = arith.constant 2 : index
    %c0_156 = arith.constant 0 : index
    %c0_157 = arith.constant 0 : index
    %161 = vector.load %arg12[%c2_155, %c0_156, %c0_157] : memref<18x18x128xf32, #tpu.memory_space<vmem>>, vector<16x16x128xf32>
    %162 = vector.shape_cast %161 : vector<16x16x128xf32> to vector<256x128xf32>
    %163 = arith.truncf %162 : vector<256x128xf32> to vector<256x128xbf16>
    %c1_158 = arith.constant 1 : index
    %c6_159 = arith.constant 6 : index
    %c0_160 = arith.constant 0 : index
    %c0_161 = arith.constant 0 : index
    %164 = vector.load %arg3[%c1_158, %c6_159, %c0_160, %c0_161] : memref<2x9x128x128xbf16, #tpu.memory_space<vmem>>, vector<1x1x128x128xbf16>
    %165 = vector.shape_cast %164 : vector<1x1x128x128xbf16> to vector<128x128xbf16>
    %cst_162 = arith.constant dense<0.000000e+00> : vector<256x128xf32>
    %166 = tpu.matmul %163, %165, %cst_162 {dimension_numbers = #tpu.dot_dimension_numbers<[1], [0], [0], [1], [0, 0, 1, 1], [], []>} : vector<256x128xbf16>, vector<128x128xbf16>, vector<256x128xf32> -> vector<256x128xf32>
    %167 = arith.addf %160, %166 : vector<256x128xf32>
    %c2_163 = arith.constant 2 : index
    %c1_164 = arith.constant 1 : index
    %c0_165 = arith.constant 0 : index
    %168 = vector.load %arg12[%c2_163, %c1_164, %c0_165] : memref<18x18x128xf32, #tpu.memory_space<vmem>>, vector<16x16x128xf32>
    %169 = vector.shape_cast %168 : vector<16x16x128xf32> to vector<256x128xf32>
    %170 = arith.truncf %169 : vector<256x128xf32> to vector<256x128xbf16>
    %c1_166 = arith.constant 1 : index
    %c7_167 = arith.constant 7 : index
    %c0_168 = arith.constant 0 : index
    %c0_169 = arith.constant 0 : index
    %171 = vector.load %arg3[%c1_166, %c7_167, %c0_168, %c0_169] : memref<2x9x128x128xbf16, #tpu.memory_space<vmem>>, vector<1x1x128x128xbf16>
    %172 = vector.shape_cast %171 : vector<1x1x128x128xbf16> to vector<128x128xbf16>
    %cst_170 = arith.constant dense<0.000000e+00> : vector<256x128xf32>
    %173 = tpu.matmul %170, %172, %cst_170 {dimension_numbers = #tpu.dot_dimension_numbers<[1], [0], [0], [1], [0, 0, 1, 1], [], []>} : vector<256x128xbf16>, vector<128x128xbf16>, vector<256x128xf32> -> vector<256x128xf32>
    %174 = arith.addf %167, %173 : vector<256x128xf32>
    %c2_171 = arith.constant 2 : index
    %c2_172 = arith.constant 2 : index
    %c0_173 = arith.constant 0 : index
    %175 = vector.load %arg12[%c2_171, %c2_172, %c0_173] : memref<18x18x128xf32, #tpu.memory_space<vmem>>, vector<16x16x128xf32>
    %176 = vector.shape_cast %175 : vector<16x16x128xf32> to vector<256x128xf32>
    %177 = arith.truncf %176 : vector<256x128xf32> to vector<256x128xbf16>
    %c1_174 = arith.constant 1 : index
    %c8_175 = arith.constant 8 : index
    %c0_176 = arith.constant 0 : index
    %c0_177 = arith.constant 0 : index
    %178 = vector.load %arg3[%c1_174, %c8_175, %c0_176, %c0_177] : memref<2x9x128x128xbf16, #tpu.memory_space<vmem>>, vector<1x1x128x128xbf16>
    %179 = vector.shape_cast %178 : vector<1x1x128x128xbf16> to vector<128x128xbf16>
    %cst_178 = arith.constant dense<0.000000e+00> : vector<256x128xf32>
    %180 = tpu.matmul %177, %179, %cst_178 {dimension_numbers = #tpu.dot_dimension_numbers<[1], [0], [0], [1], [0, 0, 1, 1], [], []>} : vector<256x128xbf16>, vector<128x128xbf16>, vector<256x128xf32> -> vector<256x128xf32>
    %181 = arith.addf %174, %180 : vector<256x128xf32>
    %182 = arith.mulf %115, %115 : vector<1x128xf32>
    %c1_179 = arith.constant 1 : index
    %c0_180 = arith.constant 0 : index
    %c0_181 = arith.constant 0 : index
    %183 = vector.load %arg4[%c1_179, %c0_180, %c0_181] : memref<2x128x128xf32, #tpu.memory_space<vmem>>, vector<1x128x128xf32>
    %184 = vector.shape_cast %183 : vector<1x128x128xf32> to vector<128x128xf32>
    %cst_182 = arith.constant dense<0.000000e+00> : vector<1x128xf32>
    %185 = tpu.matmul %182, %184, %cst_182 {dimension_numbers = #tpu.dot_dimension_numbers<[1], [0], [0], [1], [0, 0, 1, 1], [], []>} : vector<1x128xf32>, vector<128x128xf32>, vector<1x128xf32> -> vector<1x128xf32>
    %cst_183 = arith.constant 9.99999993E-9 : f32
    %186 = vector.broadcast %cst_183 : f32 to vector<1x128xf32>
    %187 = arith.addf %185, %186 : vector<1x128xf32>
    %188 = math.rsqrt %187 : vector<1x128xf32>
    %189 = vector.broadcast %188 : vector<1x128xf32> to vector<256x128xf32>
    %190 = arith.mulf %181, %189 : vector<256x128xf32>
    %c1_184 = arith.constant 1 : index
    %c0_185 = arith.constant 0 : index
    %c0_186 = arith.constant 0 : index
    %191 = vector.load %arg8[%c1_184, %c0_185, %c0_186] : memref<2x256x1xf32, #tpu.memory_space<vmem>>, vector<1x256x1xf32>
    %192 = vector.shape_cast %191 : vector<1x256x1xf32> to vector<256x1xf32>
    %193 = vector.broadcast %192 : vector<256x1xf32> to vector<256x128xf32>
    %194 = arith.addf %190, %193 : vector<256x128xf32>
    %c1_187 = arith.constant 1 : index
    %c0_188 = arith.constant 0 : index
    %c0_189 = arith.constant 0 : index
    %195 = vector.load %arg7[%c1_187, %c0_188, %c0_189] : memref<3x1x128xf32, #tpu.memory_space<vmem>>, vector<1x1x128xf32>
    %196 = vector.shape_cast %195 : vector<1x1x128xf32> to vector<1x128xf32>
    %197 = vector.broadcast %196 : vector<1x128xf32> to vector<256x128xf32>
    %198 = arith.addf %194, %197 : vector<256x128xf32>
    %cst_190 = arith.constant 0.000000e+00 : f32
    %199 = vector.broadcast %cst_190 : f32 to vector<256x128xf32>
    %200 = arith.cmpf oge, %198, %199 : vector<256x128xf32>
    %cst_191 = arith.constant 2.000000e-01 : f32
    %201 = vector.broadcast %cst_191 : f32 to vector<256x128xf32>
    %202 = arith.mulf %201, %198 : vector<256x128xf32>
    %203 = arith.select %200, %198, %202 : vector<256x128xi1>, vector<256x128xf32>
    %cst_192 = arith.constant 1.41421354 : f32
    %204 = vector.broadcast %cst_192 : f32 to vector<256x128xf32>
    %205 = arith.mulf %203, %204 : vector<256x128xf32>
    %cst_193 = arith.constant -2.560000e+02 : f32
    %cst_194 = arith.constant 2.560000e+02 : f32
    %206 = vector.broadcast %cst_193 : f32 to vector<256x128xf32>
    %207 = arith.maximumf %206, %205 : vector<256x128xf32>
    %208 = vector.broadcast %cst_194 : f32 to vector<256x128xf32>
    %209 = arith.minimumf %208, %207 : vector<256x128xf32>
    %c0_195 = arith.constant 0 : index
    %c0_196 = arith.constant 0 : index
    %c0_197 = arith.constant 0 : index
    %210 = vector.load %arg10[%c0_195, %c0_196, %c0_197] : memref<1x256x128xf32, #tpu.memory_space<vmem>>, vector<1x256x128xf32>
    %211 = vector.shape_cast %210 : vector<1x256x128xf32> to vector<256x128xf32>
    %212 = vector.shape_cast %209 : vector<256x128xf32> to vector<1x256x128xf32>
    tpu.vector_store %arg10[%c0_195, %c0_196, %c0_197], %212 {strides = array<i32>} : memref<1x256x128xf32, #tpu.memory_space<vmem>>, vector<1x256x128xf32>,
    %213 = vector.extract_strided_slice %1 {offsets = [2, 0], sizes = [1, 128], strides = [1, 1]} : vector<3x128xf32> to vector<1x128xf32>
    %c2_198 = arith.constant 2 : index
    %c0_199 = arith.constant 0 : index
    %c0_200 = arith.constant 0 : index
    %214 = vector.load %arg5[%c2_198, %c0_199, %c0_200] : memref<3x128x128xf32, #tpu.memory_space<vmem>>, vector<1x128x128xf32>
    %215 = vector.shape_cast %214 : vector<1x128x128xf32> to vector<128x128xf32>
    %cst_201 = arith.constant dense<0.000000e+00> : vector<1x128xf32>
    %216 = tpu.matmul %213, %215, %cst_201 {dimension_numbers = #tpu.dot_dimension_numbers<[1], [0], [0], [1], [0, 0, 1, 1], [], []>} : vector<1x128xf32>, vector<128x128xf32>, vector<1x128xf32> -> vector<1x128xf32>
    %cst_202 = arith.constant 2.500000e-01 : f32
    %217 = vector.broadcast %cst_202 : f32 to vector<1x128xf32>
    %218 = arith.mulf %216, %217 : vector<1x128xf32>
    %c2_203 = arith.constant 2 : index
    %c0_204 = arith.constant 0 : index
    %c0_205 = arith.constant 0 : index
    %219 = vector.load %arg6[%c2_203, %c0_204, %c0_205] : memref<3x1x128xf32, #tpu.memory_space<vmem>>, vector<1x1x128xf32>
    %220 = vector.shape_cast %219 : vector<1x1x128xf32> to vector<1x128xf32>
    %221 = arith.addf %218, %220 : vector<1x128xf32>
    %cst_206 = arith.constant 2.500000e-01 : f32
    %222 = vector.broadcast %cst_206 : f32 to vector<1x128xf32>
    %223 = arith.mulf %221, %222 : vector<1x128xf32>
    %224 = vector.broadcast %223 : vector<1x128xf32> to vector<256x128xf32>
    %225 = arith.mulf %209, %224 : vector<256x128xf32>
    %226 = arith.truncf %225 : vector<256x128xf32> to vector<256x128xbf16>
    %c0_207 = arith.constant 0 : index
    %c0_208 = arith.constant 0 : index
    %227 = vector.load %arg9[%c0_207, %c0_208] : memref<128x128xbf16, #tpu.memory_space<vmem>>, vector<128x128xbf16>
    %cst_209 = arith.constant dense<0.000000e+00> : vector<256x128xf32>
    %228 = tpu.matmul %226, %227, %cst_209 {dimension_numbers = #tpu.dot_dimension_numbers<[1], [0], [0], [1], [0, 0, 1, 1], [], []>} : vector<256x128xbf16>, vector<128x128xbf16>, vector<256x128xf32> -> vector<256x128xf32>
    %c2_210 = arith.constant 2 : index
    %c0_211 = arith.constant 0 : index
    %c0_212 = arith.constant 0 : index
    %229 = vector.load %arg7[%c2_210, %c0_211, %c0_212] : memref<3x1x128xf32, #tpu.memory_space<vmem>>, vector<1x1x128xf32>
    %230 = vector.shape_cast %229 : vector<1x1x128xf32> to vector<1x128xf32>
    %231 = vector.broadcast %230 : vector<1x128xf32> to vector<256x128xf32>
    %232 = arith.addf %228, %231 : vector<256x128xf32>
    %cst_213 = arith.constant -2.560000e+02 : f32
    %cst_214 = arith.constant 2.560000e+02 : f32
    %233 = vector.broadcast %cst_213 : f32 to vector<256x128xf32>
    %234 = arith.maximumf %233, %232 : vector<256x128xf32>
    %235 = vector.broadcast %cst_214 : f32 to vector<256x128xf32>
    %236 = arith.minimumf %235, %234 : vector<256x128xf32>
    %c0_215 = arith.constant 0 : index
    %c0_216 = arith.constant 0 : index
    %c0_217 = arith.constant 0 : index
    %237 = vector.load %arg11[%c0_215, %c0_216, %c0_217] : memref<1x256x128xf32, #tpu.memory_space<vmem>>, vector<1x256x128xf32>
    %238 = vector.shape_cast %237 : vector<1x256x128xf32> to vector<256x128xf32>
    %239 = vector.shape_cast %236 : vector<256x128xf32> to vector<1x256x128xf32>
    tpu.vector_store %arg11[%c0_215, %c0_216, %c0_217], %239 {strides = array<i32>} : memref<1x256x128xf32, #tpu.memory_space<vmem>>, vector<1x256x128xf32>,
    return
  }
  func.func @transform_0(%arg0: i32) -> (i32, i32, i32) {
    %c0_i32 = arith.constant 0 : i32
    %c0_i32_0 = arith.constant 0 : i32
    %c0_i32_1 = arith.constant 0 : i32
    return %arg0, %c0_i32, %c0_i32_0 : i32, i32, i32
  }
  func.func @transform_1(%arg0: i32) -> (i32, i32, i32, i32) {
    %c0_i32 = arith.constant 0 : i32
    %c0_i32_0 = arith.constant 0 : i32
    %c0_i32_1 = arith.constant 0 : i32
    %c0_i32_2 = arith.constant 0 : i32
    return %arg0, %c0_i32, %c0_i32_0, %c0_i32_1 : i32, i32, i32, i32
  }
  func.func @transform_2(%arg0: i32) -> (i32, i32, i32, i32) {
    %c0_i32 = arith.constant 0 : i32
    %c0_i32_0 = arith.constant 0 : i32
    %c0_i32_1 = arith.constant 0 : i32
    %c0_i32_2 = arith.constant 0 : i32
    %c0_i32_3 = arith.constant 0 : i32
    return %c0_i32, %c0_i32_0, %c0_i32_1, %c0_i32_2 : i32, i32, i32, i32
  }
  func.func @transform_3(%arg0: i32) -> (i32, i32, i32) {
    %c0_i32 = arith.constant 0 : i32
    %c0_i32_0 = arith.constant 0 : i32
    %c0_i32_1 = arith.constant 0 : i32
    %c0_i32_2 = arith.constant 0 : i32
    return %c0_i32, %c0_i32_0, %c0_i32_1 : i32, i32, i32
  }
  func.func @transform_4(%arg0: i32) -> (i32, i32, i32) {
    %c0_i32 = arith.constant 0 : i32
    %c0_i32_0 = arith.constant 0 : i32
    %c0_i32_1 = arith.constant 0 : i32
    %c0_i32_2 = arith.constant 0 : i32
    return %c0_i32, %c0_i32_0, %c0_i32_1 : i32, i32, i32
  }
  func.func @transform_5(%arg0: i32) -> (i32, i32, i32) {
    %c0_i32 = arith.constant 0 : i32
    %c0_i32_0 = arith.constant 0 : i32
    %c0_i32_1 = arith.constant 0 : i32
    %c0_i32_2 = arith.constant 0 : i32
    return %c0_i32, %c0_i32_0, %c0_i32_1 : i32, i32, i32
  }
  func.func @transform_6(%arg0: i32) -> (i32, i32, i32) {
    %c0_i32 = arith.constant 0 : i32
    %c0_i32_0 = arith.constant 0 : i32
    %c0_i32_1 = arith.constant 0 : i32
    %c0_i32_2 = arith.constant 0 : i32
    return %c0_i32, %c0_i32_0, %c0_i32_1 : i32, i32, i32
  }
  func.func @transform_7(%arg0: i32) -> (i32, i32, i32) {
    %c0_i32 = arith.constant 0 : i32
    %c0_i32_0 = arith.constant 0 : i32
    %c0_i32_1 = arith.constant 0 : i32
    %c0_i32_2 = arith.constant 0 : i32
    return %c0_i32, %c0_i32_0, %c0_i32_1 : i32, i32, i32
  }
  func.func @transform_8(%arg0: i32) -> (i32, i32) {
    %c0_i32 = arith.constant 0 : i32
    %c0_i32_0 = arith.constant 0 : i32
    %c0_i32_1 = arith.constant 0 : i32
    return %c0_i32, %c0_i32_0 : i32, i32
  }
  func.func @transform_9(%arg0: i32) -> (i32, i32, i32) {
    %c0_i32 = arith.constant 0 : i32
    %c0_i32_0 = arith.constant 0 : i32
    %c0_i32_1 = arith.constant 0 : i32
    return %arg0, %c0_i32, %c0_i32_0 : i32, i32, i32
  }
  func.func @transform_10(%arg0: i32) -> (i32, i32, i32) {
    %c0_i32 = arith.constant 0 : i32
    %c0_i32_0 = arith.constant 0 : i32
    %c0_i32_1 = arith.constant 0 : i32
    return %arg0, %c0_i32, %c0_i32_0 : i32, i32, i32
  }
}

</mosaic_0001>

<llo_original>
// kernel: tpu_custom_call.1
$region0: #{tpu_custom_call.1}
  #allocation0 [shape = 'u32[]', space=smem, size = 0x4, offset = 0x4, fixed_abs, tag = 'smem constant byte address 0x4 - core index']
  #allocation1 [shape = 'u32[144,128]{1,0:T(1,128)}', space=vmem, size = 0x12000, scoped, tag = 'internal scratch']
  #allocation2 [shape = 'f32[18,18,128]{2,1,0:T(8,128)}', space=vmem, size = 0x36000, scoped, tag = 'scratch operand']
  %s0 = inlined_call_operand.vmem [shape: f32[2,3,128], index: 0, kind: input, shape index: {}]
  %s1 = inlined_call_operand.vmem [shape: f32[2,18,18,128], index: 1, kind: input, shape index: {}]
  %s2 = inlined_call_operand.vmem [shape: bf16[2,9,128,128], index: 2, kind: input, shape index: {}]
  %s3 = inlined_call_operand.vmem [shape: f32[2,128,128], index: 3, kind: input, shape index: {}]
  %s4 = inlined_call_operand.vmem [shape: f32[3,128,128], index: 4, kind: input, shape index: {}]
  %s5 = inlined_call_operand.vmem [shape: f32[3,1,128], index: 5, kind: input, shape index: {}]
  %s6 = inlined_call_operand.vmem [shape: f32[3,1,128], index: 6, kind: input, shape index: {}]
  %s7 = inlined_call_operand.vmem [shape: f32[2,256,1], index: 7, kind: input, shape index: {}]
  %s8 = inlined_call_operand.vmem [shape: bf16[128,128], index: 8, kind: input, shape index: {}]
  %s9 = inlined_call_operand.hbm [shape: f32[2,256,128], index: 9, kind: output, shape index: {0}]
  %s10 = inlined_call_operand.hbm [shape: f32[2,256,128], index: 10, kind: output, shape index: {1}]
  %11 = xla_tuple %s9, %s10
  %s12 = sld [smem:[#allocation0]]
  $region77: #{tpu_custom_call.1} parent=0
    _
  %s14 = ssub.s32 1, %s12
  %s15 = scalar_select 0, %s14, %s12
  $region1: #{tpu_custom_call.1} parent=0
    #allocation3 [shape = 'u8[262144]{0}', space=vmem, size = 0x40000, scoped, tag = 'output window, operand 0']
    #allocation4 [shape = 's32[2]{0}', space=sflag, size = 0x8, scoped, tag = 'scoped memory for tpu_custom_call.1']
    #allocation5 [shape = 'u8[262144]{0}', space=vmem, size = 0x40000, scoped, tag = 'output window, operand 1']
    #allocation6 [shape = 's32[2]{0}', space=sflag, size = 0x8, scoped, tag = 'scoped memory for tpu_custom_call.1']
    %16 = vsyncpa [#allocation4], 0
    %s17 = scalar_lea.sflag [#allocation4], 1
    %18 = vsyncpa %s17, 0
    %19 = vsyncpa [#allocation6], 0
    %s20 = scalar_lea.sflag [#allocation6], 1
    %21 = vsyncpa %s20, 0
    loop: start=0, step=1, limit=4
    $region2: #{tpu_custom_call.1} parent=1 // loop_pre_header
      _
    $region3: #{tpu_custom_call.1} parent=1 // loop_header
      %s23 = sphi 0, %s27
      %p24 = scmp.ge.s32.totalorder %s23, 4
      %s33 = sphi 0, %s35
      %s36 = sphi 0, %s33
      %s37 = sphi 0, %s36
      %s53 = sphi 0, %s37
      %s59 = sphi 0, %s61
      %s62 = sphi 0, %s59
      %s63 = sphi 0, %s62
      %s79 = sphi 0, %s63
      %s83 = sphi 0, %s83
      %s85 = sphi 0, %s83
      %s86 = sphi 0, %s85
      %s100 = sphi 0, %s86
      %s104 = sphi 0, %s104
      %s106 = sphi 0, %s104
      %s107 = sphi 0, %s106
      %s121 = sphi 0, %s107
      %s125 = sphi 0, %s125
      %s127 = sphi 0, %s125
      %s128 = sphi 0, %s127
      %s142 = sphi 0, %s128
      %s146 = sphi 0, %s146
      %s148 = sphi 0, %s146
      %s149 = sphi 0, %s148
      %s163 = sphi 0, %s149
      %s167 = sphi 0, %s167
      %s169 = sphi 0, %s167
      %s170 = sphi 0, %s169
      %s184 = sphi 0, %s170
      %s188 = sphi 0, %s188
      %s190 = sphi 0, %s188
      %s191 = sphi 0, %s190
      %s205 = sphi 0, %s191
      %s209 = sphi 0, %s209
      %s211 = sphi 0, %s209
      %s212 = sphi 0, %s211
      %s226 = sphi 0, %s212
      %s232 = sphi 0, %s234
      %s235 = sphi 0, %s232
      %s236 = sphi 0, %s235
      %s252 = sphi 0, %s236
      %s258 = sphi 0, %s260
      %s261 = sphi 0, %s258
      %s262 = sphi 0, %s261
      %s278 = sphi 0, %s262
    $region4: #{tpu_custom_call.1} parent=1 // loop_header_branch
      %26 = sbr.rel (%p24) target = $region8
    $region5: #{tpu_custom_call.1} parent=1 // loop_body
      %s28 = ssub.s32 %s23, 1
      %s29 = ssub.s32 %s23, 2
      %s30 = sadd.s32 %s23, 1
      %s31 = ssub.s32 %s23, %s30
      %p32 = scmp.eq.s32.totalorder %s31, 0
      %s34 = sadd.s32 %s33, 1
      %s35 = scalar_select %p32, %s33, %s34
      %p38 = pneg %p32
      %p39 = scmp.eq.s32.totalorder %s23, 1
      %p40 = por %p38, %p39
      %p41 = scmp.ne.s32.totalorder %s33, %s36
      %p42 = scmp.eq.s32.totalorder %s23, 0
      %p43 = por %p41, %p42
      %p44 = scmp.ne.s32.totalorder %s33, %s36
      %p45 = scmp.eq.s32.totalorder %s28, 1
      %p46 = por %p44, %p45
      %p47 = scmp.ne.s32.totalorder %s36, %s37
      %p48 = scmp.eq.s32.totalorder %s28, 0
      %p49 = por %p47, %p48
      %p50 = scmp.ne.s32.totalorder %s36, %s37
      %p51 = scmp.eq.s32.totalorder %s29, 1
      %p52 = por %p50, %p51
      %p54 = scmp.ne.s32.totalorder %s37, %s53
      %p55 = scmp.eq.s32.totalorder %s29, 0
      %p56 = por %p54, %p55
      %s57 = ssub.s32 %s23, %s30
      %p58 = scmp.eq.s32.totalorder %s57, 0
      %s60 = sadd.s32 %s59, 1
      %s61 = scalar_select %p58, %s59, %s60
      %p64 = pneg %p58
      %p65 = scmp.eq.s32.totalorder %s23, 1
      %p66 = por %p64, %p65
      %p67 = scmp.ne.s32.totalorder %s59, %s62
      %p68 = scmp.eq.s32.totalorder %s23, 0
      %p69 = por %p67, %p68
      %p70 = scmp.ne.s32.totalorder %s59, %s62
      %p71 = scmp.eq.s32.totalorder %s28, 1
      %p72 = por %p70, %p71
      %p73 = scmp.ne.s32.totalorder %s62, %s63
      %p74 = scmp.eq.s32.totalorder %s28, 0
      %p75 = por %p73, %p74
      %p76 = scmp.ne.s32.totalorder %s62, %s63
      %p77 = scmp.eq.s32.totalorder %s29, 1
      %p78 = por %p76, %p77
      %p80 = scmp.ne.s32.totalorder %s63, %s79
      %p81 = scmp.eq.s32.totalorder %s29, 0
      %p82 = por %p80, %p81
      %s84 = sadd.s32 %s83, 1
      %p87 = scmp.eq.s32.totalorder %s23, 1
      %p88 = scmp.ne.s32.totalorder %s83, %s85
      %p89 = scmp.eq.s32.totalorder %s23, 0
      %p90 = por %p88, %p89
      %p91 = scmp.ne.s32.totalorder %s83, %s85
      %p92 = scmp.eq.s32.totalorder %s28, 1
      %p93 = por %p91, %p92
      %p94 = scmp.ne.s32.totalorder %s85, %s86
      %p95 = scmp.eq.s32.totalorder %s28, 0
      %p96 = por %p94, %p95
      %p97 = scmp.ne.s32.totalorder %s85, %s86
      %p98 = scmp.eq.s32.totalorder %s29, 1
      %p99 = por %p97, %p98
      %p101 = scmp.ne.s32.totalorder %s86, %s100
      %p102 = scmp.eq.s32.totalorder %s29, 0
      %p103 = por %p101, %p102
      %s105 = sadd.s32 %s104, 1
      %p108 = scmp.eq.s32.totalorder %s23, 1
      %p109 = scmp.ne.s32.totalorder %s104, %s106
      %p110 = scmp.eq.s32.totalorder %s23, 0
      %p111 = por %p109, %p110
      %p112 = scmp.ne.s32.totalorder %s104, %s106
      %p113 = scmp.eq.s32.totalorder %s28, 1
      %p114 = por %p112, %p113
      %p115 = scmp.ne.s32.totalorder %s106, %s107
      %p116 = scmp.eq.s32.totalorder %s28, 0
      %p117 = por %p115, %p116
      %p118 = scmp.ne.s32.totalorder %s106, %s107
      %p119 = scmp.eq.s32.totalorder %s29, 1
      %p120 = por %p118, %p119
      %p122 = scmp.ne.s32.totalorder %s107, %s121
      %p123 = scmp.eq.s32.totalorder %s29, 0
      %p124 = por %p122, %p123
      %s126 = sadd.s32 %s125, 1
      %p129 = scmp.eq.s32.totalorder %s23, 1
      %p130 = scmp.ne.s32.totalorder %s125, %s127
      %p131 = scmp.eq.s32.totalorder %s23, 0
      %p132 = por %p130, %p131
      %p133 = scmp.ne.s32.totalorder %s125, %s127
      %p134 = scmp.eq.s32.totalorder %s28, 1
      %p135 = por %p133, %p134
      %p136 = scmp.ne.s32.totalorder %s127, %s128
      %p137 = scmp.eq.s32.totalorder %s28, 0
      %p138 = por %p136, %p137
      %p139 = scmp.ne.s32.totalorder %s127, %s128
      %p140 = scmp.eq.s32.totalorder %s29, 1
      %p141 = por %p139, %p140
      %p143 = scmp.ne.s32.totalorder %s128, %s142
      %p144 = scmp.eq.s32.totalorder %s29, 0
      %p145 = por %p143, %p144
      %s147 = sadd.s32 %s146, 1
      %p150 = scmp.eq.s32.totalorder %s23, 1
      %p151 = scmp.ne.s32.totalorder %s146, %s148
      %p152 = scmp.eq.s32.totalorder %s23, 0
      %p153 = por %p151, %p152
      %p154 = scmp.ne.s32.totalorder %s146, %s148
      %p155 = scmp.eq.s32.totalorder %s28, 1
      %p156 = por %p154, %p155
      %p157 = scmp.ne.s32.totalorder %s148, %s149
      %p158 = scmp.eq.s32.totalorder %s28, 0
      %p159 = por %p157, %p158
      %p160 = scmp.ne.s32.totalorder %s148, %s149
      %p161 = scmp.eq.s32.totalorder %s29, 1
      %p162 = por %p160, %p161
      %p164 = scmp.ne.s32.totalorder %s149, %s163
      %p165 = scmp.eq.s32.totalorder %s29, 0
      %p166 = por %p164, %p165
      %s168 = sadd.s32 %s167, 1
      %p171 = scmp.eq.s32.totalorder %s23, 1
      %p172 = scmp.ne.s32.totalorder %s167, %s169
      %p173 = scmp.eq.s32.totalorder %s23, 0
      %p174 = por %p172, %p173
      %p175 = scmp.ne.s32.totalorder %s167, %s169
      %p176 = scmp.eq.s32.totalorder %s28, 1
      %p177 = por %p175, %p176
      %p178 = scmp.ne.s32.totalorder %s169, %s170
      %p179 = scmp.eq.s32.totalorder %s28, 0
      %p180 = por %p178, %p179
      %p181 = scmp.ne.s32.totalorder %s169, %s170
      %p182 = scmp.eq.s32.totalorder %s29, 1
      %p183 = por %p181, %p182
      %p185 = scmp.ne.s32.totalorder %s170, %s184
      %p186 = scmp.eq.s32.totalorder %s29, 0
      %p187 = por %p185, %p186
      %s189 = sadd.s32 %s188, 1
      %p192 = scmp.eq.s32.totalorder %s23, 1
      %p193 = scmp.ne.s32.totalorder %s188, %s190
      %p194 = scmp.eq.s32.totalorder %s23, 0
      %p195 = por %p193, %p194
      %p196 = scmp.ne.s32.totalorder %s188, %s190
      %p197 = scmp.eq.s32.totalorder %s28, 1
      %p198 = por %p196, %p197
      %p199 = scmp.ne.s32.totalorder %s190, %s191
      %p200 = scmp.eq.s32.totalorder %s28, 0
      %p201 = por %p199, %p200
      %p202 = scmp.ne.s32.totalorder %s190, %s191
      %p203 = scmp.eq.s32.totalorder %s29, 1
      %p204 = por %p202, %p203
      %p206 = scmp.ne.s32.totalorder %s191, %s205
      %p207 = scmp.eq.s32.totalorder %s29, 0
      %p208 = por %p206, %p207
      %s210 = sadd.s32 %s209, 1
      %p213 = scmp.eq.s32.totalorder %s23, 1
      %p214 = scmp.ne.s32.totalorder %s209, %s211
      %p215 = scmp.eq.s32.totalorder %s23, 0
      %p216 = por %p214, %p215
      %p217 = scmp.ne.s32.totalorder %s209, %s211
      %p218 = scmp.eq.s32.totalorder %s28, 1
      %p219 = por %p217, %p218
      %p220 = scmp.ne.s32.totalorder %s211, %s212
      %p221 = scmp.eq.s32.totalorder %s28, 0
      %p222 = por %p220, %p221
      %p223 = scmp.ne.s32.totalorder %s211, %s212
      %p224 = scmp.eq.s32.totalorder %s29, 1
      %p225 = por %p223, %p224
      %p227 = scmp.ne.s32.totalorder %s212, %s226
      %p228 = scmp.eq.s32.totalorder %s29, 0
      %p229 = por %p227, %p228
      %s230 = ssub.s32 %s23, %s30
      %p231 = scmp.eq.s32.totalorder %s230, 0
      %s233 = sadd.s32 %s232, 1
      %s234 = scalar_select %p231, %s232, %s233
      %p237 = pneg %p231
      %p238 = scmp.eq.s32.totalorder %s23, 1
      %p239 = por %p237, %p238
      %p240 = scmp.ne.s32.totalorder %s232, %s235
      %p241 = scmp.eq.s32.totalorder %s23, 0
      %p242 = por %p240, %p241
      %p243 = scmp.ne.s32.totalorder %s232, %s235
      %p244 = scmp.eq.s32.totalorder %s28, 1
      %p245 = por %p243, %p244
      %p246 = scmp.ne.s32.totalorder %s235, %s236
      %p247 = scmp.eq.s32.totalorder %s28, 0
      %p248 = por %p246, %p247
      %p249 = scmp.ne.s32.totalorder %s235, %s236
      %p250 = scmp.eq.s32.totalorder %s29, 1
      %p251 = por %p249, %p250
      %p253 = scmp.ne.s32.totalorder %s236, %s252
      %p254 = scmp.eq.s32.totalorder %s29, 0
      %p255 = por %p253, %p254
      %s256 = ssub.s32 %s23, %s30
      %p257 = scmp.eq.s32.totalorder %s256, 0
      %s259 = sadd.s32 %s258, 1
      %s260 = scalar_select %p257, %s258, %s259
      %p263 = pneg %p257
      %p264 = scmp.eq.s32.totalorder %s23, 1
      %p265 = por %p263, %p264
      %p266 = scmp.ne.s32.totalorder %s258, %s261
      %p267 = scmp.eq.s32.totalorder %s23, 0
      %p268 = por %p266, %p267
      %p269 = scmp.ne.s32.totalorder %s258, %s261
      %p270 = scmp.eq.s32.totalorder %s28, 1
      %p271 = por %p269, %p270
      %p272 = scmp.ne.s32.totalorder %s261, %s262
      %p273 = scmp.eq.s32.totalorder %s28, 0
      %p274 = por %p272, %p273
      %p275 = scmp.ne.s32.totalorder %s261, %s262
      %p276 = scmp.eq.s32.totalorder %s29, 1
      %p277 = por %p275, %p276
      %p279 = scmp.ne.s32.totalorder %s262, %s278
      %p280 = scmp.eq.s32.totalorder %s29, 0
      %p281 = por %p279, %p280
      %p282 = scmp.le.s32.totalorder 1, %s23
      %p283 = scmp.lt.s32.totalorder %s23, 3
      %p284 = pnand %p282, %p283
      %p285 = pneg %p284
      // Predicated region
      $region9: #{tpu_custom_call.1} parent=5 // pred_check
        _
      $region10: #{tpu_custom_call.1} parent=5 // pred_check_branch
        %287 = sbr.rel (%p284) target = $region12
      $region11: #{tpu_custom_call.1} parent=5 // pred_region
        %s288 = ssub.s32 %s23, 1
        // Predicated region
        $region13: #{tpu_custom_call.1} parent=11 // pred_check
          %p289 = pneg %p96
        $region14: #{tpu_custom_call.1} parent=11 // pred_check_branch
          %291 = sbr.rel (%p289) target = $region16
        $region15: #{tpu_custom_call.1} parent=11 // pred_region
          _
        $region16: #{tpu_custom_call.1} parent=11 // pred_fallthru
          _
        // Predicated region
        $region17: #{tpu_custom_call.1} parent=11 // pred_check
          %p292 = pneg %p117
        $region18: #{tpu_custom_call.1} parent=11 // pred_check_branch
          %294 = sbr.rel (%p292) target = $region20
        $region19: #{tpu_custom_call.1} parent=11 // pred_region
          _
        $region20: #{tpu_custom_call.1} parent=11 // pred_fallthru
          _
        // Predicated region
        $region21: #{tpu_custom_call.1} parent=11 // pred_check
          %p295 = pneg %p138
        $region22: #{tpu_custom_call.1} parent=11 // pred_check_branch
          %297 = sbr.rel (%p295) target = $region24
        $region23: #{tpu_custom_call.1} parent=11 // pred_region
          _
        $region24: #{tpu_custom_call.1} parent=11 // pred_fallthru
          _
        // Predicated region
        $region25: #{tpu_custom_call.1} parent=11 // pred_check
          %p298 = pneg %p159
        $region26: #{tpu_custom_call.1} parent=11 // pred_check_branch
          %300 = sbr.rel (%p298) target = $region28
        $region27: #{tpu_custom_call.1} parent=11 // pred_region
          _
        $region28: #{tpu_custom_call.1} parent=11 // pred_fallthru
          _
        // Predicated region
        $region29: #{tpu_custom_call.1} parent=11 // pred_check
          %p301 = pneg %p180
        $region30: #{tpu_custom_call.1} parent=11 // pred_check_branch
          %303 = sbr.rel (%p301) target = $region32
        $region31: #{tpu_custom_call.1} parent=11 // pred_region
          _
        $region32: #{tpu_custom_call.1} parent=11 // pred_fallthru
          _
        // Predicated region
        $region33: #{tpu_custom_call.1} parent=11 // pred_check
          %p304 = pneg %p201
        $region34: #{tpu_custom_call.1} parent=11 // pred_check_branch
          %306 = sbr.rel (%p304) target = $region36
        $region35: #{tpu_custom_call.1} parent=11 // pred_region
          _
        $region36: #{tpu_custom_call.1} parent=11 // pred_fallthru
          _
        // Predicated region
        $region37: #{tpu_custom_call.1} parent=11 // pred_check
          %p307 = pneg %p222
        $region38: #{tpu_custom_call.1} parent=11 // pred_check_branch
          %309 = sbr.rel (%p307) target = $region40
        $region39: #{tpu_custom_call.1} parent=11 // pred_region
          _
        $region40: #{tpu_custom_call.1} parent=11 // pred_fallthru
          _
      $region12: #{tpu_custom_call.1} parent=5 // pred_fallthru
        _
      %p310 = scmp.lt.s32.totalorder %s23, 2
      // Predicated region
      $region41: #{tpu_custom_call.1} parent=5 // pred_check
        %p311 = pneg %p310
      $region42: #{tpu_custom_call.1} parent=5 // pred_check_branch
        %313 = sbr.rel (%p311) target = $region44
      $region43: #{tpu_custom_call.1} parent=5 // pred_region
        // Predicated region
        $region45: #{tpu_custom_call.1} parent=43 // pred_check
          %p314 = pneg %p43
        $region46: #{tpu_custom_call.1} parent=43 // pred_check_branch
          %316 = sbr.rel (%p314) target = $region48
        $region47: #{tpu_custom_call.1} parent=43 // pred_region
          %p317 = scmp.lt.s32.totalorder %s23, 1
          %s318 = scalar_select %p317, %s23, 1
          %s319 = smul.addr %s318, 4
          %s320 = scalar_lea.vmem %s0, %s319
        $region48: #{tpu_custom_call.1} parent=43 // pred_fallthru
          _
        // Predicated region
        $region49: #{tpu_custom_call.1} parent=43 // pred_check
          %p321 = pneg %p69
        $region50: #{tpu_custom_call.1} parent=43 // pred_check_branch
          %323 = sbr.rel (%p321) target = $region52
        $region51: #{tpu_custom_call.1} parent=43 // pred_region
          %p324 = scmp.lt.s32.totalorder %s23, 1
          %s325 = scalar_select %p324, %s23, 1
          %s326 = smul.addr %s325, 54
          %s327 = smul.addr %s326, 8
          %s328 = scalar_lea.vmem %s1, %s327
        $region52: #{tpu_custom_call.1} parent=43 // pred_fallthru
          _
      $region44: #{tpu_custom_call.1} parent=5 // pred_fallthru
        _
      %p329 = scmp.le.s32.totalorder 1, %s23
      %p330 = scmp.lt.s32.totalorder %s23, 3
      %p331 = pnand %p329, %p330
      %p332 = pneg %p331
      // Predicated region
      $region53: #{tpu_custom_call.1} parent=5 // pred_check
        _
      $region54: #{tpu_custom_call.1} parent=5 // pred_check_branch
        %334 = sbr.rel (%p331) target = $region56
      $region55: #{tpu_custom_call.1} parent=5 // pred_region
        %s335 = ssub.s32 %s23, 1
        %p336 = scmp.lt.s32.totalorder %s28, 1
        %s337 = scalar_select %p336, %s28, 1
        %s338 = smul.addr %s337, 4
        %s339 = scalar_lea.vmem %s0, %s338
        %p340 = pneg %p49
        %p341 = pneg %p46
        %p342 = scmp.lt.s32.totalorder %s28, 1
        %s343 = scalar_select %p342, %s28, 1
        %s344 = smul.addr %s343, 54
        %s345 = smul.addr %s344, 8
        %s346 = scalar_lea.vmem %s1, %s345
        %p347 = pneg %p75
        %p348 = pneg %p72
        %p349 = pneg %p96
        %p350 = pneg %p93
        %p351 = pneg %p117
        %p352 = pneg %p114
        %p353 = pneg %p138
        %p354 = pneg %p135
        %p355 = pneg %p159
        %p356 = pneg %p156
        %p357 = pneg %p180
        %p358 = pneg %p177
        %p359 = pneg %p201
        %p360 = pneg %p198
        %p361 = pneg %p222
        %p362 = pneg %p219
        %p363 = pneg %p248
        %p364 = pneg %p245
        %s365 = sand.u32 %s235, 1
        %s366 = scalar_lea.sflag [#allocation4], %s365
        %s367 = sand.u32 %s235, 1
        %s368 = smul.addr %s367, 256
        %s369 = scalar_lea.vmem [#allocation3], %s368
        %p370 = pneg %p274
        %p371 = pneg %p271
        %s372 = sand.u32 %s261, 1
        %s373 = scalar_lea.sflag [#allocation6], %s372
        %s374 = sand.u32 %s261, 1
        %s375 = smul.addr %s374, 256
        %s376 = scalar_lea.vmem [#allocation5], %s375
        %p377 = scmp.lt.s32.totalorder %s28, 1
        %s378 = scalar_select %p377, %s28, 1
        %s379 = smul.addr %s378, 4
        %s380 = scalar_lea.vmem %s0, %s379
        %p381 = scmp.lt.s32.totalorder %s28, 1
        %s382 = scalar_select %p381, %s28, 1
        %s383 = smul.addr %s382, 54
        %s384 = smul.addr %s383, 8
        %s385 = scalar_lea.vmem %s1, %s384
        %v387 = vld [vmem:[%s380] sm:$0x7]
        %v388 = vld [vmem:[%s4] sm:$0xff]
        %v389 = vld [vmem:[%s4 + $0x8] sm:$0xff]
        %v390 = vld [vmem:[%s4 + $0x10] sm:$0xff]
        %v391 = vld [vmem:[%s4 + $0x18] sm:$0xff]
        %v392 = vld [vmem:[%s4 + $0x20] sm:$0xff]
        %v393 = vld [vmem:[%s4 + $0x28] sm:$0xff]
        %v394 = vld [vmem:[%s4 + $0x30] sm:$0xff]
        %v395 = vld [vmem:[%s4 + $0x38] sm:$0xff]
        %v396 = vld [vmem:[%s4 + $0x40] sm:$0xff]
        %v397 = vld [vmem:[%s4 + $0x48] sm:$0xff]
        %v398 = vld [vmem:[%s4 + $0x50] sm:$0xff]
        %v399 = vld [vmem:[%s4 + $0x58] sm:$0xff]
        %v400 = vld [vmem:[%s4 + $0x60] sm:$0xff]
        %v401 = vld [vmem:[%s4 + $0x68] sm:$0xff]
        %v402 = vld [vmem:[%s4 + $0x70] sm:$0xff]
        %v403 = vld [vmem:[%s4 + $0x78] sm:$0xff]
        %404 = vmatprep.subr.mxu0 0.0
        %405 = vmatpush1.msra.mxu0 %v388
        %406 = vmatprep.subr.mxu0 0.0
        %407 = vmatpush1.msra.mxu0 %v389
        %408 = vmatprep.subr.mxu0 0.0
        %409 = vmatpush1.msra.mxu0 %v390
        %410 = vmatprep.subr.mxu0 0.0
        %411 = vmatpush1.msra.mxu0 %v391
        %412 = vmatprep.subr.mxu0 0.0
        %413 = vmatpush1.msra.mxu0 %v392
        %414 = vmatprep.subr.mxu0 0.0
        %415 = vmatpush1.msra.mxu0 %v393
        %416 = vmatprep.subr.mxu0 0.0
        %417 = vmatpush1.msra.mxu0 %v394
        %418 = vmatprep.subr.mxu0 0.0
        %419 = vmatpush1.msra.mxu0 %v395
        %420 = vmatprep.subr.mxu0 0.0
        %421 = vmatpush1.msra.mxu0 %v396
        %422 = vmatprep.subr.mxu0 0.0
        %423 = vmatpush1.msra.mxu0 %v397
        %424 = vmatprep.subr.mxu0 0.0
        %425 = vmatpush1.msra.mxu0 %v398
        %426 = vmatprep.subr.mxu0 0.0
        %427 = vmatpush1.msra.mxu0 %v399
        %428 = vmatprep.subr.mxu0 0.0
        %429 = vmatpush1.msra.mxu0 %v400
        %430 = vmatprep.subr.mxu0 0.0
        %431 = vmatpush1.msra.mxu0 %v401
        %432 = vmatprep.subr.mxu0 0.0
        %433 = vmatpush1.msra.mxu0 %v402
        %434 = vmatprep.subr.mxu0 0.0
        %435 = vmatpush1.msra.mxu0 %v403
        %436 = vmatprep.subr.mxu0 0.0
        %437 = vmatpush1.msra.mxu0 0.0
        %438 = vmatprep.subr.mxu0 0.0
        %439 = vmatpush1.msra.mxu0 0.0
        %440 = vmatprep.subr.mxu0 0.0
        %441 = vmatpush1.msra.mxu0 0.0
        %442 = vmatprep.subr.mxu0 0.0
        %443 = vmatpush1.msra.mxu0 0.0
        %444 = vmatprep.subr.mxu0 0.0
        %445 = vmatpush1.msra.mxu0 0.0
        %446 = vmatprep.subr.mxu0 0.0
        %447 = vmatpush1.msra.mxu0 0.0
        %448 = vmatprep.subr.mxu0 0.0
        %449 = vmatpush1.msra.mxu0 0.0
        %450 = vmatprep.subr.mxu0 0.0
        %451 = vmatpush1.msra.mxu0 0.0
        %452 = vmatprep.subr.mxu0 0.0
        %453 = vmatpush1.msra.mxu0 0.0
        %454 = vmatprep.subr.mxu0 0.0
        %455 = vmatpush1.msra.mxu0 0.0
        %456 = vmatprep.subr.mxu0 0.0
        %457 = vmatpush1.msra.mxu0 0.0
        %458 = vmatprep.subr.mxu0 0.0
        %459 = vmatpush1.msra.mxu0 0.0
        %460 = vmatprep.subr.mxu0 0.0
        %461 = vmatpush1.msra.mxu0 0.0
        %462 = vmatprep.subr.mxu0 0.0
        %463 = vmatpush1.msra.mxu0 0.0
        %464 = vmatprep.subr.mxu0 0.0
        %465 = vmatpush1.msra.mxu0 0.0
        %466 = vmatprep.subr.mxu0 0.0
        %467 = vmatpush1.msra.mxu0 0.0
        %468 = vmatprep.mubr.f32.mxu0 0.0
        %469 = vmatmul.mubr.f32.gmra.mrb[0].mxu0 %v387
        %v470 = vpop.f32.mrb[0].mxu0
        %v471 = vadd.f32 0.0, %v470
        %v472 = vpop.f32.mrb[0].mxu0
        %473 = vdwg.mxu0
        %v474 = vmul.f32 %v471, 0.25
        %v475 = vld [vmem:[%s5] sm:$0x1]
        %v476 = vadd.f32 %v474, %v475
        %v477 = vld [vmem:[%s385] sm:$0xff]
        %v478 = vld [vmem:[%s385 + $0x8] sm:$0xff]
        %v479 = vld [vmem:[%s385 + $0x10] sm:$0x3]
        %v480 = vld [vmem:[%s385 + $0x18] sm:$0xff]
        %v481 = vld [vmem:[%s385 + $0x20] sm:$0xff]
        %v482 = vld [vmem:[%s385 + $0x28] sm:$0x3]
        %v483 = vld [vmem:[%s385 + $0x30] sm:$0xff]
        %v484 = vld [vmem:[%s385 + $0x38] sm:$0xff]
        %v485 = vld [vmem:[%s385 + $0x40] sm:$0x3]
        %v486 = vld [vmem:[%s385 + $0x48] sm:$0xff]
        %v487 = vld [vmem:[%s385 + $0x50] sm:$0xff]
        %v488 = vld [vmem:[%s385 + $0x58] sm:$0x3]
        %v489 = vld [vmem:[%s385 + $0x60] sm:$0xff]
        %v490 = vld [vmem:[%s385 + $0x68] sm:$0xff]
        %v491 = vld [vmem:[%s385 + $0x70] sm:$0x3]
        %v492 = vld [vmem:[%s385 + $0x78] sm:$0xff]
        %v493 = vld [vmem:[%s385 + $0x80] sm:$0xff]
        %v494 = vld [vmem:[%s385 + $0x88] sm:$0x3]
        %v495 = vld [vmem:[%s385 + $0x90] sm:$0xff]
        %v496 = vld [vmem:[%s385 + $0x98] sm:$0xff]
        %v497 = vld [vmem:[%s385 + $0xa0] sm:$0x3]
        %v498 = vld [vmem:[%s385 + $0xa8] sm:$0xff]
        %v499 = vld [vmem:[%s385 + $0xb0] sm:$0xff]
        %v500 = vld [vmem:[%s385 + $0xb8] sm:$0x3]
        %v501 = vld [vmem:[%s385 + $0xc0] sm:$0xff]
        %v502 = vld [vmem:[%s385 + $0xc8] sm:$0xff]
        %v503 = vld [vmem:[%s385 + $0xd0] sm:$0x3]
        %v504 = vld [vmem:[%s385 + $0xd8] sm:$0xff]
        %v505 = vld [vmem:[%s385 + $0xe0] sm:$0xff]
        %v506 = vld [vmem:[%s385 + $0xe8] sm:$0x3]
        %v507 = vld [vmem:[%s385 + $0xf0] sm:$0xff]
        %v508 = vld [vmem:[%s385 + $0xf8] sm:$0xff]
        %v509 = vld [vmem:[%s385 + $0x100] sm:$0x3]
        %v510 = vld [vmem:[%s385 + $0x108] sm:$0xff]
        %v511 = vld [vmem:[%s385 + $0x110] sm:$0xff]
        %v512 = vld [vmem:[%s385 + $0x118] sm:$0x3]
        %v513 = vld [vmem:[%s385 + $0x120] sm:$0xff]
        %v514 = vld [vmem:[%s385 + $0x128] sm:$0xff]
        %v515 = vld [vmem:[%s385 + $0x130] sm:$0x3]
        %v516 = vld [vmem:[%s385 + $0x138] sm:$0xff]
        %v517 = vld [vmem:[%s385 + $0x140] sm:$0xff]
        %v518 = vld [vmem:[%s385 + $0x148] sm:$0x3]
        %v519 = vld [vmem:[%s385 + $0x150] sm:$0xff]
        %v520 = vld [vmem:[%s385 + $0x158] sm:$0xff]
        %v521 = vld [vmem:[%s385 + $0x160] sm:$0x3]
        %v522 = vld [vmem:[%s385 + $0x168] sm:$0xff]
        %v523 = vld [vmem:[%s385 + $0x170] sm:$0xff]
        %v524 = vld [vmem:[%s385 + $0x178] sm:$0x3]
        %v525 = vld [vmem:[%s385 + $0x180] sm:$0xff]
        %v526 = vld [vmem:[%s385 + $0x188] sm:$0xff]
        %v527 = vld [vmem:[%s385 + $0x190] sm:$0x3]
        %v528 = vld [vmem:[%s385 + $0x198] sm:$0xff]
        %v529 = vld [vmem:[%s385 + $0x1a0] sm:$0xff]
        %v530 = vld [vmem:[%s385 + $0x1a8] sm:$0x3]
        %v531 = vlaneseq
        %v532 = vshrl.u32 %v531, 7
        %v533 = vsub.s32 0, %v532
        %v534 = vrot.slane %v476, %v533
        %v535 = vmul.f32 %v477, %v534
        %v536 = vmul.f32 %v478, %v534
        %v537 = vmul.f32 %v479, %v534
        %v538 = vmul.f32 %v480, %v534
        %v539 = vmul.f32 %v481, %v534
        %v540 = vmul.f32 %v482, %v534
        %v541 = vmul.f32 %v483, %v534
        %v542 = vmul.f32 %v484, %v534
        %v543 = vmul.f32 %v485, %v534
        %v544 = vmul.f32 %v486, %v534
        %v545 = vmul.f32 %v487, %v534
        %v546 = vmul.f32 %v488, %v534
        %v547 = vmul.f32 %v489, %v534
        %v548 = vmul.f32 %v490, %v534
        %v549 = vmul.f32 %v491, %v534
        %v550 = vmul.f32 %v492, %v534
        %v551 = vmul.f32 %v493, %v534
        %v552 = vmul.f32 %v494, %v534
        %v553 = vmul.f32 %v495, %v534
        %v554 = vmul.f32 %v496, %v534
        %v555 = vmul.f32 %v497, %v534
        %v556 = vmul.f32 %v498, %v534
        %v557 = vmul.f32 %v499, %v534
        %v558 = vmul.f32 %v500, %v534
        %v559 = vmul.f32 %v501, %v534
        %v560 = vmul.f32 %v502, %v534
        %v561 = vmul.f32 %v503, %v534
        %v562 = vmul.f32 %v504, %v534
        %v563 = vmul.f32 %v505, %v534
        %v564 = vmul.f32 %v506, %v534
        %v565 = vmul.f32 %v507, %v534
        %v566 = vmul.f32 %v508, %v534
        %v567 = vmul.f32 %v509, %v534
        %v568 = vmul.f32 %v510, %v534
        %v569 = vmul.f32 %v511, %v534
        %v570 = vmul.f32 %v512, %v534
        %v571 = vmul.f32 %v513, %v534
        %v572 = vmul.f32 %v514, %v534
        %v573 = vmul.f32 %v515, %v534
        %v574 = vmul.f32 %v516, %v534
        %v575 = vmul.f32 %v517, %v534
        %v576 = vmul.f32 %v518, %v534
        %v577 = vmul.f32 %v519, %v534
        %v578 = vmul.f32 %v520, %v534
        %v579 = vmul.f32 %v521, %v534
        %v580 = vmul.f32 %v522, %v534
        %v581 = vmul.f32 %v523, %v534
        %v582 = vmul.f32 %v524, %v534
        %v583 = vmul.f32 %v525, %v534
        %v584 = vmul.f32 %v526, %v534
        %v585 = vmul.f32 %v527, %v534
        %v586 = vmul.f32 %v528, %v534
        %v587 = vmul.f32 %v529, %v534
        %v588 = vmul.f32 %v530, %v534
        %589 = vst [vmem:[#allocation2] sm:$0xff] %v535
        %590 = vst [vmem:[#allocation2 + $0x8] sm:$0xff] %v536
        %591 = vst [vmem:[#allocation2 + $0x10] sm:$0x3] %v537
        %592 = vst [vmem:[#allocation2 + $0x18] sm:$0xff] %v538
        %593 = vst [vmem:[#allocation2 + $0x20] sm:$0xff] %v539
        %594 = vst [vmem:[#allocation2 + $0x28] sm:$0x3] %v540
        %595 = vst [vmem:[#allocation2 + $0x30] sm:$0xff] %v541
        %596 = vst [vmem:[#allocation2 + $0x38] sm:$0xff] %v542
        %597 = vst [vmem:[#allocation2 + $0x40] sm:$0x3] %v543
        %598 = vst [vmem:[#allocation2 + $0x48] sm:$0xff] %v544
        %599 = vst [vmem:[#allocation2 + $0x50] sm:$0xff] %v545
        %600 = vst [vmem:[#allocation2 + $0x58] sm:$0x3] %v546
        %601 = vst [vmem:[#allocation2 + $0x60] sm:$0xff] %v547
        %602 = vst [vmem:[#allocation2 + $0x68] sm:$0xff] %v548
        %603 = vst [vmem:[#allocation2 + $0x70] sm:$0x3] %v549
        %604 = vst [vmem:[#allocation2 + $0x78] sm:$0xff] %v550
        %605 = vst [vmem:[#allocation2 + $0x80] sm:$0xff] %v551
        %606 = vst [vmem:[#allocation2 + $0x88] sm:$0x3] %v552
        %607 = vst [vmem:[#allocation2 + $0x90] sm:$0xff] %v553
        %608 = vst [vmem:[#allocation2 + $0x98] sm:$0xff] %v554
        %609 = vst [vmem:[#allocation2 + $0xa0] sm:$0x3] %v555
        %610 = vst [vmem:[#allocation2 + $0xa8] sm:$0xff] %v556
        %611 = vst [vmem:[#allocation2 + $0xb0] sm:$0xff] %v557
        %612 = vst [vmem:[#allocation2 + $0xb8] sm:$0x3] %v558
        %613 = vst [vmem:[#allocation2 + $0xc0] sm:$0xff] %v559
        %614 = vst [vmem:[#allocation2 + $0xc8] sm:$0xff] %v560
        %615 = vst [vmem:[#allocation2 + $0xd0] sm:$0x3] %v561
        %616 = vst [vmem:[#allocation2 + $0xd8] sm:$0xff] %v562
        %617 = vst [vmem:[#allocation2 + $0xe0] sm:$0xff] %v563
        %618 = vst [vmem:[#allocation2 + $0xe8] sm:$0x3] %v564
        %619 = vst [vmem:[#allocation2 + $0xf0] sm:$0xff] %v565
        %620 = vst [vmem:[#allocation2 + $0xf8] sm:$0xff] %v566
        %621 = vst [vmem:[#allocation2 + $0x100] sm:$0x3] %v567
        %622 = vst [vmem:[#allocation2 + $0x108] sm:$0xff] %v568
        %623 = vst [vmem:[#allocation2 + $0x110] sm:$0xff] %v569
        %624 = vst [vmem:[#allocation2 + $0x118] sm:$0x3] %v570
        %625 = vst [vmem:[#allocation2 + $0x120] sm:$0xff] %v571
        %626 = vst [vmem:[#allocation2 + $0x128] sm:$0xff] %v572
        %627 = vst [vmem:[#allocation2 + $0x130] sm:$0x3] %v573
        %628 = vst [vmem:[#allocation2 + $0x138] sm:$0xff] %v574
        %629 = vst [vmem:[#allocation2 + $0x140] sm:$0xff] %v575
        %630 = vst [vmem:[#allocation2 + $0x148] sm:$0x3] %v576
        %631 = vst [vmem:[#allocation2 + $0x150] sm:$0xff] %v577
        %632 = vst [vmem:[#allocation2 + $0x158] sm:$0xff] %v578
        %633 = vst [vmem:[#allocation2 + $0x160] sm:$0x3] %v579
        %634 = vst [vmem:[#allocation2 + $0x168] sm:$0xff] %v580
        %635 = vst [vmem:[#allocation2 + $0x170] sm:$0xff] %v581
        %636 = vst [vmem:[#allocation2 + $0x178] sm:$0x3] %v582
        %637 = vst [vmem:[#allocation2 + $0x180] sm:$0xff] %v583
        %638 = vst [vmem:[#allocation2 + $0x188] sm:$0xff] %v584
        %639 = vst [vmem:[#allocation2 + $0x190] sm:$0x3] %v585
        %640 = vst [vmem:[#allocation2 + $0x198] sm:$0xff] %v586
        %641 = vst [vmem:[#allocation2 + $0x1a0] sm:$0xff] %v587
        %642 = vst [vmem:[#allocation2 + $0x1a8] sm:$0x3] %v588
        %v643 = vld [vmem:[#allocation2] sm:$0xff]
        %v644 = vld [vmem:[#allocation2 + $0x8] sm:$0xff]
        %v645 = vld [vmem:[#allocation2 + $0x18] sm:$0xff]
        %v646 = vld [vmem:[#allocation2 + $0x20] sm:$0xff]
        %v647 = vld [vmem:[#allocation2 + $0x30] sm:$0xff]
        %v648 = vld [vmem:[#allocation2 + $0x38] sm:$0xff]
        %v649 = vld [vmem:[#allocation2 + $0x48] sm:$0xff]
        %v650 = vld [vmem:[#allocation2 + $0x50] sm:$0xff]
        %v651 = vld [vmem:[#allocation2 + $0x60] sm:$0xff]
        %v652 = vld [vmem:[#allocation2 + $0x68] sm:$0xff]
        %v653 = vld [vmem:[#allocation2 + $0x78] sm:$0xff]
        %v654 = vld [vmem:[#allocation2 + $0x80] sm:$0xff]
        %v655 = vld [vmem:[#allocation2 + $0x90] sm:$0xff]
        %v656 = vld [vmem:[#allocation2 + $0x98] sm:$0xff]
        %v657 = vld [vmem:[#allocation2 + $0xa8] sm:$0xff]
        %v658 = vld [vmem:[#allocation2 + $0xb0] sm:$0xff]
        %v659 = vld [vmem:[#allocation2 + $0xc0] sm:$0xff]
        %v660 = vld [vmem:[#allocation2 + $0xc8] sm:$0xff]
        %v661 = vld [vmem:[#allocation2 + $0xd8] sm:$0xff]
        %v662 = vld [vmem:[#allocation2 + $0xe0] sm:$0xff]
        %v663 = vld [vmem:[#allocation2 + $0xf0] sm:$0xff]
        %v664 = vld [vmem:[#allocation2 + $0xf8] sm:$0xff]
        %v665 = vld [vmem:[#allocation2 + $0x108] sm:$0xff]
        %v666 = vld [vmem:[#allocation2 + $0x110] sm:$0xff]
        %v667 = vld [vmem:[#allocation2 + $0x120] sm:$0xff]
        %v668 = vld [vmem:[#allocation2 + $0x128] sm:$0xff]
        %v669 = vld [vmem:[#allocation2 + $0x138] sm:$0xff]
        %v670 = vld [vmem:[#allocation2 + $0x140] sm:$0xff]
        %v671 = vld [vmem:[#allocation2 + $0x150] sm:$0xff]
        %v672 = vld [vmem:[#allocation2 + $0x158] sm:$0xff]
        %v673 = vld [vmem:[#allocation2 + $0x168] sm:$0xff]
        %v674 = vld [vmem:[#allocation2 + $0x170] sm:$0xff]
        %v675 = vpack.c.bf16 %v644, %v643
        %v676 = vpack.c.bf16 %v646, %v645
        %v677 = vpack.c.bf16 %v648, %v647
        %v678 = vpack.c.bf16 %v650, %v649
        %v679 = vpack.c.bf16 %v652, %v651
        %v680 = vpack.c.bf16 %v654, %v653
        %v681 = vpack.c.bf16 %v656, %v655
        %v682 = vpack.c.bf16 %v658, %v657
        %v683 = vpack.c.bf16 %v660, %v659
        %v684 = vpack.c.bf16 %v662, %v661
        %v685 = vpack.c.bf16 %v664, %v663
        %v686 = vpack.c.bf16 %v666, %v665
        %v687 = vpack.c.bf16 %v668, %v667
        %v688 = vpack.c.bf16 %v670, %v669
        %v689 = vpack.c.bf16 %v672, %v671
        %v690 = vpack.c.bf16 %v674, %v673
        %v691 = vld [vmem:[%s2] sm:$0xf]
        %v692 = vld [vmem:[%s2 + $0x4] sm:$0xf]
        %v693 = vld [vmem:[%s2 + $0x8] sm:$0xf]
        %v694 = vld [vmem:[%s2 + $0xc] sm:$0xf]
        %v695 = vld [vmem:[%s2 + $0x10] sm:$0xf]
        %v696 = vld [vmem:[%s2 + $0x14] sm:$0xf]
        %v697 = vld [vmem:[%s2 + $0x18] sm:$0xf]
        %v698 = vld [vmem:[%s2 + $0x1c] sm:$0xf]
        %v699 = vld [vmem:[%s2 + $0x20] sm:$0xf]
        %v700 = vld [vmem:[%s2 + $0x24] sm:$0xf]
        %v701 = vld [vmem:[%s2 + $0x28] sm:$0xf]
        %v702 = vld [vmem:[%s2 + $0x2c] sm:$0xf]
        %v703 = vld [vmem:[%s2 + $0x30] sm:$0xf]
        %v704 = vld [vmem:[%s2 + $0x34] sm:$0xf]
        %v705 = vld [vmem:[%s2 + $0x38] sm:$0xf]
        %v706 = vld [vmem:[%s2 + $0x3c] sm:$0xf]
        %v707 = vld [vmem:[#allocation2 + $0x1] sm:$0xff]
        %v708 = vld [vmem:[#allocation2 + $0x9] sm:$0xff]
        %v709 = vld [vmem:[#allocation2 + $0x19] sm:$0xff]
        %v710 = vld [vmem:[#allocation2 + $0x21] sm:$0xff]
        %v711 = vld [vmem:[#allocation2 + $0x31] sm:$0xff]
        %v712 = vld [vmem:[#allocation2 + $0x39] sm:$0xff]
        %v713 = vld [vmem:[#allocation2 + $0x49] sm:$0xff]
        %v714 = vld [vmem:[#allocation2 + $0x51] sm:$0xff]
        %v715 = vld [vmem:[#allocation2 + $0x61] sm:$0xff]
        %v716 = vld [vmem:[#allocation2 + $0x69] sm:$0xff]
        %v717 = vld [vmem:[#allocation2 + $0x79] sm:$0xff]
        %v718 = vld [vmem:[#allocation2 + $0x81] sm:$0xff]
        %v719 = vld [vmem:[#allocation2 + $0x91] sm:$0xff]
        %v720 = vld [vmem:[#allocation2 + $0x99] sm:$0xff]
        %v721 = vld [vmem:[#allocation2 + $0xa9] sm:$0xff]
        %v722 = vld [vmem:[#allocation2 + $0xb1] sm:$0xff]
        %v723 = vld [vmem:[#allocation2 + $0xc1] sm:$0xff]
        %v724 = vld [vmem:[#allocation2 + $0xc9] sm:$0xff]
        %v725 = vld [vmem:[#allocation2 + $0xd9] sm:$0xff]
        %v726 = vld [vmem:[#allocation2 + $0xe1] sm:$0xff]
        %v727 = vld [vmem:[#allocation2 + $0xf1] sm:$0xff]
        %v728 = vld [vmem:[#allocation2 + $0xf9] sm:$0xff]
        %v729 = vld [vmem:[#allocation2 + $0x109] sm:$0xff]
        %v730 = vld [vmem:[#allocation2 + $0x111] sm:$0xff]
        %v731 = vld [vmem:[#allocation2 + $0x121] sm:$0xff]
        %v732 = vld [vmem:[#allocation2 + $0x129] sm:$0xff]
        %v733 = vld [vmem:[#allocation2 + $0x139] sm:$0xff]
        %v734 = vld [vmem:[#allocation2 + $0x141] sm:$0xff]
        %v735 = vld [vmem:[#allocation2 + $0x151] sm:$0xff]
        %v736 = vld [vmem:[#allocation2 + $0x159] sm:$0xff]
        %v737 = vld [vmem:[#allocation2 + $0x169] sm:$0xff]
        %v738 = vld [vmem:[#allocation2 + $0x171] sm:$0xff]
        %v739 = vpack.c.bf16 %v708, %v707
        %v740 = vpack.c.bf16 %v710, %v709
        %v741 = vpack.c.bf16 %v712, %v711
        %v742 = vpack.c.bf16 %v714, %v713
        %v743 = vpack.c.bf16 %v716, %v715
        %v744 = vpack.c.bf16 %v718, %v717
        %v745 = vpack.c.bf16 %v720, %v719
        %v746 = vpack.c.bf16 %v722, %v721
        %v747 = vpack.c.bf16 %v724, %v723
        %v748 = vpack.c.bf16 %v726, %v725
        %v749 = vpack.c.bf16 %v728, %v727
        %v750 = vpack.c.bf16 %v730, %v729
        %v751 = vpack.c.bf16 %v732, %v731
        %v752 = vpack.c.bf16 %v734, %v733
        %v753 = vpack.c.bf16 %v736, %v735
        %v754 = vpack.c.bf16 %v738, %v737
        %s755 = scalar_lea.vmem %s2, 64
        %v756 = vld [vmem:[%s755] sm:$0xf]
        %v757 = vld [vmem:[%s755 + $0x4] sm:$0xf]
        %v758 = vld [vmem:[%s755 + $0x8] sm:$0xf]
        %v759 = vld [vmem:[%s755 + $0xc] sm:$0xf]
        %v760 = vld [vmem:[%s755 + $0x10] sm:$0xf]
        %v761 = vld [vmem:[%s755 + $0x14] sm:$0xf]
        %v762 = vld [vmem:[%s755 + $0x18] sm:$0xf]
        %v763 = vld [vmem:[%s755 + $0x1c] sm:$0xf]
        %v764 = vld [vmem:[%s755 + $0x20] sm:$0xf]
        %v765 = vld [vmem:[%s755 + $0x24] sm:$0xf]
        %v766 = vld [vmem:[%s755 + $0x28] sm:$0xf]
        %v767 = vld [vmem:[%s755 + $0x2c] sm:$0xf]
        %v768 = vld [vmem:[%s755 + $0x30] sm:$0xf]
        %v769 = vld [vmem:[%s755 + $0x34] sm:$0xf]
        %v770 = vld [vmem:[%s755 + $0x38] sm:$0xf]
        %v771 = vld [vmem:[%s755 + $0x3c] sm:$0xf]
        %v788 = vunpack.c.l.b16 %v756
        %v789 = vunpack.c.l.b16 %v757
        %v790 = vunpack.c.l.b16 %v758
        %v791 = vunpack.c.l.b16 %v759
        %v792 = vunpack.c.l.b16 %v760
        %v793 = vunpack.c.l.b16 %v761
        %v794 = vunpack.c.l.b16 %v762
        %v795 = vunpack.c.l.b16 %v763
        %v796 = vunpack.c.l.b16 %v764
        %v797 = vunpack.c.l.b16 %v765
        %v798 = vunpack.c.l.b16 %v766
        %v799 = vunpack.c.l.b16 %v767
        %v800 = vunpack.c.l.b16 %v768
        %v801 = vunpack.c.l.b16 %v769
        %v802 = vunpack.c.l.b16 %v770
        %v803 = vunpack.c.l.b16 %v771
        %v804 = vpack.c.b16 %v789, %v788
        %v805 = vpack.c.b16 %v791, %v790
        %v806 = vpack.c.b16 %v793, %v792
        %v807 = vpack.c.b16 %v795, %v794
        %v808 = vpack.c.b16 %v797, %v796
        %v809 = vpack.c.b16 %v799, %v798
        %v810 = vpack.c.b16 %v801, %v800
        %v811 = vpack.c.b16 %v803, %v802
        %820 = vmatprep.subr.bf16.mxu0 0
        %821 = vmatpush1.bf16.msra.mxu0 %v804
        %822 = vmatprep.subr.bf16.mxu0 0
        %823 = vmatpush1.bf16.msra.mxu0 %v805
        %824 = vmatprep.subr.bf16.mxu0 0
        %825 = vmatpush1.bf16.msra.mxu0 %v806
        %826 = vmatprep.subr.bf16.mxu0 0
        %827 = vmatpush1.bf16.msra.mxu0 %v807
        %828 = vmatprep.subr.bf16.mxu0 0
        %829 = vmatpush1.bf16.msra.mxu0 %v808
        %830 = vmatprep.subr.bf16.mxu0 0
        %831 = vmatpush1.bf16.msra.mxu0 %v809
        %832 = vmatprep.subr.bf16.mxu0 0
        %833 = vmatpush1.bf16.msra.mxu0 %v810
        %834 = vmatprep.subr.bf16.mxu0 0
        %835 = vmatpush1.bf16.msra.mxu0 %v811
        %836 = vmatprep.subr.bf16.mxu0 0
        %837 = vmatpush1.bf16.msra.mxu0 0
        %838 = vmatprep.subr.bf16.mxu0 0
        %839 = vmatpush1.bf16.msra.mxu0 0
        %840 = vmatprep.subr.bf16.mxu0 0
        %841 = vmatpush1.bf16.msra.mxu0 0
        %842 = vmatprep.subr.bf16.mxu0 0
        %843 = vmatpush1.bf16.msra.mxu0 0
        %844 = vmatprep.subr.bf16.mxu0 0
        %845 = vmatpush1.bf16.msra.mxu0 0
        %846 = vmatprep.subr.bf16.mxu0 0
        %847 = vmatpush1.bf16.msra.mxu0 0
        %848 = vmatprep.subr.bf16.mxu0 0
        %849 = vmatpush1.bf16.msra.mxu0 0
        %850 = vmatprep.subr.bf16.mxu0 0
        %851 = vmatpush1.bf16.msra.mxu0 0
        %852 = vmatprep.mubr.bf16.mxu0 0
        %853 = vmatmul.mubr.bf16.gmra.mrb[0].mxu0 %v739
        %v854 = vpop.f32.mrb[0].mxu0
        %v855 = vadd.f32 0.0, %v854
        %v856 = vpop.f32.mrb[0].mxu0
        %v857 = vpop.f32.mrb[0].mxu0
        %v858 = vadd.f32 0.0, %v857
        %v859 = vpop.f32.mrb[0].mxu0
        %860 = vmatprep.mubr.bf16.mxu0 0
        %861 = vmatmul.mubr.bf16.gmra.mrb[0].mxu0 %v740
        %v862 = vpop.f32.mrb[0].mxu0
        %v863 = vadd.f32 0.0, %v862
        %v864 = vpop.f32.mrb[0].mxu0
        %v865 = vpop.f32.mrb[0].mxu0
        %v866 = vadd.f32 0.0, %v865
        %v867 = vpop.f32.mrb[0].mxu0
        %868 = vmatprep.mubr.bf16.mxu0 0
        %869 = vmatmul.mubr.bf16.gmra.mrb[0].mxu0 %v741
        %v870 = vpop.f32.mrb[0].mxu0
        %v871 = vadd.f32 0.0, %v870
        %v872 = vpop.f32.mrb[0].mxu0
        %v873 = vpop.f32.mrb[0].mxu0
        %v874 = vadd.f32 0.0, %v873
        %v875 = vpop.f32.mrb[0].mxu0
        %876 = vmatprep.mubr.bf16.mxu0 0
        %877 = vmatmul.mubr.bf16.gmra.mrb[0].mxu0 %v742
        %v878 = vpop.f32.mrb[0].mxu0
        %v879 = vadd.f32 0.0, %v878
        %v880 = vpop.f32.mrb[0].mxu0
        %v881 = vpop.f32.mrb[0].mxu0
        %v882 = vadd.f32 0.0, %v881
        %v883 = vpop.f32.mrb[0].mxu0
        %884 = vmatprep.mubr.bf16.mxu0 0
        %885 = vmatmul.mubr.bf16.gmra.mrb[0].mxu0 %v743
        %v886 = vpop.f32.mrb[0].mxu0
        %v887 = vadd.f32 0.0, %v886
        %v888 = vpop.f32.mrb[0].mxu0
        %v889 = vpop.f32.mrb[0].mxu0
        %v890 = vadd.f32 0.0, %v889
        %v891 = vpop.f32.mrb[0].mxu0
        %892 = vmatprep.mubr.bf16.mxu0 0
        %893 = vmatmul.mubr.bf16.gmra.mrb[0].mxu0 %v744
        %v894 = vpop.f32.mrb[0].mxu0
        %v895 = vadd.f32 0.0, %v894
        %v896 = vpop.f32.mrb[0].mxu0
        %v897 = vpop.f32.mrb[0].mxu0
        %v898 = vadd.f32 0.0, %v897
        %v899 = vpop.f32.mrb[0].mxu0
        %900 = vmatprep.mubr.bf16.mxu0 0
        %901 = vmatmul.mubr.bf16.gmra.mrb[0].mxu0 %v745
        %v902 = vpop.f32.mrb[0].mxu0
        %v903 = vadd.f32 0.0, %v902
        %v904 = vpop.f32.mrb[0].mxu0
        %v905 = vpop.f32.mrb[0].mxu0
        %v906 = vadd.f32 0.0, %v905
        %v907 = vpop.f32.mrb[0].mxu0
        %908 = vmatprep.mubr.bf16.mxu0 0
        %909 = vmatmul.mubr.bf16.gmra.mrb[0].mxu0 %v746
        %v910 = vpop.f32.mrb[0].mxu0
        %v911 = vadd.f32 0.0, %v910
        %v912 = vpop.f32.mrb[0].mxu0
        %v913 = vpop.f32.mrb[0].mxu0
        %v914 = vadd.f32 0.0, %v913
        %v915 = vpop.f32.mrb[0].mxu0
        %916 = vmatprep.mubr.bf16.mxu0 0
        %917 = vmatmul.mubr.bf16.gmra.mrb[0].mxu0 %v747
        %v918 = vpop.f32.mrb[0].mxu0
        %v919 = vadd.f32 0.0, %v918
        %v920 = vpop.f32.mrb[0].mxu0
        %v921 = vpop.f32.mrb[0].mxu0
        %v922 = vadd.f32 0.0, %v921
        %v923 = vpop.f32.mrb[0].mxu0
        %924 = vmatprep.mubr.bf16.mxu0 0
        %925 = vmatmul.mubr.bf16.gmra.mrb[0].mxu0 %v748
        %v926 = vpop.f32.mrb[0].mxu0
        %v927 = vadd.f32 0.0, %v926
        %v928 = vpop.f32.mrb[0].mxu0
        %v929 = vpop.f32.mrb[0].mxu0
        %v930 = vadd.f32 0.0, %v929
        %v931 = vpop.f32.mrb[0].mxu0
        %932 = vmatprep.mubr.bf16.mxu0 0
        %933 = vmatmul.mubr.bf16.gmra.mrb[0].mxu0 %v749
        %v934 = vpop.f32.mrb[0].mxu0
        %v935 = vadd.f32 0.0, %v934
        %v936 = vpop.f32.mrb[0].mxu0
        %v937 = vpop.f32.mrb[0].mxu0
        %v938 = vadd.f32 0.0, %v937
        %v939 = vpop.f32.mrb[0].mxu0
        %940 = vmatprep.mubr.bf16.mxu0 0
        %941 = vmatmul.mubr.bf16.gmra.mrb[0].mxu0 %v750
        %v942 = vpop.f32.mrb[0].mxu0
        %v943 = vadd.f32 0.0, %v942
        %v944 = vpop.f32.mrb[0].mxu0
        %v945 = vpop.f32.mrb[0].mxu0
        %v946 = vadd.f32 0.0, %v945
        %v947 = vpop.f32.mrb[0].mxu0
        %948 = vmatprep.mubr.bf16.mxu0 0
        %949 = vmatmul.mubr.bf16.gmra.mrb[0].mxu0 %v751
        %v950 = vpop.f32.mrb[0].mxu0
        %v951 = vadd.f32 0.0, %v950
        %v952 = vpop.f32.mrb[0].mxu0
        %v953 = vpop.f32.mrb[0].mxu0
        %v954 = vadd.f32 0.0, %v953
        %v955 = vpop.f32.mrb[0].mxu0
        %956 = vmatprep.mubr.bf16.mxu0 0
        %957 = vmatmul.mubr.bf16.gmra.mrb[0].mxu0 %v752
        %v958 = vpop.f32.mrb[0].mxu0
        %v959 = vadd.f32 0.0, %v958
        %v960 = vpop.f32.mrb[0].mxu0
        %v961 = vpop.f32.mrb[0].mxu0
        %v962 = vadd.f32 0.0, %v961
        %v963 = vpop.f32.mrb[0].mxu0
        %964 = vmatprep.mubr.bf16.mxu0 0
        %965 = vmatmul.mubr.bf16.gmra.mrb[0].mxu0 %v753
        %v966 = vpop.f32.mrb[0].mxu0
        %v967 = vadd.f32 0.0, %v966
        %v968 = vpop.f32.mrb[0].mxu0
        %v969 = vpop.f32.mrb[0].mxu0
        %v970 = vadd.f32 0.0, %v969
        %v971 = vpop.f32.mrb[0].mxu0
        %972 = vmatprep.mubr.bf16.mxu0 0
        %973 = vmatmul.mubr.bf16.gmra.mrb[0].mxu0 %v754
        %v974 = vpop.f32.mrb[0].mxu0
        %v975 = vadd.f32 0.0, %v974
        %v976 = vpop.f32.mrb[0].mxu0
        %v977 = vpop.f32.mrb[0].mxu0
        %v978 = vadd.f32 0.0, %v977
        %v979 = vpop.f32.mrb[0].mxu0
        %980 = vdwg.mxu0
        %v997 = vunpack.c.l.b16 %v691
        %v998 = vunpack.c.l.b16 %v692
        %v999 = vunpack.c.l.b16 %v693
        %v1000 = vunpack.c.l.b16 %v694
        %v1001 = vunpack.c.l.b16 %v695
        %v1002 = vunpack.c.l.b16 %v696
        %v1003 = vunpack.c.l.b16 %v697
        %v1004 = vunpack.c.l.b16 %v698
        %v1005 = vunpack.c.l.b16 %v699
        %v1006 = vunpack.c.l.b16 %v700
        %v1007 = vunpack.c.l.b16 %v701
        %v1008 = vunpack.c.l.b16 %v702
        %v1009 = vunpack.c.l.b16 %v703
        %v1010 = vunpack.c.l.b16 %v704
        %v1011 = vunpack.c.l.b16 %v705
        %v1012 = vunpack.c.l.b16 %v706
        %v1013 = vpack.c.b16 %v998, %v997
        %v1014 = vpack.c.b16 %v1000, %v999
        %v1015 = vpack.c.b16 %v1002, %v1001
        %v1016 = vpack.c.b16 %v1004, %v1003
        %v1017 = vpack.c.b16 %v1006, %v1005
        %v1018 = vpack.c.b16 %v1008, %v1007
        %v1019 = vpack.c.b16 %v1010, %v1009
        %v1020 = vpack.c.b16 %v1012, %v1011
        %1029 = vmatprep.subr.bf16.mxu0 0
        %1030 = vmatpush1.bf16.msra.mxu0 %v1013
        %1031 = vmatprep.subr.bf16.mxu0 0
        %1032 = vmatpush1.bf16.msra.mxu0 %v1014
        %1033 = vmatprep.subr.bf16.mxu0 0
        %1034 = vmatpush1.bf16.msra.mxu0 %v1015
        %1035 = vmatprep.subr.bf16.mxu0 0
        %1036 = vmatpush1.bf16.msra.mxu0 %v1016
        %1037 = vmatprep.subr.bf16.mxu0 0
        %1038 = vmatpush1.bf16.msra.mxu0 %v1017
        %1039 = vmatprep.subr.bf16.mxu0 0
        %1040 = vmatpush1.bf16.msra.mxu0 %v1018
        %1041 = vmatprep.subr.bf16.mxu0 0
        %1042 = vmatpush1.bf16.msra.mxu0 %v1019
        %1043 = vmatprep.subr.bf16.mxu0 0
        %1044 = vmatpush1.bf16.msra.mxu0 %v1020
        %1045 = vmatprep.subr.bf16.mxu0 0
        %1046 = vmatpush1.bf16.msra.mxu0 0
        %1047 = vmatprep.subr.bf16.mxu0 0
        %1048 = vmatpush1.bf16.msra.mxu0 0
        %1049 = vmatprep.subr.bf16.mxu0 0
        %1050 = vmatpush1.bf16.msra.mxu0 0
        %1051 = vmatprep.subr.bf16.mxu0 0
        %1052 = vmatpush1.bf16.msra.mxu0 0
        %1053 = vmatprep.subr.bf16.mxu0 0
        %1054 = vmatpush1.bf16.msra.mxu0 0
        %1055 = vmatprep.subr.bf16.mxu0 0
        %1056 = vmatpush1.bf16.msra.mxu0 0
        %1057 = vmatprep.subr.bf16.mxu0 0
        %1058 = vmatpush1.bf16.msra.mxu0 0
        %1059 = vmatprep.subr.bf16.mxu0 0
        %1060 = vmatpush1.bf16.msra.mxu0 0
        %1061 = vmatprep.mubr.bf16.mxu0 0
        %1062 = vmatmul.mubr.bf16.gmra.mrb[0].mxu0 %v675
        %v1063 = vpop.f32.mrb[0].mxu0
        %v1064 = vadd.f32 %v855, %v1063
        %v1065 = vpop.f32.mrb[0].mxu0
        %v1066 = vpop.f32.mrb[0].mxu0
        %v1067 = vadd.f32 %v858, %v1066
        %v1068 = vpop.f32.mrb[0].mxu0
        %1069 = vmatprep.mubr.bf16.mxu0 0
        %1070 = vmatmul.mubr.bf16.gmra.mrb[0].mxu0 %v676
        %v1071 = vpop.f32.mrb[0].mxu0
        %v1072 = vadd.f32 %v863, %v1071
        %v1073 = vpop.f32.mrb[0].mxu0
        %v1074 = vpop.f32.mrb[0].mxu0
        %v1075 = vadd.f32 %v866, %v1074
        %v1076 = vpop.f32.mrb[0].mxu0
        %1077 = vmatprep.mubr.bf16.mxu0 0
        %1078 = vmatmul.mubr.bf16.gmra.mrb[0].mxu0 %v677
        %v1079 = vpop.f32.mrb[0].mxu0
        %v1080 = vadd.f32 %v871, %v1079
        %v1081 = vpop.f32.mrb[0].mxu0
        %v1082 = vpop.f32.mrb[0].mxu0
        %v1083 = vadd.f32 %v874, %v1082
        %v1084 = vpop.f32.mrb[0].mxu0
        %1085 = vmatprep.mubr.bf16.mxu0 0
        %1086 = vmatmul.mubr.bf16.gmra.mrb[0].mxu0 %v678
        %v1087 = vpop.f32.mrb[0].mxu0
        %v1088 = vadd.f32 %v879, %v1087
        %v1089 = vpop.f32.mrb[0].mxu0
        %v1090 = vpop.f32.mrb[0].mxu0
        %v1091 = vadd.f32 %v882, %v1090
        %v1092 = vpop.f32.mrb[0].mxu0
        %1093 = vmatprep.mubr.bf16.mxu0 0
        %1094 = vmatmul.mubr.bf16.gmra.mrb[0].mxu0 %v679
        %v1095 = vpop.f32.mrb[0].mxu0
        %v1096 = vadd.f32 %v887, %v1095
        %v1097 = vpop.f32.mrb[0].mxu0
        %v1098 = vpop.f32.mrb[0].mxu0
        %v1099 = vadd.f32 %v890, %v1098
        %v1100 = vpop.f32.mrb[0].mxu0
        %1101 = vmatprep.mubr.bf16.mxu0 0
        %1102 = vmatmul.mubr.bf16.gmra.mrb[0].mxu0 %v680
        %v1103 = vpop.f32.mrb[0].mxu0
        %v1104 = vadd.f32 %v895, %v1103
        %v1105 = vpop.f32.mrb[0].mxu0
        %v1106 = vpop.f32.mrb[0].mxu0
        %v1107 = vadd.f32 %v898, %v1106
        %v1108 = vpop.f32.mrb[0].mxu0
        %1109 = vmatprep.mubr.bf16.mxu0 0
        %1110 = vmatmul.mubr.bf16.gmra.mrb[0].mxu0 %v681
        %v1111 = vpop.f32.mrb[0].mxu0
        %v1112 = vadd.f32 %v903, %v1111
        %v1113 = vpop.f32.mrb[0].mxu0
        %v1114 = vpop.f32.mrb[0].mxu0
        %v1115 = vadd.f32 %v906, %v1114
        %v1116 = vpop.f32.mrb[0].mxu0
        %1117 = vmatprep.mubr.bf16.mxu0 0
        %1118 = vmatmul.mubr.bf16.gmra.mrb[0].mxu0 %v682
        %v1119 = vpop.f32.mrb[0].mxu0
        %v1120 = vadd.f32 %v911, %v1119
        %v1121 = vpop.f32.mrb[0].mxu0
        %v1122 = vpop.f32.mrb[0].mxu0
        %v1123 = vadd.f32 %v914, %v1122
        %v1124 = vpop.f32.mrb[0].mxu0
        %1125 = vmatprep.mubr.bf16.mxu0 0
        %1126 = vmatmul.mubr.bf16.gmra.mrb[0].mxu0 %v683
        %v1127 = vpop.f32.mrb[0].mxu0
        %v1128 = vadd.f32 %v919, %v1127
        %v1129 = vpop.f32.mrb[0].mxu0
        %v1130 = vpop.f32.mrb[0].mxu0
        %v1131 = vadd.f32 %v922, %v1130
        %v1132 = vpop.f32.mrb[0].mxu0
        %1133 = vmatprep.mubr.bf16.mxu0 0
        %1134 = vmatmul.mubr.bf16.gmra.mrb[0].mxu0 %v684
        %v1135 = vpop.f32.mrb[0].mxu0
        %v1136 = vadd.f32 %v927, %v1135
        %v1137 = vpop.f32.mrb[0].mxu0
        %v1138 = vpop.f32.mrb[0].mxu0
        %v1139 = vadd.f32 %v930, %v1138
        %v1140 = vpop.f32.mrb[0].mxu0
        %1141 = vmatprep.mubr.bf16.mxu0 0
        %1142 = vmatmul.mubr.bf16.gmra.mrb[0].mxu0 %v685
        %v1143 = vpop.f32.mrb[0].mxu0
        %v1144 = vadd.f32 %v935, %v1143
        %v1145 = vpop.f32.mrb[0].mxu0
        %v1146 = vpop.f32.mrb[0].mxu0
        %v1147 = vadd.f32 %v938, %v1146
        %v1148 = vpop.f32.mrb[0].mxu0
        %1149 = vmatprep.mubr.bf16.mxu0 0
        %1150 = vmatmul.mubr.bf16.gmra.mrb[0].mxu0 %v686
        %v1151 = vpop.f32.mrb[0].mxu0
        %v1152 = vadd.f32 %v943, %v1151
        %v1153 = vpop.f32.mrb[0].mxu0
        %v1154 = vpop.f32.mrb[0].mxu0
        %v1155 = vadd.f32 %v946, %v1154
        %v1156 = vpop.f32.mrb[0].mxu0
        %1157 = vmatprep.mubr.bf16.mxu0 0
        %1158 = vmatmul.mubr.bf16.gmra.mrb[0].mxu0 %v687
        %v1159 = vpop.f32.mrb[0].mxu0
        %v1160 = vadd.f32 %v951, %v1159
        %v1161 = vpop.f32.mrb[0].mxu0
        %v1162 = vpop.f32.mrb[0].mxu0
        %v1163 = vadd.f32 %v954, %v1162
        %v1164 = vpop.f32.mrb[0].mxu0
        %1165 = vmatprep.mubr.bf16.mxu0 0
        %1166 = vmatmul.mubr.bf16.gmra.mrb[0].mxu0 %v688
        %v1167 = vpop.f32.mrb[0].mxu0
        %v1168 = vadd.f32 %v959, %v1167
        %v1169 = vpop.f32.mrb[0].mxu0
        %v1170 = vpop.f32.mrb[0].mxu0
        %v1171 = vadd.f32 %v962, %v1170
        %v1172 = vpop.f32.mrb[0].mxu0
        %1173 = vmatprep.mubr.bf16.mxu0 0
        %1174 = vmatmul.mubr.bf16.gmra.mrb[0].mxu0 %v689
        %v1175 = vpop.f32.mrb[0].mxu0
        %v1176 = vadd.f32 %v967, %v1175
        %v1177 = vpop.f32.mrb[0].mxu0
        %v1178 = vpop.f32.mrb[0].mxu0
        %v1179 = vadd.f32 %v970, %v1178
        %v1180 = vpop.f32.mrb[0].mxu0
        %1181 = vmatprep.mubr.bf16.mxu0 0
        %1182 = vmatmul.mubr.bf16.gmra.mrb[0].mxu0 %v690
        %v1183 = vpop.f32.mrb[0].mxu0
        %v1184 = vadd.f32 %v975, %v1183
        %v1185 = vpop.f32.mrb[0].mxu0
        %v1186 = vpop.f32.mrb[0].mxu0
        %v1187 = vadd.f32 %v978, %v1186
        %v1188 = vpop.f32.mrb[0].mxu0
        %1189 = vdwg.mxu0
        %v1190 = vld [vmem:[#allocation2 + $0x2] sm:$0xff]
        %v1191 = vld [vmem:[#allocation2 + $0xa] sm:$0xff]
        %v1192 = vld [vmem:[#allocation2 + $0x1a] sm:$0xff]
        %v1193 = vld [vmem:[#allocation2 + $0x22] sm:$0xff]
        %v1194 = vld [vmem:[#allocation2 + $0x32] sm:$0xff]
        %v1195 = vld [vmem:[#allocation2 + $0x3a] sm:$0xff]
        %v1196 = vld [vmem:[#allocation2 + $0x4a] sm:$0xff]
        %v1197 = vld [vmem:[#allocation2 + $0x52] sm:$0xff]
        %v1198 = vld [vmem:[#allocation2 + $0x62] sm:$0xff]
        %v1199 = vld [vmem:[#allocation2 + $0x6a] sm:$0xff]
        %v1200 = vld [vmem:[#allocation2 + $0x7a] sm:$0xff]
        %v1201 = vld [vmem:[#allocation2 + $0x82] sm:$0xff]
        %v1202 = vld [vmem:[#allocation2 + $0x92] sm:$0xff]
        %v1203 = vld [vmem:[#allocation2 + $0x9a] sm:$0xff]
        %v1204 = vld [vmem:[#allocation2 + $0xaa] sm:$0xff]
        %v1205 = vld [vmem:[#allocation2 + $0xb2] sm:$0xff]
        %v1206 = vld [vmem:[#allocation2 + $0xc2] sm:$0xff]
        %v1207 = vld [vmem:[#allocation2 + $0xca] sm:$0xff]
        %v1208 = vld [vmem:[#allocation2 + $0xda] sm:$0xff]
        %v1209 = vld [vmem:[#allocation2 + $0xe2] sm:$0xff]
        %v1210 = vld [vmem:[#allocation2 + $0xf2] sm:$0xff]
        %v1211 = vld [vmem:[#allocation2 + $0xfa] sm:$0xff]
        %v1212 = vld [vmem:[#allocation2 + $0x10a] sm:$0xff]
        %v1213 = vld [vmem:[#allocation2 + $0x112] sm:$0xff]
        %v1214 = vld [vmem:[#allocation2 + $0x122] sm:$0xff]
        %v1215 = vld [vmem:[#allocation2 + $0x12a] sm:$0xff]
        %v1216 = vld [vmem:[#allocation2 + $0x13a] sm:$0xff]
        %v1217 = vld [vmem:[#allocation2 + $0x142] sm:$0xff]
        %v1218 = vld [vmem:[#allocation2 + $0x152] sm:$0xff]
        %v1219 = vld [vmem:[#allocation2 + $0x15a] sm:$0xff]
        %v1220 = vld [vmem:[#allocation2 + $0x16a] sm:$0xff]
        %v1221 = vld [vmem:[#allocation2 + $0x172] sm:$0xff]
        %v1222 = vpack.c.bf16 %v1191, %v1190
        %v1223 = vpack.c.bf16 %v1193, %v1192
        %v1224 = vpack.c.bf16 %v1195, %v1194
        %v1225 = vpack.c.bf16 %v1197, %v1196
        %v1226 = vpack.c.bf16 %v1199, %v1198
        %v1227 = vpack.c.bf16 %v1201, %v1200
        %v1228 = vpack.c.bf16 %v1203, %v1202
        %v1229 = vpack.c.bf16 %v1205, %v1204
        %v1230 = vpack.c.bf16 %v1207, %v1206
        %v1231 = vpack.c.bf16 %v1209, %v1208
        %v1232 = vpack.c.bf16 %v1211, %v1210
        %v1233 = vpack.c.bf16 %v1213, %v1212
        %v1234 = vpack.c.bf16 %v1215, %v1214
        %v1235 = vpack.c.bf16 %v1217, %v1216
        %v1236 = vpack.c.bf16 %v1219, %v1218
        %v1237 = vpack.c.bf16 %v1221, %v1220
        %s1238 = scalar_lea.vmem %s2, 128
        %v1239 = vld [vmem:[%s1238] sm:$0xf]
        %v1240 = vld [vmem:[%s1238 + $0x4] sm:$0xf]
        %v1241 = vld [vmem:[%s1238 + $0x8] sm:$0xf]
        %v1242 = vld [vmem:[%s1238 + $0xc] sm:$0xf]
        %v1243 = vld [vmem:[%s1238 + $0x10] sm:$0xf]
        %v1244 = vld [vmem:[%s1238 + $0x14] sm:$0xf]
        %v1245 = vld [vmem:[%s1238 + $0x18] sm:$0xf]
        %v1246 = vld [vmem:[%s1238 + $0x1c] sm:$0xf]
        %v1247 = vld [vmem:[%s1238 + $0x20] sm:$0xf]
        %v1248 = vld [vmem:[%s1238 + $0x24] sm:$0xf]
        %v1249 = vld [vmem:[%s1238 + $0x28] sm:$0xf]
        %v1250 = vld [vmem:[%s1238 + $0x2c] sm:$0xf]
        %v1251 = vld [vmem:[%s1238 + $0x30] sm:$0xf]
        %v1252 = vld [vmem:[%s1238 + $0x34] sm:$0xf]
        %v1253 = vld [vmem:[%s1238 + $0x38] sm:$0xf]
        %v1254 = vld [vmem:[%s1238 + $0x3c] sm:$0xf]
        %v1271 = vunpack.c.l.b16 %v1239
        %v1272 = vunpack.c.l.b16 %v1240
        %v1273 = vunpack.c.l.b16 %v1241
        %v1274 = vunpack.c.l.b16 %v1242
        %v1275 = vunpack.c.l.b16 %v1243
        %v1276 = vunpack.c.l.b16 %v1244
        %v1277 = vunpack.c.l.b16 %v1245
        %v1278 = vunpack.c.l.b16 %v1246
        %v1279 = vunpack.c.l.b16 %v1247
        %v1280 = vunpack.c.l.b16 %v1248
        %v1281 = vunpack.c.l.b16 %v1249
        %v1282 = vunpack.c.l.b16 %v1250
        %v1283 = vunpack.c.l.b16 %v1251
        %v1284 = vunpack.c.l.b16 %v1252
        %v1285 = vunpack.c.l.b16 %v1253
        %v1286 = vunpack.c.l.b16 %v1254
        %v1287 = vpack.c.b16 %v1272, %v1271
        %v1288 = vpack.c.b16 %v1274, %v1273
        %v1289 = vpack.c.b16 %v1276, %v1275
        %v1290 = vpack.c.b16 %v1278, %v1277
        %v1291 = vpack.c.b16 %v1280, %v1279
        %v1292 = vpack.c.b16 %v1282, %v1281
        %v1293 = vpack.c.b16 %v1284, %v1283
        %v1294 = vpack.c.b16 %v1286, %v1285
        %1303 = vmatprep.subr.bf16.mxu0 0
        %1304 = vmatpush1.bf16.msra.mxu0 %v1287
        %1305 = vmatprep.subr.bf16.mxu0 0
        %1306 = vmatpush1.bf16.msra.mxu0 %v1288
        %1307 = vmatprep.subr.bf16.mxu0 0
        %1308 = vmatpush1.bf16.msra.mxu0 %v1289
        %1309 = vmatprep.subr.bf16.mxu0 0
        %1310 = vmatpush1.bf16.msra.mxu0 %v1290
        %1311 = vmatprep.subr.bf16.mxu0 0
        %1312 = vmatpush1.bf16.msra.mxu0 %v1291
        %1313 = vmatprep.subr.bf16.mxu0 0
        %1314 = vmatpush1.bf16.msra.mxu0 %v1292
        %1315 = vmatprep.subr.bf16.mxu0 0
        %1316 = vmatpush1.bf16.msra.mxu0 %v1293
        %1317 = vmatprep.subr.bf16.mxu0 0
        %1318 = vmatpush1.bf16.msra.mxu0 %v1294
        %1319 = vmatprep.subr.bf16.mxu0 0
        %1320 = vmatpush1.bf16.msra.mxu0 0
        %1321 = vmatprep.subr.bf16.mxu0 0
        %1322 = vmatpush1.bf16.msra.mxu0 0
        %1323 = vmatprep.subr.bf16.mxu0 0
        %1324 = vmatpush1.bf16.msra.mxu0 0
        %1325 = vmatprep.subr.bf16.mxu0 0
        %1326 = vmatpush1.bf16.msra.mxu0 0
        %1327 = vmatprep.subr.bf16.mxu0 0
        %1328 = vmatpush1.bf16.msra.mxu0 0
        %1329 = vmatprep.subr.bf16.mxu0 0
        %1330 = vmatpush1.bf16.msra.mxu0 0
        %1331 = vmatprep.subr.bf16.mxu0 0
        %1332 = vmatpush1.bf16.msra.mxu0 0
        %1333 = vmatprep.subr.bf16.mxu0 0
        %1334 = vmatpush1.bf16.msra.mxu0 0
        %1335 = vmatprep.mubr.bf16.mxu0 0
        %1336 = vmatmul.mubr.bf16.gmra.mrb[0].mxu0 %v1222
        %v1337 = vpop.f32.mrb[0].mxu0
        %v1338 = vadd.f32 0.0, %v1337
        %v1339 = vpop.f32.mrb[0].mxu0
        %v1340 = vpop.f32.mrb[0].mxu0
        %v1341 = vadd.f32 0.0, %v1340
        %v1342 = vpop.f32.mrb[0].mxu0
        %1343 = vmatprep.mubr.bf16.mxu0 0
        %1344 = vmatmul.mubr.bf16.gmra.mrb[0].mxu0 %v1223
        %v1345 = vpop.f32.mrb[0].mxu0
        %v1346 = vadd.f32 0.0, %v1345
        %v1347 = vpop.f32.mrb[0].mxu0
        %v1348 = vpop.f32.mrb[0].mxu0
        %v1349 = vadd.f32 0.0, %v1348
        %v1350 = vpop.f32.mrb[0].mxu0
        %1351 = vmatprep.mubr.bf16.mxu0 0
        %1352 = vmatmul.mubr.bf16.gmra.mrb[0].mxu0 %v1224
        %v1353 = vpop.f32.mrb[0].mxu0
        %v1354 = vadd.f32 0.0, %v1353
        %v1355 = vpop.f32.mrb[0].mxu0
        %v1356 = vpop.f32.mrb[0].mxu0
        %v1357 = vadd.f32 0.0, %v1356
        %v1358 = vpop.f32.mrb[0].mxu0
        %1359 = vmatprep.mubr.bf16.mxu0 0
        %1360 = vmatmul.mubr.bf16.gmra.mrb[0].mxu0 %v1225
        %v1361 = vpop.f32.mrb[0].mxu0
        %v1362 = vadd.f32 0.0, %v1361
        %v1363 = vpop.f32.mrb[0].mxu0
        %v1364 = vpop.f32.mrb[0].mxu0
        %v1365 = vadd.f32 0.0, %v1364
        %v1366 = vpop.f32.mrb[0].mxu0
        %1367 = vmatprep.mubr.bf16.mxu0 0
        %1368 = vmatmul.mubr.bf16.gmra.mrb[0].mxu0 %v1226
        %v1369 = vpop.f32.mrb[0].mxu0
        %v1370 = vadd.f32 0.0, %v1369
        %v1371 = vpop.f32.mrb[0].mxu0
        %v1372 = vpop.f32.mrb[0].mxu0
        %v1373 = vadd.f32 0.0, %v1372
        %v1374 = vpop.f32.mrb[0].mxu0
        %1375 = vmatprep.mubr.bf16.mxu0 0
        %1376 = vmatmul.mubr.bf16.gmra.mrb[0].mxu0 %v1227
        %v1377 = vpop.f32.mrb[0].mxu0
        %v1378 = vadd.f32 0.0, %v1377
        %v1379 = vpop.f32.mrb[0].mxu0
        %v1380 = vpop.f32.mrb[0].mxu0
        %v1381 = vadd.f32 0.0, %v1380
        %v1382 = vpop.f32.mrb[0].mxu0
        %1383 = vmatprep.mubr.bf16.mxu0 0
        %1384 = vmatmul.mubr.bf16.gmra.mrb[0].mxu0 %v1228
        %v1385 = vpop.f32.mrb[0].mxu0
        %v1386 = vadd.f32 0.0, %v1385
        %v1387 = vpop.f32.mrb[0].mxu0
        %v1388 = vpop.f32.mrb[0].mxu0
        %v1389 = vadd.f32 0.0, %v1388
        %v1390 = vpop.f32.mrb[0].mxu0
        %1391 = vmatprep.mubr.bf16.mxu0 0
        %1392 = vmatmul.mubr.bf16.gmra.mrb[0].mxu0 %v1229
        %v1393 = vpop.f32.mrb[0].mxu0
        %v1394 = vadd.f32 0.0, %v1393
        %v1395 = vpop.f32.mrb[0].mxu0
        %v1396 = vpop.f32.mrb[0].mxu0
        %v1397 = vadd.f32 0.0, %v1396
        %v1398 = vpop.f32.mrb[0].mxu0
        %1399 = vmatprep.mubr.bf16.mxu0 0
        %1400 = vmatmul.mubr.bf16.gmra.mrb[0].mxu0 %v1230
        %v1401 = vpop.f32.mrb[0].mxu0
        %v1402 = vadd.f32 0.0, %v1401
        %v1403 = vpop.f32.mrb[0].mxu0
        %v1404 = vpop.f32.mrb[0].mxu0
        %v1405 = vadd.f32 0.0, %v1404
        %v1406 = vpop.f32.mrb[0].mxu0
        %1407 = vmatprep.mubr.bf16.mxu0 0
        %1408 = vmatmul.mubr.bf16.gmra.mrb[0].mxu0 %v1231
        %v1409 = vpop.f32.mrb[0].mxu0
        %v1410 = vadd.f32 0.0, %v1409
        %v1411 = vpop.f32.mrb[0].mxu0
        %v1412 = vpop.f32.mrb[0].mxu0
        %v1413 = vadd.f32 0.0, %v1412
        %v1414 = vpop.f32.mrb[0].mxu0
        %1415 = vmatprep.mubr.bf16.mxu0 0
        %1416 = vmatmul.mubr.bf16.gmra.mrb[0].mxu0 %v1232
        %v1417 = vpop.f32.mrb[0].mxu0
        %v1418 = vadd.f32 0.0, %v1417
        %v1419 = vpop.f32.mrb[0].mxu0
        %v1420 = vpop.f32.mrb[0].mxu0
        %v1421 = vadd.f32 0.0, %v1420
        %v1422 = vpop.f32.mrb[0].mxu0
        %1423 = vmatprep.mubr.bf16.mxu0 0
        %1424 = vmatmul.mubr.bf16.gmra.mrb[0].mxu0 %v1233
        %v1425 = vpop.f32.mrb[0].mxu0
        %v1426 = vadd.f32 0.0, %v1425
        %v1427 = vpop.f32.mrb[0].mxu0
        %v1428 = vpop.f32.mrb[0].mxu0
        %v1429 = vadd.f32 0.0, %v1428
        %v1430 = vpop.f32.mrb[0].mxu0
        %1431 = vmatprep.mubr.bf16.mxu0 0
        %1432 = vmatmul.mubr.bf16.gmra.mrb[0].mxu0 %v1234
        %v1433 = vpop.f32.mrb[0].mxu0
        %v1434 = vadd.f32 0.0, %v1433
        %v1435 = vpop.f32.mrb[0].mxu0
        %v1436 = vpop.f32.mrb[0].mxu0
        %v1437 = vadd.f32 0.0, %v1436
        %v1438 = vpop.f32.mrb[0].mxu0
        %1439 = vmatprep.mubr.bf16.mxu0 0
        %1440 = vmatmul.mubr.bf16.gmra.mrb[0].mxu0 %v1235
        %v1441 = vpop.f32.mrb[0].mxu0
        %v1442 = vadd.f32 0.0, %v1441
        %v1443 = vpop.f32.mrb[0].mxu0
        %v1444 = vpop.f32.mrb[0].mxu0
        %v1445 = vadd.f32 0.0, %v1444
        %v1446 = vpop.f32.mrb[0].mxu0
        %1447 = vmatprep.mubr.bf16.mxu0 0
        %1448 = vmatmul.mubr.bf16.gmra.mrb[0].mxu0 %v1236
        %v1449 = vpop.f32.mrb[0].mxu0
        %v1450 = vadd.f32 0.0, %v1449
        %v1451 = vpop.f32.mrb[0].mxu0
        %v1452 = vpop.f32.mrb[0].mxu0
        %v1453 = vadd.f32 0.0, %v1452
        %v1454 = vpop.f32.mrb[0].mxu0
        %1455 = vmatprep.mubr.bf16.mxu0 0
        %1456 = vmatmul.mubr.bf16.gmra.mrb[0].mxu0 %v1237
        %v1457 = vpop.f32.mrb[0].mxu0
        %v1458 = vadd.f32 0.0, %v1457
        %v1459 = vpop.f32.mrb[0].mxu0
        %v1460 = vpop.f32.mrb[0].mxu0
        %v1461 = vadd.f32 0.0, %v1460
        %v1462 = vpop.f32.mrb[0].mxu0
        %1463 = vdwg.mxu0
        %v1464 = vadd.f32 %v1064, %v1338
        %v1465 = vadd.f32 %v1067, %v1341
        %v1466 = vadd.f32 %v1072, %v1346
        %v1467 = vadd.f32 %v1075, %v1349
        %v1468 = vadd.f32 %v1080, %v1354
        %v1469 = vadd.f32 %v1083, %v1357
        %v1470 = vadd.f32 %v1088, %v1362
        %v1471 = vadd.f32 %v1091, %v1365
        %v1472 = vadd.f32 %v1096, %v1370
        %v1473 = vadd.f32 %v1099, %v1373
        %v1474 = vadd.f32 %v1104, %v1378
        %v1475 = vadd.f32 %v1107, %v1381
        %v1476 = vadd.f32 %v1112, %v1386
        %v1477 = vadd.f32 %v1115, %v1389
        %v1478 = vadd.f32 %v1120, %v1394
        %v1479 = vadd.f32 %v1123, %v1397
        %v1480 = vadd.f32 %v1128, %v1402
        %v1481 = vadd.f32 %v1131, %v1405
        %v1482 = vadd.f32 %v1136, %v1410
        %v1483 = vadd.f32 %v1139, %v1413
        %v1484 = vadd.f32 %v1144, %v1418
        %v1485 = vadd.f32 %v1147, %v1421
        %v1486 = vadd.f32 %v1152, %v1426
        %v1487 = vadd.f32 %v1155, %v1429
        %v1488 = vadd.f32 %v1160, %v1434
        %v1489 = vadd.f32 %v1163, %v1437
        %v1490 = vadd.f32 %v1168, %v1442
        %v1491 = vadd.f32 %v1171, %v1445
        %v1492 = vadd.f32 %v1176, %v1450
        %v1493 = vadd.f32 %v1179, %v1453
        %v1494 = vadd.f32 %v1184, %v1458
        %v1495 = vadd.f32 %v1187, %v1461
        %s1496 = scalar_lea.vmem [#allocation2], 24
        %v1497 = vld [vmem:[%s1496] sm:$0xff]
        %v1498 = vld [vmem:[%s1496 + $0x8] sm:$0xff]
        %v1499 = vld [vmem:[%s1496 + $0x18] sm:$0xff]
        %v1500 = vld [vmem:[%s1496 + $0x20] sm:$0xff]
        %v1501 = vld [vmem:[%s1496 + $0x30] sm:$0xff]
        %v1502 = vld [vmem:[%s1496 + $0x38] sm:$0xff]
        %v1503 = vld [vmem:[%s1496 + $0x48] sm:$0xff]
        %v1504 = vld [vmem:[%s1496 + $0x50] sm:$0xff]
        %v1505 = vld [vmem:[%s1496 + $0x60] sm:$0xff]
        %v1506 = vld [vmem:[%s1496 + $0x68] sm:$0xff]
        %v1507 = vld [vmem:[%s1496 + $0x78] sm:$0xff]
        %v1508 = vld [vmem:[%s1496 + $0x80] sm:$0xff]
        %v1509 = vld [vmem:[%s1496 + $0x90] sm:$0xff]
        %v1510 = vld [vmem:[%s1496 + $0x98] sm:$0xff]
        %v1511 = vld [vmem:[%s1496 + $0xa8] sm:$0xff]
        %v1512 = vld [vmem:[%s1496 + $0xb0] sm:$0xff]
        %v1513 = vld [vmem:[%s1496 + $0xc0] sm:$0xff]
        %v1514 = vld [vmem:[%s1496 + $0xc8] sm:$0xff]
        %v1515 = vld [vmem:[%s1496 + $0xd8] sm:$0xff]
        %v1516 = vld [vmem:[%s1496 + $0xe0] sm:$0xff]
        %v1517 = vld [vmem:[%s1496 + $0xf0] sm:$0xff]
        %v1518 = vld [vmem:[%s1496 + $0xf8] sm:$0xff]
        %v1519 = vld [vmem:[%s1496 + $0x108] sm:$0xff]
        %v1520 = vld [vmem:[%s1496 + $0x110] sm:$0xff]
        %v1521 = vld [vmem:[%s1496 + $0x120] sm:$0xff]
        %v1522 = vld [vmem:[%s1496 + $0x128] sm:$0xff]
        %v1523 = vld [vmem:[%s1496 + $0x138] sm:$0xff]
        %v1524 = vld [vmem:[%s1496 + $0x140] sm:$0xff]
        %v1525 = vld [vmem:[%s1496 + $0x150] sm:$0xff]
        %v1526 = vld [vmem:[%s1496 + $0x158] sm:$0xff]
        %v1527 = vld [vmem:[%s1496 + $0x168] sm:$0xff]
        %v1528 = vld [vmem:[%s1496 + $0x170] sm:$0xff]
        %v1529 = vpack.c.bf16 %v1498, %v1497
        %v1530 = vpack.c.bf16 %v1500, %v1499
        %v1531 = vpack.c.bf16 %v1502, %v1501
        %v1532 = vpack.c.bf16 %v1504, %v1503
        %v1533 = vpack.c.bf16 %v1506, %v1505
        %v1534 = vpack.c.bf16 %v1508, %v1507
        %v1535 = vpack.c.bf16 %v1510, %v1509
        %v1536 = vpack.c.bf16 %v1512, %v1511
        %v1537 = vpack.c.bf16 %v1514, %v1513
        %v1538 = vpack.c.bf16 %v1516, %v1515
        %v1539 = vpack.c.bf16 %v1518, %v1517
        %v1540 = vpack.c.bf16 %v1520, %v1519
        %v1541 = vpack.c.bf16 %v1522, %v1521
        %v1542 = vpack.c.bf16 %v1524, %v1523
        %v1543 = vpack.c.bf16 %v1526, %v1525
        %v1544 = vpack.c.bf16 %v1528, %v1527
        %s1545 = scalar_lea.vmem %s2, 192
        %v1546 = vld [vmem:[%s1545] sm:$0xf]
        %v1547 = vld [vmem:[%s1545 + $0x4] sm:$0xf]
        %v1548 = vld [vmem:[%s1545 + $0x8] sm:$0xf]
        %v1549 = vld [vmem:[%s1545 + $0xc] sm:$0xf]
        %v1550 = vld [vmem:[%s1545 + $0x10] sm:$0xf]
        %v1551 = vld [vmem:[%s1545 + $0x14] sm:$0xf]
        %v1552 = vld [vmem:[%s1545 + $0x18] sm:$0xf]
        %v1553 = vld [vmem:[%s1545 + $0x1c] sm:$0xf]
        %v1554 = vld [vmem:[%s1545 + $0x20] sm:$0xf]
        %v1555 = vld [vmem:[%s1545 + $0x24] sm:$0xf]
        %v1556 = vld [vmem:[%s1545 + $0x28] sm:$0xf]
        %v1557 = vld [vmem:[%s1545 + $0x2c] sm:$0xf]
        %v1558 = vld [vmem:[%s1545 + $0x30] sm:$0xf]
        %v1559 = vld [vmem:[%s1545 + $0x34] sm:$0xf]
        %v1560 = vld [vmem:[%s1545 + $0x38] sm:$0xf]
        %v1561 = vld [vmem:[%s1545 + $0x3c] sm:$0xf]
        %v1578 = vunpack.c.l.b16 %v1546
        %v1579 = vunpack.c.l.b16 %v1547
        %v1580 = vunpack.c.l.b16 %v1548
        %v1581 = vunpack.c.l.b16 %v1549
        %v1582 = vunpack.c.l.b16 %v1550
        %v1583 = vunpack.c.l.b16 %v1551
        %v1584 = vunpack.c.l.b16 %v1552
        %v1585 = vunpack.c.l.b16 %v1553
        %v1586 = vunpack.c.l.b16 %v1554
        %v1587 = vunpack.c.l.b16 %v1555
        %v1588 = vunpack.c.l.b16 %v1556
        %v1589 = vunpack.c.l.b16 %v1557
        %v1590 = vunpack.c.l.b16 %v1558
        %v1591 = vunpack.c.l.b16 %v1559
        %v1592 = vunpack.c.l.b16 %v1560
        %v1593 = vunpack.c.l.b16 %v1561
        %v1594 = vpack.c.b16 %v1579, %v1578
        %v1595 = vpack.c.b16 %v1581, %v1580
        %v1596 = vpack.c.b16 %v1583, %v1582
        %v1597 = vpack.c.b16 %v1585, %v1584
        %v1598 = vpack.c.b16 %v1587, %v1586
        %v1599 = vpack.c.b16 %v1589, %v1588
        %v1600 = vpack.c.b16 %v1591, %v1590
        %v1601 = vpack.c.b16 %v1593, %v1592
        %1610 = vmatprep.subr.bf16.mxu0 0
        %1611 = vmatpush1.bf16.msra.mxu0 %v1594
        %1612 = vmatprep.subr.bf16.mxu0 0
        %1613 = vmatpush1.bf16.msra.mxu0 %v1595
        %1614 = vmatprep.subr.bf16.mxu0 0
        %1615 = vmatpush1.bf16.msra.mxu0 %v1596
        %1616 = vmatprep.subr.bf16.mxu0 0
        %1617 = vmatpush1.bf16.msra.mxu0 %v1597
        %1618 = vmatprep.subr.bf16.mxu0 0
        %1619 = vmatpush1.bf16.msra.mxu0 %v1598
        %1620 = vmatprep.subr.bf16.mxu0 0
        %1621 = vmatpush1.bf16.msra.mxu0 %v1599
        %1622 = vmatprep.subr.bf16.mxu0 0
        %1623 = vmatpush1.bf16.msra.mxu0 %v1600
        %1624 = vmatprep.subr.bf16.mxu0 0
        %1625 = vmatpush1.bf16.msra.mxu0 %v1601
        %1626 = vmatprep.subr.bf16.mxu0 0
        %1627 = vmatpush1.bf16.msra.mxu0 0
        %1628 = vmatprep.subr.bf16.mxu0 0
        %1629 = vmatpush1.bf16.msra.mxu0 0
        %1630 = vmatprep.subr.bf16.mxu0 0
        %1631 = vmatpush1.bf16.msra.mxu0 0
        %1632 = vmatprep.subr.bf16.mxu0 0
        %1633 = vmatpush1.bf16.msra.mxu0 0
        %1634 = vmatprep.subr.bf16.mxu0 0
        %1635 = vmatpush1.bf16.msra.mxu0 0
        %1636 = vmatprep.subr.bf16.mxu0 0
        %1637 = vmatpush1.bf16.msra.mxu0 0
        %1638 = vmatprep.subr.bf16.mxu0 0
        %1639 = vmatpush1.bf16.msra.mxu0 0
        %1640 = vmatprep.subr.bf16.mxu0 0
        %1641 = vmatpush1.bf16.msra.mxu0 0
        %1642 = vmatprep.mubr.bf16.mxu0 0
        %1643 = vmatmul.mubr.bf16.gmra.mrb[0].mxu0 %v1529
        %v1644 = vpop.f32.mrb[0].mxu0
        %v1645 = vadd.f32 0.0, %v1644
        %v1646 = vpop.f32.mrb[0].mxu0
        %v1647 = vpop.f32.mrb[0].mxu0
        %v1648 = vadd.f32 0.0, %v1647
        %v1649 = vpop.f32.mrb[0].mxu0
        %1650 = vmatprep.mubr.bf16.mxu0 0
        %1651 = vmatmul.mubr.bf16.gmra.mrb[0].mxu0 %v1530
        %v1652 = vpop.f32.mrb[0].mxu0
        %v1653 = vadd.f32 0.0, %v1652
        %v1654 = vpop.f32.mrb[0].mxu0
        %v1655 = vpop.f32.mrb[0].mxu0
        %v1656 = vadd.f32 0.0, %v1655
        %v1657 = vpop.f32.mrb[0].mxu0
        %1658 = vmatprep.mubr.bf16.mxu0 0
        %1659 = vmatmul.mubr.bf16.gmra.mrb[0].mxu0 %v1531
        %v1660 = vpop.f32.mrb[0].mxu0
        %v1661 = vadd.f32 0.0, %v1660
        %v1662 = vpop.f32.mrb[0].mxu0
        %v1663 = vpop.f32.mrb[0].mxu0
        %v1664 = vadd.f32 0.0, %v1663
        %v1665 = vpop.f32.mrb[0].mxu0
        %1666 = vmatprep.mubr.bf16.mxu0 0
        %1667 = vmatmul.mubr.bf16.gmra.mrb[0].mxu0 %v1532
        %v1668 = vpop.f32.mrb[0].mxu0
        %v1669 = vadd.f32 0.0, %v1668
        %v1670 = vpop.f32.mrb[0].mxu0
        %v1671 = vpop.f32.mrb[0].mxu0
        %v1672 = vadd.f32 0.0, %v1671
        %v1673 = vpop.f32.mrb[0].mxu0
        %1674 = vmatprep.mubr.bf16.mxu0 0
        %1675 = vmatmul.mubr.bf16.gmra.mrb[0].mxu0 %v1533
        %v1676 = vpop.f32.mrb[0].mxu0
        %v1677 = vadd.f32 0.0, %v1676
        %v1678 = vpop.f32.mrb[0].mxu0
        %v1679 = vpop.f32.mrb[0].mxu0
        %v1680 = vadd.f32 0.0, %v1679
        %v1681 = vpop.f32.mrb[0].mxu0
        %1682 = vmatprep.mubr.bf16.mxu0 0
        %1683 = vmatmul.mubr.bf16.gmra.mrb[0].mxu0 %v1534
        %v1684 = vpop.f32.mrb[0].mxu0
        %v1685 = vadd.f32 0.0, %v1684
        %v1686 = vpop.f32.mrb[0].mxu0
        %v1687 = vpop.f32.mrb[0].mxu0
        %v1688 = vadd.f32 0.0, %v1687
        %v1689 = vpop.f32.mrb[0].mxu0
        %1690 = vmatprep.mubr.bf16.mxu0 0
        %1691 = vmatmul.mubr.bf16.gmra.mrb[0].mxu0 %v1535
        %v1692 = vpop.f32.mrb[0].mxu0
        %v1693 = vadd.f32 0.0, %v1692
        %v1694 = vpop.f32.mrb[0].mxu0
        %v1695 = vpop.f32.mrb[0].mxu0
        %v1696 = vadd.f32 0.0, %v1695
        %v1697 = vpop.f32.mrb[0].mxu0
        %1698 = vmatprep.mubr.bf16.mxu0 0
        %1699 = vmatmul.mubr.bf16.gmra.mrb[0].mxu0 %v1536
        %v1700 = vpop.f32.mrb[0].mxu0
        %v1701 = vadd.f32 0.0, %v1700
        %v1702 = vpop.f32.mrb[0].mxu0
        %v1703 = vpop.f32.mrb[0].mxu0
        %v1704 = vadd.f32 0.0, %v1703
        %v1705 = vpop.f32.mrb[0].mxu0
        %1706 = vmatprep.mubr.bf16.mxu0 0
        %1707 = vmatmul.mubr.bf16.gmra.mrb[0].mxu0 %v1537
        %v1708 = vpop.f32.mrb[0].mxu0
        %v1709 = vadd.f32 0.0, %v1708
        %v1710 = vpop.f32.mrb[0].mxu0
        %v1711 = vpop.f32.mrb[0].mxu0
        %v1712 = vadd.f32 0.0, %v1711
        %v1713 = vpop.f32.mrb[0].mxu0
        %1714 = vmatprep.mubr.bf16.mxu0 0
        %1715 = vmatmul.mubr.bf16.gmra.mrb[0].mxu0 %v1538
        %v1716 = vpop.f32.mrb[0].mxu0
        %v1717 = vadd.f32 0.0, %v1716
        %v1718 = vpop.f32.mrb[0].mxu0
        %v1719 = vpop.f32.mrb[0].mxu0
        %v1720 = vadd.f32 0.0, %v1719
        %v1721 = vpop.f32.mrb[0].mxu0
        %1722 = vmatprep.mubr.bf16.mxu0 0
        %1723 = vmatmul.mubr.bf16.gmra.mrb[0].mxu0 %v1539
        %v1724 = vpop.f32.mrb[0].mxu0
        %v1725 = vadd.f32 0.0, %v1724
        %v1726 = vpop.f32.mrb[0].mxu0
        %v1727 = vpop.f32.mrb[0].mxu0
        %v1728 = vadd.f32 0.0, %v1727
        %v1729 = vpop.f32.mrb[0].mxu0
        %1730 = vmatprep.mubr.bf16.mxu0 0
        %1731 = vmatmul.mubr.bf16.gmra.mrb[0].mxu0 %v1540
        %v1732 = vpop.f32.mrb[0].mxu0
        %v1733 = vadd.f32 0.0, %v1732
        %v1734 = vpop.f32.mrb[0].mxu0
        %v1735 = vpop.f32.mrb[0].mxu0
        %v1736 = vadd.f32 0.0, %v1735
        %v1737 = vpop.f32.mrb[0].mxu0
        %1738 = vmatprep.mubr.bf16.mxu0 0
        %1739 = vmatmul.mubr.bf16.gmra.mrb[0].mxu0 %v1541
        %v1740 = vpop.f32.mrb[0].mxu0
        %v1741 = vadd.f32 0.0, %v1740
        %v1742 = vpop.f32.mrb[0].mxu0
        %v1743 = vpop.f32.mrb[0].mxu0
        %v1744 = vadd.f32 0.0, %v1743
        %v1745 = vpop.f32.mrb[0].mxu0
        %1746 = vmatprep.mubr.bf16.mxu0 0
        %1747 = vmatmul.mubr.bf16.gmra.mrb[0].mxu0 %v1542
        %v1748 = vpop.f32.mrb[0].mxu0
        %v1749 = vadd.f32 0.0, %v1748
        %v1750 = vpop.f32.mrb[0].mxu0
        %v1751 = vpop.f32.mrb[0].mxu0
        %v1752 = vadd.f32 0.0, %v1751
        %v1753 = vpop.f32.mrb[0].mxu0
        %1754 = vmatprep.mubr.bf16.mxu0 0
        %1755 = vmatmul.mubr.bf16.gmra.mrb[0].mxu0 %v1543
        %v1756 = vpop.f32.mrb[0].mxu0
        %v1757 = vadd.f32 0.0, %v1756
        %v1758 = vpop.f32.mrb[0].mxu0
        %v1759 = vpop.f32.mrb[0].mxu0
        %v1760 = vadd.f32 0.0, %v1759
        %v1761 = vpop.f32.mrb[0].mxu0
        %1762 = vmatprep.mubr.bf16.mxu0 0
        %1763 = vmatmul.mubr.bf16.gmra.mrb[0].mxu0 %v1544
        %v1764 = vpop.f32.mrb[0].mxu0
        %v1765 = vadd.f32 0.0, %v1764
        %v1766 = vpop.f32.mrb[0].mxu0
        %v1767 = vpop.f32.mrb[0].mxu0
        %v1768 = vadd.f32 0.0, %v1767
        %v1769 = vpop.f32.mrb[0].mxu0
        %1770 = vdwg.mxu0
        %v1771 = vadd.f32 %v1464, %v1645
        %v1772 = vadd.f32 %v1465, %v1648
        %v1773 = vadd.f32 %v1466, %v1653
        %v1774 = vadd.f32 %v1467, %v1656
        %v1775 = vadd.f32 %v1468, %v1661
        %v1776 = vadd.f32 %v1469, %v1664
        %v1777 = vadd.f32 %v1470, %v1669
        %v1778 = vadd.f32 %v1471, %v1672
        %v1779 = vadd.f32 %v1472, %v1677
        %v1780 = vadd.f32 %v1473, %v1680
        %v1781 = vadd.f32 %v1474, %v1685
        %v1782 = vadd.f32 %v1475, %v1688
        %v1783 = vadd.f32 %v1476, %v1693
        %v1784 = vadd.f32 %v1477, %v1696
        %v1785 = vadd.f32 %v1478, %v1701
        %v1786 = vadd.f32 %v1479, %v1704
        %v1787 = vadd.f32 %v1480, %v1709
        %v1788 = vadd.f32 %v1481, %v1712
        %v1789 = vadd.f32 %v1482, %v1717
        %v1790 = vadd.f32 %v1483, %v1720
        %v1791 = vadd.f32 %v1484, %v1725
        %v1792 = vadd.f32 %v1485, %v1728
        %v1793 = vadd.f32 %v1486, %v1733
        %v1794 = vadd.f32 %v1487, %v1736
        %v1795 = vadd.f32 %v1488, %v1741
        %v1796 = vadd.f32 %v1489, %v1744
        %v1797 = vadd.f32 %v1490, %v1749
        %v1798 = vadd.f32 %v1491, %v1752
        %v1799 = vadd.f32 %v1492, %v1757
        %v1800 = vadd.f32 %v1493, %v1760
        %v1801 = vadd.f32 %v1494, %v1765
        %v1802 = vadd.f32 %v1495, %v1768
        %v1803 = vld [vmem:[%s1496 + $0x1] sm:$0xff]
        %v1804 = vld [vmem:[%s1496 + $0x9] sm:$0xff]
        %v1805 = vld [vmem:[%s1496 + $0x19] sm:$0xff]
        %v1806 = vld [vmem:[%s1496 + $0x21] sm:$0xff]
        %v1807 = vld [vmem:[%s1496 + $0x31] sm:$0xff]
        %v1808 = vld [vmem:[%s1496 + $0x39] sm:$0xff]
        %v1809 = vld [vmem:[%s1496 + $0x49] sm:$0xff]
        %v1810 = vld [vmem:[%s1496 + $0x51] sm:$0xff]
        %v1811 = vld [vmem:[%s1496 + $0x61] sm:$0xff]
        %v1812 = vld [vmem:[%s1496 + $0x69] sm:$0xff]
        %v1813 = vld [vmem:[%s1496 + $0x79] sm:$0xff]
        %v1814 = vld [vmem:[%s1496 + $0x81] sm:$0xff]
        %v1815 = vld [vmem:[%s1496 + $0x91] sm:$0xff]
        %v1816 = vld [vmem:[%s1496 + $0x99] sm:$0xff]
        %v1817 = vld [vmem:[%s1496 + $0xa9] sm:$0xff]
        %v1818 = vld [vmem:[%s1496 + $0xb1] sm:$0xff]
        %v1819 = vld [vmem:[%s1496 + $0xc1] sm:$0xff]
        %v1820 = vld [vmem:[%s1496 + $0xc9] sm:$0xff]
        %v1821 = vld [vmem:[%s1496 + $0xd9] sm:$0xff]
        %v1822 = vld [vmem:[%s1496 + $0xe1] sm:$0xff]
        %v1823 = vld [vmem:[%s1496 + $0xf1] sm:$0xff]
        %v1824 = vld [vmem:[%s1496 + $0xf9] sm:$0xff]
        %v1825 = vld [vmem:[%s1496 + $0x109] sm:$0xff]
        %v1826 = vld [vmem:[%s1496 + $0x111] sm:$0xff]
        %v1827 = vld [vmem:[%s1496 + $0x121] sm:$0xff]
        %v1828 = vld [vmem:[%s1496 + $0x129] sm:$0xff]
        %v1829 = vld [vmem:[%s1496 + $0x139] sm:$0xff]
        %v1830 = vld [vmem:[%s1496 + $0x141] sm:$0xff]
        %v1831 = vld [vmem:[%s1496 + $0x151] sm:$0xff]
        %v1832 = vld [vmem:[%s1496 + $0x159] sm:$0xff]
        %v1833 = vld [vmem:[%s1496 + $0x169] sm:$0xff]
        %v1834 = vld [vmem:[%s1496 + $0x171] sm:$0xff]
        %v1835 = vpack.c.bf16 %v1804, %v1803
        %v1836 = vpack.c.bf16 %v1806, %v1805
        %v1837 = vpack.c.bf16 %v1808, %v1807
        %v1838 = vpack.c.bf16 %v1810, %v1809
        %v1839 = vpack.c.bf16 %v1812, %v1811
        %v1840 = vpack.c.bf16 %v1814, %v1813
        %v1841 = vpack.c.bf16 %v1816, %v1815
        %v1842 = vpack.c.bf16 %v1818, %v1817
        %v1843 = vpack.c.bf16 %v1820, %v1819
        %v1844 = vpack.c.bf16 %v1822, %v1821
        %v1845 = vpack.c.bf16 %v1824, %v1823
        %v1846 = vpack.c.bf16 %v1826, %v1825
        %v1847 = vpack.c.bf16 %v1828, %v1827
        %v1848 = vpack.c.bf16 %v1830, %v1829
        %v1849 = vpack.c.bf16 %v1832, %v1831
        %v1850 = vpack.c.bf16 %v1834, %v1833
        %s1851 = scalar_lea.vmem %s2, 256
        %v1852 = vld [vmem:[%s1851] sm:$0xf]
        %v1853 = vld [vmem:[%s1851 + $0x4] sm:$0xf]
        %v1854 = vld [vmem:[%s1851 + $0x8] sm:$0xf]
        %v1855 = vld [vmem:[%s1851 + $0xc] sm:$0xf]
        %v1856 = vld [vmem:[%s1851 + $0x10] sm:$0xf]
        %v1857 = vld [vmem:[%s1851 + $0x14] sm:$0xf]
        %v1858 = vld [vmem:[%s1851 + $0x18] sm:$0xf]
        %v1859 = vld [vmem:[%s1851 + $0x1c] sm:$0xf]
        %v1860 = vld [vmem:[%s1851 + $0x20] sm:$0xf]
        %v1861 = vld [vmem:[%s1851 + $0x24] sm:$0xf]
        %v1862 = vld [vmem:[%s1851 + $0x28] sm:$0xf]
        %v1863 = vld [vmem:[%s1851 + $0x2c] sm:$0xf]
        %v1864 = vld [vmem:[%s1851 + $0x30] sm:$0xf]
        %v1865 = vld [vmem:[%s1851 + $0x34] sm:$0xf]
        %v1866 = vld [vmem:[%s1851 + $0x38] sm:$0xf]
        %v1867 = vld [vmem:[%s1851 + $0x3c] sm:$0xf]
        %v1884 = vunpack.c.l.b16 %v1852
        %v1885 = vunpack.c.l.b16 %v1853
        %v1886 = vunpack.c.l.b16 %v1854
        %v1887 = vunpack.c.l.b16 %v1855
        %v1888 = vunpack.c.l.b16 %v1856
        %v1889 = vunpack.c.l.b16 %v1857
        %v1890 = vunpack.c.l.b16 %v1858
        %v1891 = vunpack.c.l.b16 %v1859
        %v1892 = vunpack.c.l.b16 %v1860
        %v1893 = vunpack.c.l.b16 %v1861
        %v1894 = vunpack.c.l.b16 %v1862
        %v1895 = vunpack.c.l.b16 %v1863
        %v1896 = vunpack.c.l.b16 %v1864
        %v1897 = vunpack.c.l.b16 %v1865
        %v1898 = vunpack.c.l.b16 %v1866
        %v1899 = vunpack.c.l.b16 %v1867
        %v1900 = vpack.c.b16 %v1885, %v1884
        %v1901 = vpack.c.b16 %v1887, %v1886
        %v1902 = vpack.c.b16 %v1889, %v1888
        %v1903 = vpack.c.b16 %v1891, %v1890
        %v1904 = vpack.c.b16 %v1893, %v1892
        %v1905 = vpack.c.b16 %v1895, %v1894
        %v1906 = vpack.c.b16 %v1897, %v1896
        %v1907 = vpack.c.b16 %v1899, %v1898
        %1916 = vmatprep.subr.bf16.mxu0 0
        %1917 = vmatpush1.bf16.msra.mxu0 %v1900
        %1918 = vmatprep.subr.bf16.mxu0 0
        %1919 = vmatpush1.bf16.msra.mxu0 %v1901
        %1920 = vmatprep.subr.bf16.mxu0 0
        %1921 = vmatpush1.bf16.msra.mxu0 %v1902
        %1922 = vmatprep.subr.bf16.mxu0 0
        %1923 = vmatpush1.bf16.msra.mxu0 %v1903
        %1924 = vmatprep.subr.bf16.mxu0 0
        %1925 = vmatpush1.bf16.msra.mxu0 %v1904
        %1926 = vmatprep.subr.bf16.mxu0 0
        %1927 = vmatpush1.bf16.msra.mxu0 %v1905
        %1928 = vmatprep.subr.bf16.mxu0 0
        %1929 = vmatpush1.bf16.msra.mxu0 %v1906
        %1930 = vmatprep.subr.bf16.mxu0 0
        %1931 = vmatpush1.bf16.msra.mxu0 %v1907
        %1932 = vmatprep.subr.bf16.mxu0 0
        %1933 = vmatpush1.bf16.msra.mxu0 0
        %1934 = vmatprep.subr.bf16.mxu0 0
        %1935 = vmatpush1.bf16.msra.mxu0 0
        %1936 = vmatprep.subr.bf16.mxu0 0
        %1937 = vmatpush1.bf16.msra.mxu0 0
        %1938 = vmatprep.subr.bf16.mxu0 0
        %1939 = vmatpush1.bf16.msra.mxu0 0
        %1940 = vmatprep.subr.bf16.mxu0 0
        %1941 = vmatpush1.bf16.msra.mxu0 0
        %1942 = vmatprep.subr.bf16.mxu0 0
        %1943 = vmatpush1.bf16.msra.mxu0 0
        %1944 = vmatprep.subr.bf16.mxu0 0
        %1945 = vmatpush1.bf16.msra.mxu0 0
        %1946 = vmatprep.subr.bf16.mxu0 0
        %1947 = vmatpush1.bf16.msra.mxu0 0
        %1948 = vmatprep.mubr.bf16.mxu0 0
        %1949 = vmatmul.mubr.bf16.gmra.mrb[0].mxu0 %v1835
        %v1950 = vpop.f32.mrb[0].mxu0
        %v1951 = vadd.f32 0.0, %v1950
        %v1952 = vpop.f32.mrb[0].mxu0
        %v1953 = vpop.f32.mrb[0].mxu0
        %v1954 = vadd.f32 0.0, %v1953
        %v1955 = vpop.f32.mrb[0].mxu0
        %1956 = vmatprep.mubr.bf16.mxu0 0
        %1957 = vmatmul.mubr.bf16.gmra.mrb[0].mxu0 %v1836
        %v1958 = vpop.f32.mrb[0].mxu0
        %v1959 = vadd.f32 0.0, %v1958
        %v1960 = vpop.f32.mrb[0].mxu0
        %v1961 = vpop.f32.mrb[0].mxu0
        %v1962 = vadd.f32 0.0, %v1961
        %v1963 = vpop.f32.mrb[0].mxu0
        %1964 = vmatprep.mubr.bf16.mxu0 0
        %1965 = vmatmul.mubr.bf16.gmra.mrb[0].mxu0 %v1837
        %v1966 = vpop.f32.mrb[0].mxu0
        %v1967 = vadd.f32 0.0, %v1966
        %v1968 = vpop.f32.mrb[0].mxu0
        %v1969 = vpop.f32.mrb[0].mxu0
        %v1970 = vadd.f32 0.0, %v1969
        %v1971 = vpop.f32.mrb[0].mxu0
        %1972 = vmatprep.mubr.bf16.mxu0 0
        %1973 = vmatmul.mubr.bf16.gmra.mrb[0].mxu0 %v1838
        %v1974 = vpop.f32.mrb[0].mxu0
        %v1975 = vadd.f32 0.0, %v1974
        %v1976 = vpop.f32.mrb[0].mxu0
        %v1977 = vpop.f32.mrb[0].mxu0
        %v1978 = vadd.f32 0.0, %v1977
        %v1979 = vpop.f32.mrb[0].mxu0
        %1980 = vmatprep.mubr.bf16.mxu0 0
        %1981 = vmatmul.mubr.bf16.gmra.mrb[0].mxu0 %v1839
        %v1982 = vpop.f32.mrb[0].mxu0
        %v1983 = vadd.f32 0.0, %v1982
        %v1984 = vpop.f32.mrb[0].mxu0
        %v1985 = vpop.f32.mrb[0].mxu0
        %v1986 = vadd.f32 0.0, %v1985
        %v1987 = vpop.f32.mrb[0].mxu0
        %1988 = vmatprep.mubr.bf16.mxu0 0
        %1989 = vmatmul.mubr.bf16.gmra.mrb[0].mxu0 %v1840
        %v1990 = vpop.f32.mrb[0].mxu0
        %v1991 = vadd.f32 0.0, %v1990
        %v1992 = vpop.f32.mrb[0].mxu0
        %v1993 = vpop.f32.mrb[0].mxu0
        %v1994 = vadd.f32 0.0, %v1993
        %v1995 = vpop.f32.mrb[0].mxu0
        %1996 = vmatprep.mubr.bf16.mxu0 0
        %1997 = vmatmul.mubr.bf16.gmra.mrb[0].mxu0 %v1841
        %v1998 = vpop.f32.mrb[0].mxu0
        %v1999 = vadd.f32 0.0, %v1998
        %v2000 = vpop.f32.mrb[0].mxu0
        %v2001 = vpop.f32.mrb[0].mxu0
        %v2002 = vadd.f32 0.0, %v2001
        %v2003 = vpop.f32.mrb[0].mxu0
        %2004 = vmatprep.mubr.bf16.mxu0 0
        %2005 = vmatmul.mubr.bf16.gmra.mrb[0].mxu0 %v1842
        %v2006 = vpop.f32.mrb[0].mxu0
        %v2007 = vadd.f32 0.0, %v2006
        %v2008 = vpop.f32.mrb[0].mxu0
        %v2009 = vpop.f32.mrb[0].mxu0
        %v2010 = vadd.f32 0.0, %v2009
        %v2011 = vpop.f32.mrb[0].mxu0
        %2012 = vmatprep.mubr.bf16.mxu0 0
        %2013 = vmatmul.mubr.bf16.gmra.mrb[0].mxu0 %v1843
        %v2014 = vpop.f32.mrb[0].mxu0
        %v2015 = vadd.f32 0.0, %v2014
        %v2016 = vpop.f32.mrb[0].mxu0
        %v2017 = vpop.f32.mrb[0].mxu0
        %v2018 = vadd.f32 0.0, %v2017
        %v2019 = vpop.f32.mrb[0].mxu0
        %2020 = vmatprep.mubr.bf16.mxu0 0
        %2021 = vmatmul.mubr.bf16.gmra.mrb[0].mxu0 %v1844
        %v2022 = vpop.f32.mrb[0].mxu0
        %v2023 = vadd.f32 0.0, %v2022
        %v2024 = vpop.f32.mrb[0].mxu0
        %v2025 = vpop.f32.mrb[0].mxu0
        %v2026 = vadd.f32 0.0, %v2025
        %v2027 = vpop.f32.mrb[0].mxu0
        %2028 = vmatprep.mubr.bf16.mxu0 0
        %2029 = vmatmul.mubr.bf16.gmra.mrb[0].mxu0 %v1845
        %v2030 = vpop.f32.mrb[0].mxu0
        %v2031 = vadd.f32 0.0, %v2030
        %v2032 = vpop.f32.mrb[0].mxu0
        %v2033 = vpop.f32.mrb[0].mxu0
        %v2034 = vadd.f32 0.0, %v2033
        %v2035 = vpop.f32.mrb[0].mxu0
        %2036 = vmatprep.mubr.bf16.mxu0 0
        %2037 = vmatmul.mubr.bf16.gmra.mrb[0].mxu0 %v1846
        %v2038 = vpop.f32.mrb[0].mxu0
        %v2039 = vadd.f32 0.0, %v2038
        %v2040 = vpop.f32.mrb[0].mxu0
        %v2041 = vpop.f32.mrb[0].mxu0
        %v2042 = vadd.f32 0.0, %v2041
        %v2043 = vpop.f32.mrb[0].mxu0
        %2044 = vmatprep.mubr.bf16.mxu0 0
        %2045 = vmatmul.mubr.bf16.gmra.mrb[0].mxu0 %v1847
        %v2046 = vpop.f32.mrb[0].mxu0
        %v2047 = vadd.f32 0.0, %v2046
        %v2048 = vpop.f32.mrb[0].mxu0
        %v2049 = vpop.f32.mrb[0].mxu0
        %v2050 = vadd.f32 0.0, %v2049
        %v2051 = vpop.f32.mrb[0].mxu0
        %2052 = vmatprep.mubr.bf16.mxu0 0
        %2053 = vmatmul.mubr.bf16.gmra.mrb[0].mxu0 %v1848
        %v2054 = vpop.f32.mrb[0].mxu0
        %v2055 = vadd.f32 0.0, %v2054
        %v2056 = vpop.f32.mrb[0].mxu0
        %v2057 = vpop.f32.mrb[0].mxu0
        %v2058 = vadd.f32 0.0, %v2057
        %v2059 = vpop.f32.mrb[0].mxu0
        %2060 = vmatprep.mubr.bf16.mxu0 0
        %2061 = vmatmul.mubr.bf16.gmra.mrb[0].mxu0 %v1849
        %v2062 = vpop.f32.mrb[0].mxu0
        %v2063 = vadd.f32 0.0, %v2062
        %v2064 = vpop.f32.mrb[0].mxu0
        %v2065 = vpop.f32.mrb[0].mxu0
        %v2066 = vadd.f32 0.0, %v2065
        %v2067 = vpop.f32.mrb[0].mxu0
        %2068 = vmatprep.mubr.bf16.mxu0 0
        %2069 = vmatmul.mubr.bf16.gmra.mrb[0].mxu0 %v1850
        %v2070 = vpop.f32.mrb[0].mxu0
        %v2071 = vadd.f32 0.0, %v2070
        %v2072 = vpop.f32.mrb[0].mxu0
        %v2073 = vpop.f32.mrb[0].mxu0
        %v2074 = vadd.f32 0.0, %v2073
        %v2075 = vpop.f32.mrb[0].mxu0
        %2076 = vdwg.mxu0
        %v2077 = vadd.f32 %v1771, %v1951
        %v2078 = vadd.f32 %v1772, %v1954
        %v2079 = vadd.f32 %v1773, %v1959
        %v2080 = vadd.f32 %v1774, %v1962
        %v2081 = vadd.f32 %v1775, %v1967
        %v2082 = vadd.f32 %v1776, %v1970
        %v2083 = vadd.f32 %v1777, %v1975
        %v2084 = vadd.f32 %v1778, %v1978
        %v2085 = vadd.f32 %v1779, %v1983
        %v2086 = vadd.f32 %v1780, %v1986
        %v2087 = vadd.f32 %v1781, %v1991
        %v2088 = vadd.f32 %v1782, %v1994
        %v2089 = vadd.f32 %v1783, %v1999
        %v2090 = vadd.f32 %v1784, %v2002
        %v2091 = vadd.f32 %v1785, %v2007
        %v2092 = vadd.f32 %v1786, %v2010
        %v2093 = vadd.f32 %v1787, %v2015
        %v2094 = vadd.f32 %v1788, %v2018
        %v2095 = vadd.f32 %v1789, %v2023
        %v2096 = vadd.f32 %v1790, %v2026
        %v2097 = vadd.f32 %v1791, %v2031
        %v2098 = vadd.f32 %v1792, %v2034
        %v2099 = vadd.f32 %v1793, %v2039
        %v2100 = vadd.f32 %v1794, %v2042
        %v2101 = vadd.f32 %v1795, %v2047
        %v2102 = vadd.f32 %v1796, %v2050
        %v2103 = vadd.f32 %v1797, %v2055
        %v2104 = vadd.f32 %v1798, %v2058
        %v2105 = vadd.f32 %v1799, %v2063
        %v2106 = vadd.f32 %v1800, %v2066
        %v2107 = vadd.f32 %v1801, %v2071
        %v2108 = vadd.f32 %v1802, %v2074
        %v2109 = vld [vmem:[%s1496 + $0x2] sm:$0xff]
        %v2110 = vld [vmem:[%s1496 + $0xa] sm:$0xff]
        %v2111 = vld [vmem:[%s1496 + $0x1a] sm:$0xff]
        %v2112 = vld [vmem:[%s1496 + $0x22] sm:$0xff]
        %v2113 = vld [vmem:[%s1496 + $0x32] sm:$0xff]
        %v2114 = vld [vmem:[%s1496 + $0x3a] sm:$0xff]
        %v2115 = vld [vmem:[%s1496 + $0x4a] sm:$0xff]
        %v2116 = vld [vmem:[%s1496 + $0x52] sm:$0xff]
        %v2117 = vld [vmem:[%s1496 + $0x62] sm:$0xff]
        %v2118 = vld [vmem:[%s1496 + $0x6a] sm:$0xff]
        %v2119 = vld [vmem:[%s1496 + $0x7a] sm:$0xff]
        %v2120 = vld [vmem:[%s1496 + $0x82] sm:$0xff]
        %v2121 = vld [vmem:[%s1496 + $0x92] sm:$0xff]
        %v2122 = vld [vmem:[%s1496 + $0x9a] sm:$0xff]
        %v2123 = vld [vmem:[%s1496 + $0xaa] sm:$0xff]
        %v2124 = vld [vmem:[%s1496 + $0xb2] sm:$0xff]
        %v2125 = vld [vmem:[%s1496 + $0xc2] sm:$0xff]
        %v2126 = vld [vmem:[%s1496 + $0xca] sm:$0xff]
        %v2127 = vld [vmem:[%s1496 + $0xda] sm:$0xff]
        %v2128 = vld [vmem:[%s1496 + $0xe2] sm:$0xff]
        %v2129 = vld [vmem:[%s1496 + $0xf2] sm:$0xff]
        %v2130 = vld [vmem:[%s1496 + $0xfa] sm:$0xff]
        %v2131 = vld [vmem:[%s1496 + $0x10a] sm:$0xff]
        %v2132 = vld [vmem:[%s1496 + $0x112] sm:$0xff]
        %v2133 = vld [vmem:[%s1496 + $0x122] sm:$0xff]
        %v2134 = vld [vmem:[%s1496 + $0x12a] sm:$0xff]
        %v2135 = vld [vmem:[%s1496 + $0x13a] sm:$0xff]
        %v2136 = vld [vmem:[%s1496 + $0x142] sm:$0xff]
        %v2137 = vld [vmem:[%s1496 + $0x152] sm:$0xff]
        %v2138 = vld [vmem:[%s1496 + $0x15a] sm:$0xff]
        %v2139 = vld [vmem:[%s1496 + $0x16a] sm:$0xff]
        %v2140 = vld [vmem:[%s1496 + $0x172] sm:$0xff]
        %v2141 = vpack.c.bf16 %v2110, %v2109
        %v2142 = vpack.c.bf16 %v2112, %v2111
        %v2143 = vpack.c.bf16 %v2114, %v2113
        %v2144 = vpack.c.bf16 %v2116, %v2115
        %v2145 = vpack.c.bf16 %v2118, %v2117
        %v2146 = vpack.c.bf16 %v2120, %v2119
        %v2147 = vpack.c.bf16 %v2122, %v2121
        %v2148 = vpack.c.bf16 %v2124, %v2123
        %v2149 = vpack.c.bf16 %v2126, %v2125
        %v2150 = vpack.c.bf16 %v2128, %v2127
        %v2151 = vpack.c.bf16 %v2130, %v2129
        %v2152 = vpack.c.bf16 %v2132, %v2131
        %v2153 = vpack.c.bf16 %v2134, %v2133
        %v2154 = vpack.c.bf16 %v2136, %v2135
        %v2155 = vpack.c.bf16 %v2138, %v2137
        %v2156 = vpack.c.bf16 %v2140, %v2139
        %s2157 = scalar_lea.vmem %s2, 320
        %v2158 = vld [vmem:[%s2157] sm:$0xf]
        %v2159 = vld [vmem:[%s2157 + $0x4] sm:$0xf]
        %v2160 = vld [vmem:[%s2157 + $0x8] sm:$0xf]
        %v2161 = vld [vmem:[%s2157 + $0xc] sm:$0xf]
        %v2162 = vld [vmem:[%s2157 + $0x10] sm:$0xf]
        %v2163 = vld [vmem:[%s2157 + $0x14] sm:$0xf]
        %v2164 = vld [vmem:[%s2157 + $0x18] sm:$0xf]
        %v2165 = vld [vmem:[%s2157 + $0x1c] sm:$0xf]
        %v2166 = vld [vmem:[%s2157 + $0x20] sm:$0xf]
        %v2167 = vld [vmem:[%s2157 + $0x24] sm:$0xf]
        %v2168 = vld [vmem:[%s2157 + $0x28] sm:$0xf]
        %v2169 = vld [vmem:[%s2157 + $0x2c] sm:$0xf]
        %v2170 = vld [vmem:[%s2157 + $0x30] sm:$0xf]
        %v2171 = vld [vmem:[%s2157 + $0x34] sm:$0xf]
        %v2172 = vld [vmem:[%s2157 + $0x38] sm:$0xf]
        %v2173 = vld [vmem:[%s2157 + $0x3c] sm:$0xf]
        %v2190 = vunpack.c.l.b16 %v2158
        %v2191 = vunpack.c.l.b16 %v2159
        %v2192 = vunpack.c.l.b16 %v2160
        %v2193 = vunpack.c.l.b16 %v2161
        %v2194 = vunpack.c.l.b16 %v2162
        %v2195 = vunpack.c.l.b16 %v2163
        %v2196 = vunpack.c.l.b16 %v2164
        %v2197 = vunpack.c.l.b16 %v2165
        %v2198 = vunpack.c.l.b16 %v2166
        %v2199 = vunpack.c.l.b16 %v2167
        %v2200 = vunpack.c.l.b16 %v2168
        %v2201 = vunpack.c.l.b16 %v2169
        %v2202 = vunpack.c.l.b16 %v2170
        %v2203 = vunpack.c.l.b16 %v2171
        %v2204 = vunpack.c.l.b16 %v2172
        %v2205 = vunpack.c.l.b16 %v2173
        %v2206 = vpack.c.b16 %v2191, %v2190
        %v2207 = vpack.c.b16 %v2193, %v2192
        %v2208 = vpack.c.b16 %v2195, %v2194
        %v2209 = vpack.c.b16 %v2197, %v2196
        %v2210 = vpack.c.b16 %v2199, %v2198
        %v2211 = vpack.c.b16 %v2201, %v2200
        %v2212 = vpack.c.b16 %v2203, %v2202
        %v2213 = vpack.c.b16 %v2205, %v2204
        %2222 = vmatprep.subr.bf16.mxu0 0
        %2223 = vmatpush1.bf16.msra.mxu0 %v2206
        %2224 = vmatprep.subr.bf16.mxu0 0
        %2225 = vmatpush1.bf16.msra.mxu0 %v2207
        %2226 = vmatprep.subr.bf16.mxu0 0
        %2227 = vmatpush1.bf16.msra.mxu0 %v2208
        %2228 = vmatprep.subr.bf16.mxu0 0
        %2229 = vmatpush1.bf16.msra.mxu0 %v2209
        %2230 = vmatprep.subr.bf16.mxu0 0
        %2231 = vmatpush1.bf16.msra.mxu0 %v2210
        %2232 = vmatprep.subr.bf16.mxu0 0
        %2233 = vmatpush1.bf16.msra.mxu0 %v2211
        %2234 = vmatprep.subr.bf16.mxu0 0
        %2235 = vmatpush1.bf16.msra.mxu0 %v2212
        %2236 = vmatprep.subr.bf16.mxu0 0
        %2237 = vmatpush1.bf16.msra.mxu0 %v2213
        %2238 = vmatprep.subr.bf16.mxu0 0
        %2239 = vmatpush1.bf16.msra.mxu0 0
        %2240 = vmatprep.subr.bf16.mxu0 0
        %2241 = vmatpush1.bf16.msra.mxu0 0
        %2242 = vmatprep.subr.bf16.mxu0 0
        %2243 = vmatpush1.bf16.msra.mxu0 0
        %2244 = vmatprep.subr.bf16.mxu0 0
        %2245 = vmatpush1.bf16.msra.mxu0 0
        %2246 = vmatprep.subr.bf16.mxu0 0
        %2247 = vmatpush1.bf16.msra.mxu0 0
        %2248 = vmatprep.subr.bf16.mxu0 0
        %2249 = vmatpush1.bf16.msra.mxu0 0
        %2250 = vmatprep.subr.bf16.mxu0 0
        %2251 = vmatpush1.bf16.msra.mxu0 0
        %2252 = vmatprep.subr.bf16.mxu0 0
        %2253 = vmatpush1.bf16.msra.mxu0 0
        %2254 = vmatprep.mubr.bf16.mxu0 0
        %2255 = vmatmul.mubr.bf16.gmra.mrb[0].mxu0 %v2141
        %v2256 = vpop.f32.mrb[0].mxu0
        %v2257 = vadd.f32 0.0, %v2256
        %v2258 = vpop.f32.mrb[0].mxu0
        %v2259 = vpop.f32.mrb[0].mxu0
        %v2260 = vadd.f32 0.0, %v2259
        %v2261 = vpop.f32.mrb[0].mxu0
        %2262 = vmatprep.mubr.bf16.mxu0 0
        %2263 = vmatmul.mubr.bf16.gmra.mrb[0].mxu0 %v2142
        %v2264 = vpop.f32.mrb[0].mxu0
        %v2265 = vadd.f32 0.0, %v2264
        %v2266 = vpop.f32.mrb[0].mxu0
        %v2267 = vpop.f32.mrb[0].mxu0
        %v2268 = vadd.f32 0.0, %v2267
        %v2269 = vpop.f32.mrb[0].mxu0
        %2270 = vmatprep.mubr.bf16.mxu0 0
        %2271 = vmatmul.mubr.bf16.gmra.mrb[0].mxu0 %v2143
        %v2272 = vpop.f32.mrb[0].mxu0
        %v2273 = vadd.f32 0.0, %v2272
        %v2274 = vpop.f32.mrb[0].mxu0
        %v2275 = vpop.f32.mrb[0].mxu0
        %v2276 = vadd.f32 0.0, %v2275
        %v2277 = vpop.f32.mrb[0].mxu0
        %2278 = vmatprep.mubr.bf16.mxu0 0
        %2279 = vmatmul.mubr.bf16.gmra.mrb[0].mxu0 %v2144
        %v2280 = vpop.f32.mrb[0].mxu0
        %v2281 = vadd.f32 0.0, %v2280
        %v2282 = vpop.f32.mrb[0].mxu0
        %v2283 = vpop.f32.mrb[0].mxu0
        %v2284 = vadd.f32 0.0, %v2283
        %v2285 = vpop.f32.mrb[0].mxu0
        %2286 = vmatprep.mubr.bf16.mxu0 0
        %2287 = vmatmul.mubr.bf16.gmra.mrb[0].mxu0 %v2145
        %v2288 = vpop.f32.mrb[0].mxu0
        %v2289 = vadd.f32 0.0, %v2288
        %v2290 = vpop.f32.mrb[0].mxu0
        %v2291 = vpop.f32.mrb[0].mxu0
        %v2292 = vadd.f32 0.0, %v2291
        %v2293 = vpop.f32.mrb[0].mxu0
        %2294 = vmatprep.mubr.bf16.mxu0 0
        %2295 = vmatmul.mubr.bf16.gmra.mrb[0].mxu0 %v2146
        %v2296 = vpop.f32.mrb[0].mxu0
        %v2297 = vadd.f32 0.0, %v2296
        %v2298 = vpop.f32.mrb[0].mxu0
        %v2299 = vpop.f32.mrb[0].mxu0
        %v2300 = vadd.f32 0.0, %v2299
        %v2301 = vpop.f32.mrb[0].mxu0
        %2302 = vmatprep.mubr.bf16.mxu0 0
        %2303 = vmatmul.mubr.bf16.gmra.mrb[0].mxu0 %v2147
        %v2304 = vpop.f32.mrb[0].mxu0
        %v2305 = vadd.f32 0.0, %v2304
        %v2306 = vpop.f32.mrb[0].mxu0
        %v2307 = vpop.f32.mrb[0].mxu0
        %v2308 = vadd.f32 0.0, %v2307
        %v2309 = vpop.f32.mrb[0].mxu0
        %2310 = vmatprep.mubr.bf16.mxu0 0
        %2311 = vmatmul.mubr.bf16.gmra.mrb[0].mxu0 %v2148
        %v2312 = vpop.f32.mrb[0].mxu0
        %v2313 = vadd.f32 0.0, %v2312
        %v2314 = vpop.f32.mrb[0].mxu0
        %v2315 = vpop.f32.mrb[0].mxu0
        %v2316 = vadd.f32 0.0, %v2315
        %v2317 = vpop.f32.mrb[0].mxu0
        %2318 = vmatprep.mubr.bf16.mxu0 0
        %2319 = vmatmul.mubr.bf16.gmra.mrb[0].mxu0 %v2149
        %v2320 = vpop.f32.mrb[0].mxu0
        %v2321 = vadd.f32 0.0, %v2320
        %v2322 = vpop.f32.mrb[0].mxu0
        %v2323 = vpop.f32.mrb[0].mxu0
        %v2324 = vadd.f32 0.0, %v2323
        %v2325 = vpop.f32.mrb[0].mxu0
        %2326 = vmatprep.mubr.bf16.mxu0 0
        %2327 = vmatmul.mubr.bf16.gmra.mrb[0].mxu0 %v2150
        %v2328 = vpop.f32.mrb[0].mxu0
        %v2329 = vadd.f32 0.0, %v2328
        %v2330 = vpop.f32.mrb[0].mxu0
        %v2331 = vpop.f32.mrb[0].mxu0
        %v2332 = vadd.f32 0.0, %v2331
        %v2333 = vpop.f32.mrb[0].mxu0
        %2334 = vmatprep.mubr.bf16.mxu0 0
        %2335 = vmatmul.mubr.bf16.gmra.mrb[0].mxu0 %v2151
        %v2336 = vpop.f32.mrb[0].mxu0
        %v2337 = vadd.f32 0.0, %v2336
        %v2338 = vpop.f32.mrb[0].mxu0
        %v2339 = vpop.f32.mrb[0].mxu0
        %v2340 = vadd.f32 0.0, %v2339
        %v2341 = vpop.f32.mrb[0].mxu0
        %2342 = vmatprep.mubr.bf16.mxu0 0
        %2343 = vmatmul.mubr.bf16.gmra.mrb[0].mxu0 %v2152
        %v2344 = vpop.f32.mrb[0].mxu0
        %v2345 = vadd.f32 0.0, %v2344
        %v2346 = vpop.f32.mrb[0].mxu0
        %v2347 = vpop.f32.mrb[0].mxu0
        %v2348 = vadd.f32 0.0, %v2347
        %v2349 = vpop.f32.mrb[0].mxu0
        %2350 = vmatprep.mubr.bf16.mxu0 0
        %2351 = vmatmul.mubr.bf16.gmra.mrb[0].mxu0 %v2153
        %v2352 = vpop.f32.mrb[0].mxu0
        %v2353 = vadd.f32 0.0, %v2352
        %v2354 = vpop.f32.mrb[0].mxu0
        %v2355 = vpop.f32.mrb[0].mxu0
        %v2356 = vadd.f32 0.0, %v2355
        %v2357 = vpop.f32.mrb[0].mxu0
        %2358 = vmatprep.mubr.bf16.mxu0 0
        %2359 = vmatmul.mubr.bf16.gmra.mrb[0].mxu0 %v2154
        %v2360 = vpop.f32.mrb[0].mxu0
        %v2361 = vadd.f32 0.0, %v2360
        %v2362 = vpop.f32.mrb[0].mxu0
        %v2363 = vpop.f32.mrb[0].mxu0
        %v2364 = vadd.f32 0.0, %v2363
        %v2365 = vpop.f32.mrb[0].mxu0
        %2366 = vmatprep.mubr.bf16.mxu0 0
        %2367 = vmatmul.mubr.bf16.gmra.mrb[0].mxu0 %v2155
        %v2368 = vpop.f32.mrb[0].mxu0
        %v2369 = vadd.f32 0.0, %v2368
        %v2370 = vpop.f32.mrb[0].mxu0
        %v2371 = vpop.f32.mrb[0].mxu0
        %v2372 = vadd.f32 0.0, %v2371
        %v2373 = vpop.f32.mrb[0].mxu0
        %2374 = vmatprep.mubr.bf16.mxu0 0
        %2375 = vmatmul.mubr.bf16.gmra.mrb[0].mxu0 %v2156
        %v2376 = vpop.f32.mrb[0].mxu0
        %v2377 = vadd.f32 0.0, %v2376
        %v2378 = vpop.f32.mrb[0].mxu0
        %v2379 = vpop.f32.mrb[0].mxu0
        %v2380 = vadd.f32 0.0, %v2379
        %v2381 = vpop.f32.mrb[0].mxu0
        %2382 = vdwg.mxu0
        %v2383 = vadd.f32 %v2077, %v2257
        %v2384 = vadd.f32 %v2078, %v2260
        %v2385 = vadd.f32 %v2079, %v2265
        %v2386 = vadd.f32 %v2080, %v2268
        %v2387 = vadd.f32 %v2081, %v2273
        %v2388 = vadd.f32 %v2082, %v2276
        %v2389 = vadd.f32 %v2083, %v2281
        %v2390 = vadd.f32 %v2084, %v2284
        %v2391 = vadd.f32 %v2085, %v2289
        %v2392 = vadd.f32 %v2086, %v2292
        %v2393 = vadd.f32 %v2087, %v2297
        %v2394 = vadd.f32 %v2088, %v2300
        %v2395 = vadd.f32 %v2089, %v2305
        %v2396 = vadd.f32 %v2090, %v2308
        %v2397 = vadd.f32 %v2091, %v2313
        %v2398 = vadd.f32 %v2092, %v2316
        %v2399 = vadd.f32 %v2093, %v2321
        %v2400 = vadd.f32 %v2094, %v2324
        %v2401 = vadd.f32 %v2095, %v2329
        %v2402 = vadd.f32 %v2096, %v2332
        %v2403 = vadd.f32 %v2097, %v2337
        %v2404 = vadd.f32 %v2098, %v2340
        %v2405 = vadd.f32 %v2099, %v2345
        %v2406 = vadd.f32 %v2100, %v2348
        %v2407 = vadd.f32 %v2101, %v2353
        %v2408 = vadd.f32 %v2102, %v2356
        %v2409 = vadd.f32 %v2103, %v2361
        %v2410 = vadd.f32 %v2104, %v2364
        %v2411 = vadd.f32 %v2105, %v2369
        %v2412 = vadd.f32 %v2106, %v2372
        %v2413 = vadd.f32 %v2107, %v2377
        %v2414 = vadd.f32 %v2108, %v2380
        %s2415 = scalar_lea.vmem [#allocation2], 48
        %v2416 = vld [vmem:[%s2415] sm:$0xff]
        %v2417 = vld [vmem:[%s2415 + $0x8] sm:$0xff]
        %v2418 = vld [vmem:[%s2415 + $0x18] sm:$0xff]
        %v2419 = vld [vmem:[%s2415 + $0x20] sm:$0xff]
        %v2420 = vld [vmem:[%s2415 + $0x30] sm:$0xff]
        %v2421 = vld [vmem:[%s2415 + $0x38] sm:$0xff]
        %v2422 = vld [vmem:[%s2415 + $0x48] sm:$0xff]
        %v2423 = vld [vmem:[%s2415 + $0x50] sm:$0xff]
        %v2424 = vld [vmem:[%s2415 + $0x60] sm:$0xff]
        %v2425 = vld [vmem:[%s2415 + $0x68] sm:$0xff]
        %v2426 = vld [vmem:[%s2415 + $0x78] sm:$0xff]
        %v2427 = vld [vmem:[%s2415 + $0x80] sm:$0xff]
        %v2428 = vld [vmem:[%s2415 + $0x90] sm:$0xff]
        %v2429 = vld [vmem:[%s2415 + $0x98] sm:$0xff]
        %v2430 = vld [vmem:[%s2415 + $0xa8] sm:$0xff]
        %v2431 = vld [vmem:[%s2415 + $0xb0] sm:$0xff]
        %v2432 = vld [vmem:[%s2415 + $0xc0] sm:$0xff]
        %v2433 = vld [vmem:[%s2415 + $0xc8] sm:$0xff]
        %v2434 = vld [vmem:[%s2415 + $0xd8] sm:$0xff]
        %v2435 = vld [vmem:[%s2415 + $0xe0] sm:$0xff]
        %v2436 = vld [vmem:[%s2415 + $0xf0] sm:$0xff]
        %v2437 = vld [vmem:[%s2415 + $0xf8] sm:$0xff]
        %v2438 = vld [vmem:[%s2415 + $0x108] sm:$0xff]
        %v2439 = vld [vmem:[%s2415 + $0x110] sm:$0xff]
        %v2440 = vld [vmem:[%s2415 + $0x120] sm:$0xff]
        %v2441 = vld [vmem:[%s2415 + $0x128] sm:$0xff]
        %v2442 = vld [vmem:[%s2415 + $0x138] sm:$0xff]
        %v2443 = vld [vmem:[%s2415 + $0x140] sm:$0xff]
        %v2444 = vld [vmem:[%s2415 + $0x150] sm:$0xff]
        %v2445 = vld [vmem:[%s2415 + $0x158] sm:$0xff]
        %v2446 = vld [vmem:[%s2415 + $0x168] sm:$0xff]
        %v2447 = vld [vmem:[%s2415 + $0x170] sm:$0xff]
        %v2448 = vpack.c.bf16 %v2417, %v2416
        %v2449 = vpack.c.bf16 %v2419, %v2418
        %v2450 = vpack.c.bf16 %v2421, %v2420
        %v2451 = vpack.c.bf16 %v2423, %v2422
        %v2452 = vpack.c.bf16 %v2425, %v2424
        %v2453 = vpack.c.bf16 %v2427, %v2426
        %v2454 = vpack.c.bf16 %v2429, %v2428
        %v2455 = vpack.c.bf16 %v2431, %v2430
        %v2456 = vpack.c.bf16 %v2433, %v2432
        %v2457 = vpack.c.bf16 %v2435, %v2434
        %v2458 = vpack.c.bf16 %v2437, %v2436
        %v2459 = vpack.c.bf16 %v2439, %v2438
        %v2460 = vpack.c.bf16 %v2441, %v2440
        %v2461 = vpack.c.bf16 %v2443, %v2442
        %v2462 = vpack.c.bf16 %v2445, %v2444
        %v2463 = vpack.c.bf16 %v2447, %v2446
        %s2464 = scalar_lea.vmem %s2, 384
        %v2465 = vld [vmem:[%s2464] sm:$0xf]
        %v2466 = vld [vmem:[%s2464 + $0x4] sm:$0xf]
        %v2467 = vld [vmem:[%s2464 + $0x8] sm:$0xf]
        %v2468 = vld [vmem:[%s2464 + $0xc] sm:$0xf]
        %v2469 = vld [vmem:[%s2464 + $0x10] sm:$0xf]
        %v2470 = vld [vmem:[%s2464 + $0x14] sm:$0xf]
        %v2471 = vld [vmem:[%s2464 + $0x18] sm:$0xf]
        %v2472 = vld [vmem:[%s2464 + $0x1c] sm:$0xf]
        %v2473 = vld [vmem:[%s2464 + $0x20] sm:$0xf]
        %v2474 = vld [vmem:[%s2464 + $0x24] sm:$0xf]
        %v2475 = vld [vmem:[%s2464 + $0x28] sm:$0xf]
        %v2476 = vld [vmem:[%s2464 + $0x2c] sm:$0xf]
        %v2477 = vld [vmem:[%s2464 + $0x30] sm:$0xf]
        %v2478 = vld [vmem:[%s2464 + $0x34] sm:$0xf]
        %v2479 = vld [vmem:[%s2464 + $0x38] sm:$0xf]
        %v2480 = vld [vmem:[%s2464 + $0x3c] sm:$0xf]
        %v2497 = vunpack.c.l.b16 %v2465
        %v2498 = vunpack.c.l.b16 %v2466
        %v2499 = vunpack.c.l.b16 %v2467
        %v2500 = vunpack.c.l.b16 %v2468
        %v2501 = vunpack.c.l.b16 %v2469
        %v2502 = vunpack.c.l.b16 %v2470
        %v2503 = vunpack.c.l.b16 %v2471
        %v2504 = vunpack.c.l.b16 %v2472
        %v2505 = vunpack.c.l.b16 %v2473
        %v2506 = vunpack.c.l.b16 %v2474
        %v2507 = vunpack.c.l.b16 %v2475
        %v2508 = vunpack.c.l.b16 %v2476
        %v2509 = vunpack.c.l.b16 %v2477
        %v2510 = vunpack.c.l.b16 %v2478
        %v2511 = vunpack.c.l.b16 %v2479
        %v2512 = vunpack.c.l.b16 %v2480
        %v2513 = vpack.c.b16 %v2498, %v2497
        %v2514 = vpack.c.b16 %v2500, %v2499
        %v2515 = vpack.c.b16 %v2502, %v2501
        %v2516 = vpack.c.b16 %v2504, %v2503
        %v2517 = vpack.c.b16 %v2506, %v2505
        %v2518 = vpack.c.b16 %v2508, %v2507
        %v2519 = vpack.c.b16 %v2510, %v2509
        %v2520 = vpack.c.b16 %v2512, %v2511
        %2529 = vmatprep.subr.bf16.mxu0 0
        %2530 = vmatpush1.bf16.msra.mxu0 %v2513
        %2531 = vmatprep.subr.bf16.mxu0 0
        %2532 = vmatpush1.bf16.msra.mxu0 %v2514
        %2533 = vmatprep.subr.bf16.mxu0 0
        %2534 = vmatpush1.bf16.msra.mxu0 %v2515
        %2535 = vmatprep.subr.bf16.mxu0 0
        %2536 = vmatpush1.bf16.msra.mxu0 %v2516
        %2537 = vmatprep.subr.bf16.mxu0 0
        %2538 = vmatpush1.bf16.msra.mxu0 %v2517
        %2539 = vmatprep.subr.bf16.mxu0 0
        %2540 = vmatpush1.bf16.msra.mxu0 %v2518
        %2541 = vmatprep.subr.bf16.mxu0 0
        %2542 = vmatpush1.bf16.msra.mxu0 %v2519
        %2543 = vmatprep.subr.bf16.mxu0 0
        %2544 = vmatpush1.bf16.msra.mxu0 %v2520
        %2545 = vmatprep.subr.bf16.mxu0 0
        %2546 = vmatpush1.bf16.msra.mxu0 0
        %2547 = vmatprep.subr.bf16.mxu0 0
        %2548 = vmatpush1.bf16.msra.mxu0 0
        %2549 = vmatprep.subr.bf16.mxu0 0
        %2550 = vmatpush1.bf16.msra.mxu0 0
        %2551 = vmatprep.subr.bf16.mxu0 0
        %2552 = vmatpush1.bf16.msra.mxu0 0
        %2553 = vmatprep.subr.bf16.mxu0 0
        %2554 = vmatpush1.bf16.msra.mxu0 0
        %2555 = vmatprep.subr.bf16.mxu0 0
        %2556 = vmatpush1.bf16.msra.mxu0 0
        %2557 = vmatprep.subr.bf16.mxu0 0
        %2558 = vmatpush1.bf16.msra.mxu0 0
        %2559 = vmatprep.subr.bf16.mxu0 0
        %2560 = vmatpush1.bf16.msra.mxu0 0
        %2561 = vmatprep.mubr.bf16.mxu0 0
        %2562 = vmatmul.mubr.bf16.gmra.mrb[0].mxu0 %v2448
        %v2563 = vpop.f32.mrb[0].mxu0
        %v2564 = vadd.f32 0.0, %v2563
        %v2565 = vpop.f32.mrb[0].mxu0
        %v2566 = vpop.f32.mrb[0].mxu0
        %v2567 = vadd.f32 0.0, %v2566
        %v2568 = vpop.f32.mrb[0].mxu0
        %2569 = vmatprep.mubr.bf16.mxu0 0
        %2570 = vmatmul.mubr.bf16.gmra.mrb[0].mxu0 %v2449
        %v2571 = vpop.f32.mrb[0].mxu0
        %v2572 = vadd.f32 0.0, %v2571
        %v2573 = vpop.f32.mrb[0].mxu0
        %v2574 = vpop.f32.mrb[0].mxu0
        %v2575 = vadd.f32 0.0, %v2574
        %v2576 = vpop.f32.mrb[0].mxu0
        %2577 = vmatprep.mubr.bf16.mxu0 0
        %2578 = vmatmul.mubr.bf16.gmra.mrb[0].mxu0 %v2450
        %v2579 = vpop.f32.mrb[0].mxu0
        %v2580 = vadd.f32 0.0, %v2579
        %v2581 = vpop.f32.mrb[0].mxu0
        %v2582 = vpop.f32.mrb[0].mxu0
        %v2583 = vadd.f32 0.0, %v2582
        %v2584 = vpop.f32.mrb[0].mxu0
        %2585 = vmatprep.mubr.bf16.mxu0 0
        %2586 = vmatmul.mubr.bf16.gmra.mrb[0].mxu0 %v2451
        %v2587 = vpop.f32.mrb[0].mxu0
        %v2588 = vadd.f32 0.0, %v2587
        %v2589 = vpop.f32.mrb[0].mxu0
        %v2590 = vpop.f32.mrb[0].mxu0
        %v2591 = vadd.f32 0.0, %v2590
        %v2592 = vpop.f32.mrb[0].mxu0
        %2593 = vmatprep.mubr.bf16.mxu0 0
        %2594 = vmatmul.mubr.bf16.gmra.mrb[0].mxu0 %v2452
        %v2595 = vpop.f32.mrb[0].mxu0
        %v2596 = vadd.f32 0.0, %v2595
        %v2597 = vpop.f32.mrb[0].mxu0
        %v2598 = vpop.f32.mrb[0].mxu0
        %v2599 = vadd.f32 0.0, %v2598
        %v2600 = vpop.f32.mrb[0].mxu0
        %2601 = vmatprep.mubr.bf16.mxu0 0
        %2602 = vmatmul.mubr.bf16.gmra.mrb[0].mxu0 %v2453
        %v2603 = vpop.f32.mrb[0].mxu0
        %v2604 = vadd.f32 0.0, %v2603
        %v2605 = vpop.f32.mrb[0].mxu0
        %v2606 = vpop.f32.mrb[0].mxu0
        %v2607 = vadd.f32 0.0, %v2606
        %v2608 = vpop.f32.mrb[0].mxu0
        %2609 = vmatprep.mubr.bf16.mxu0 0
        %2610 = vmatmul.mubr.bf16.gmra.mrb[0].mxu0 %v2454
        %v2611 = vpop.f32.mrb[0].mxu0
        %v2612 = vadd.f32 0.0, %v2611
        %v2613 = vpop.f32.mrb[0].mxu0
        %v2614 = vpop.f32.mrb[0].mxu0
        %v2615 = vadd.f32 0.0, %v2614
        %v2616 = vpop.f32.mrb[0].mxu0
        %2617 = vmatprep.mubr.bf16.mxu0 0
        %2618 = vmatmul.mubr.bf16.gmra.mrb[0].mxu0 %v2455
        %v2619 = vpop.f32.mrb[0].mxu0
        %v2620 = vadd.f32 0.0, %v2619
        %v2621 = vpop.f32.mrb[0].mxu0
        %v2622 = vpop.f32.mrb[0].mxu0
        %v2623 = vadd.f32 0.0, %v2622
        %v2624 = vpop.f32.mrb[0].mxu0
        %2625 = vmatprep.mubr.bf16.mxu0 0
        %2626 = vmatmul.mubr.bf16.gmra.mrb[0].mxu0 %v2456
        %v2627 = vpop.f32.mrb[0].mxu0
        %v2628 = vadd.f32 0.0, %v2627
        %v2629 = vpop.f32.mrb[0].mxu0
        %v2630 = vpop.f32.mrb[0].mxu0
        %v2631 = vadd.f32 0.0, %v2630
        %v2632 = vpop.f32.mrb[0].mxu0
        %2633 = vmatprep.mubr.bf16.mxu0 0
        %2634 = vmatmul.mubr.bf16.gmra.mrb[0].mxu0 %v2457
        %v2635 = vpop.f32.mrb[0].mxu0
        %v2636 = vadd.f32 0.0, %v2635
        %v2637 = vpop.f32.mrb[0].mxu0
        %v2638 = vpop.f32.mrb[0].mxu0
        %v2639 = vadd.f32 0.0, %v2638
        %v2640 = vpop.f32.mrb[0].mxu0
        %2641 = vmatprep.mubr.bf16.mxu0 0
        %2642 = vmatmul.mubr.bf16.gmra.mrb[0].mxu0 %v2458
        %v2643 = vpop.f32.mrb[0].mxu0
        %v2644 = vadd.f32 0.0, %v2643
        %v2645 = vpop.f32.mrb[0].mxu0
        %v2646 = vpop.f32.mrb[0].mxu0
        %v2647 = vadd.f32 0.0, %v2646
        %v2648 = vpop.f32.mrb[0].mxu0
        %2649 = vmatprep.mubr.bf16.mxu0 0
        %2650 = vmatmul.mubr.bf16.gmra.mrb[0].mxu0 %v2459
        %v2651 = vpop.f32.mrb[0].mxu0
        %v2652 = vadd.f32 0.0, %v2651
        %v2653 = vpop.f32.mrb[0].mxu0
        %v2654 = vpop.f32.mrb[0].mxu0
        %v2655 = vadd.f32 0.0, %v2654
        %v2656 = vpop.f32.mrb[0].mxu0
        %2657 = vmatprep.mubr.bf16.mxu0 0
        %2658 = vmatmul.mubr.bf16.gmra.mrb[0].mxu0 %v2460
        %v2659 = vpop.f32.mrb[0].mxu0
        %v2660 = vadd.f32 0.0, %v2659
        %v2661 = vpop.f32.mrb[0].mxu0
        %v2662 = vpop.f32.mrb[0].mxu0
        %v2663 = vadd.f32 0.0, %v2662
        %v2664 = vpop.f32.mrb[0].mxu0
        %2665 = vmatprep.mubr.bf16.mxu0 0
        %2666 = vmatmul.mubr.bf16.gmra.mrb[0].mxu0 %v2461
        %v2667 = vpop.f32.mrb[0].mxu0
        %v2668 = vadd.f32 0.0, %v2667
        %v2669 = vpop.f32.mrb[0].mxu0
        %v2670 = vpop.f32.mrb[0].mxu0
        %v2671 = vadd.f32 0.0, %v2670
        %v2672 = vpop.f32.mrb[0].mxu0
        %2673 = vmatprep.mubr.bf16.mxu0 0
        %2674 = vmatmul.mubr.bf16.gmra.mrb[0].mxu0 %v2462
        %v2675 = vpop.f32.mrb[0].mxu0
        %v2676 = vadd.f32 0.0, %v2675
        %v2677 = vpop.f32.mrb[0].mxu0
        %v2678 = vpop.f32.mrb[0].mxu0
        %v2679 = vadd.f32 0.0, %v2678
        %v2680 = vpop.f32.mrb[0].mxu0
        %2681 = vmatprep.mubr.bf16.mxu0 0
        %2682 = vmatmul.mubr.bf16.gmra.mrb[0].mxu0 %v2463
        %v2683 = vpop.f32.mrb[0].mxu0
        %v2684 = vadd.f32 0.0, %v2683
        %v2685 = vpop.f32.mrb[0].mxu0
        %v2686 = vpop.f32.mrb[0].mxu0
        %v2687 = vadd.f32 0.0, %v2686
        %v2688 = vpop.f32.mrb[0].mxu0
        %2689 = vdwg.mxu0
        %v2690 = vadd.f32 %v2383, %v2564
        %v2691 = vadd.f32 %v2384, %v2567
        %v2692 = vadd.f32 %v2385, %v2572
        %v2693 = vadd.f32 %v2386, %v2575
        %v2694 = vadd.f32 %v2387, %v2580
        %v2695 = vadd.f32 %v2388, %v2583
        %v2696 = vadd.f32 %v2389, %v2588
        %v2697 = vadd.f32 %v2390, %v2591
        %v2698 = vadd.f32 %v2391, %v2596
        %v2699 = vadd.f32 %v2392, %v2599
        %v2700 = vadd.f32 %v2393, %v2604
        %v2701 = vadd.f32 %v2394, %v2607
        %v2702 = vadd.f32 %v2395, %v2612
        %v2703 = vadd.f32 %v2396, %v2615
        %v2704 = vadd.f32 %v2397, %v2620
        %v2705 = vadd.f32 %v2398, %v2623
        %v2706 = vadd.f32 %v2399, %v2628
        %v2707 = vadd.f32 %v2400, %v2631
        %v2708 = vadd.f32 %v2401, %v2636
        %v2709 = vadd.f32 %v2402, %v2639
        %v2710 = vadd.f32 %v2403, %v2644
        %v2711 = vadd.f32 %v2404, %v2647
        %v2712 = vadd.f32 %v2405, %v2652
        %v2713 = vadd.f32 %v2406, %v2655
        %v2714 = vadd.f32 %v2407, %v2660
        %v2715 = vadd.f32 %v2408, %v2663
        %v2716 = vadd.f32 %v2409, %v2668
        %v2717 = vadd.f32 %v2410, %v2671
        %v2718 = vadd.f32 %v2411, %v2676
        %v2719 = vadd.f32 %v2412, %v2679
        %v2720 = vadd.f32 %v2413, %v2684
        %v2721 = vadd.f32 %v2414, %v2687
        %v2722 = vld [vmem:[%s2415 + $0x1] sm:$0xff]
        %v2723 = vld [vmem:[%s2415 + $0x9] sm:$0xff]
        %v2724 = vld [vmem:[%s2415 + $0x19] sm:$0xff]
        %v2725 = vld [vmem:[%s2415 + $0x21] sm:$0xff]
        %v2726 = vld [vmem:[%s2415 + $0x31] sm:$0xff]
        %v2727 = vld [vmem:[%s2415 + $0x39] sm:$0xff]
        %v2728 = vld [vmem:[%s2415 + $0x49] sm:$0xff]
        %v2729 = vld [vmem:[%s2415 + $0x51] sm:$0xff]
        %v2730 = vld [vmem:[%s2415 + $0x61] sm:$0xff]
        %v2731 = vld [vmem:[%s2415 + $0x69] sm:$0xff]
        %v2732 = vld [vmem:[%s2415 + $0x79] sm:$0xff]
        %v2733 = vld [vmem:[%s2415 + $0x81] sm:$0xff]
        %v2734 = vld [vmem:[%s2415 + $0x91] sm:$0xff]
        %v2735 = vld [vmem:[%s2415 + $0x99] sm:$0xff]
        %v2736 = vld [vmem:[%s2415 + $0xa9] sm:$0xff]
        %v2737 = vld [vmem:[%s2415 + $0xb1] sm:$0xff]
        %v2738 = vld [vmem:[%s2415 + $0xc1] sm:$0xff]
        %v2739 = vld [vmem:[%s2415 + $0xc9] sm:$0xff]
        %v2740 = vld [vmem:[%s2415 + $0xd9] sm:$0xff]
        %v2741 = vld [vmem:[%s2415 + $0xe1] sm:$0xff]
        %v2742 = vld [vmem:[%s2415 + $0xf1] sm:$0xff]
        %v2743 = vld [vmem:[%s2415 + $0xf9] sm:$0xff]
        %v2744 = vld [vmem:[%s2415 + $0x109] sm:$0xff]
        %v2745 = vld [vmem:[%s2415 + $0x111] sm:$0xff]
        %v2746 = vld [vmem:[%s2415 + $0x121] sm:$0xff]
        %v2747 = vld [vmem:[%s2415 + $0x129] sm:$0xff]
        %v2748 = vld [vmem:[%s2415 + $0x139] sm:$0xff]
        %v2749 = vld [vmem:[%s2415 + $0x141] sm:$0xff]
        %v2750 = vld [vmem:[%s2415 + $0x151] sm:$0xff]
        %v2751 = vld [vmem:[%s2415 + $0x159] sm:$0xff]
        %v2752 = vld [vmem:[%s2415 + $0x169] sm:$0xff]
        %v2753 = vld [vmem:[%s2415 + $0x171] sm:$0xff]
        %v2754 = vpack.c.bf16 %v2723, %v2722
        %v2755 = vpack.c.bf16 %v2725, %v2724
        %v2756 = vpack.c.bf16 %v2727, %v2726
        %v2757 = vpack.c.bf16 %v2729, %v2728
        %v2758 = vpack.c.bf16 %v2731, %v2730
        %v2759 = vpack.c.bf16 %v2733, %v2732
        %v2760 = vpack.c.bf16 %v2735, %v2734
        %v2761 = vpack.c.bf16 %v2737, %v2736
        %v2762 = vpack.c.bf16 %v2739, %v2738
        %v2763 = vpack.c.bf16 %v2741, %v2740
        %v2764 = vpack.c.bf16 %v2743, %v2742
        %v2765 = vpack.c.bf16 %v2745, %v2744
        %v2766 = vpack.c.bf16 %v2747, %v2746
        %v2767 = vpack.c.bf16 %v2749, %v2748
        %v2768 = vpack.c.bf16 %v2751, %v2750
        %v2769 = vpack.c.bf16 %v2753, %v2752
        %s2770 = scalar_lea.vmem %s2, 448
        %v2771 = vld [vmem:[%s2770] sm:$0xf]
        %v2772 = vld [vmem:[%s2770 + $0x4] sm:$0xf]
        %v2773 = vld [vmem:[%s2770 + $0x8] sm:$0xf]
        %v2774 = vld [vmem:[%s2770 + $0xc] sm:$0xf]
        %v2775 = vld [vmem:[%s2770 + $0x10] sm:$0xf]
        %v2776 = vld [vmem:[%s2770 + $0x14] sm:$0xf]
        %v2777 = vld [vmem:[%s2770 + $0x18] sm:$0xf]
        %v2778 = vld [vmem:[%s2770 + $0x1c] sm:$0xf]
        %v2779 = vld [vmem:[%s2770 + $0x20] sm:$0xf]
        %v2780 = vld [vmem:[%s2770 + $0x24] sm:$0xf]
        %v2781 = vld [vmem:[%s2770 + $0x28] sm:$0xf]
        %v2782 = vld [vmem:[%s2770 + $0x2c] sm:$0xf]
        %v2783 = vld [vmem:[%s2770 + $0x30] sm:$0xf]
        %v2784 = vld [vmem:[%s2770 + $0x34] sm:$0xf]
        %v2785 = vld [vmem:[%s2770 + $0x38] sm:$0xf]
        %v2786 = vld [vmem:[%s2770 + $0x3c] sm:$0xf]
        %v2803 = vunpack.c.l.b16 %v2771
        %v2804 = vunpack.c.l.b16 %v2772
        %v2805 = vunpack.c.l.b16 %v2773
        %v2806 = vunpack.c.l.b16 %v2774
        %v2807 = vunpack.c.l.b16 %v2775
        %v2808 = vunpack.c.l.b16 %v2776
        %v2809 = vunpack.c.l.b16 %v2777
        %v2810 = vunpack.c.l.b16 %v2778
        %v2811 = vunpack.c.l.b16 %v2779
        %v2812 = vunpack.c.l.b16 %v2780
        %v2813 = vunpack.c.l.b16 %v2781
        %v2814 = vunpack.c.l.b16 %v2782
        %v2815 = vunpack.c.l.b16 %v2783
        %v2816 = vunpack.c.l.b16 %v2784
        %v2817 = vunpack.c.l.b16 %v2785
        %v2818 = vunpack.c.l.b16 %v2786
        %v2819 = vpack.c.b16 %v2804, %v2803
        %v2820 = vpack.c.b16 %v2806, %v2805
        %v2821 = vpack.c.b16 %v2808, %v2807
        %v2822 = vpack.c.b16 %v2810, %v2809
        %v2823 = vpack.c.b16 %v2812, %v2811
        %v2824 = vpack.c.b16 %v2814, %v2813
        %v2825 = vpack.c.b16 %v2816, %v2815
        %v2826 = vpack.c.b16 %v2818, %v2817
        %2835 = vmatprep.subr.bf16.mxu0 0
        %2836 = vmatpush1.bf16.msra.mxu0 %v2819
        %2837 = vmatprep.subr.bf16.mxu0 0
        %2838 = vmatpush1.bf16.msra.mxu0 %v2820
        %2839 = vmatprep.subr.bf16.mxu0 0
        %2840 = vmatpush1.bf16.msra.mxu0 %v2821
        %2841 = vmatprep.subr.bf16.mxu0 0
        %2842 = vmatpush1.bf16.msra.mxu0 %v2822
        %2843 = vmatprep.subr.bf16.mxu0 0
        %2844 = vmatpush1.bf16.msra.mxu0 %v2823
        %2845 = vmatprep.subr.bf16.mxu0 0
        %2846 = vmatpush1.bf16.msra.mxu0 %v2824
        %2847 = vmatprep.subr.bf16.mxu0 0
        %2848 = vmatpush1.bf16.msra.mxu0 %v2825
        %2849 = vmatprep.subr.bf16.mxu0 0
        %2850 = vmatpush1.bf16.msra.mxu0 %v2826
        %2851 = vmatprep.subr.bf16.mxu0 0
        %2852 = vmatpush1.bf16.msra.mxu0 0
        %2853 = vmatprep.subr.bf16.mxu0 0
        %2854 = vmatpush1.bf16.msra.mxu0 0
        %2855 = vmatprep.subr.bf16.mxu0 0
        %2856 = vmatpush1.bf16.msra.mxu0 0
        %2857 = vmatprep.subr.bf16.mxu0 0
        %2858 = vmatpush1.bf16.msra.mxu0 0
        %2859 = vmatprep.subr.bf16.mxu0 0
        %2860 = vmatpush1.bf16.msra.mxu0 0
        %2861 = vmatprep.subr.bf16.mxu0 0
        %2862 = vmatpush1.bf16.msra.mxu0 0
        %2863 = vmatprep.subr.bf16.mxu0 0
        %2864 = vmatpush1.bf16.msra.mxu0 0
        %2865 = vmatprep.subr.bf16.mxu0 0
        %2866 = vmatpush1.bf16.msra.mxu0 0
        %2867 = vmatprep.mubr.bf16.mxu0 0
        %2868 = vmatmul.mubr.bf16.gmra.mrb[0].mxu0 %v2754
        %v2869 = vpop.f32.mrb[0].mxu0
        %v2870 = vadd.f32 0.0, %v2869
        %v2871 = vpop.f32.mrb[0].mxu0
        %v2872 = vpop.f32.mrb[0].mxu0
        %v2873 = vadd.f32 0.0, %v2872
        %v2874 = vpop.f32.mrb[0].mxu0
        %2875 = vmatprep.mubr.bf16.mxu0 0
        %2876 = vmatmul.mubr.bf16.gmra.mrb[0].mxu0 %v2755
        %v2877 = vpop.f32.mrb[0].mxu0
        %v2878 = vadd.f32 0.0, %v2877
        %v2879 = vpop.f32.mrb[0].mxu0
        %v2880 = vpop.f32.mrb[0].mxu0
        %v2881 = vadd.f32 0.0, %v2880
        %v2882 = vpop.f32.mrb[0].mxu0
        %2883 = vmatprep.mubr.bf16.mxu0 0
        %2884 = vmatmul.mubr.bf16.gmra.mrb[0].mxu0 %v2756
        %v2885 = vpop.f32.mrb[0].mxu0
        %v2886 = vadd.f32 0.0, %v2885
        %v2887 = vpop.f32.mrb[0].mxu0
        %v2888 = vpop.f32.mrb[0].mxu0
        %v2889 = vadd.f32 0.0, %v2888
        %v2890 = vpop.f32.mrb[0].mxu0
        %2891 = vmatprep.mubr.bf16.mxu0 0
        %2892 = vmatmul.mubr.bf16.gmra.mrb[0].mxu0 %v2757
        %v2893 = vpop.f32.mrb[0].mxu0
        %v2894 = vadd.f32 0.0, %v2893
        %v2895 = vpop.f32.mrb[0].mxu0
        %v2896 = vpop.f32.mrb[0].mxu0
        %v2897 = vadd.f32 0.0, %v2896
        %v2898 = vpop.f32.mrb[0].mxu0
        %2899 = vmatprep.mubr.bf16.mxu0 0
        %2900 = vmatmul.mubr.bf16.gmra.mrb[0].mxu0 %v2758
        %v2901 = vpop.f32.mrb[0].mxu0
        %v2902 = vadd.f32 0.0, %v2901
        %v2903 = vpop.f32.mrb[0].mxu0
        %v2904 = vpop.f32.mrb[0].mxu0
        %v2905 = vadd.f32 0.0, %v2904
        %v2906 = vpop.f32.mrb[0].mxu0
        %2907 = vmatprep.mubr.bf16.mxu0 0
        %2908 = vmatmul.mubr.bf16.gmra.mrb[0].mxu0 %v2759
        %v2909 = vpop.f32.mrb[0].mxu0
        %v2910 = vadd.f32 0.0, %v2909
        %v2911 = vpop.f32.mrb[0].mxu0
        %v2912 = vpop.f32.mrb[0].mxu0
        %v2913 = vadd.f32 0.0, %v2912
        %v2914 = vpop.f32.mrb[0].mxu0
        %2915 = vmatprep.mubr.bf16.mxu0 0
        %2916 = vmatmul.mubr.bf16.gmra.mrb[0].mxu0 %v2760
        %v2917 = vpop.f32.mrb[0].mxu0
        %v2918 = vadd.f32 0.0, %v2917
        %v2919 = vpop.f32.mrb[0].mxu0
        %v2920 = vpop.f32.mrb[0].mxu0
        %v2921 = vadd.f32 0.0, %v2920
        %v2922 = vpop.f32.mrb[0].mxu0
        %2923 = vmatprep.mubr.bf16.mxu0 0
        %2924 = vmatmul.mubr.bf16.gmra.mrb[0].mxu0 %v2761
        %v2925 = vpop.f32.mrb[0].mxu0
        %v2926 = vadd.f32 0.0, %v2925
        %v2927 = vpop.f32.mrb[0].mxu0
        %v2928 = vpop.f32.mrb[0].mxu0
        %v2929 = vadd.f32 0.0, %v2928
        %v2930 = vpop.f32.mrb[0].mxu0
        %2931 = vmatprep.mubr.bf16.mxu0 0
        %2932 = vmatmul.mubr.bf16.gmra.mrb[0].mxu0 %v2762
        %v2933 = vpop.f32.mrb[0].mxu0
        %v2934 = vadd.f32 0.0, %v2933
        %v2935 = vpop.f32.mrb[0].mxu0
        %v2936 = vpop.f32.mrb[0].mxu0
        %v2937 = vadd.f32 0.0, %v2936
        %v2938 = vpop.f32.mrb[0].mxu0
        %2939 = vmatprep.mubr.bf16.mxu0 0
        %2940 = vmatmul.mubr.bf16.gmra.mrb[0].mxu0 %v2763
        %v2941 = vpop.f32.mrb[0].mxu0
        %v2942 = vadd.f32 0.0, %v2941
        %v2943 = vpop.f32.mrb[0].mxu0
        %v2944 = vpop.f32.mrb[0].mxu0
        %v2945 = vadd.f32 0.0, %v2944
        %v2946 = vpop.f32.mrb[0].mxu0
        %2947 = vmatprep.mubr.bf16.mxu0 0
        %2948 = vmatmul.mubr.bf16.gmra.mrb[0].mxu0 %v2764
        %v2949 = vpop.f32.mrb[0].mxu0
        %v2950 = vadd.f32 0.0, %v2949
        %v2951 = vpop.f32.mrb[0].mxu0
        %v2952 = vpop.f32.mrb[0].mxu0
        %v2953 = vadd.f32 0.0, %v2952
        %v2954 = vpop.f32.mrb[0].mxu0
        %2955 = vmatprep.mubr.bf16.mxu0 0
        %2956 = vmatmul.mubr.bf16.gmra.mrb[0].mxu0 %v2765
        %v2957 = vpop.f32.mrb[0].mxu0
        %v2958 = vadd.f32 0.0, %v2957
        %v2959 = vpop.f32.mrb[0].mxu0
        %v2960 = vpop.f32.mrb[0].mxu0
        %v2961 = vadd.f32 0.0, %v2960
        %v2962 = vpop.f32.mrb[0].mxu0
        %2963 = vmatprep.mubr.bf16.mxu0 0
        %2964 = vmatmul.mubr.bf16.gmra.mrb[0].mxu0 %v2766
        %v2965 = vpop.f32.mrb[0].mxu0
        %v2966 = vadd.f32 0.0, %v2965
        %v2967 = vpop.f32.mrb[0].mxu0
        %v2968 = vpop.f32.mrb[0].mxu0
        %v2969 = vadd.f32 0.0, %v2968
        %v2970 = vpop.f32.mrb[0].mxu0
        %2971 = vmatprep.mubr.bf16.mxu0 0
        %2972 = vmatmul.mubr.bf16.gmra.mrb[0].mxu0 %v2767
        %v2973 = vpop.f32.mrb[0].mxu0
        %v2974 = vadd.f32 0.0, %v2973
        %v2975 = vpop.f32.mrb[0].mxu0
        %v2976 = vpop.f32.mrb[0].mxu0
        %v2977 = vadd.f32 0.0, %v2976
        %v2978 = vpop.f32.mrb[0].mxu0
        %2979 = vmatprep.mubr.bf16.mxu0 0
        %2980 = vmatmul.mubr.bf16.gmra.mrb[0].mxu0 %v2768
        %v2981 = vpop.f32.mrb[0].mxu0
        %v2982 = vadd.f32 0.0, %v2981
        %v2983 = vpop.f32.mrb[0].mxu0
        %v2984 = vpop.f32.mrb[0].mxu0
        %v2985 = vadd.f32 0.0, %v2984
        %v2986 = vpop.f32.mrb[0].mxu0
        %2987 = vmatprep.mubr.bf16.mxu0 0
        %2988 = vmatmul.mubr.bf16.gmra.mrb[0].mxu0 %v2769
        %v2989 = vpop.f32.mrb[0].mxu0
        %v2990 = vadd.f32 0.0, %v2989
        %v2991 = vpop.f32.mrb[0].mxu0
        %v2992 = vpop.f32.mrb[0].mxu0
        %v2993 = vadd.f32 0.0, %v2992
        %v2994 = vpop.f32.mrb[0].mxu0
        %2995 = vdwg.mxu0
        %v2996 = vadd.f32 %v2690, %v2870
        %v2997 = vadd.f32 %v2691, %v2873
        %v2998 = vadd.f32 %v2692, %v2878
        %v2999 = vadd.f32 %v2693, %v2881
        %v3000 = vadd.f32 %v2694, %v2886
        %v3001 = vadd.f32 %v2695, %v2889
        %v3002 = vadd.f32 %v2696, %v2894
        %v3003 = vadd.f32 %v2697, %v2897
        %v3004 = vadd.f32 %v2698, %v2902
        %v3005 = vadd.f32 %v2699, %v2905
        %v3006 = vadd.f32 %v2700, %v2910
        %v3007 = vadd.f32 %v2701, %v2913
        %v3008 = vadd.f32 %v2702, %v2918
        %v3009 = vadd.f32 %v2703, %v2921
        %v3010 = vadd.f32 %v2704, %v2926
        %v3011 = vadd.f32 %v2705, %v2929
        %v3012 = vadd.f32 %v2706, %v2934
        %v3013 = vadd.f32 %v2707, %v2937
        %v3014 = vadd.f32 %v2708, %v2942
        %v3015 = vadd.f32 %v2709, %v2945
        %v3016 = vadd.f32 %v2710, %v2950
        %v3017 = vadd.f32 %v2711, %v2953
        %v3018 = vadd.f32 %v2712, %v2958
        %v3019 = vadd.f32 %v2713, %v2961
        %v3020 = vadd.f32 %v2714, %v2966
        %v3021 = vadd.f32 %v2715, %v2969
        %v3022 = vadd.f32 %v2716, %v2974
        %v3023 = vadd.f32 %v2717, %v2977
        %v3024 = vadd.f32 %v2718, %v2982
        %v3025 = vadd.f32 %v2719, %v2985
        %v3026 = vadd.f32 %v2720, %v2990
        %v3027 = vadd.f32 %v2721, %v2993
        %v3028 = vld [vmem:[%s2415 + $0x2] sm:$0xff]
        %v3029 = vld [vmem:[%s2415 + $0xa] sm:$0xff]
        %v3030 = vld [vmem:[%s2415 + $0x1a] sm:$0xff]
        %v3031 = vld [vmem:[%s2415 + $0x22] sm:$0xff]
        %v3032 = vld [vmem:[%s2415 + $0x32] sm:$0xff]
        %v3033 = vld [vmem:[%s2415 + $0x3a] sm:$0xff]
        %v3034 = vld [vmem:[%s2415 + $0x4a] sm:$0xff]
        %v3035 = vld [vmem:[%s2415 + $0x52] sm:$0xff]
        %v3036 = vld [vmem:[%s2415 + $0x62] sm:$0xff]
        %v3037 = vld [vmem:[%s2415 + $0x6a] sm:$0xff]
        %v3038 = vld [vmem:[%s2415 + $0x7a] sm:$0xff]
        %v3039 = vld [vmem:[%s2415 + $0x82] sm:$0xff]
        %v3040 = vld [vmem:[%s2415 + $0x92] sm:$0xff]
        %v3041 = vld [vmem:[%s2415 + $0x9a] sm:$0xff]
        %v3042 = vld [vmem:[%s2415 + $0xaa] sm:$0xff]
        %v3043 = vld [vmem:[%s2415 + $0xb2] sm:$0xff]
        %v3044 = vld [vmem:[%s2415 + $0xc2] sm:$0xff]
        %v3045 = vld [vmem:[%s2415 + $0xca] sm:$0xff]
        %v3046 = vld [vmem:[%s2415 + $0xda] sm:$0xff]
        %v3047 = vld [vmem:[%s2415 + $0xe2] sm:$0xff]
        %v3048 = vld [vmem:[%s2415 + $0xf2] sm:$0xff]
        %v3049 = vld [vmem:[%s2415 + $0xfa] sm:$0xff]
        %v3050 = vld [vmem:[%s2415 + $0x10a] sm:$0xff]
        %v3051 = vld [vmem:[%s2415 + $0x112] sm:$0xff]
        %v3052 = vld [vmem:[%s2415 + $0x122] sm:$0xff]
        %v3053 = vld [vmem:[%s2415 + $0x12a] sm:$0xff]
        %v3054 = vld [vmem:[%s2415 + $0x13a] sm:$0xff]
        %v3055 = vld [vmem:[%s2415 + $0x142] sm:$0xff]
        %v3056 = vld [vmem:[%s2415 + $0x152] sm:$0xff]
        %v3057 = vld [vmem:[%s2415 + $0x15a] sm:$0xff]
        %v3058 = vld [vmem:[%s2415 + $0x16a] sm:$0xff]
        %v3059 = vld [vmem:[%s2415 + $0x172] sm:$0xff]
        %v3060 = vpack.c.bf16 %v3029, %v3028
        %v3061 = vpack.c.bf16 %v3031, %v3030
        %v3062 = vpack.c.bf16 %v3033, %v3032
        %v3063 = vpack.c.bf16 %v3035, %v3034
        %v3064 = vpack.c.bf16 %v3037, %v3036
        %v3065 = vpack.c.bf16 %v3039, %v3038
        %v3066 = vpack.c.bf16 %v3041, %v3040
        %v3067 = vpack.c.bf16 %v3043, %v3042
        %v3068 = vpack.c.bf16 %v3045, %v3044
        %v3069 = vpack.c.bf16 %v3047, %v3046
        %v3070 = vpack.c.bf16 %v3049, %v3048
        %v3071 = vpack.c.bf16 %v3051, %v3050
        %v3072 = vpack.c.bf16 %v3053, %v3052
        %v3073 = vpack.c.bf16 %v3055, %v3054
        %v3074 = vpack.c.bf16 %v3057, %v3056
        %v3075 = vpack.c.bf16 %v3059, %v3058
        %s3076 = scalar_lea.vmem %s2, 512
        %v3077 = vld [vmem:[%s3076] sm:$0xf]
        %v3078 = vld [vmem:[%s3076 + $0x4] sm:$0xf]
        %v3079 = vld [vmem:[%s3076 + $0x8] sm:$0xf]
        %v3080 = vld [vmem:[%s3076 + $0xc] sm:$0xf]
        %v3081 = vld [vmem:[%s3076 + $0x10] sm:$0xf]
        %v3082 = vld [vmem:[%s3076 + $0x14] sm:$0xf]
        %v3083 = vld [vmem:[%s3076 + $0x18] sm:$0xf]
        %v3084 = vld [vmem:[%s3076 + $0x1c] sm:$0xf]
        %v3085 = vld [vmem:[%s3076 + $0x20] sm:$0xf]
        %v3086 = vld [vmem:[%s3076 + $0x24] sm:$0xf]
        %v3087 = vld [vmem:[%s3076 + $0x28] sm:$0xf]
        %v3088 = vld [vmem:[%s3076 + $0x2c] sm:$0xf]
        %v3089 = vld [vmem:[%s3076 + $0x30] sm:$0xf]
        %v3090 = vld [vmem:[%s3076 + $0x34] sm:$0xf]
        %v3091 = vld [vmem:[%s3076 + $0x38] sm:$0xf]
        %v3092 = vld [vmem:[%s3076 + $0x3c] sm:$0xf]
        %v3109 = vunpack.c.l.b16 %v3077
        %v3110 = vunpack.c.l.b16 %v3078
        %v3111 = vunpack.c.l.b16 %v3079
        %v3112 = vunpack.c.l.b16 %v3080
        %v3113 = vunpack.c.l.b16 %v3081
        %v3114 = vunpack.c.l.b16 %v3082
        %v3115 = vunpack.c.l.b16 %v3083
        %v3116 = vunpack.c.l.b16 %v3084
        %v3117 = vunpack.c.l.b16 %v3085
        %v3118 = vunpack.c.l.b16 %v3086
        %v3119 = vunpack.c.l.b16 %v3087
        %v3120 = vunpack.c.l.b16 %v3088
        %v3121 = vunpack.c.l.b16 %v3089
        %v3122 = vunpack.c.l.b16 %v3090
        %v3123 = vunpack.c.l.b16 %v3091
        %v3124 = vunpack.c.l.b16 %v3092
        %v3125 = vpack.c.b16 %v3110, %v3109
        %v3126 = vpack.c.b16 %v3112, %v3111
        %v3127 = vpack.c.b16 %v3114, %v3113
        %v3128 = vpack.c.b16 %v3116, %v3115
        %v3129 = vpack.c.b16 %v3118, %v3117
        %v3130 = vpack.c.b16 %v3120, %v3119
        %v3131 = vpack.c.b16 %v3122, %v3121
        %v3132 = vpack.c.b16 %v3124, %v3123
        %3141 = vmatprep.subr.bf16.mxu0 0
        %3142 = vmatpush1.bf16.msra.mxu0 %v3125
        %3143 = vmatprep.subr.bf16.mxu0 0
        %3144 = vmatpush1.bf16.msra.mxu0 %v3126
        %3145 = vmatprep.subr.bf16.mxu0 0
        %3146 = vmatpush1.bf16.msra.mxu0 %v3127
        %3147 = vmatprep.subr.bf16.mxu0 0
        %3148 = vmatpush1.bf16.msra.mxu0 %v3128
        %3149 = vmatprep.subr.bf16.mxu0 0
        %3150 = vmatpush1.bf16.msra.mxu0 %v3129
        %3151 = vmatprep.subr.bf16.mxu0 0
        %3152 = vmatpush1.bf16.msra.mxu0 %v3130
        %3153 = vmatprep.subr.bf16.mxu0 0
        %3154 = vmatpush1.bf16.msra.mxu0 %v3131
        %3155 = vmatprep.subr.bf16.mxu0 0
        %3156 = vmatpush1.bf16.msra.mxu0 %v3132
        %3157 = vmatprep.subr.bf16.mxu0 0
        %3158 = vmatpush1.bf16.msra.mxu0 0
        %3159 = vmatprep.subr.bf16.mxu0 0
        %3160 = vmatpush1.bf16.msra.mxu0 0
        %3161 = vmatprep.subr.bf16.mxu0 0
        %3162 = vmatpush1.bf16.msra.mxu0 0
        %3163 = vmatprep.subr.bf16.mxu0 0
        %3164 = vmatpush1.bf16.msra.mxu0 0
        %3165 = vmatprep.subr.bf16.mxu0 0
        %3166 = vmatpush1.bf16.msra.mxu0 0
        %3167 = vmatprep.subr.bf16.mxu0 0
        %3168 = vmatpush1.bf16.msra.mxu0 0
        %3169 = vmatprep.subr.bf16.mxu0 0
        %3170 = vmatpush1.bf16.msra.mxu0 0
        %3171 = vmatprep.subr.bf16.mxu0 0
        %3172 = vmatpush1.bf16.msra.mxu0 0
        %3173 = vmatprep.mubr.bf16.mxu0 0
        %3174 = vmatmul.mubr.bf16.gmra.mrb[0].mxu0 %v3060
        %v3175 = vpop.f32.mrb[0].mxu0
        %v3176 = vadd.f32 0.0, %v3175
        %v3177 = vpop.f32.mrb[0].mxu0
        %v3178 = vpop.f32.mrb[0].mxu0
        %v3179 = vadd.f32 0.0, %v3178
        %v3180 = vpop.f32.mrb[0].mxu0
        %3181 = vmatprep.mubr.bf16.mxu0 0
        %3182 = vmatmul.mubr.bf16.gmra.mrb[0].mxu0 %v3061
        %v3183 = vpop.f32.mrb[0].mxu0
        %v3184 = vadd.f32 0.0, %v3183
        %v3185 = vpop.f32.mrb[0].mxu0
        %v3186 = vpop.f32.mrb[0].mxu0
        %v3187 = vadd.f32 0.0, %v3186
        %v3188 = vpop.f32.mrb[0].mxu0
        %3189 = vmatprep.mubr.bf16.mxu0 0
        %3190 = vmatmul.mubr.bf16.gmra.mrb[0].mxu0 %v3062
        %v3191 = vpop.f32.mrb[0].mxu0
        %v3192 = vadd.f32 0.0, %v3191
        %v3193 = vpop.f32.mrb[0].mxu0
        %v3194 = vpop.f32.mrb[0].mxu0
        %v3195 = vadd.f32 0.0, %v3194
        %v3196 = vpop.f32.mrb[0].mxu0
        %3197 = vmatprep.mubr.bf16.mxu0 0
        %3198 = vmatmul.mubr.bf16.gmra.mrb[0].mxu0 %v3063
        %v3199 = vpop.f32.mrb[0].mxu0
        %v3200 = vadd.f32 0.0, %v3199
        %v3201 = vpop.f32.mrb[0].mxu0
        %v3202 = vpop.f32.mrb[0].mxu0
        %v3203 = vadd.f32 0.0, %v3202
        %v3204 = vpop.f32.mrb[0].mxu0
        %3205 = vmatprep.mubr.bf16.mxu0 0
        %3206 = vmatmul.mubr.bf16.gmra.mrb[0].mxu0 %v3064
        %v3207 = vpop.f32.mrb[0].mxu0
        %v3208 = vadd.f32 0.0, %v3207
        %v3209 = vpop.f32.mrb[0].mxu0
        %v3210 = vpop.f32.mrb[0].mxu0
        %v3211 = vadd.f32 0.0, %v3210
        %v3212 = vpop.f32.mrb[0].mxu0
        %3213 = vmatprep.mubr.bf16.mxu0 0
        %3214 = vmatmul.mubr.bf16.gmra.mrb[0].mxu0 %v3065
        %v3215 = vpop.f32.mrb[0].mxu0
        %v3216 = vadd.f32 0.0, %v3215
        %v3217 = vpop.f32.mrb[0].mxu0
        %v3218 = vpop.f32.mrb[0].mxu0
        %v3219 = vadd.f32 0.0, %v3218
        %v3220 = vpop.f32.mrb[0].mxu0
        %3221 = vmatprep.mubr.bf16.mxu0 0
        %3222 = vmatmul.mubr.bf16.gmra.mrb[0].mxu0 %v3066
        %v3223 = vpop.f32.mrb[0].mxu0
        %v3224 = vadd.f32 0.0, %v3223
        %v3225 = vpop.f32.mrb[0].mxu0
        %v3226 = vpop.f32.mrb[0].mxu0
        %v3227 = vadd.f32 0.0, %v3226
        %v3228 = vpop.f32.mrb[0].mxu0
        %3229 = vmatprep.mubr.bf16.mxu0 0
        %3230 = vmatmul.mubr.bf16.gmra.mrb[0].mxu0 %v3067
        %v3231 = vpop.f32.mrb[0].mxu0
        %v3232 = vadd.f32 0.0, %v3231
        %v3233 = vpop.f32.mrb[0].mxu0
        %v3234 = vpop.f32.mrb[0].mxu0
        %v3235 = vadd.f32 0.0, %v3234
        %v3236 = vpop.f32.mrb[0].mxu0
        %3237 = vmatprep.mubr.bf16.mxu0 0
        %3238 = vmatmul.mubr.bf16.gmra.mrb[0].mxu0 %v3068
        %v3239 = vpop.f32.mrb[0].mxu0
        %v3240 = vadd.f32 0.0, %v3239
        %v3241 = vpop.f32.mrb[0].mxu0
        %v3242 = vpop.f32.mrb[0].mxu0
        %v3243 = vadd.f32 0.0, %v3242
        %v3244 = vpop.f32.mrb[0].mxu0
        %3245 = vmatprep.mubr.bf16.mxu0 0
        %3246 = vmatmul.mubr.bf16.gmra.mrb[0].mxu0 %v3069
        %v3247 = vpop.f32.mrb[0].mxu0
        %v3248 = vadd.f32 0.0, %v3247
        %v3249 = vpop.f32.mrb[0].mxu0
        %v3250 = vpop.f32.mrb[0].mxu0
        %v3251 = vadd.f32 0.0, %v3250
        %v3252 = vpop.f32.mrb[0].mxu0
        %3253 = vmatprep.mubr.bf16.mxu0 0
        %3254 = vmatmul.mubr.bf16.gmra.mrb[0].mxu0 %v3070
        %v3255 = vpop.f32.mrb[0].mxu0
        %v3256 = vadd.f32 0.0, %v3255
        %v3257 = vpop.f32.mrb[0].mxu0
        %v3258 = vpop.f32.mrb[0].mxu0
        %v3259 = vadd.f32 0.0, %v3258
        %v3260 = vpop.f32.mrb[0].mxu0
        %3261 = vmatprep.mubr.bf16.mxu0 0
        %3262 = vmatmul.mubr.bf16.gmra.mrb[0].mxu0 %v3071
        %v3263 = vpop.f32.mrb[0].mxu0
        %v3264 = vadd.f32 0.0, %v3263
        %v3265 = vpop.f32.mrb[0].mxu0
        %v3266 = vpop.f32.mrb[0].mxu0
        %v3267 = vadd.f32 0.0, %v3266
        %v3268 = vpop.f32.mrb[0].mxu0
        %3269 = vmatprep.mubr.bf16.mxu0 0
        %3270 = vmatmul.mubr.bf16.gmra.mrb[0].mxu0 %v3072
        %v3271 = vpop.f32.mrb[0].mxu0
        %v3272 = vadd.f32 0.0, %v3271
        %v3273 = vpop.f32.mrb[0].mxu0
        %v3274 = vpop.f32.mrb[0].mxu0
        %v3275 = vadd.f32 0.0, %v3274
        %v3276 = vpop.f32.mrb[0].mxu0
        %3277 = vmatprep.mubr.bf16.mxu0 0
        %3278 = vmatmul.mubr.bf16.gmra.mrb[0].mxu0 %v3073
        %v3279 = vpop.f32.mrb[0].mxu0
        %v3280 = vadd.f32 0.0, %v3279
        %v3281 = vpop.f32.mrb[0].mxu0
        %v3282 = vpop.f32.mrb[0].mxu0
        %v3283 = vadd.f32 0.0, %v3282
        %v3284 = vpop.f32.mrb[0].mxu0
        %3285 = vmatprep.mubr.bf16.mxu0 0
        %3286 = vmatmul.mubr.bf16.gmra.mrb[0].mxu0 %v3074
        %v3287 = vpop.f32.mrb[0].mxu0
        %v3288 = vadd.f32 0.0, %v3287
        %v3289 = vpop.f32.mrb[0].mxu0
        %v3290 = vpop.f32.mrb[0].mxu0
        %v3291 = vadd.f32 0.0, %v3290
        %v3292 = vpop.f32.mrb[0].mxu0
        %3293 = vmatprep.mubr.bf16.mxu0 0
        %3294 = vmatmul.mubr.bf16.gmra.mrb[0].mxu0 %v3075
        %v3295 = vpop.f32.mrb[0].mxu0
        %v3296 = vadd.f32 0.0, %v3295
        %v3297 = vpop.f32.mrb[0].mxu0
        %v3298 = vpop.f32.mrb[0].mxu0
        %v3299 = vadd.f32 0.0, %v3298
        %v3300 = vpop.f32.mrb[0].mxu0
        %3301 = vdwg.mxu0
        %v3302 = vadd.f32 %v2996, %v3176
        %v3303 = vadd.f32 %v2997, %v3179
        %v3304 = vadd.f32 %v2998, %v3184
        %v3305 = vadd.f32 %v2999, %v3187
        %v3306 = vadd.f32 %v3000, %v3192
        %v3307 = vadd.f32 %v3001, %v3195
        %v3308 = vadd.f32 %v3002, %v3200
        %v3309 = vadd.f32 %v3003, %v3203
        %v3310 = vadd.f32 %v3004, %v3208
        %v3311 = vadd.f32 %v3005, %v3211
        %v3312 = vadd.f32 %v3006, %v3216
        %v3313 = vadd.f32 %v3007, %v3219
        %v3314 = vadd.f32 %v3008, %v3224
        %v3315 = vadd.f32 %v3009, %v3227
        %v3316 = vadd.f32 %v3010, %v3232
        %v3317 = vadd.f32 %v3011, %v3235
        %v3318 = vadd.f32 %v3012, %v3240
        %v3319 = vadd.f32 %v3013, %v3243
        %v3320 = vadd.f32 %v3014, %v3248
        %v3321 = vadd.f32 %v3015, %v3251
        %v3322 = vadd.f32 %v3016, %v3256
        %v3323 = vadd.f32 %v3017, %v3259
        %v3324 = vadd.f32 %v3018, %v3264
        %v3325 = vadd.f32 %v3019, %v3267
        %v3326 = vadd.f32 %v3020, %v3272
        %v3327 = vadd.f32 %v3021, %v3275
        %v3328 = vadd.f32 %v3022, %v3280
        %v3329 = vadd.f32 %v3023, %v3283
        %v3330 = vadd.f32 %v3024, %v3288
        %v3331 = vadd.f32 %v3025, %v3291
        %v3332 = vadd.f32 %v3026, %v3296
        %v3333 = vadd.f32 %v3027, %v3299
        %v3334 = vmul.f32 %v476, %v476
        %v3335 = vld [vmem:[%s3] sm:$0xff]
        %v3336 = vld [vmem:[%s3 + $0x8] sm:$0xff]
        %v3337 = vld [vmem:[%s3 + $0x10] sm:$0xff]
        %v3338 = vld [vmem:[%s3 + $0x18] sm:$0xff]
        %v3339 = vld [vmem:[%s3 + $0x20] sm:$0xff]
        %v3340 = vld [vmem:[%s3 + $0x28] sm:$0xff]
        %v3341 = vld [vmem:[%s3 + $0x30] sm:$0xff]
        %v3342 = vld [vmem:[%s3 + $0x38] sm:$0xff]
        %v3343 = vld [vmem:[%s3 + $0x40] sm:$0xff]
        %v3344 = vld [vmem:[%s3 + $0x48] sm:$0xff]
        %v3345 = vld [vmem:[%s3 + $0x50] sm:$0xff]
        %v3346 = vld [vmem:[%s3 + $0x58] sm:$0xff]
        %v3347 = vld [vmem:[%s3 + $0x60] sm:$0xff]
        %v3348 = vld [vmem:[%s3 + $0x68] sm:$0xff]
        %v3349 = vld [vmem:[%s3 + $0x70] sm:$0xff]
        %v3350 = vld [vmem:[%s3 + $0x78] sm:$0xff]
        %3351 = vmatprep.subr.mxu0 0.0
        %3352 = vmatpush1.msra.mxu0 %v3335
        %3353 = vmatprep.subr.mxu0 0.0
        %3354 = vmatpush1.msra.mxu0 %v3336
        %3355 = vmatprep.subr.mxu0 0.0
        %3356 = vmatpush1.msra.mxu0 %v3337
        %3357 = vmatprep.subr.mxu0 0.0
        %3358 = vmatpush1.msra.mxu0 %v3338
        %3359 = vmatprep.subr.mxu0 0.0
        %3360 = vmatpush1.msra.mxu0 %v3339
        %3361 = vmatprep.subr.mxu0 0.0
        %3362 = vmatpush1.msra.mxu0 %v3340
        %3363 = vmatprep.subr.mxu0 0.0
        %3364 = vmatpush1.msra.mxu0 %v3341
        %3365 = vmatprep.subr.mxu0 0.0
        %3366 = vmatpush1.msra.mxu0 %v3342
        %3367 = vmatprep.subr.mxu0 0.0
        %3368 = vmatpush1.msra.mxu0 %v3343
        %3369 = vmatprep.subr.mxu0 0.0
        %3370 = vmatpush1.msra.mxu0 %v3344
        %3371 = vmatprep.subr.mxu0 0.0
        %3372 = vmatpush1.msra.mxu0 %v3345
        %3373 = vmatprep.subr.mxu0 0.0
        %3374 = vmatpush1.msra.mxu0 %v3346
        %3375 = vmatprep.subr.mxu0 0.0
        %3376 = vmatpush1.msra.mxu0 %v3347
        %3377 = vmatprep.subr.mxu0 0.0
        %3378 = vmatpush1.msra.mxu0 %v3348
        %3379 = vmatprep.subr.mxu0 0.0
        %3380 = vmatpush1.msra.mxu0 %v3349
        %3381 = vmatprep.subr.mxu0 0.0
        %3382 = vmatpush1.msra.mxu0 %v3350
        %3383 = vmatprep.subr.mxu0 0.0
        %3384 = vmatpush1.msra.mxu0 0.0
        %3385 = vmatprep.subr.mxu0 0.0
        %3386 = vmatpush1.msra.mxu0 0.0
        %3387 = vmatprep.subr.mxu0 0.0
        %3388 = vmatpush1.msra.mxu0 0.0
        %3389 = vmatprep.subr.mxu0 0.0
        %3390 = vmatpush1.msra.mxu0 0.0
        %3391 = vmatprep.subr.mxu0 0.0
        %3392 = vmatpush1.msra.mxu0 0.0
        %3393 = vmatprep.subr.mxu0 0.0
        %3394 = vmatpush1.msra.mxu0 0.0
        %3395 = vmatprep.subr.mxu0 0.0
        %3396 = vmatpush1.msra.mxu0 0.0
        %3397 = vmatprep.subr.mxu0 0.0
        %3398 = vmatpush1.msra.mxu0 0.0
        %3399 = vmatprep.subr.mxu0 0.0
        %3400 = vmatpush1.msra.mxu0 0.0
        %3401 = vmatprep.subr.mxu0 0.0
        %3402 = vmatpush1.msra.mxu0 0.0
        %3403 = vmatprep.subr.mxu0 0.0
        %3404 = vmatpush1.msra.mxu0 0.0
        %3405 = vmatprep.subr.mxu0 0.0
        %3406 = vmatpush1.msra.mxu0 0.0
        %3407 = vmatprep.subr.mxu0 0.0
        %3408 = vmatpush1.msra.mxu0 0.0
        %3409 = vmatprep.subr.mxu0 0.0
        %3410 = vmatpush1.msra.mxu0 0.0
        %3411 = vmatprep.subr.mxu0 0.0
        %3412 = vmatpush1.msra.mxu0 0.0
        %3413 = vmatprep.subr.mxu0 0.0
        %3414 = vmatpush1.msra.mxu0 0.0
        %3415 = vmatprep.mubr.f32.mxu0 0.0
        %3416 = vmatmul.mubr.f32.gmra.mrb[0].mxu0 %v3334
        %v3417 = vpop.f32.mrb[0].mxu0
        %v3418 = vadd.f32 1e-08, %v3417
        %v3419 = vpop.f32.mrb[0].mxu0
        %3420 = vdwg.mxu0
        %v3421 = vrsqrt.pop %v3418
        %v3422 = vlaneseq
        %v3423 = vshrl.u32 %v3422, 7
        %v3424 = vsub.s32 0, %v3423
        %v3425 = vrot.slane %v3421, %v3424
        %v3426 = vmul.f32 %v3302, %v3425
        %v3427 = vmul.f32 %v3303, %v3425
        %v3428 = vmul.f32 %v3304, %v3425
        %v3429 = vmul.f32 %v3305, %v3425
        %v3430 = vmul.f32 %v3306, %v3425
        %v3431 = vmul.f32 %v3307, %v3425
        %v3432 = vmul.f32 %v3308, %v3425
        %v3433 = vmul.f32 %v3309, %v3425
        %v3434 = vmul.f32 %v3310, %v3425
        %v3435 = vmul.f32 %v3311, %v3425
        %v3436 = vmul.f32 %v3312, %v3425
        %v3437 = vmul.f32 %v3313, %v3425
        %v3438 = vmul.f32 %v3314, %v3425
        %v3439 = vmul.f32 %v3315, %v3425
        %v3440 = vmul.f32 %v3316, %v3425
        %v3441 = vmul.f32 %v3317, %v3425
        %v3442 = vmul.f32 %v3318, %v3425
        %v3443 = vmul.f32 %v3319, %v3425
        %v3444 = vmul.f32 %v3320, %v3425
        %v3445 = vmul.f32 %v3321, %v3425
        %v3446 = vmul.f32 %v3322, %v3425
        %v3447 = vmul.f32 %v3323, %v3425
        %v3448 = vmul.f32 %v3324, %v3425
        %v3449 = vmul.f32 %v3325, %v3425
        %v3450 = vmul.f32 %v3326, %v3425
        %v3451 = vmul.f32 %v3327, %v3425
        %v3452 = vmul.f32 %v3328, %v3425
        %v3453 = vmul.f32 %v3329, %v3425
        %v3454 = vmul.f32 %v3330, %v3425
        %v3455 = vmul.f32 %v3331, %v3425
        %v3456 = vmul.f32 %v3332, %v3425
        %v3457 = vmul.f32 %v3333, %v3425
        %v3458 = vld [vmem:[%s7] sm:$0xff]
        %v3459 = vld [vmem:[%s7 + $0x8] sm:$0xff]
        %v3460 = vld [vmem:[%s7 + $0x10] sm:$0xff]
        %v3461 = vld [vmem:[%s7 + $0x18] sm:$0xff]
        %v3462 = vld [vmem:[%s7 + $0x20] sm:$0xff]
        %v3463 = vld [vmem:[%s7 + $0x28] sm:$0xff]
        %v3464 = vld [vmem:[%s7 + $0x30] sm:$0xff]
        %v3465 = vld [vmem:[%s7 + $0x38] sm:$0xff]
        %v3466 = vld [vmem:[%s7 + $0x40] sm:$0xff]
        %v3467 = vld [vmem:[%s7 + $0x48] sm:$0xff]
        %v3468 = vld [vmem:[%s7 + $0x50] sm:$0xff]
        %v3469 = vld [vmem:[%s7 + $0x58] sm:$0xff]
        %v3470 = vld [vmem:[%s7 + $0x60] sm:$0xff]
        %v3471 = vld [vmem:[%s7 + $0x68] sm:$0xff]
        %v3472 = vld [vmem:[%s7 + $0x70] sm:$0xff]
        %v3473 = vld [vmem:[%s7 + $0x78] sm:$0xff]
        %v3474 = vld [vmem:[%s7 + $0x80] sm:$0xff]
        %v3475 = vld [vmem:[%s7 + $0x88] sm:$0xff]
        %v3476 = vld [vmem:[%s7 + $0x90] sm:$0xff]
        %v3477 = vld [vmem:[%s7 + $0x98] sm:$0xff]
        %v3478 = vld [vmem:[%s7 + $0xa0] sm:$0xff]
        %v3479 = vld [vmem:[%s7 + $0xa8] sm:$0xff]
        %v3480 = vld [vmem:[%s7 + $0xb0] sm:$0xff]
        %v3481 = vld [vmem:[%s7 + $0xb8] sm:$0xff]
        %v3482 = vld [vmem:[%s7 + $0xc0] sm:$0xff]
        %v3483 = vld [vmem:[%s7 + $0xc8] sm:$0xff]
        %v3484 = vld [vmem:[%s7 + $0xd0] sm:$0xff]
        %v3485 = vld [vmem:[%s7 + $0xd8] sm:$0xff]
        %v3486 = vld [vmem:[%s7 + $0xe0] sm:$0xff]
        %v3487 = vld [vmem:[%s7 + $0xe8] sm:$0xff]
        %v3488 = vld [vmem:[%s7 + $0xf0] sm:$0xff]
        %v3489 = vld [vmem:[%s7 + $0xf8] sm:$0xff]
        %3491 = vset.pattern.permute.xlu0 0
        %3492 = vperm.xlu0 %3491, %v3458
        %v3493 = vpop.permute.xlu0 %3492
        %3496 = vset.pattern.permute.xlu0 0
        %3497 = vperm.xlu0 %3496, %v3459
        %v3498 = vpop.permute.xlu0 %3497
        %3501 = vset.pattern.permute.xlu0 0
        %3502 = vperm.xlu0 %3501, %v3460
        %v3503 = vpop.permute.xlu0 %3502
        %3506 = vset.pattern.permute.xlu0 0
        %3507 = vperm.xlu0 %3506, %v3461
        %v3508 = vpop.permute.xlu0 %3507
        %3511 = vset.pattern.permute.xlu0 0
        %3512 = vperm.xlu0 %3511, %v3462
        %v3513 = vpop.permute.xlu0 %3512
        %3516 = vset.pattern.permute.xlu0 0
        %3517 = vperm.xlu0 %3516, %v3463
        %v3518 = vpop.permute.xlu0 %3517
        %3521 = vset.pattern.permute.xlu0 0
        %3522 = vperm.xlu0 %3521, %v3464
        %v3523 = vpop.permute.xlu0 %3522
        %3526 = vset.pattern.permute.xlu0 0
        %3527 = vperm.xlu0 %3526, %v3465
        %v3528 = vpop.permute.xlu0 %3527
        %3531 = vset.pattern.permute.xlu0 0
        %3532 = vperm.xlu0 %3531, %v3466
        %v3533 = vpop.permute.xlu0 %3532
        %3536 = vset.pattern.permute.xlu0 0
        %3537 = vperm.xlu0 %3536, %v3467
        %v3538 = vpop.permute.xlu0 %3537
        %3541 = vset.pattern.permute.xlu0 0
        %3542 = vperm.xlu0 %3541, %v3468
        %v3543 = vpop.permute.xlu0 %3542
        %3546 = vset.pattern.permute.xlu0 0
        %3547 = vperm.xlu0 %3546, %v3469
        %v3548 = vpop.permute.xlu0 %3547
        %3551 = vset.pattern.permute.xlu0 0
        %3552 = vperm.xlu0 %3551, %v3470
        %v3553 = vpop.permute.xlu0 %3552
        %3556 = vset.pattern.permute.xlu0 0
        %3557 = vperm.xlu0 %3556, %v3471
        %v3558 = vpop.permute.xlu0 %3557
        %3561 = vset.pattern.permute.xlu0 0
        %3562 = vperm.xlu0 %3561, %v3472
        %v3563 = vpop.permute.xlu0 %3562
        %3566 = vset.pattern.permute.xlu0 0
        %3567 = vperm.xlu0 %3566, %v3473
        %v3568 = vpop.permute.xlu0 %3567
        %3571 = vset.pattern.permute.xlu0 0
        %3572 = vperm.xlu0 %3571, %v3474
        %v3573 = vpop.permute.xlu0 %3572
        %3576 = vset.pattern.permute.xlu0 0
        %3577 = vperm.xlu0 %3576, %v3475
        %v3578 = vpop.permute.xlu0 %3577
        %3581 = vset.pattern.permute.xlu0 0
        %3582 = vperm.xlu0 %3581, %v3476
        %v3583 = vpop.permute.xlu0 %3582
        %3586 = vset.pattern.permute.xlu0 0
        %3587 = vperm.xlu0 %3586, %v3477
        %v3588 = vpop.permute.xlu0 %3587
        %3591 = vset.pattern.permute.xlu0 0
        %3592 = vperm.xlu0 %3591, %v3478
        %v3593 = vpop.permute.xlu0 %3592
        %3596 = vset.pattern.permute.xlu0 0
        %3597 = vperm.xlu0 %3596, %v3479
        %v3598 = vpop.permute.xlu0 %3597
        %3601 = vset.pattern.permute.xlu0 0
        %3602 = vperm.xlu0 %3601, %v3480
        %v3603 = vpop.permute.xlu0 %3602
        %3606 = vset.pattern.permute.xlu0 0
        %3607 = vperm.xlu0 %3606, %v3481
        %v3608 = vpop.permute.xlu0 %3607
        %3611 = vset.pattern.permute.xlu0 0
        %3612 = vperm.xlu0 %3611, %v3482
        %v3613 = vpop.permute.xlu0 %3612
        %3616 = vset.pattern.permute.xlu0 0
        %3617 = vperm.xlu0 %3616, %v3483
        %v3618 = vpop.permute.xlu0 %3617
        %3621 = vset.pattern.permute.xlu0 0
        %3622 = vperm.xlu0 %3621, %v3484
        %v3623 = vpop.permute.xlu0 %3622
        %3626 = vset.pattern.permute.xlu0 0
        %3627 = vperm.xlu0 %3626, %v3485
        %v3628 = vpop.permute.xlu0 %3627
        %3631 = vset.pattern.permute.xlu0 0
        %3632 = vperm.xlu0 %3631, %v3486
        %v3633 = vpop.permute.xlu0 %3632
        %3636 = vset.pattern.permute.xlu0 0
        %3637 = vperm.xlu0 %3636, %v3487
        %v3638 = vpop.permute.xlu0 %3637
        %3641 = vset.pattern.permute.xlu0 0
        %3642 = vperm.xlu0 %3641, %v3488
        %v3643 = vpop.permute.xlu0 %3642
        %3646 = vset.pattern.permute.xlu0 0
        %3647 = vperm.xlu0 %3646, %v3489
        %v3648 = vpop.permute.xlu0 %3647
        %v3650 = vadd.f32 %v3426, %v3493
        %v3651 = vadd.f32 %v3427, %v3498
        %v3652 = vadd.f32 %v3428, %v3503
        %v3653 = vadd.f32 %v3429, %v3508
        %v3654 = vadd.f32 %v3430, %v3513
        %v3655 = vadd.f32 %v3431, %v3518
        %v3656 = vadd.f32 %v3432, %v3523
        %v3657 = vadd.f32 %v3433, %v3528
        %v3658 = vadd.f32 %v3434, %v3533
        %v3659 = vadd.f32 %v3435, %v3538
        %v3660 = vadd.f32 %v3436, %v3543
        %v3661 = vadd.f32 %v3437, %v3548
        %v3662 = vadd.f32 %v3438, %v3553
        %v3663 = vadd.f32 %v3439, %v3558
        %v3664 = vadd.f32 %v3440, %v3563
        %v3665 = vadd.f32 %v3441, %v3568
        %v3666 = vadd.f32 %v3442, %v3573
        %v3667 = vadd.f32 %v3443, %v3578
        %v3668 = vadd.f32 %v3444, %v3583
        %v3669 = vadd.f32 %v3445, %v3588
        %v3670 = vadd.f32 %v3446, %v3593
        %v3671 = vadd.f32 %v3447, %v3598
        %v3672 = vadd.f32 %v3448, %v3603
        %v3673 = vadd.f32 %v3449, %v3608
        %v3674 = vadd.f32 %v3450, %v3613
        %v3675 = vadd.f32 %v3451, %v3618
        %v3676 = vadd.f32 %v3452, %v3623
        %v3677 = vadd.f32 %v3453, %v3628
        %v3678 = vadd.f32 %v3454, %v3633
        %v3679 = vadd.f32 %v3455, %v3638
        %v3680 = vadd.f32 %v3456, %v3643
        %v3681 = vadd.f32 %v3457, %v3648
        %v3682 = vld [vmem:[%s6] sm:$0x1]
        %v3684 = vlaneseq
        %v3685 = vshrl.u32 %v3684, 7
        %v3686 = vsub.s32 0, %v3685
        %v3687 = vrot.slane %v3682, %v3686
        %v3689 = vadd.f32 %v3650, %v3687
        %v3690 = vadd.f32 %v3651, %v3687
        %v3691 = vadd.f32 %v3652, %v3687
        %v3692 = vadd.f32 %v3653, %v3687
        %v3693 = vadd.f32 %v3654, %v3687
        %v3694 = vadd.f32 %v3655, %v3687
        %v3695 = vadd.f32 %v3656, %v3687
        %v3696 = vadd.f32 %v3657, %v3687
        %v3697 = vadd.f32 %v3658, %v3687
        %v3698 = vadd.f32 %v3659, %v3687
        %v3699 = vadd.f32 %v3660, %v3687
        %v3700 = vadd.f32 %v3661, %v3687
        %v3701 = vadd.f32 %v3662, %v3687
        %v3702 = vadd.f32 %v3663, %v3687
        %v3703 = vadd.f32 %v3664, %v3687
        %v3704 = vadd.f32 %v3665, %v3687
        %v3705 = vadd.f32 %v3666, %v3687
        %v3706 = vadd.f32 %v3667, %v3687
        %v3707 = vadd.f32 %v3668, %v3687
        %v3708 = vadd.f32 %v3669, %v3687
        %v3709 = vadd.f32 %v3670, %v3687
        %v3710 = vadd.f32 %v3671, %v3687
        %v3711 = vadd.f32 %v3672, %v3687
        %v3712 = vadd.f32 %v3673, %v3687
        %v3713 = vadd.f32 %v3674, %v3687
        %v3714 = vadd.f32 %v3675, %v3687
        %v3715 = vadd.f32 %v3676, %v3687
        %v3716 = vadd.f32 %v3677, %v3687
        %v3717 = vadd.f32 %v3678, %v3687
        %v3718 = vadd.f32 %v3679, %v3687
        %v3719 = vadd.f32 %v3680, %v3687
        %v3720 = vadd.f32 %v3681, %v3687
        %vm3721 = vcmp.ge.f32.partialorder %v3689, 0.0
        %vm3722 = vcmp.ge.f32.partialorder %v3690, 0.0
        %vm3723 = vcmp.ge.f32.partialorder %v3691, 0.0
        %vm3724 = vcmp.ge.f32.partialorder %v3692, 0.0
        %vm3725 = vcmp.ge.f32.partialorder %v3693, 0.0
        %vm3726 = vcmp.ge.f32.partialorder %v3694, 0.0
        %vm3727 = vcmp.ge.f32.partialorder %v3695, 0.0
        %vm3728 = vcmp.ge.f32.partialorder %v3696, 0.0
        %vm3729 = vcmp.ge.f32.partialorder %v3697, 0.0
        %vm3730 = vcmp.ge.f32.partialorder %v3698, 0.0
        %vm3731 = vcmp.ge.f32.partialorder %v3699, 0.0
        %vm3732 = vcmp.ge.f32.partialorder %v3700, 0.0
        %vm3733 = vcmp.ge.f32.partialorder %v3701, 0.0
        %vm3734 = vcmp.ge.f32.partialorder %v3702, 0.0
        %vm3735 = vcmp.ge.f32.partialorder %v3703, 0.0
        %vm3736 = vcmp.ge.f32.partialorder %v3704, 0.0
        %vm3737 = vcmp.ge.f32.partialorder %v3705, 0.0
        %vm3738 = vcmp.ge.f32.partialorder %v3706, 0.0
        %vm3739 = vcmp.ge.f32.partialorder %v3707, 0.0
        %vm3740 = vcmp.ge.f32.partialorder %v3708, 0.0
        %vm3741 = vcmp.ge.f32.partialorder %v3709, 0.0
        %vm3742 = vcmp.ge.f32.partialorder %v3710, 0.0
        %vm3743 = vcmp.ge.f32.partialorder %v3711, 0.0
        %vm3744 = vcmp.ge.f32.partialorder %v3712, 0.0
        %vm3745 = vcmp.ge.f32.partialorder %v3713, 0.0
        %vm3746 = vcmp.ge.f32.partialorder %v3714, 0.0
        %vm3747 = vcmp.ge.f32.partialorder %v3715, 0.0
        %vm3748 = vcmp.ge.f32.partialorder %v3716, 0.0
        %vm3749 = vcmp.ge.f32.partialorder %v3717, 0.0
        %vm3750 = vcmp.ge.f32.partialorder %v3718, 0.0
        %vm3751 = vcmp.ge.f32.partialorder %v3719, 0.0
        %vm3752 = vcmp.ge.f32.partialorder %v3720, 0.0
        %v3753 = vmul.f32 %v3689, 0.2
        %v3754 = vmul.f32 %v3690, 0.2
        %v3755 = vmul.f32 %v3691, 0.2
        %v3756 = vmul.f32 %v3692, 0.2
        %v3757 = vmul.f32 %v3693, 0.2
        %v3758 = vmul.f32 %v3694, 0.2
        %v3759 = vmul.f32 %v3695, 0.2
        %v3760 = vmul.f32 %v3696, 0.2
        %v3761 = vmul.f32 %v3697, 0.2
        %v3762 = vmul.f32 %v3698, 0.2
        %v3763 = vmul.f32 %v3699, 0.2
        %v3764 = vmul.f32 %v3700, 0.2
        %v3765 = vmul.f32 %v3701, 0.2
        %v3766 = vmul.f32 %v3702, 0.2
        %v3767 = vmul.f32 %v3703, 0.2
        %v3768 = vmul.f32 %v3704, 0.2
        %v3769 = vmul.f32 %v3705, 0.2
        %v3770 = vmul.f32 %v3706, 0.2
        %v3771 = vmul.f32 %v3707, 0.2
        %v3772 = vmul.f32 %v3708, 0.2
        %v3773 = vmul.f32 %v3709, 0.2
        %v3774 = vmul.f32 %v3710, 0.2
        %v3775 = vmul.f32 %v3711, 0.2
        %v3776 = vmul.f32 %v3712, 0.2
        %v3777 = vmul.f32 %v3713, 0.2
        %v3778 = vmul.f32 %v3714, 0.2
        %v3779 = vmul.f32 %v3715, 0.2
        %v3780 = vmul.f32 %v3716, 0.2
        %v3781 = vmul.f32 %v3717, 0.2
        %v3782 = vmul.f32 %v3718, 0.2
        %v3783 = vmul.f32 %v3719, 0.2
        %v3784 = vmul.f32 %v3720, 0.2
        %v3785 = vsel %vm3721, %v3689, %v3753
        %v3786 = vsel %vm3722, %v3690, %v3754
        %v3787 = vsel %vm3723, %v3691, %v3755
        %v3788 = vsel %vm3724, %v3692, %v3756
        %v3789 = vsel %vm3725, %v3693, %v3757
        %v3790 = vsel %vm3726, %v3694, %v3758
        %v3791 = vsel %vm3727, %v3695, %v3759
        %v3792 = vsel %vm3728, %v3696, %v3760
        %v3793 = vsel %vm3729, %v3697, %v3761
        %v3794 = vsel %vm3730, %v3698, %v3762
        %v3795 = vsel %vm3731, %v3699, %v3763
        %v3796 = vsel %vm3732, %v3700, %v3764
        %v3797 = vsel %vm3733, %v3701, %v3765
        %v3798 = vsel %vm3734, %v3702, %v3766
        %v3799 = vsel %vm3735, %v3703, %v3767
        %v3800 = vsel %vm3736, %v3704, %v3768
        %v3801 = vsel %vm3737, %v3705, %v3769
        %v3802 = vsel %vm3738, %v3706, %v3770
        %v3803 = vsel %vm3739, %v3707, %v3771
        %v3804 = vsel %vm3740, %v3708, %v3772
        %v3805 = vsel %vm3741, %v3709, %v3773
        %v3806 = vsel %vm3742, %v3710, %v3774
        %v3807 = vsel %vm3743, %v3711, %v3775
        %v3808 = vsel %vm3744, %v3712, %v3776
        %v3809 = vsel %vm3745, %v3713, %v3777
        %v3810 = vsel %vm3746, %v3714, %v3778
        %v3811 = vsel %vm3747, %v3715, %v3779
        %v3812 = vsel %vm3748, %v3716, %v3780
        %v3813 = vsel %vm3749, %v3717, %v3781
        %v3814 = vsel %vm3750, %v3718, %v3782
        %v3815 = vsel %vm3751, %v3719, %v3783
        %v3816 = vsel %vm3752, %v3720, %v3784
        %v3817 = vmul.f32 %v3785, 1.4142135
        %v3818 = vmul.f32 %v3786, 1.4142135
        %v3819 = vmul.f32 %v3787, 1.4142135
        %v3820 = vmul.f32 %v3788, 1.4142135
        %v3821 = vmul.f32 %v3789, 1.4142135
        %v3822 = vmul.f32 %v3790, 1.4142135
        %v3823 = vmul.f32 %v3791, 1.4142135
        %v3824 = vmul.f32 %v3792, 1.4142135
        %v3825 = vmul.f32 %v3793, 1.4142135
        %v3826 = vmul.f32 %v3794, 1.4142135
        %v3827 = vmul.f32 %v3795, 1.4142135
        %v3828 = vmul.f32 %v3796, 1.4142135
        %v3829 = vmul.f32 %v3797, 1.4142135
        %v3830 = vmul.f32 %v3798, 1.4142135
        %v3831 = vmul.f32 %v3799, 1.4142135
        %v3832 = vmul.f32 %v3800, 1.4142135
        %v3833 = vmul.f32 %v3801, 1.4142135
        %v3834 = vmul.f32 %v3802, 1.4142135
        %v3835 = vmul.f32 %v3803, 1.4142135
        %v3836 = vmul.f32 %v3804, 1.4142135
        %v3837 = vmul.f32 %v3805, 1.4142135
        %v3838 = vmul.f32 %v3806, 1.4142135
        %v3839 = vmul.f32 %v3807, 1.4142135
        %v3840 = vmul.f32 %v3808, 1.4142135
        %v3841 = vmul.f32 %v3809, 1.4142135
        %v3842 = vmul.f32 %v3810, 1.4142135
        %v3843 = vmul.f32 %v3811, 1.4142135
        %v3844 = vmul.f32 %v3812, 1.4142135
        %v3845 = vmul.f32 %v3813, 1.4142135
        %v3846 = vmul.f32 %v3814, 1.4142135
        %v3847 = vmul.f32 %v3815, 1.4142135
        %v3848 = vmul.f32 %v3816, 1.4142135
        %v3849 = vmax.f32 %v3817, -256.0
        %v3850 = vmax.f32 %v3818, -256.0
        %v3851 = vmax.f32 %v3819, -256.0
        %v3852 = vmax.f32 %v3820, -256.0
        %v3853 = vmax.f32 %v3821, -256.0
        %v3854 = vmax.f32 %v3822, -256.0
        %v3855 = vmax.f32 %v3823, -256.0
        %v3856 = vmax.f32 %v3824, -256.0
        %v3857 = vmax.f32 %v3825, -256.0
        %v3858 = vmax.f32 %v3826, -256.0
        %v3859 = vmax.f32 %v3827, -256.0
        %v3860 = vmax.f32 %v3828, -256.0
        %v3861 = vmax.f32 %v3829, -256.0
        %v3862 = vmax.f32 %v3830, -256.0
        %v3863 = vmax.f32 %v3831, -256.0
        %v3864 = vmax.f32 %v3832, -256.0
        %v3865 = vmax.f32 %v3833, -256.0
        %v3866 = vmax.f32 %v3834, -256.0
        %v3867 = vmax.f32 %v3835, -256.0
        %v3868 = vmax.f32 %v3836, -256.0
        %v3869 = vmax.f32 %v3837, -256.0
        %v3870 = vmax.f32 %v3838, -256.0
        %v3871 = vmax.f32 %v3839, -256.0
        %v3872 = vmax.f32 %v3840, -256.0
        %v3873 = vmax.f32 %v3841, -256.0
        %v3874 = vmax.f32 %v3842, -256.0
        %v3875 = vmax.f32 %v3843, -256.0
        %v3876 = vmax.f32 %v3844, -256.0
        %v3877 = vmax.f32 %v3845, -256.0
        %v3878 = vmax.f32 %v3846, -256.0
        %v3879 = vmax.f32 %v3847, -256.0
        %v3880 = vmax.f32 %v3848, -256.0
        %v3881 = vmin.f32 %v3849, 256.0
        %v3882 = vmin.f32 %v3850, 256.0
        %v3883 = vmin.f32 %v3851, 256.0
        %v3884 = vmin.f32 %v3852, 256.0
        %v3885 = vmin.f32 %v3853, 256.0
        %v3886 = vmin.f32 %v3854, 256.0
        %v3887 = vmin.f32 %v3855, 256.0
        %v3888 = vmin.f32 %v3856, 256.0
        %v3889 = vmin.f32 %v3857, 256.0
        %v3890 = vmin.f32 %v3858, 256.0
        %v3891 = vmin.f32 %v3859, 256.0
        %v3892 = vmin.f32 %v3860, 256.0
        %v3893 = vmin.f32 %v3861, 256.0
        %v3894 = vmin.f32 %v3862, 256.0
        %v3895 = vmin.f32 %v3863, 256.0
        %v3896 = vmin.f32 %v3864, 256.0
        %v3897 = vmin.f32 %v3865, 256.0
        %v3898 = vmin.f32 %v3866, 256.0
        %v3899 = vmin.f32 %v3867, 256.0
        %v3900 = vmin.f32 %v3868, 256.0
        %v3901 = vmin.f32 %v3869, 256.0
        %v3902 = vmin.f32 %v3870, 256.0
        %v3903 = vmin.f32 %v3871, 256.0
        %v3904 = vmin.f32 %v3872, 256.0
        %v3905 = vmin.f32 %v3873, 256.0
        %v3906 = vmin.f32 %v3874, 256.0
        %v3907 = vmin.f32 %v3875, 256.0
        %v3908 = vmin.f32 %v3876, 256.0
        %v3909 = vmin.f32 %v3877, 256.0
        %v3910 = vmin.f32 %v3878, 256.0
        %v3911 = vmin.f32 %v3879, 256.0
        %v3912 = vmin.f32 %v3880, 256.0
        %s3913 = scalar_lea.vmem %s4, 128
        %v3914 = vld [vmem:[%s3913] sm:$0xff]
        %v3915 = vld [vmem:[%s3913 + $0x8] sm:$0xff]
        %v3916 = vld [vmem:[%s3913 + $0x10] sm:$0xff]
        %v3917 = vld [vmem:[%s3913 + $0x18] sm:$0xff]
        %v3918 = vld [vmem:[%s3913 + $0x20] sm:$0xff]
        %v3919 = vld [vmem:[%s3913 + $0x28] sm:$0xff]
        %v3920 = vld [vmem:[%s3913 + $0x30] sm:$0xff]
        %v3921 = vld [vmem:[%s3913 + $0x38] sm:$0xff]
        %v3922 = vld [vmem:[%s3913 + $0x40] sm:$0xff]
        %v3923 = vld [vmem:[%s3913 + $0x48] sm:$0xff]
        %v3924 = vld [vmem:[%s3913 + $0x50] sm:$0xff]
        %v3925 = vld [vmem:[%s3913 + $0x58] sm:$0xff]
        %v3926 = vld [vmem:[%s3913 + $0x60] sm:$0xff]
        %v3927 = vld [vmem:[%s3913 + $0x68] sm:$0xff]
        %v3928 = vld [vmem:[%s3913 + $0x70] sm:$0xff]
        %v3929 = vld [vmem:[%s3913 + $0x78] sm:$0xff]
        %v3931 = vrot.slane %v387, 1
        %3933 = vmatprep.subr.mxu0 0.0
        %3934 = vmatpush1.msra.mxu0 %v3914
        %3935 = vmatprep.subr.mxu0 0.0
        %3936 = vmatpush1.msra.mxu0 %v3915
        %3937 = vmatprep.subr.mxu0 0.0
        %3938 = vmatpush1.msra.mxu0 %v3916
        %3939 = vmatprep.subr.mxu0 0.0
        %3940 = vmatpush1.msra.mxu0 %v3917
        %3941 = vmatprep.subr.mxu0 0.0
        %3942 = vmatpush1.msra.mxu0 %v3918
        %3943 = vmatprep.subr.mxu0 0.0
        %3944 = vmatpush1.msra.mxu0 %v3919
        %3945 = vmatprep.subr.mxu0 0.0
        %3946 = vmatpush1.msra.mxu0 %v3920
        %3947 = vmatprep.subr.mxu0 0.0
        %3948 = vmatpush1.msra.mxu0 %v3921
        %3949 = vmatprep.subr.mxu0 0.0
        %3950 = vmatpush1.msra.mxu0 %v3922
        %3951 = vmatprep.subr.mxu0 0.0
        %3952 = vmatpush1.msra.mxu0 %v3923
        %3953 = vmatprep.subr.mxu0 0.0
        %3954 = vmatpush1.msra.mxu0 %v3924
        %3955 = vmatprep.subr.mxu0 0.0
        %3956 = vmatpush1.msra.mxu0 %v3925
        %3957 = vmatprep.subr.mxu0 0.0
        %3958 = vmatpush1.msra.mxu0 %v3926
        %3959 = vmatprep.subr.mxu0 0.0
        %3960 = vmatpush1.msra.mxu0 %v3927
        %3961 = vmatprep.subr.mxu0 0.0
        %3962 = vmatpush1.msra.mxu0 %v3928
        %3963 = vmatprep.subr.mxu0 0.0
        %3964 = vmatpush1.msra.mxu0 %v3929
        %3965 = vmatprep.subr.mxu0 0.0
        %3966 = vmatpush1.msra.mxu0 0.0
        %3967 = vmatprep.subr.mxu0 0.0
        %3968 = vmatpush1.msra.mxu0 0.0
        %3969 = vmatprep.subr.mxu0 0.0
        %3970 = vmatpush1.msra.mxu0 0.0
        %3971 = vmatprep.subr.mxu0 0.0
        %3972 = vmatpush1.msra.mxu0 0.0
        %3973 = vmatprep.subr.mxu0 0.0
        %3974 = vmatpush1.msra.mxu0 0.0
        %3975 = vmatprep.subr.mxu0 0.0
        %3976 = vmatpush1.msra.mxu0 0.0
        %3977 = vmatprep.subr.mxu0 0.0
        %3978 = vmatpush1.msra.mxu0 0.0
        %3979 = vmatprep.subr.mxu0 0.0
        %3980 = vmatpush1.msra.mxu0 0.0
        %3981 = vmatprep.subr.mxu0 0.0
        %3982 = vmatpush1.msra.mxu0 0.0
        %3983 = vmatprep.subr.mxu0 0.0
        %3984 = vmatpush1.msra.mxu0 0.0
        %3985 = vmatprep.subr.mxu0 0.0
        %3986 = vmatpush1.msra.mxu0 0.0
        %3987 = vmatprep.subr.mxu0 0.0
        %3988 = vmatpush1.msra.mxu0 0.0
        %3989 = vmatprep.subr.mxu0 0.0
        %3990 = vmatpush1.msra.mxu0 0.0
        %3991 = vmatprep.subr.mxu0 0.0
        %3992 = vmatpush1.msra.mxu0 0.0
        %3993 = vmatprep.subr.mxu0 0.0
        %3994 = vmatpush1.msra.mxu0 0.0
        %3995 = vmatprep.subr.mxu0 0.0
        %3996 = vmatpush1.msra.mxu0 0.0
        %3997 = vmatprep.mubr.f32.mxu0 0.0
        %3998 = vmatmul.mubr.f32.gmra.mrb[0].mxu0 %v3931
        %v3999 = vpop.f32.mrb[0].mxu0
        %v4000 = vadd.f32 0.0, %v3999
        %v4001 = vpop.f32.mrb[0].mxu0
        %4002 = vdwg.mxu0
        %v4003 = vmul.f32 %v4000, 0.25
        %s4004 = scalar_lea.vmem %s5, 1
        %v4005 = vld [vmem:[%s4004] sm:$0x1]
        %v4006 = vadd.f32 %v4003, %v4005
        %v4007 = vlaneseq
        %v4008 = vshrl.u32 %v4007, 7
        %v4009 = vsub.s32 0, %v4008
        %v4010 = vrot.slane %v4006, %v4009
        %v4011 = vmul.f32 %v3881, %v4010
        %v4012 = vmul.f32 %v3882, %v4010
        %v4013 = vmul.f32 %v3883, %v4010
        %v4014 = vmul.f32 %v3884, %v4010
        %v4015 = vmul.f32 %v3885, %v4010
        %v4016 = vmul.f32 %v3886, %v4010
        %v4017 = vmul.f32 %v3887, %v4010
        %v4018 = vmul.f32 %v3888, %v4010
        %v4019 = vmul.f32 %v3889, %v4010
        %v4020 = vmul.f32 %v3890, %v4010
        %v4021 = vmul.f32 %v3891, %v4010
        %v4022 = vmul.f32 %v3892, %v4010
        %v4023 = vmul.f32 %v3893, %v4010
        %v4024 = vmul.f32 %v3894, %v4010
        %v4025 = vmul.f32 %v3895, %v4010
        %v4026 = vmul.f32 %v3896, %v4010
        %v4027 = vmul.f32 %v3897, %v4010
        %v4028 = vmul.f32 %v3898, %v4010
        %v4029 = vmul.f32 %v3899, %v4010
        %v4030 = vmul.f32 %v3900, %v4010
        %v4031 = vmul.f32 %v3901, %v4010
        %v4032 = vmul.f32 %v3902, %v4010
        %v4033 = vmul.f32 %v3903, %v4010
        %v4034 = vmul.f32 %v3904, %v4010
        %v4035 = vmul.f32 %v3905, %v4010
        %v4036 = vmul.f32 %v3906, %v4010
        %v4037 = vmul.f32 %v3907, %v4010
        %v4038 = vmul.f32 %v3908, %v4010
        %v4039 = vmul.f32 %v3909, %v4010
        %v4040 = vmul.f32 %v3910, %v4010
        %v4041 = vmul.f32 %v3911, %v4010
        %v4042 = vmul.f32 %v3912, %v4010
        %4043 = vst [vmem:[%s1496 + $0x1] sm:$0xff] %v4011
        %4044 = vst [vmem:[%s1496 + $0x9] sm:$0xff] %v4012
        %4045 = vst [vmem:[%s1496 + $0x19] sm:$0xff] %v4013
        %4046 = vst [vmem:[%s1496 + $0x21] sm:$0xff] %v4014
        %4047 = vst [vmem:[%s1496 + $0x31] sm:$0xff] %v4015
        %4048 = vst [vmem:[%s1496 + $0x39] sm:$0xff] %v4016
        %4049 = vst [vmem:[%s1496 + $0x49] sm:$0xff] %v4017
        %4050 = vst [vmem:[%s1496 + $0x51] sm:$0xff] %v4018
        %4051 = vst [vmem:[%s1496 + $0x61] sm:$0xff] %v4019
        %4052 = vst [vmem:[%s1496 + $0x69] sm:$0xff] %v4020
        %4053 = vst [vmem:[%s1496 + $0x79] sm:$0xff] %v4021
        %4054 = vst [vmem:[%s1496 + $0x81] sm:$0xff] %v4022
        %4055 = vst [vmem:[%s1496 + $0x91] sm:$0xff] %v4023
        %4056 = vst [vmem:[%s1496 + $0x99] sm:$0xff] %v4024
        %4057 = vst [vmem:[%s1496 + $0xa9] sm:$0xff] %v4025
        %4058 = vst [vmem:[%s1496 + $0xb1] sm:$0xff] %v4026
        %4059 = vst [vmem:[%s1496 + $0xc1] sm:$0xff] %v4027
        %4060 = vst [vmem:[%s1496 + $0xc9] sm:$0xff] %v4028
        %4061 = vst [vmem:[%s1496 + $0xd9] sm:$0xff] %v4029
        %4062 = vst [vmem:[%s1496 + $0xe1] sm:$0xff] %v4030
        %4063 = vst [vmem:[%s1496 + $0xf1] sm:$0xff] %v4031
        %4064 = vst [vmem:[%s1496 + $0xf9] sm:$0xff] %v4032
        %4065 = vst [vmem:[%s1496 + $0x109] sm:$0xff] %v4033
        %4066 = vst [vmem:[%s1496 + $0x111] sm:$0xff] %v4034
        %4067 = vst [vmem:[%s1496 + $0x121] sm:$0xff] %v4035
        %4068 = vst [vmem:[%s1496 + $0x129] sm:$0xff] %v4036
        %4069 = vst [vmem:[%s1496 + $0x139] sm:$0xff] %v4037
        %4070 = vst [vmem:[%s1496 + $0x141] sm:$0xff] %v4038
        %4071 = vst [vmem:[%s1496 + $0x151] sm:$0xff] %v4039
        %4072 = vst [vmem:[%s1496 + $0x159] sm:$0xff] %v4040
        %4073 = vst [vmem:[%s1496 + $0x169] sm:$0xff] %v4041
        %4074 = vst [vmem:[%s1496 + $0x171] sm:$0xff] %v4042
        %v4075 = vld [vmem:[#allocation2] sm:$0xff]
        %v4076 = vld [vmem:[#allocation2 + $0x8] sm:$0xff]
        %v4077 = vld [vmem:[#allocation2 + $0x18] sm:$0xff]
        %v4078 = vld [vmem:[#allocation2 + $0x20] sm:$0xff]
        %v4079 = vld [vmem:[#allocation2 + $0x30] sm:$0xff]
        %v4080 = vld [vmem:[#allocation2 + $0x38] sm:$0xff]
        %v4081 = vld [vmem:[#allocation2 + $0x48] sm:$0xff]
        %v4082 = vld [vmem:[#allocation2 + $0x50] sm:$0xff]
        %v4083 = vld [vmem:[#allocation2 + $0x60] sm:$0xff]
        %v4084 = vld [vmem:[#allocation2 + $0x68] sm:$0xff]
        %v4085 = vld [vmem:[#allocation2 + $0x78] sm:$0xff]
        %v4086 = vld [vmem:[#allocation2 + $0x80] sm:$0xff]
        %v4087 = vld [vmem:[#allocation2 + $0x90] sm:$0xff]
        %v4088 = vld [vmem:[#allocation2 + $0x98] sm:$0xff]
        %v4089 = vld [vmem:[#allocation2 + $0xa8] sm:$0xff]
        %v4090 = vld [vmem:[#allocation2 + $0xb0] sm:$0xff]
        %v4091 = vld [vmem:[#allocation2 + $0xc0] sm:$0xff]
        %v4092 = vld [vmem:[#allocation2 + $0xc8] sm:$0xff]
        %v4093 = vld [vmem:[#allocation2 + $0xd8] sm:$0xff]
        %v4094 = vld [vmem:[#allocation2 + $0xe0] sm:$0xff]
        %v4095 = vld [vmem:[#allocation2 + $0xf0] sm:$0xff]
        %v4096 = vld [vmem:[#allocation2 + $0xf8] sm:$0xff]
        %v4097 = vld [vmem:[#allocation2 + $0x108] sm:$0xff]
        %v4098 = vld [vmem:[#allocation2 + $0x110] sm:$0xff]
        %v4099 = vld [vmem:[#allocation2 + $0x120] sm:$0xff]
        %v4100 = vld [vmem:[#allocation2 + $0x128] sm:$0xff]
        %v4101 = vld [vmem:[#allocation2 + $0x138] sm:$0xff]
        %v4102 = vld [vmem:[#allocation2 + $0x140] sm:$0xff]
        %v4103 = vld [vmem:[#allocation2 + $0x150] sm:$0xff]
        %v4104 = vld [vmem:[#allocation2 + $0x158] sm:$0xff]
        %v4105 = vld [vmem:[#allocation2 + $0x168] sm:$0xff]
        %v4106 = vld [vmem:[#allocation2 + $0x170] sm:$0xff]
        %v4107 = vpack.c.bf16 %v4076, %v4075
        %v4108 = vpack.c.bf16 %v4078, %v4077
        %v4109 = vpack.c.bf16 %v4080, %v4079
        %v4110 = vpack.c.bf16 %v4082, %v4081
        %v4111 = vpack.c.bf16 %v4084, %v4083
        %v4112 = vpack.c.bf16 %v4086, %v4085
        %v4113 = vpack.c.bf16 %v4088, %v4087
        %v4114 = vpack.c.bf16 %v4090, %v4089
        %v4115 = vpack.c.bf16 %v4092, %v4091
        %v4116 = vpack.c.bf16 %v4094, %v4093
        %v4117 = vpack.c.bf16 %v4096, %v4095
        %v4118 = vpack.c.bf16 %v4098, %v4097
        %v4119 = vpack.c.bf16 %v4100, %v4099
        %v4120 = vpack.c.bf16 %v4102, %v4101
        %v4121 = vpack.c.bf16 %v4104, %v4103
        %v4122 = vpack.c.bf16 %v4106, %v4105
        %s4123 = scalar_lea.vmem %s2, 576
        %v4124 = vld [vmem:[%s4123] sm:$0xf]
        %v4125 = vld [vmem:[%s4123 + $0x4] sm:$0xf]
        %v4126 = vld [vmem:[%s4123 + $0x8] sm:$0xf]
        %v4127 = vld [vmem:[%s4123 + $0xc] sm:$0xf]
        %v4128 = vld [vmem:[%s4123 + $0x10] sm:$0xf]
        %v4129 = vld [vmem:[%s4123 + $0x14] sm:$0xf]
        %v4130 = vld [vmem:[%s4123 + $0x18] sm:$0xf]
        %v4131 = vld [vmem:[%s4123 + $0x1c] sm:$0xf]
        %v4132 = vld [vmem:[%s4123 + $0x20] sm:$0xf]
        %v4133 = vld [vmem:[%s4123 + $0x24] sm:$0xf]
        %v4134 = vld [vmem:[%s4123 + $0x28] sm:$0xf]
        %v4135 = vld [vmem:[%s4123 + $0x2c] sm:$0xf]
        %v4136 = vld [vmem:[%s4123 + $0x30] sm:$0xf]
        %v4137 = vld [vmem:[%s4123 + $0x34] sm:$0xf]
        %v4138 = vld [vmem:[%s4123 + $0x38] sm:$0xf]
        %v4139 = vld [vmem:[%s4123 + $0x3c] sm:$0xf]
        %v4140 = vld [vmem:[#allocation2 + $0x1] sm:$0xff]
        %v4141 = vld [vmem:[#allocation2 + $0x9] sm:$0xff]
        %v4142 = vld [vmem:[#allocation2 + $0x19] sm:$0xff]
        %v4143 = vld [vmem:[#allocation2 + $0x21] sm:$0xff]
        %v4144 = vld [vmem:[#allocation2 + $0x31] sm:$0xff]
        %v4145 = vld [vmem:[#allocation2 + $0x39] sm:$0xff]
        %v4146 = vld [vmem:[#allocation2 + $0x49] sm:$0xff]
        %v4147 = vld [vmem:[#allocation2 + $0x51] sm:$0xff]
        %v4148 = vld [vmem:[#allocation2 + $0x61] sm:$0xff]
        %v4149 = vld [vmem:[#allocation2 + $0x69] sm:$0xff]
        %v4150 = vld [vmem:[#allocation2 + $0x79] sm:$0xff]
        %v4151 = vld [vmem:[#allocation2 + $0x81] sm:$0xff]
        %v4152 = vld [vmem:[#allocation2 + $0x91] sm:$0xff]
        %v4153 = vld [vmem:[#allocation2 + $0x99] sm:$0xff]
        %v4154 = vld [vmem:[#allocation2 + $0xa9] sm:$0xff]
        %v4155 = vld [vmem:[#allocation2 + $0xb1] sm:$0xff]
        %v4156 = vld [vmem:[#allocation2 + $0xc1] sm:$0xff]
        %v4157 = vld [vmem:[#allocation2 + $0xc9] sm:$0xff]
        %v4158 = vld [vmem:[#allocation2 + $0xd9] sm:$0xff]
        %v4159 = vld [vmem:[#allocation2 + $0xe1] sm:$0xff]
        %v4160 = vld [vmem:[#allocation2 + $0xf1] sm:$0xff]
        %v4161 = vld [vmem:[#allocation2 + $0xf9] sm:$0xff]
        %v4162 = vld [vmem:[#allocation2 + $0x109] sm:$0xff]
        %v4163 = vld [vmem:[#allocation2 + $0x111] sm:$0xff]
        %v4164 = vld [vmem:[#allocation2 + $0x121] sm:$0xff]
        %v4165 = vld [vmem:[#allocation2 + $0x129] sm:$0xff]
        %v4166 = vld [vmem:[#allocation2 + $0x139] sm:$0xff]
        %v4167 = vld [vmem:[#allocation2 + $0x141] sm:$0xff]
        %v4168 = vld [vmem:[#allocation2 + $0x151] sm:$0xff]
        %v4169 = vld [vmem:[#allocation2 + $0x159] sm:$0xff]
        %v4170 = vld [vmem:[#allocation2 + $0x169] sm:$0xff]
        %v4171 = vld [vmem:[#allocation2 + $0x171] sm:$0xff]
        %v4172 = vpack.c.bf16 %v4141, %v4140
        %v4173 = vpack.c.bf16 %v4143, %v4142
        %v4174 = vpack.c.bf16 %v4145, %v4144
        %v4175 = vpack.c.bf16 %v4147, %v4146
        %v4176 = vpack.c.bf16 %v4149, %v4148
        %v4177 = vpack.c.bf16 %v4151, %v4150
        %v4178 = vpack.c.bf16 %v4153, %v4152
        %v4179 = vpack.c.bf16 %v4155, %v4154
        %v4180 = vpack.c.bf16 %v4157, %v4156
        %v4181 = vpack.c.bf16 %v4159, %v4158
        %v4182 = vpack.c.bf16 %v4161, %v4160
        %v4183 = vpack.c.bf16 %v4163, %v4162
        %v4184 = vpack.c.bf16 %v4165, %v4164
        %v4185 = vpack.c.bf16 %v4167, %v4166
        %v4186 = vpack.c.bf16 %v4169, %v4168
        %v4187 = vpack.c.bf16 %v4171, %v4170
        %s4188 = scalar_lea.vmem %s2, 640
        %v4189 = vld [vmem:[%s4188] sm:$0xf]
        %v4190 = vld [vmem:[%s4188 + $0x4] sm:$0xf]
        %v4191 = vld [vmem:[%s4188 + $0x8] sm:$0xf]
        %v4192 = vld [vmem:[%s4188 + $0xc] sm:$0xf]
        %v4193 = vld [vmem:[%s4188 + $0x10] sm:$0xf]
        %v4194 = vld [vmem:[%s4188 + $0x14] sm:$0xf]
        %v4195 = vld [vmem:[%s4188 + $0x18] sm:$0xf]
        %v4196 = vld [vmem:[%s4188 + $0x1c] sm:$0xf]
        %v4197 = vld [vmem:[%s4188 + $0x20] sm:$0xf]
        %v4198 = vld [vmem:[%s4188 + $0x24] sm:$0xf]
        %v4199 = vld [vmem:[%s4188 + $0x28] sm:$0xf]
        %v4200 = vld [vmem:[%s4188 + $0x2c] sm:$0xf]
        %v4201 = vld [vmem:[%s4188 + $0x30] sm:$0xf]
        %v4202 = vld [vmem:[%s4188 + $0x34] sm:$0xf]
        %v4203 = vld [vmem:[%s4188 + $0x38] sm:$0xf]
        %v4204 = vld [vmem:[%s4188 + $0x3c] sm:$0xf]
        %v4221 = vunpack.c.l.b16 %v4189
        %v4222 = vunpack.c.l.b16 %v4190
        %v4223 = vunpack.c.l.b16 %v4191
        %v4224 = vunpack.c.l.b16 %v4192
        %v4225 = vunpack.c.l.b16 %v4193
        %v4226 = vunpack.c.l.b16 %v4194
        %v4227 = vunpack.c.l.b16 %v4195
        %v4228 = vunpack.c.l.b16 %v4196
        %v4229 = vunpack.c.l.b16 %v4197
        %v4230 = vunpack.c.l.b16 %v4198
        %v4231 = vunpack.c.l.b16 %v4199
        %v4232 = vunpack.c.l.b16 %v4200
        %v4233 = vunpack.c.l.b16 %v4201
        %v4234 = vunpack.c.l.b16 %v4202
        %v4235 = vunpack.c.l.b16 %v4203
        %v4236 = vunpack.c.l.b16 %v4204
        %v4237 = vpack.c.b16 %v4222, %v4221
        %v4238 = vpack.c.b16 %v4224, %v4223
        %v4239 = vpack.c.b16 %v4226, %v4225
        %v4240 = vpack.c.b16 %v4228, %v4227
        %v4241 = vpack.c.b16 %v4230, %v4229
        %v4242 = vpack.c.b16 %v4232, %v4231
        %v4243 = vpack.c.b16 %v4234, %v4233
        %v4244 = vpack.c.b16 %v4236, %v4235
        %4253 = vmatprep.subr.bf16.mxu0 0
        %4254 = vmatpush1.bf16.msra.mxu0 %v4237
        %4255 = vmatprep.subr.bf16.mxu0 0
        %4256 = vmatpush1.bf16.msra.mxu0 %v4238
        %4257 = vmatprep.subr.bf16.mxu0 0
        %4258 = vmatpush1.bf16.msra.mxu0 %v4239
        %4259 = vmatprep.subr.bf16.mxu0 0
        %4260 = vmatpush1.bf16.msra.mxu0 %v4240
        %4261 = vmatprep.subr.bf16.mxu0 0
        %4262 = vmatpush1.bf16.msra.mxu0 %v4241
        %4263 = vmatprep.subr.bf16.mxu0 0
        %4264 = vmatpush1.bf16.msra.mxu0 %v4242
        %4265 = vmatprep.subr.bf16.mxu0 0
        %4266 = vmatpush1.bf16.msra.mxu0 %v4243
        %4267 = vmatprep.subr.bf16.mxu0 0
        %4268 = vmatpush1.bf16.msra.mxu0 %v4244
        %4269 = vmatprep.subr.bf16.mxu0 0
        %4270 = vmatpush1.bf16.msra.mxu0 0
        %4271 = vmatprep.subr.bf16.mxu0 0
        %4272 = vmatpush1.bf16.msra.mxu0 0
        %4273 = vmatprep.subr.bf16.mxu0 0
        %4274 = vmatpush1.bf16.msra.mxu0 0
        %4275 = vmatprep.subr.bf16.mxu0 0
        %4276 = vmatpush1.bf16.msra.mxu0 0
        %4277 = vmatprep.subr.bf16.mxu0 0
        %4278 = vmatpush1.bf16.msra.mxu0 0
        %4279 = vmatprep.subr.bf16.mxu0 0
        %4280 = vmatpush1.bf16.msra.mxu0 0
        %4281 = vmatprep.subr.bf16.mxu0 0
        %4282 = vmatpush1.bf16.msra.mxu0 0
        %4283 = vmatprep.subr.bf16.mxu0 0
        %4284 = vmatpush1.bf16.msra.mxu0 0
        %4285 = vmatprep.mubr.bf16.mxu0 0
        %4286 = vmatmul.mubr.bf16.gmra.mrb[0].mxu0 %v4172
        %v4287 = vpop.f32.mrb[0].mxu0
        %v4288 = vadd.f32 0.0, %v4287
        %v4289 = vpop.f32.mrb[0].mxu0
        %v4290 = vpop.f32.mrb[0].mxu0
        %v4291 = vadd.f32 0.0, %v4290
        %v4292 = vpop.f32.mrb[0].mxu0
        %4293 = vmatprep.mubr.bf16.mxu0 0
        %4294 = vmatmul.mubr.bf16.gmra.mrb[0].mxu0 %v4173
        %v4295 = vpop.f32.mrb[0].mxu0
        %v4296 = vadd.f32 0.0, %v4295
        %v4297 = vpop.f32.mrb[0].mxu0
        %v4298 = vpop.f32.mrb[0].mxu0
        %v4299 = vadd.f32 0.0, %v4298
        %v4300 = vpop.f32.mrb[0].mxu0
        %4301 = vmatprep.mubr.bf16.mxu0 0
        %4302 = vmatmul.mubr.bf16.gmra.mrb[0].mxu0 %v4174
        %v4303 = vpop.f32.mrb[0].mxu0
        %v4304 = vadd.f32 0.0, %v4303
        %v4305 = vpop.f32.mrb[0].mxu0
        %v4306 = vpop.f32.mrb[0].mxu0
        %v4307 = vadd.f32 0.0, %v4306
        %v4308 = vpop.f32.mrb[0].mxu0
        %4309 = vmatprep.mubr.bf16.mxu0 0
        %4310 = vmatmul.mubr.bf16.gmra.mrb[0].mxu0 %v4175
        %v4311 = vpop.f32.mrb[0].mxu0
        %v4312 = vadd.f32 0.0, %v4311
        %v4313 = vpop.f32.mrb[0].mxu0
        %v4314 = vpop.f32.mrb[0].mxu0
        %v4315 = vadd.f32 0.0, %v4314
        %v4316 = vpop.f32.mrb[0].mxu0
        %4317 = vmatprep.mubr.bf16.mxu0 0
        %4318 = vmatmul.mubr.bf16.gmra.mrb[0].mxu0 %v4176
        %v4319 = vpop.f32.mrb[0].mxu0
        %v4320 = vadd.f32 0.0, %v4319
        %v4321 = vpop.f32.mrb[0].mxu0
        %v4322 = vpop.f32.mrb[0].mxu0
        %v4323 = vadd.f32 0.0, %v4322
        %v4324 = vpop.f32.mrb[0].mxu0
        %4325 = vmatprep.mubr.bf16.mxu0 0
        %4326 = vmatmul.mubr.bf16.gmra.mrb[0].mxu0 %v4177
        %v4327 = vpop.f32.mrb[0].mxu0
        %v4328 = vadd.f32 0.0, %v4327
        %v4329 = vpop.f32.mrb[0].mxu0
        %v4330 = vpop.f32.mrb[0].mxu0
        %v4331 = vadd.f32 0.0, %v4330
        %v4332 = vpop.f32.mrb[0].mxu0
        %4333 = vmatprep.mubr.bf16.mxu0 0
        %4334 = vmatmul.mubr.bf16.gmra.mrb[0].mxu0 %v4178
        %v4335 = vpop.f32.mrb[0].mxu0
        %v4336 = vadd.f32 0.0, %v4335
        %v4337 = vpop.f32.mrb[0].mxu0
        %v4338 = vpop.f32.mrb[0].mxu0
        %v4339 = vadd.f32 0.0, %v4338
        %v4340 = vpop.f32.mrb[0].mxu0
        %4341 = vmatprep.mubr.bf16.mxu0 0
        %4342 = vmatmul.mubr.bf16.gmra.mrb[0].mxu0 %v4179
        %v4343 = vpop.f32.mrb[0].mxu0
        %v4344 = vadd.f32 0.0, %v4343
        %v4345 = vpop.f32.mrb[0].mxu0
        %v4346 = vpop.f32.mrb[0].mxu0
        %v4347 = vadd.f32 0.0, %v4346
        %v4348 = vpop.f32.mrb[0].mxu0
        %4349 = vmatprep.mubr.bf16.mxu0 0
        %4350 = vmatmul.mubr.bf16.gmra.mrb[0].mxu0 %v4180
        %v4351 = vpop.f32.mrb[0].mxu0
        %v4352 = vadd.f32 0.0, %v4351
        %v4353 = vpop.f32.mrb[0].mxu0
        %v4354 = vpop.f32.mrb[0].mxu0
        %v4355 = vadd.f32 0.0, %v4354
        %v4356 = vpop.f32.mrb[0].mxu0
        %4357 = vmatprep.mubr.bf16.mxu0 0
        %4358 = vmatmul.mubr.bf16.gmra.mrb[0].mxu0 %v4181
        %v4359 = vpop.f32.mrb[0].mxu0
        %v4360 = vadd.f32 0.0, %v4359
        %v4361 = vpop.f32.mrb[0].mxu0
        %v4362 = vpop.f32.mrb[0].mxu0
        %v4363 = vadd.f32 0.0, %v4362
        %v4364 = vpop.f32.mrb[0].mxu0
        %4365 = vmatprep.mubr.bf16.mxu0 0
        %4366 = vmatmul.mubr.bf16.gmra.mrb[0].mxu0 %v4182
        %v4367 = vpop.f32.mrb[0].mxu0
        %v4368 = vadd.f32 0.0, %v4367
        %v4369 = vpop.f32.mrb[0].mxu0
        %v4370 = vpop.f32.mrb[0].mxu0
        %v4371 = vadd.f32 0.0, %v4370
        %v4372 = vpop.f32.mrb[0].mxu0
        %4373 = vmatprep.mubr.bf16.mxu0 0
        %4374 = vmatmul.mubr.bf16.gmra.mrb[0].mxu0 %v4183
        %v4375 = vpop.f32.mrb[0].mxu0
        %v4376 = vadd.f32 0.0, %v4375
        %v4377 = vpop.f32.mrb[0].mxu0
        %v4378 = vpop.f32.mrb[0].mxu0
        %v4379 = vadd.f32 0.0, %v4378
        %v4380 = vpop.f32.mrb[0].mxu0
        %4381 = vmatprep.mubr.bf16.mxu0 0
        %4382 = vmatmul.mubr.bf16.gmra.mrb[0].mxu0 %v4184
        %v4383 = vpop.f32.mrb[0].mxu0
        %v4384 = vadd.f32 0.0, %v4383
        %v4385 = vpop.f32.mrb[0].mxu0
        %v4386 = vpop.f32.mrb[0].mxu0
        %v4387 = vadd.f32 0.0, %v4386
        %v4388 = vpop.f32.mrb[0].mxu0
        %4389 = vmatprep.mubr.bf16.mxu0 0
        %4390 = vmatmul.mubr.bf16.gmra.mrb[0].mxu0 %v4185
        %v4391 = vpop.f32.mrb[0].mxu0
        %v4392 = vadd.f32 0.0, %v4391
        %v4393 = vpop.f32.mrb[0].mxu0
        %v4394 = vpop.f32.mrb[0].mxu0
        %v4395 = vadd.f32 0.0, %v4394
        %v4396 = vpop.f32.mrb[0].mxu0
        %4397 = vmatprep.mubr.bf16.mxu0 0
        %4398 = vmatmul.mubr.bf16.gmra.mrb[0].mxu0 %v4186
        %v4399 = vpop.f32.mrb[0].mxu0
        %v4400 = vadd.f32 0.0, %v4399
        %v4401 = vpop.f32.mrb[0].mxu0
        %v4402 = vpop.f32.mrb[0].mxu0
        %v4403 = vadd.f32 0.0, %v4402
        %v4404 = vpop.f32.mrb[0].mxu0
        %4405 = vmatprep.mubr.bf16.mxu0 0
        %4406 = vmatmul.mubr.bf16.gmra.mrb[0].mxu0 %v4187
        %v4407 = vpop.f32.mrb[0].mxu0
        %v4408 = vadd.f32 0.0, %v4407
        %v4409 = vpop.f32.mrb[0].mxu0
        %v4410 = vpop.f32.mrb[0].mxu0
        %v4411 = vadd.f32 0.0, %v4410
        %v4412 = vpop.f32.mrb[0].mxu0
        %4413 = vdwg.mxu0
        %v4430 = vunpack.c.l.b16 %v4124
        %v4431 = vunpack.c.l.b16 %v4125
        %v4432 = vunpack.c.l.b16 %v4126
        %v4433 = vunpack.c.l.b16 %v4127
        %v4434 = vunpack.c.l.b16 %v4128
        %v4435 = vunpack.c.l.b16 %v4129
        %v4436 = vunpack.c.l.b16 %v4130
        %v4437 = vunpack.c.l.b16 %v4131
        %v4438 = vunpack.c.l.b16 %v4132
        %v4439 = vunpack.c.l.b16 %v4133
        %v4440 = vunpack.c.l.b16 %v4134
        %v4441 = vunpack.c.l.b16 %v4135
        %v4442 = vunpack.c.l.b16 %v4136
        %v4443 = vunpack.c.l.b16 %v4137
        %v4444 = vunpack.c.l.b16 %v4138
        %v4445 = vunpack.c.l.b16 %v4139
        %v4446 = vpack.c.b16 %v4431, %v4430
        %v4447 = vpack.c.b16 %v4433, %v4432
        %v4448 = vpack.c.b16 %v4435, %v4434
        %v4449 = vpack.c.b16 %v4437, %v4436
        %v4450 = vpack.c.b16 %v4439, %v4438
        %v4451 = vpack.c.b16 %v4441, %v4440
        %v4452 = vpack.c.b16 %v4443, %v4442
        %v4453 = vpack.c.b16 %v4445, %v4444
        %4462 = vmatprep.subr.bf16.mxu0 0
        %4463 = vmatpush1.bf16.msra.mxu0 %v4446
        %4464 = vmatprep.subr.bf16.mxu0 0
        %4465 = vmatpush1.bf16.msra.mxu0 %v4447
        %4466 = vmatprep.subr.bf16.mxu0 0
        %4467 = vmatpush1.bf16.msra.mxu0 %v4448
        %4468 = vmatprep.subr.bf16.mxu0 0
        %4469 = vmatpush1.bf16.msra.mxu0 %v4449
        %4470 = vmatprep.subr.bf16.mxu0 0
        %4471 = vmatpush1.bf16.msra.mxu0 %v4450
        %4472 = vmatprep.subr.bf16.mxu0 0
        %4473 = vmatpush1.bf16.msra.mxu0 %v4451
        %4474 = vmatprep.subr.bf16.mxu0 0
        %4475 = vmatpush1.bf16.msra.mxu0 %v4452
        %4476 = vmatprep.subr.bf16.mxu0 0
        %4477 = vmatpush1.bf16.msra.mxu0 %v4453
        %4478 = vmatprep.subr.bf16.mxu0 0
        %4479 = vmatpush1.bf16.msra.mxu0 0
        %4480 = vmatprep.subr.bf16.mxu0 0
        %4481 = vmatpush1.bf16.msra.mxu0 0
        %4482 = vmatprep.subr.bf16.mxu0 0
        %4483 = vmatpush1.bf16.msra.mxu0 0
        %4484 = vmatprep.subr.bf16.mxu0 0
        %4485 = vmatpush1.bf16.msra.mxu0 0
        %4486 = vmatprep.subr.bf16.mxu0 0
        %4487 = vmatpush1.bf16.msra.mxu0 0
        %4488 = vmatprep.subr.bf16.mxu0 0
        %4489 = vmatpush1.bf16.msra.mxu0 0
        %4490 = vmatprep.subr.bf16.mxu0 0
        %4491 = vmatpush1.bf16.msra.mxu0 0
        %4492 = vmatprep.subr.bf16.mxu0 0
        %4493 = vmatpush1.bf16.msra.mxu0 0
        %4494 = vmatprep.mubr.bf16.mxu0 0
        %4495 = vmatmul.mubr.bf16.gmra.mrb[0].mxu0 %v4107
        %v4496 = vpop.f32.mrb[0].mxu0
        %v4497 = vadd.f32 %v4288, %v4496
        %v4498 = vpop.f32.mrb[0].mxu0
        %v4499 = vpop.f32.mrb[0].mxu0
        %v4500 = vadd.f32 %v4291, %v4499
        %v4501 = vpop.f32.mrb[0].mxu0
        %4502 = vmatprep.mubr.bf16.mxu0 0
        %4503 = vmatmul.mubr.bf16.gmra.mrb[0].mxu0 %v4108
        %v4504 = vpop.f32.mrb[0].mxu0
        %v4505 = vadd.f32 %v4296, %v4504
        %v4506 = vpop.f32.mrb[0].mxu0
        %v4507 = vpop.f32.mrb[0].mxu0
        %v4508 = vadd.f32 %v4299, %v4507
        %v4509 = vpop.f32.mrb[0].mxu0
        %4510 = vmatprep.mubr.bf16.mxu0 0
        %4511 = vmatmul.mubr.bf16.gmra.mrb[0].mxu0 %v4109
        %v4512 = vpop.f32.mrb[0].mxu0
        %v4513 = vadd.f32 %v4304, %v4512
        %v4514 = vpop.f32.mrb[0].mxu0
        %v4515 = vpop.f32.mrb[0].mxu0
        %v4516 = vadd.f32 %v4307, %v4515
        %v4517 = vpop.f32.mrb[0].mxu0
        %4518 = vmatprep.mubr.bf16.mxu0 0
        %4519 = vmatmul.mubr.bf16.gmra.mrb[0].mxu0 %v4110
        %v4520 = vpop.f32.mrb[0].mxu0
        %v4521 = vadd.f32 %v4312, %v4520
        %v4522 = vpop.f32.mrb[0].mxu0
        %v4523 = vpop.f32.mrb[0].mxu0
        %v4524 = vadd.f32 %v4315, %v4523
        %v4525 = vpop.f32.mrb[0].mxu0
        %4526 = vmatprep.mubr.bf16.mxu0 0
        %4527 = vmatmul.mubr.bf16.gmra.mrb[0].mxu0 %v4111
        %v4528 = vpop.f32.mrb[0].mxu0
        %v4529 = vadd.f32 %v4320, %v4528
        %v4530 = vpop.f32.mrb[0].mxu0
        %v4531 = vpop.f32.mrb[0].mxu0
        %v4532 = vadd.f32 %v4323, %v4531
        %v4533 = vpop.f32.mrb[0].mxu0
        %4534 = vmatprep.mubr.bf16.mxu0 0
        %4535 = vmatmul.mubr.bf16.gmra.mrb[0].mxu0 %v4112
        %v4536 = vpop.f32.mrb[0].mxu0
        %v4537 = vadd.f32 %v4328, %v4536
        %v4538 = vpop.f32.mrb[0].mxu0
        %v4539 = vpop.f32.mrb[0].mxu0
        %v4540 = vadd.f32 %v4331, %v4539
        %v4541 = vpop.f32.mrb[0].mxu0
        %4542 = vmatprep.mubr.bf16.mxu0 0
        %4543 = vmatmul.mubr.bf16.gmra.mrb[0].mxu0 %v4113
        %v4544 = vpop.f32.mrb[0].mxu0
        %v4545 = vadd.f32 %v4336, %v4544
        %v4546 = vpop.f32.mrb[0].mxu0
        %v4547 = vpop.f32.mrb[0].mxu0
        %v4548 = vadd.f32 %v4339, %v4547
        %v4549 = vpop.f32.mrb[0].mxu0
        %4550 = vmatprep.mubr.bf16.mxu0 0
        %4551 = vmatmul.mubr.bf16.gmra.mrb[0].mxu0 %v4114
        %v4552 = vpop.f32.mrb[0].mxu0
        %v4553 = vadd.f32 %v4344, %v4552
        %v4554 = vpop.f32.mrb[0].mxu0
        %v4555 = vpop.f32.mrb[0].mxu0
        %v4556 = vadd.f32 %v4347, %v4555
        %v4557 = vpop.f32.mrb[0].mxu0
        %4558 = vmatprep.mubr.bf16.mxu0 0
        %4559 = vmatmul.mubr.bf16.gmra.mrb[0].mxu0 %v4115
        %v4560 = vpop.f32.mrb[0].mxu0
        %v4561 = vadd.f32 %v4352, %v4560
        %v4562 = vpop.f32.mrb[0].mxu0
        %v4563 = vpop.f32.mrb[0].mxu0
        %v4564 = vadd.f32 %v4355, %v4563
        %v4565 = vpop.f32.mrb[0].mxu0
        %4566 = vmatprep.mubr.bf16.mxu0 0
        %4567 = vmatmul.mubr.bf16.gmra.mrb[0].mxu0 %v4116
        %v4568 = vpop.f32.mrb[0].mxu0
        %v4569 = vadd.f32 %v4360, %v4568
        %v4570 = vpop.f32.mrb[0].mxu0
        %v4571 = vpop.f32.mrb[0].mxu0
        %v4572 = vadd.f32 %v4363, %v4571
        %v4573 = vpop.f32.mrb[0].mxu0
        %4574 = vmatprep.mubr.bf16.mxu0 0
        %4575 = vmatmul.mubr.bf16.gmra.mrb[0].mxu0 %v4117
        %v4576 = vpop.f32.mrb[0].mxu0
        %v4577 = vadd.f32 %v4368, %v4576
        %v4578 = vpop.f32.mrb[0].mxu0
        %v4579 = vpop.f32.mrb[0].mxu0
        %v4580 = vadd.f32 %v4371, %v4579
        %v4581 = vpop.f32.mrb[0].mxu0
        %4582 = vmatprep.mubr.bf16.mxu0 0
        %4583 = vmatmul.mubr.bf16.gmra.mrb[0].mxu0 %v4118
        %v4584 = vpop.f32.mrb[0].mxu0
        %v4585 = vadd.f32 %v4376, %v4584
        %v4586 = vpop.f32.mrb[0].mxu0
        %v4587 = vpop.f32.mrb[0].mxu0
        %v4588 = vadd.f32 %v4379, %v4587
        %v4589 = vpop.f32.mrb[0].mxu0
        %4590 = vmatprep.mubr.bf16.mxu0 0
        %4591 = vmatmul.mubr.bf16.gmra.mrb[0].mxu0 %v4119
        %v4592 = vpop.f32.mrb[0].mxu0
        %v4593 = vadd.f32 %v4384, %v4592
        %v4594 = vpop.f32.mrb[0].mxu0
        %v4595 = vpop.f32.mrb[0].mxu0
        %v4596 = vadd.f32 %v4387, %v4595
        %v4597 = vpop.f32.mrb[0].mxu0
        %4598 = vmatprep.mubr.bf16.mxu0 0
        %4599 = vmatmul.mubr.bf16.gmra.mrb[0].mxu0 %v4120
        %v4600 = vpop.f32.mrb[0].mxu0
        %v4601 = vadd.f32 %v4392, %v4600
        %v4602 = vpop.f32.mrb[0].mxu0
        %v4603 = vpop.f32.mrb[0].mxu0
        %v4604 = vadd.f32 %v4395, %v4603
        %v4605 = vpop.f32.mrb[0].mxu0
        %4606 = vmatprep.mubr.bf16.mxu0 0
        %4607 = vmatmul.mubr.bf16.gmra.mrb[0].mxu0 %v4121
        %v4608 = vpop.f32.mrb[0].mxu0
        %v4609 = vadd.f32 %v4400, %v4608
        %v4610 = vpop.f32.mrb[0].mxu0
        %v4611 = vpop.f32.mrb[0].mxu0
        %v4612 = vadd.f32 %v4403, %v4611
        %v4613 = vpop.f32.mrb[0].mxu0
        %4614 = vmatprep.mubr.bf16.mxu0 0
        %4615 = vmatmul.mubr.bf16.gmra.mrb[0].mxu0 %v4122
        %v4616 = vpop.f32.mrb[0].mxu0
        %v4617 = vadd.f32 %v4408, %v4616
        %v4618 = vpop.f32.mrb[0].mxu0
        %v4619 = vpop.f32.mrb[0].mxu0
        %v4620 = vadd.f32 %v4411, %v4619
        %v4621 = vpop.f32.mrb[0].mxu0
        %4622 = vdwg.mxu0
        %v4623 = vld [vmem:[#allocation2 + $0x2] sm:$0xff]
        %v4624 = vld [vmem:[#allocation2 + $0xa] sm:$0xff]
        %v4625 = vld [vmem:[#allocation2 + $0x1a] sm:$0xff]
        %v4626 = vld [vmem:[#allocation2 + $0x22] sm:$0xff]
        %v4627 = vld [vmem:[#allocation2 + $0x32] sm:$0xff]
        %v4628 = vld [vmem:[#allocation2 + $0x3a] sm:$0xff]
        %v4629 = vld [vmem:[#allocation2 + $0x4a] sm:$0xff]
        %v4630 = vld [vmem:[#allocation2 + $0x52] sm:$0xff]
        %v4631 = vld [vmem:[#allocation2 + $0x62] sm:$0xff]
        %v4632 = vld [vmem:[#allocation2 + $0x6a] sm:$0xff]
        %v4633 = vld [vmem:[#allocation2 + $0x7a] sm:$0xff]
        %v4634 = vld [vmem:[#allocation2 + $0x82] sm:$0xff]
        %v4635 = vld [vmem:[#allocation2 + $0x92] sm:$0xff]
        %v4636 = vld [vmem:[#allocation2 + $0x9a] sm:$0xff]
        %v4637 = vld [vmem:[#allocation2 + $0xaa] sm:$0xff]
        %v4638 = vld [vmem:[#allocation2 + $0xb2] sm:$0xff]
        %v4639 = vld [vmem:[#allocation2 + $0xc2] sm:$0xff]
        %v4640 = vld [vmem:[#allocation2 + $0xca] sm:$0xff]
        %v4641 = vld [vmem:[#allocation2 + $0xda] sm:$0xff]
        %v4642 = vld [vmem:[#allocation2 + $0xe2] sm:$0xff]
        %v4643 = vld [vmem:[#allocation2 + $0xf2] sm:$0xff]
        %v4644 = vld [vmem:[#allocation2 + $0xfa] sm:$0xff]
        %v4645 = vld [vmem:[#allocation2 + $0x10a] sm:$0xff]
        %v4646 = vld [vmem:[#allocation2 + $0x112] sm:$0xff]
        %v4647 = vld [vmem:[#allocation2 + $0x122] sm:$0xff]
        %v4648 = vld [vmem:[#allocation2 + $0x12a] sm:$0xff]
        %v4649 = vld [vmem:[#allocation2 + $0x13a] sm:$0xff]
        %v4650 = vld [vmem:[#allocation2 + $0x142] sm:$0xff]
        %v4651 = vld [vmem:[#allocation2 + $0x152] sm:$0xff]
        %v4652 = vld [vmem:[#allocation2 + $0x15a] sm:$0xff]
        %v4653 = vld [vmem:[#allocation2 + $0x16a] sm:$0xff]
        %v4654 = vld [vmem:[#allocation2 + $0x172] sm:$0xff]
        %v4655 = vpack.c.bf16 %v4624, %v4623
        %v4656 = vpack.c.bf16 %v4626, %v4625
        %v4657 = vpack.c.bf16 %v4628, %v4627
        %v4658 = vpack.c.bf16 %v4630, %v4629
        %v4659 = vpack.c.bf16 %v4632, %v4631
        %v4660 = vpack.c.bf16 %v4634, %v4633
        %v4661 = vpack.c.bf16 %v4636, %v4635
        %v4662 = vpack.c.bf16 %v4638, %v4637
        %v4663 = vpack.c.bf16 %v4640, %v4639
        %v4664 = vpack.c.bf16 %v4642, %v4641
        %v4665 = vpack.c.bf16 %v4644, %v4643
        %v4666 = vpack.c.bf16 %v4646, %v4645
        %v4667 = vpack.c.bf16 %v4648, %v4647
        %v4668 = vpack.c.bf16 %v4650, %v4649
        %v4669 = vpack.c.bf16 %v4652, %v4651
        %v4670 = vpack.c.bf16 %v4654, %v4653
        %s4671 = scalar_lea.vmem %s2, 704
        %v4672 = vld [vmem:[%s4671] sm:$0xf]
        %v4673 = vld [vmem:[%s4671 + $0x4] sm:$0xf]
        %v4674 = vld [vmem:[%s4671 + $0x8] sm:$0xf]
        %v4675 = vld [vmem:[%s4671 + $0xc] sm:$0xf]
        %v4676 = vld [vmem:[%s4671 + $0x10] sm:$0xf]
        %v4677 = vld [vmem:[%s4671 + $0x14] sm:$0xf]
        %v4678 = vld [vmem:[%s4671 + $0x18] sm:$0xf]
        %v4679 = vld [vmem:[%s4671 + $0x1c] sm:$0xf]
        %v4680 = vld [vmem:[%s4671 + $0x20] sm:$0xf]
        %v4681 = vld [vmem:[%s4671 + $0x24] sm:$0xf]
        %v4682 = vld [vmem:[%s4671 + $0x28] sm:$0xf]
        %v4683 = vld [vmem:[%s4671 + $0x2c] sm:$0xf]
        %v4684 = vld [vmem:[%s4671 + $0x30] sm:$0xf]
        %v4685 = vld [vmem:[%s4671 + $0x34] sm:$0xf]
        %v4686 = vld [vmem:[%s4671 + $0x38] sm:$0xf]
        %v4687 = vld [vmem:[%s4671 + $0x3c] sm:$0xf]
        %v4704 = vunpack.c.l.b16 %v4672
        %v4705 = vunpack.c.l.b16 %v4673
        %v4706 = vunpack.c.l.b16 %v4674
        %v4707 = vunpack.c.l.b16 %v4675
        %v4708 = vunpack.c.l.b16 %v4676
        %v4709 = vunpack.c.l.b16 %v4677
        %v4710 = vunpack.c.l.b16 %v4678
        %v4711 = vunpack.c.l.b16 %v4679
        %v4712 = vunpack.c.l.b16 %v4680
        %v4713 = vunpack.c.l.b16 %v4681
        %v4714 = vunpack.c.l.b16 %v4682
        %v4715 = vunpack.c.l.b16 %v4683
        %v4716 = vunpack.c.l.b16 %v4684
        %v4717 = vunpack.c.l.b16 %v4685
        %v4718 = vunpack.c.l.b16 %v4686
        %v4719 = vunpack.c.l.b16 %v4687
        %v4720 = vpack.c.b16 %v4705, %v4704
        %v4721 = vpack.c.b16 %v4707, %v4706
        %v4722 = vpack.c.b16 %v4709, %v4708
        %v4723 = vpack.c.b16 %v4711, %v4710
        %v4724 = vpack.c.b16 %v4713, %v4712
        %v4725 = vpack.c.b16 %v4715, %v4714
        %v4726 = vpack.c.b16 %v4717, %v4716
        %v4727 = vpack.c.b16 %v4719, %v4718
        %4736 = vmatprep.subr.bf16.mxu0 0
        %4737 = vmatpush1.bf16.msra.mxu0 %v4720
        %4738 = vmatprep.subr.bf16.mxu0 0
        %4739 = vmatpush1.bf16.msra.mxu0 %v4721
        %4740 = vmatprep.subr.bf16.mxu0 0
        %4741 = vmatpush1.bf16.msra.mxu0 %v4722
        %4742 = vmatprep.subr.bf16.mxu0 0
        %4743 = vmatpush1.bf16.msra.mxu0 %v4723
        %4744 = vmatprep.subr.bf16.mxu0 0
        %4745 = vmatpush1.bf16.msra.mxu0 %v4724
        %4746 = vmatprep.subr.bf16.mxu0 0
        %4747 = vmatpush1.bf16.msra.mxu0 %v4725
        %4748 = vmatprep.subr.bf16.mxu0 0
        %4749 = vmatpush1.bf16.msra.mxu0 %v4726
        %4750 = vmatprep.subr.bf16.mxu0 0
        %4751 = vmatpush1.bf16.msra.mxu0 %v4727
        %4752 = vmatprep.subr.bf16.mxu0 0
        %4753 = vmatpush1.bf16.msra.mxu0 0
        %4754 = vmatprep.subr.bf16.mxu0 0
        %4755 = vmatpush1.bf16.msra.mxu0 0
        %4756 = vmatprep.subr.bf16.mxu0 0
        %4757 = vmatpush1.bf16.msra.mxu0 0
        %4758 = vmatprep.subr.bf16.mxu0 0
        %4759 = vmatpush1.bf16.msra.mxu0 0
        %4760 = vmatprep.subr.bf16.mxu0 0
        %4761 = vmatpush1.bf16.msra.mxu0 0
        %4762 = vmatprep.subr.bf16.mxu0 0
        %4763 = vmatpush1.bf16.msra.mxu0 0
        %4764 = vmatprep.subr.bf16.mxu0 0
        %4765 = vmatpush1.bf16.msra.mxu0 0
        %4766 = vmatprep.subr.bf16.mxu0 0
        %4767 = vmatpush1.bf16.msra.mxu0 0
        %4768 = vmatprep.mubr.bf16.mxu0 0
        %4769 = vmatmul.mubr.bf16.gmra.mrb[0].mxu0 %v4655
        %v4770 = vpop.f32.mrb[0].mxu0
        %v4771 = vadd.f32 0.0, %v4770
        %v4772 = vpop.f32.mrb[0].mxu0
        %v4773 = vpop.f32.mrb[0].mxu0
        %v4774 = vadd.f32 0.0, %v4773
        %v4775 = vpop.f32.mrb[0].mxu0
        %4776 = vmatprep.mubr.bf16.mxu0 0
        %4777 = vmatmul.mubr.bf16.gmra.mrb[0].mxu0 %v4656
        %v4778 = vpop.f32.mrb[0].mxu0
        %v4779 = vadd.f32 0.0, %v4778
        %v4780 = vpop.f32.mrb[0].mxu0
        %v4781 = vpop.f32.mrb[0].mxu0
        %v4782 = vadd.f32 0.0, %v4781
        %v4783 = vpop.f32.mrb[0].mxu0
        %4784 = vmatprep.mubr.bf16.mxu0 0
        %4785 = vmatmul.mubr.bf16.gmra.mrb[0].mxu0 %v4657
        %v4786 = vpop.f32.mrb[0].mxu0
        %v4787 = vadd.f32 0.0, %v4786
        %v4788 = vpop.f32.mrb[0].mxu0
        %v4789 = vpop.f32.mrb[0].mxu0
        %v4790 = vadd.f32 0.0, %v4789
        %v4791 = vpop.f32.mrb[0].mxu0
        %4792 = vmatprep.mubr.bf16.mxu0 0
        %4793 = vmatmul.mubr.bf16.gmra.mrb[0].mxu0 %v4658
        %v4794 = vpop.f32.mrb[0].mxu0
        %v4795 = vadd.f32 0.0, %v4794
        %v4796 = vpop.f32.mrb[0].mxu0
        %v4797 = vpop.f32.mrb[0].mxu0
        %v4798 = vadd.f32 0.0, %v4797
        %v4799 = vpop.f32.mrb[0].mxu0
        %4800 = vmatprep.mubr.bf16.mxu0 0
        %4801 = vmatmul.mubr.bf16.gmra.mrb[0].mxu0 %v4659
        %v4802 = vpop.f32.mrb[0].mxu0
        %v4803 = vadd.f32 0.0, %v4802
        %v4804 = vpop.f32.mrb[0].mxu0
        %v4805 = vpop.f32.mrb[0].mxu0
        %v4806 = vadd.f32 0.0, %v4805
        %v4807 = vpop.f32.mrb[0].mxu0
        %4808 = vmatprep.mubr.bf16.mxu0 0
        %4809 = vmatmul.mubr.bf16.gmra.mrb[0].mxu0 %v4660
        %v4810 = vpop.f32.mrb[0].mxu0
        %v4811 = vadd.f32 0.0, %v4810
        %v4812 = vpop.f32.mrb[0].mxu0
        %v4813 = vpop.f32.mrb[0].mxu0
        %v4814 = vadd.f32 0.0, %v4813
        %v4815 = vpop.f32.mrb[0].mxu0
        %4816 = vmatprep.mubr.bf16.mxu0 0
        %4817 = vmatmul.mubr.bf16.gmra.mrb[0].mxu0 %v4661
        %v4818 = vpop.f32.mrb[0].mxu0
        %v4819 = vadd.f32 0.0, %v4818
        %v4820 = vpop.f32.mrb[0].mxu0
        %v4821 = vpop.f32.mrb[0].mxu0
        %v4822 = vadd.f32 0.0, %v4821
        %v4823 = vpop.f32.mrb[0].mxu0
        %4824 = vmatprep.mubr.bf16.mxu0 0
        %4825 = vmatmul.mubr.bf16.gmra.mrb[0].mxu0 %v4662
        %v4826 = vpop.f32.mrb[0].mxu0
        %v4827 = vadd.f32 0.0, %v4826
        %v4828 = vpop.f32.mrb[0].mxu0
        %v4829 = vpop.f32.mrb[0].mxu0
        %v4830 = vadd.f32 0.0, %v4829
        %v4831 = vpop.f32.mrb[0].mxu0
        %4832 = vmatprep.mubr.bf16.mxu0 0
        %4833 = vmatmul.mubr.bf16.gmra.mrb[0].mxu0 %v4663
        %v4834 = vpop.f32.mrb[0].mxu0
        %v4835 = vadd.f32 0.0, %v4834
        %v4836 = vpop.f32.mrb[0].mxu0
        %v4837 = vpop.f32.mrb[0].mxu0
        %v4838 = vadd.f32 0.0, %v4837
        %v4839 = vpop.f32.mrb[0].mxu0
        %4840 = vmatprep.mubr.bf16.mxu0 0
        %4841 = vmatmul.mubr.bf16.gmra.mrb[0].mxu0 %v4664
        %v4842 = vpop.f32.mrb[0].mxu0
        %v4843 = vadd.f32 0.0, %v4842
        %v4844 = vpop.f32.mrb[0].mxu0
        %v4845 = vpop.f32.mrb[0].mxu0
        %v4846 = vadd.f32 0.0, %v4845
        %v4847 = vpop.f32.mrb[0].mxu0
        %4848 = vmatprep.mubr.bf16.mxu0 0
        %4849 = vmatmul.mubr.bf16.gmra.mrb[0].mxu0 %v4665
        %v4850 = vpop.f32.mrb[0].mxu0
        %v4851 = vadd.f32 0.0, %v4850
        %v4852 = vpop.f32.mrb[0].mxu0
        %v4853 = vpop.f32.mrb[0].mxu0
        %v4854 = vadd.f32 0.0, %v4853
        %v4855 = vpop.f32.mrb[0].mxu0
        %4856 = vmatprep.mubr.bf16.mxu0 0
        %4857 = vmatmul.mubr.bf16.gmra.mrb[0].mxu0 %v4666
        %v4858 = vpop.f32.mrb[0].mxu0
        %v4859 = vadd.f32 0.0, %v4858
        %v4860 = vpop.f32.mrb[0].mxu0
        %v4861 = vpop.f32.mrb[0].mxu0
        %v4862 = vadd.f32 0.0, %v4861
        %v4863 = vpop.f32.mrb[0].mxu0
        %4864 = vmatprep.mubr.bf16.mxu0 0
        %4865 = vmatmul.mubr.bf16.gmra.mrb[0].mxu0 %v4667
        %v4866 = vpop.f32.mrb[0].mxu0
        %v4867 = vadd.f32 0.0, %v4866
        %v4868 = vpop.f32.mrb[0].mxu0
        %v4869 = vpop.f32.mrb[0].mxu0
        %v4870 = vadd.f32 0.0, %v4869
        %v4871 = vpop.f32.mrb[0].mxu0
        %4872 = vmatprep.mubr.bf16.mxu0 0
        %4873 = vmatmul.mubr.bf16.gmra.mrb[0].mxu0 %v4668
        %v4874 = vpop.f32.mrb[0].mxu0
        %v4875 = vadd.f32 0.0, %v4874
        %v4876 = vpop.f32.mrb[0].mxu0
        %v4877 = vpop.f32.mrb[0].mxu0
        %v4878 = vadd.f32 0.0, %v4877
        %v4879 = vpop.f32.mrb[0].mxu0
        %4880 = vmatprep.mubr.bf16.mxu0 0
        %4881 = vmatmul.mubr.bf16.gmra.mrb[0].mxu0 %v4669
        %v4882 = vpop.f32.mrb[0].mxu0
        %v4883 = vadd.f32 0.0, %v4882
        %v4884 = vpop.f32.mrb[0].mxu0
        %v4885 = vpop.f32.mrb[0].mxu0
        %v4886 = vadd.f32 0.0, %v4885
        %v4887 = vpop.f32.mrb[0].mxu0
        %4888 = vmatprep.mubr.bf16.mxu0 0
        %4889 = vmatmul.mubr.bf16.gmra.mrb[0].mxu0 %v4670
        %v4890 = vpop.f32.mrb[0].mxu0
        %v4891 = vadd.f32 0.0, %v4890
        %v4892 = vpop.f32.mrb[0].mxu0
        %v4893 = vpop.f32.mrb[0].mxu0
        %v4894 = vadd.f32 0.0, %v4893
        %v4895 = vpop.f32.mrb[0].mxu0
        %4896 = vdwg.mxu0
        %v4897 = vadd.f32 %v4497, %v4771
        %v4898 = vadd.f32 %v4500, %v4774
        %v4899 = vadd.f32 %v4505, %v4779
        %v4900 = vadd.f32 %v4508, %v4782
        %v4901 = vadd.f32 %v4513, %v4787
        %v4902 = vadd.f32 %v4516, %v4790
        %v4903 = vadd.f32 %v4521, %v4795
        %v4904 = vadd.f32 %v4524, %v4798
        %v4905 = vadd.f32 %v4529, %v4803
        %v4906 = vadd.f32 %v4532, %v4806
        %v4907 = vadd.f32 %v4537, %v4811
        %v4908 = vadd.f32 %v4540, %v4814
        %v4909 = vadd.f32 %v4545, %v4819
        %v4910 = vadd.f32 %v4548, %v4822
        %v4911 = vadd.f32 %v4553, %v4827
        %v4912 = vadd.f32 %v4556, %v4830
        %v4913 = vadd.f32 %v4561, %v4835
        %v4914 = vadd.f32 %v4564, %v4838
        %v4915 = vadd.f32 %v4569, %v4843
        %v4916 = vadd.f32 %v4572, %v4846
        %v4917 = vadd.f32 %v4577, %v4851
        %v4918 = vadd.f32 %v4580, %v4854
        %v4919 = vadd.f32 %v4585, %v4859
        %v4920 = vadd.f32 %v4588, %v4862
        %v4921 = vadd.f32 %v4593, %v4867
        %v4922 = vadd.f32 %v4596, %v4870
        %v4923 = vadd.f32 %v4601, %v4875
        %v4924 = vadd.f32 %v4604, %v4878
        %v4925 = vadd.f32 %v4609, %v4883
        %v4926 = vadd.f32 %v4612, %v4886
        %v4927 = vadd.f32 %v4617, %v4891
        %v4928 = vadd.f32 %v4620, %v4894
        %v4929 = vld [vmem:[%s1496] sm:$0xff]
        %v4930 = vld [vmem:[%s1496 + $0x8] sm:$0xff]
        %v4931 = vld [vmem:[%s1496 + $0x18] sm:$0xff]
        %v4932 = vld [vmem:[%s1496 + $0x20] sm:$0xff]
        %v4933 = vld [vmem:[%s1496 + $0x30] sm:$0xff]
        %v4934 = vld [vmem:[%s1496 + $0x38] sm:$0xff]
        %v4935 = vld [vmem:[%s1496 + $0x48] sm:$0xff]
        %v4936 = vld [vmem:[%s1496 + $0x50] sm:$0xff]
        %v4937 = vld [vmem:[%s1496 + $0x60] sm:$0xff]
        %v4938 = vld [vmem:[%s1496 + $0x68] sm:$0xff]
        %v4939 = vld [vmem:[%s1496 + $0x78] sm:$0xff]
        %v4940 = vld [vmem:[%s1496 + $0x80] sm:$0xff]
        %v4941 = vld [vmem:[%s1496 + $0x90] sm:$0xff]
        %v4942 = vld [vmem:[%s1496 + $0x98] sm:$0xff]
        %v4943 = vld [vmem:[%s1496 + $0xa8] sm:$0xff]
        %v4944 = vld [vmem:[%s1496 + $0xb0] sm:$0xff]
        %v4945 = vld [vmem:[%s1496 + $0xc0] sm:$0xff]
        %v4946 = vld [vmem:[%s1496 + $0xc8] sm:$0xff]
        %v4947 = vld [vmem:[%s1496 + $0xd8] sm:$0xff]
        %v4948 = vld [vmem:[%s1496 + $0xe0] sm:$0xff]
        %v4949 = vld [vmem:[%s1496 + $0xf0] sm:$0xff]
        %v4950 = vld [vmem:[%s1496 + $0xf8] sm:$0xff]
        %v4951 = vld [vmem:[%s1496 + $0x108] sm:$0xff]
        %v4952 = vld [vmem:[%s1496 + $0x110] sm:$0xff]
        %v4953 = vld [vmem:[%s1496 + $0x120] sm:$0xff]
        %v4954 = vld [vmem:[%s1496 + $0x128] sm:$0xff]
        %v4955 = vld [vmem:[%s1496 + $0x138] sm:$0xff]
        %v4956 = vld [vmem:[%s1496 + $0x140] sm:$0xff]
        %v4957 = vld [vmem:[%s1496 + $0x150] sm:$0xff]
        %v4958 = vld [vmem:[%s1496 + $0x158] sm:$0xff]
        %v4959 = vld [vmem:[%s1496 + $0x168] sm:$0xff]
        %v4960 = vld [vmem:[%s1496 + $0x170] sm:$0xff]
        %v4961 = vpack.c.bf16 %v4930, %v4929
        %v4962 = vpack.c.bf16 %v4932, %v4931
        %v4963 = vpack.c.bf16 %v4934, %v4933
        %v4964 = vpack.c.bf16 %v4936, %v4935
        %v4965 = vpack.c.bf16 %v4938, %v4937
        %v4966 = vpack.c.bf16 %v4940, %v4939
        %v4967 = vpack.c.bf16 %v4942, %v4941
        %v4968 = vpack.c.bf16 %v4944, %v4943
        %v4969 = vpack.c.bf16 %v4946, %v4945
        %v4970 = vpack.c.bf16 %v4948, %v4947
        %v4971 = vpack.c.bf16 %v4950, %v4949
        %v4972 = vpack.c.bf16 %v4952, %v4951
        %v4973 = vpack.c.bf16 %v4954, %v4953
        %v4974 = vpack.c.bf16 %v4956, %v4955
        %v4975 = vpack.c.bf16 %v4958, %v4957
        %v4976 = vpack.c.bf16 %v4960, %v4959
        %s4977 = scalar_lea.vmem %s2, 768
        %v4978 = vld [vmem:[%s4977] sm:$0xf]
        %v4979 = vld [vmem:[%s4977 + $0x4] sm:$0xf]
        %v4980 = vld [vmem:[%s4977 + $0x8] sm:$0xf]
        %v4981 = vld [vmem:[%s4977 + $0xc] sm:$0xf]
        %v4982 = vld [vmem:[%s4977 + $0x10] sm:$0xf]
        %v4983 = vld [vmem:[%s4977 + $0x14] sm:$0xf]
        %v4984 = vld [vmem:[%s4977 + $0x18] sm:$0xf]
        %v4985 = vld [vmem:[%s4977 + $0x1c] sm:$0xf]
        %v4986 = vld [vmem:[%s4977 + $0x20] sm:$0xf]
        %v4987 = vld [vmem:[%s4977 + $0x24] sm:$0xf]
        %v4988 = vld [vmem:[%s4977 + $0x28] sm:$0xf]
        %v4989 = vld [vmem:[%s4977 + $0x2c] sm:$0xf]
        %v4990 = vld [vmem:[%s4977 + $0x30] sm:$0xf]
        %v4991 = vld [vmem:[%s4977 + $0x34] sm:$0xf]
        %v4992 = vld [vmem:[%s4977 + $0x38] sm:$0xf]
        %v4993 = vld [vmem:[%s4977 + $0x3c] sm:$0xf]
        %v5010 = vunpack.c.l.b16 %v4978
        %v5011 = vunpack.c.l.b16 %v4979
        %v5012 = vunpack.c.l.b16 %v4980
        %v5013 = vunpack.c.l.b16 %v4981
        %v5014 = vunpack.c.l.b16 %v4982
        %v5015 = vunpack.c.l.b16 %v4983
        %v5016 = vunpack.c.l.b16 %v4984
        %v5017 = vunpack.c.l.b16 %v4985
        %v5018 = vunpack.c.l.b16 %v4986
        %v5019 = vunpack.c.l.b16 %v4987
        %v5020 = vunpack.c.l.b16 %v4988
        %v5021 = vunpack.c.l.b16 %v4989
        %v5022 = vunpack.c.l.b16 %v4990
        %v5023 = vunpack.c.l.b16 %v4991
        %v5024 = vunpack.c.l.b16 %v4992
        %v5025 = vunpack.c.l.b16 %v4993
        %v5026 = vpack.c.b16 %v5011, %v5010
        %v5027 = vpack.c.b16 %v5013, %v5012
        %v5028 = vpack.c.b16 %v5015, %v5014
        %v5029 = vpack.c.b16 %v5017, %v5016
        %v5030 = vpack.c.b16 %v5019, %v5018
        %v5031 = vpack.c.b16 %v5021, %v5020
        %v5032 = vpack.c.b16 %v5023, %v5022
        %v5033 = vpack.c.b16 %v5025, %v5024
        %5042 = vmatprep.subr.bf16.mxu0 0
        %5043 = vmatpush1.bf16.msra.mxu0 %v5026
        %5044 = vmatprep.subr.bf16.mxu0 0
        %5045 = vmatpush1.bf16.msra.mxu0 %v5027
        %5046 = vmatprep.subr.bf16.mxu0 0
        %5047 = vmatpush1.bf16.msra.mxu0 %v5028
        %5048 = vmatprep.subr.bf16.mxu0 0
        %5049 = vmatpush1.bf16.msra.mxu0 %v5029
        %5050 = vmatprep.subr.bf16.mxu0 0
        %5051 = vmatpush1.bf16.msra.mxu0 %v5030
        %5052 = vmatprep.subr.bf16.mxu0 0
        %5053 = vmatpush1.bf16.msra.mxu0 %v5031
        %5054 = vmatprep.subr.bf16.mxu0 0
        %5055 = vmatpush1.bf16.msra.mxu0 %v5032
        %5056 = vmatprep.subr.bf16.mxu0 0
        %5057 = vmatpush1.bf16.msra.mxu0 %v5033
        %5058 = vmatprep.subr.bf16.mxu0 0
        %5059 = vmatpush1.bf16.msra.mxu0 0
        %5060 = vmatprep.subr.bf16.mxu0 0
        %5061 = vmatpush1.bf16.msra.mxu0 0
        %5062 = vmatprep.subr.bf16.mxu0 0
        %5063 = vmatpush1.bf16.msra.mxu0 0
        %5064 = vmatprep.subr.bf16.mxu0 0
        %5065 = vmatpush1.bf16.msra.mxu0 0
        %5066 = vmatprep.subr.bf16.mxu0 0
        %5067 = vmatpush1.bf16.msra.mxu0 0
        %5068 = vmatprep.subr.bf16.mxu0 0
        %5069 = vmatpush1.bf16.msra.mxu0 0
        %5070 = vmatprep.subr.bf16.mxu0 0
        %5071 = vmatpush1.bf16.msra.mxu0 0
        %5072 = vmatprep.subr.bf16.mxu0 0
        %5073 = vmatpush1.bf16.msra.mxu0 0
        %5074 = vmatprep.mubr.bf16.mxu0 0
        %5075 = vmatmul.mubr.bf16.gmra.mrb[0].mxu0 %v4961
        %v5076 = vpop.f32.mrb[0].mxu0
        %v5077 = vadd.f32 0.0, %v5076
        %v5078 = vpop.f32.mrb[0].mxu0
        %v5079 = vpop.f32.mrb[0].mxu0
        %v5080 = vadd.f32 0.0, %v5079
        %v5081 = vpop.f32.mrb[0].mxu0
        %5082 = vmatprep.mubr.bf16.mxu0 0
        %5083 = vmatmul.mubr.bf16.gmra.mrb[0].mxu0 %v4962
        %v5084 = vpop.f32.mrb[0].mxu0
        %v5085 = vadd.f32 0.0, %v5084
        %v5086 = vpop.f32.mrb[0].mxu0
        %v5087 = vpop.f32.mrb[0].mxu0
        %v5088 = vadd.f32 0.0, %v5087
        %v5089 = vpop.f32.mrb[0].mxu0
        %5090 = vmatprep.mubr.bf16.mxu0 0
        %5091 = vmatmul.mubr.bf16.gmra.mrb[0].mxu0 %v4963
        %v5092 = vpop.f32.mrb[0].mxu0
        %v5093 = vadd.f32 0.0, %v5092
        %v5094 = vpop.f32.mrb[0].mxu0
        %v5095 = vpop.f32.mrb[0].mxu0
        %v5096 = vadd.f32 0.0, %v5095
        %v5097 = vpop.f32.mrb[0].mxu0
        %5098 = vmatprep.mubr.bf16.mxu0 0
        %5099 = vmatmul.mubr.bf16.gmra.mrb[0].mxu0 %v4964
        %v5100 = vpop.f32.mrb[0].mxu0
        %v5101 = vadd.f32 0.0, %v5100
        %v5102 = vpop.f32.mrb[0].mxu0
        %v5103 = vpop.f32.mrb[0].mxu0
        %v5104 = vadd.f32 0.0, %v5103
        %v5105 = vpop.f32.mrb[0].mxu0
        %5106 = vmatprep.mubr.bf16.mxu0 0
        %5107 = vmatmul.mubr.bf16.gmra.mrb[0].mxu0 %v4965
        %v5108 = vpop.f32.mrb[0].mxu0
        %v5109 = vadd.f32 0.0, %v5108
        %v5110 = vpop.f32.mrb[0].mxu0
        %v5111 = vpop.f32.mrb[0].mxu0
        %v5112 = vadd.f32 0.0, %v5111
        %v5113 = vpop.f32.mrb[0].mxu0
        %5114 = vmatprep.mubr.bf16.mxu0 0
        %5115 = vmatmul.mubr.bf16.gmra.mrb[0].mxu0 %v4966
        %v5116 = vpop.f32.mrb[0].mxu0
        %v5117 = vadd.f32 0.0, %v5116
        %v5118 = vpop.f32.mrb[0].mxu0
        %v5119 = vpop.f32.mrb[0].mxu0
        %v5120 = vadd.f32 0.0, %v5119
        %v5121 = vpop.f32.mrb[0].mxu0
        %5122 = vmatprep.mubr.bf16.mxu0 0
        %5123 = vmatmul.mubr.bf16.gmra.mrb[0].mxu0 %v4967
        %v5124 = vpop.f32.mrb[0].mxu0
        %v5125 = vadd.f32 0.0, %v5124
        %v5126 = vpop.f32.mrb[0].mxu0
        %v5127 = vpop.f32.mrb[0].mxu0
        %v5128 = vadd.f32 0.0, %v5127
        %v5129 = vpop.f32.mrb[0].mxu0
        %5130 = vmatprep.mubr.bf16.mxu0 0
        %5131 = vmatmul.mubr.bf16.gmra.mrb[0].mxu0 %v4968
        %v5132 = vpop.f32.mrb[0].mxu0
        %v5133 = vadd.f32 0.0, %v5132
        %v5134 = vpop.f32.mrb[0].mxu0
        %v5135 = vpop.f32.mrb[0].mxu0
        %v5136 = vadd.f32 0.0, %v5135
        %v5137 = vpop.f32.mrb[0].mxu0
        %5138 = vmatprep.mubr.bf16.mxu0 0
        %5139 = vmatmul.mubr.bf16.gmra.mrb[0].mxu0 %v4969
        %v5140 = vpop.f32.mrb[0].mxu0
        %v5141 = vadd.f32 0.0, %v5140
        %v5142 = vpop.f32.mrb[0].mxu0
        %v5143 = vpop.f32.mrb[0].mxu0
        %v5144 = vadd.f32 0.0, %v5143
        %v5145 = vpop.f32.mrb[0].mxu0
        %5146 = vmatprep.mubr.bf16.mxu0 0
        %5147 = vmatmul.mubr.bf16.gmra.mrb[0].mxu0 %v4970
        %v5148 = vpop.f32.mrb[0].mxu0
        %v5149 = vadd.f32 0.0, %v5148
        %v5150 = vpop.f32.mrb[0].mxu0
        %v5151 = vpop.f32.mrb[0].mxu0
        %v5152 = vadd.f32 0.0, %v5151
        %v5153 = vpop.f32.mrb[0].mxu0
        %5154 = vmatprep.mubr.bf16.mxu0 0
        %5155 = vmatmul.mubr.bf16.gmra.mrb[0].mxu0 %v4971
        %v5156 = vpop.f32.mrb[0].mxu0
        %v5157 = vadd.f32 0.0, %v5156
        %v5158 = vpop.f32.mrb[0].mxu0
        %v5159 = vpop.f32.mrb[0].mxu0
        %v5160 = vadd.f32 0.0, %v5159
        %v5161 = vpop.f32.mrb[0].mxu0
        %5162 = vmatprep.mubr.bf16.mxu0 0
        %5163 = vmatmul.mubr.bf16.gmra.mrb[0].mxu0 %v4972
        %v5164 = vpop.f32.mrb[0].mxu0
        %v5165 = vadd.f32 0.0, %v5164
        %v5166 = vpop.f32.mrb[0].mxu0
        %v5167 = vpop.f32.mrb[0].mxu0
        %v5168 = vadd.f32 0.0, %v5167
        %v5169 = vpop.f32.mrb[0].mxu0
        %5170 = vmatprep.mubr.bf16.mxu0 0
        %5171 = vmatmul.mubr.bf16.gmra.mrb[0].mxu0 %v4973
        %v5172 = vpop.f32.mrb[0].mxu0
        %v5173 = vadd.f32 0.0, %v5172
        %v5174 = vpop.f32.mrb[0].mxu0
        %v5175 = vpop.f32.mrb[0].mxu0
        %v5176 = vadd.f32 0.0, %v5175
        %v5177 = vpop.f32.mrb[0].mxu0
        %5178 = vmatprep.mubr.bf16.mxu0 0
        %5179 = vmatmul.mubr.bf16.gmra.mrb[0].mxu0 %v4974
        %v5180 = vpop.f32.mrb[0].mxu0
        %v5181 = vadd.f32 0.0, %v5180
        %v5182 = vpop.f32.mrb[0].mxu0
        %v5183 = vpop.f32.mrb[0].mxu0
        %v5184 = vadd.f32 0.0, %v5183
        %v5185 = vpop.f32.mrb[0].mxu0
        %5186 = vmatprep.mubr.bf16.mxu0 0
        %5187 = vmatmul.mubr.bf16.gmra.mrb[0].mxu0 %v4975
        %v5188 = vpop.f32.mrb[0].mxu0
        %v5189 = vadd.f32 0.0, %v5188
        %v5190 = vpop.f32.mrb[0].mxu0
        %v5191 = vpop.f32.mrb[0].mxu0
        %v5192 = vadd.f32 0.0, %v5191
        %v5193 = vpop.f32.mrb[0].mxu0
        %5194 = vmatprep.mubr.bf16.mxu0 0
        %5195 = vmatmul.mubr.bf16.gmra.mrb[0].mxu0 %v4976
        %v5196 = vpop.f32.mrb[0].mxu0
        %v5197 = vadd.f32 0.0, %v5196
        %v5198 = vpop.f32.mrb[0].mxu0
        %v5199 = vpop.f32.mrb[0].mxu0
        %v5200 = vadd.f32 0.0, %v5199
        %v5201 = vpop.f32.mrb[0].mxu0
        %5202 = vdwg.mxu0
        %v5203 = vadd.f32 %v4897, %v5077
        %v5204 = vadd.f32 %v4898, %v5080
        %v5205 = vadd.f32 %v4899, %v5085
        %v5206 = vadd.f32 %v4900, %v5088
        %v5207 = vadd.f32 %v4901, %v5093
        %v5208 = vadd.f32 %v4902, %v5096
        %v5209 = vadd.f32 %v4903, %v5101
        %v5210 = vadd.f32 %v4904, %v5104
        %v5211 = vadd.f32 %v4905, %v5109
        %v5212 = vadd.f32 %v4906, %v5112
        %v5213 = vadd.f32 %v4907, %v5117
        %v5214 = vadd.f32 %v4908, %v5120
        %v5215 = vadd.f32 %v4909, %v5125
        %v5216 = vadd.f32 %v4910, %v5128
        %v5217 = vadd.f32 %v4911, %v5133
        %v5218 = vadd.f32 %v4912, %v5136
        %v5219 = vadd.f32 %v4913, %v5141
        %v5220 = vadd.f32 %v4914, %v5144
        %v5221 = vadd.f32 %v4915, %v5149
        %v5222 = vadd.f32 %v4916, %v5152
        %v5223 = vadd.f32 %v4917, %v5157
        %v5224 = vadd.f32 %v4918, %v5160
        %v5225 = vadd.f32 %v4919, %v5165
        %v5226 = vadd.f32 %v4920, %v5168
        %v5227 = vadd.f32 %v4921, %v5173
        %v5228 = vadd.f32 %v4922, %v5176
        %v5229 = vadd.f32 %v4923, %v5181
        %v5230 = vadd.f32 %v4924, %v5184
        %v5231 = vadd.f32 %v4925, %v5189
        %v5232 = vadd.f32 %v4926, %v5192
        %v5233 = vadd.f32 %v4927, %v5197
        %v5234 = vadd.f32 %v4928, %v5200
        %v5235 = vld [vmem:[%s1496 + $0x1] sm:$0xff]
        %v5236 = vld [vmem:[%s1496 + $0x9] sm:$0xff]
        %v5237 = vld [vmem:[%s1496 + $0x19] sm:$0xff]
        %v5238 = vld [vmem:[%s1496 + $0x21] sm:$0xff]
        %v5239 = vld [vmem:[%s1496 + $0x31] sm:$0xff]
        %v5240 = vld [vmem:[%s1496 + $0x39] sm:$0xff]
        %v5241 = vld [vmem:[%s1496 + $0x49] sm:$0xff]
        %v5242 = vld [vmem:[%s1496 + $0x51] sm:$0xff]
        %v5243 = vld [vmem:[%s1496 + $0x61] sm:$0xff]
        %v5244 = vld [vmem:[%s1496 + $0x69] sm:$0xff]
        %v5245 = vld [vmem:[%s1496 + $0x79] sm:$0xff]
        %v5246 = vld [vmem:[%s1496 + $0x81] sm:$0xff]
        %v5247 = vld [vmem:[%s1496 + $0x91] sm:$0xff]
        %v5248 = vld [vmem:[%s1496 + $0x99] sm:$0xff]
        %v5249 = vld [vmem:[%s1496 + $0xa9] sm:$0xff]
        %v5250 = vld [vmem:[%s1496 + $0xb1] sm:$0xff]
        %v5251 = vld [vmem:[%s1496 + $0xc1] sm:$0xff]
        %v5252 = vld [vmem:[%s1496 + $0xc9] sm:$0xff]
        %v5253 = vld [vmem:[%s1496 + $0xd9] sm:$0xff]
        %v5254 = vld [vmem:[%s1496 + $0xe1] sm:$0xff]
        %v5255 = vld [vmem:[%s1496 + $0xf1] sm:$0xff]
        %v5256 = vld [vmem:[%s1496 + $0xf9] sm:$0xff]
        %v5257 = vld [vmem:[%s1496 + $0x109] sm:$0xff]
        %v5258 = vld [vmem:[%s1496 + $0x111] sm:$0xff]
        %v5259 = vld [vmem:[%s1496 + $0x121] sm:$0xff]
        %v5260 = vld [vmem:[%s1496 + $0x129] sm:$0xff]
        %v5261 = vld [vmem:[%s1496 + $0x139] sm:$0xff]
        %v5262 = vld [vmem:[%s1496 + $0x141] sm:$0xff]
        %v5263 = vld [vmem:[%s1496 + $0x151] sm:$0xff]
        %v5264 = vld [vmem:[%s1496 + $0x159] sm:$0xff]
        %v5265 = vld [vmem:[%s1496 + $0x169] sm:$0xff]
        %v5266 = vld [vmem:[%s1496 + $0x171] sm:$0xff]
        %v5267 = vpack.c.bf16 %v5236, %v5235
        %v5268 = vpack.c.bf16 %v5238, %v5237
        %v5269 = vpack.c.bf16 %v5240, %v5239
        %v5270 = vpack.c.bf16 %v5242, %v5241
        %v5271 = vpack.c.bf16 %v5244, %v5243
        %v5272 = vpack.c.bf16 %v5246, %v5245
        %v5273 = vpack.c.bf16 %v5248, %v5247
        %v5274 = vpack.c.bf16 %v5250, %v5249
        %v5275 = vpack.c.bf16 %v5252, %v5251
        %v5276 = vpack.c.bf16 %v5254, %v5253
        %v5277 = vpack.c.bf16 %v5256, %v5255
        %v5278 = vpack.c.bf16 %v5258, %v5257
        %v5279 = vpack.c.bf16 %v5260, %v5259
        %v5280 = vpack.c.bf16 %v5262, %v5261
        %v5281 = vpack.c.bf16 %v5264, %v5263
        %v5282 = vpack.c.bf16 %v5266, %v5265
        %s5283 = scalar_lea.vmem %s2, 832
        %v5284 = vld [vmem:[%s5283] sm:$0xf]
        %v5285 = vld [vmem:[%s5283 + $0x4] sm:$0xf]
        %v5286 = vld [vmem:[%s5283 + $0x8] sm:$0xf]
        %v5287 = vld [vmem:[%s5283 + $0xc] sm:$0xf]
        %v5288 = vld [vmem:[%s5283 + $0x10] sm:$0xf]
        %v5289 = vld [vmem:[%s5283 + $0x14] sm:$0xf]
        %v5290 = vld [vmem:[%s5283 + $0x18] sm:$0xf]
        %v5291 = vld [vmem:[%s5283 + $0x1c] sm:$0xf]
        %v5292 = vld [vmem:[%s5283 + $0x20] sm:$0xf]
        %v5293 = vld [vmem:[%s5283 + $0x24] sm:$0xf]
        %v5294 = vld [vmem:[%s5283 + $0x28] sm:$0xf]
        %v5295 = vld [vmem:[%s5283 + $0x2c] sm:$0xf]
        %v5296 = vld [vmem:[%s5283 + $0x30] sm:$0xf]
        %v5297 = vld [vmem:[%s5283 + $0x34] sm:$0xf]
        %v5298 = vld [vmem:[%s5283 + $0x38] sm:$0xf]
        %v5299 = vld [vmem:[%s5283 + $0x3c] sm:$0xf]
        %v5316 = vunpack.c.l.b16 %v5284
        %v5317 = vunpack.c.l.b16 %v5285
        %v5318 = vunpack.c.l.b16 %v5286
        %v5319 = vunpack.c.l.b16 %v5287
        %v5320 = vunpack.c.l.b16 %v5288
        %v5321 = vunpack.c.l.b16 %v5289
        %v5322 = vunpack.c.l.b16 %v5290
        %v5323 = vunpack.c.l.b16 %v5291
        %v5324 = vunpack.c.l.b16 %v5292
        %v5325 = vunpack.c.l.b16 %v5293
        %v5326 = vunpack.c.l.b16 %v5294
        %v5327 = vunpack.c.l.b16 %v5295
        %v5328 = vunpack.c.l.b16 %v5296
        %v5329 = vunpack.c.l.b16 %v5297
        %v5330 = vunpack.c.l.b16 %v5298
        %v5331 = vunpack.c.l.b16 %v5299
        %v5332 = vpack.c.b16 %v5317, %v5316
        %v5333 = vpack.c.b16 %v5319, %v5318
        %v5334 = vpack.c.b16 %v5321, %v5320
        %v5335 = vpack.c.b16 %v5323, %v5322
        %v5336 = vpack.c.b16 %v5325, %v5324
        %v5337 = vpack.c.b16 %v5327, %v5326
        %v5338 = vpack.c.b16 %v5329, %v5328
        %v5339 = vpack.c.b16 %v5331, %v5330
        %5348 = vmatprep.subr.bf16.mxu0 0
        %5349 = vmatpush1.bf16.msra.mxu0 %v5332
        %5350 = vmatprep.subr.bf16.mxu0 0
        %5351 = vmatpush1.bf16.msra.mxu0 %v5333
        %5352 = vmatprep.subr.bf16.mxu0 0
        %5353 = vmatpush1.bf16.msra.mxu0 %v5334
        %5354 = vmatprep.subr.bf16.mxu0 0
        %5355 = vmatpush1.bf16.msra.mxu0 %v5335
        %5356 = vmatprep.subr.bf16.mxu0 0
        %5357 = vmatpush1.bf16.msra.mxu0 %v5336
        %5358 = vmatprep.subr.bf16.mxu0 0
        %5359 = vmatpush1.bf16.msra.mxu0 %v5337
        %5360 = vmatprep.subr.bf16.mxu0 0
        %5361 = vmatpush1.bf16.msra.mxu0 %v5338
        %5362 = vmatprep.subr.bf16.mxu0 0
        %5363 = vmatpush1.bf16.msra.mxu0 %v5339
        %5364 = vmatprep.subr.bf16.mxu0 0
        %5365 = vmatpush1.bf16.msra.mxu0 0
        %5366 = vmatprep.subr.bf16.mxu0 0
        %5367 = vmatpush1.bf16.msra.mxu0 0
        %5368 = vmatprep.subr.bf16.mxu0 0
        %5369 = vmatpush1.bf16.msra.mxu0 0
        %5370 = vmatprep.subr.bf16.mxu0 0
        %5371 = vmatpush1.bf16.msra.mxu0 0
        %5372 = vmatprep.subr.bf16.mxu0 0
        %5373 = vmatpush1.bf16.msra.mxu0 0
        %5374 = vmatprep.subr.bf16.mxu0 0
        %5375 = vmatpush1.bf16.msra.mxu0 0
        %5376 = vmatprep.subr.bf16.mxu0 0
        %5377 = vmatpush1.bf16.msra.mxu0 0
        %5378 = vmatprep.subr.bf16.mxu0 0
        %5379 = vmatpush1.bf16.msra.mxu0 0
        %5380 = vmatprep.mubr.bf16.mxu0 0
        %5381 = vmatmul.mubr.bf16.gmra.mrb[0].mxu0 %v5267
        %v5382 = vpop.f32.mrb[0].mxu0
        %v5383 = vadd.f32 0.0, %v5382
        %v5384 = vpop.f32.mrb[0].mxu0
        %v5385 = vpop.f32.mrb[0].mxu0
        %v5386 = vadd.f32 0.0, %v5385
        %v5387 = vpop.f32.mrb[0].mxu0
        %5388 = vmatprep.mubr.bf16.mxu0 0
        %5389 = vmatmul.mubr.bf16.gmra.mrb[0].mxu0 %v5268
        %v5390 = vpop.f32.mrb[0].mxu0
        %v5391 = vadd.f32 0.0, %v5390
        %v5392 = vpop.f32.mrb[0].mxu0
        %v5393 = vpop.f32.mrb[0].mxu0
        %v5394 = vadd.f32 0.0, %v5393
        %v5395 = vpop.f32.mrb[0].mxu0
        %5396 = vmatprep.mubr.bf16.mxu0 0
        %5397 = vmatmul.mubr.bf16.gmra.mrb[0].mxu0 %v5269
        %v5398 = vpop.f32.mrb[0].mxu0
        %v5399 = vadd.f32 0.0, %v5398
        %v5400 = vpop.f32.mrb[0].mxu0
        %v5401 = vpop.f32.mrb[0].mxu0
        %v5402 = vadd.f32 0.0, %v5401
        %v5403 = vpop.f32.mrb[0].mxu0
        %5404 = vmatprep.mubr.bf16.mxu0 0
        %5405 = vmatmul.mubr.bf16.gmra.mrb[0].mxu0 %v5270
        %v5406 = vpop.f32.mrb[0].mxu0
        %v5407 = vadd.f32 0.0, %v5406
        %v5408 = vpop.f32.mrb[0].mxu0
        %v5409 = vpop.f32.mrb[0].mxu0
        %v5410 = vadd.f32 0.0, %v5409
        %v5411 = vpop.f32.mrb[0].mxu0
        %5412 = vmatprep.mubr.bf16.mxu0 0
        %5413 = vmatmul.mubr.bf16.gmra.mrb[0].mxu0 %v5271
        %v5414 = vpop.f32.mrb[0].mxu0
        %v5415 = vadd.f32 0.0, %v5414
        %v5416 = vpop.f32.mrb[0].mxu0
        %v5417 = vpop.f32.mrb[0].mxu0
        %v5418 = vadd.f32 0.0, %v5417
        %v5419 = vpop.f32.mrb[0].mxu0
        %5420 = vmatprep.mubr.bf16.mxu0 0
        %5421 = vmatmul.mubr.bf16.gmra.mrb[0].mxu0 %v5272
        %v5422 = vpop.f32.mrb[0].mxu0
        %v5423 = vadd.f32 0.0, %v5422
        %v5424 = vpop.f32.mrb[0].mxu0
        %v5425 = vpop.f32.mrb[0].mxu0
        %v5426 = vadd.f32 0.0, %v5425
        %v5427 = vpop.f32.mrb[0].mxu0
        %5428 = vmatprep.mubr.bf16.mxu0 0
        %5429 = vmatmul.mubr.bf16.gmra.mrb[0].mxu0 %v5273
        %v5430 = vpop.f32.mrb[0].mxu0
        %v5431 = vadd.f32 0.0, %v5430
        %v5432 = vpop.f32.mrb[0].mxu0
        %v5433 = vpop.f32.mrb[0].mxu0
        %v5434 = vadd.f32 0.0, %v5433
        %v5435 = vpop.f32.mrb[0].mxu0
        %5436 = vmatprep.mubr.bf16.mxu0 0
        %5437 = vmatmul.mubr.bf16.gmra.mrb[0].mxu0 %v5274
        %v5438 = vpop.f32.mrb[0].mxu0
        %v5439 = vadd.f32 0.0, %v5438
        %v5440 = vpop.f32.mrb[0].mxu0
        %v5441 = vpop.f32.mrb[0].mxu0
        %v5442 = vadd.f32 0.0, %v5441
        %v5443 = vpop.f32.mrb[0].mxu0
        %5444 = vmatprep.mubr.bf16.mxu0 0
        %5445 = vmatmul.mubr.bf16.gmra.mrb[0].mxu0 %v5275
        %v5446 = vpop.f32.mrb[0].mxu0
        %v5447 = vadd.f32 0.0, %v5446
        %v5448 = vpop.f32.mrb[0].mxu0
        %v5449 = vpop.f32.mrb[0].mxu0
        %v5450 = vadd.f32 0.0, %v5449
        %v5451 = vpop.f32.mrb[0].mxu0
        %5452 = vmatprep.mubr.bf16.mxu0 0
        %5453 = vmatmul.mubr.bf16.gmra.mrb[0].mxu0 %v5276
        %v5454 = vpop.f32.mrb[0].mxu0
        %v5455 = vadd.f32 0.0, %v5454
        %v5456 = vpop.f32.mrb[0].mxu0
        %v5457 = vpop.f32.mrb[0].mxu0
        %v5458 = vadd.f32 0.0, %v5457
        %v5459 = vpop.f32.mrb[0].mxu0
        %5460 = vmatprep.mubr.bf16.mxu0 0
        %5461 = vmatmul.mubr.bf16.gmra.mrb[0].mxu0 %v5277
        %v5462 = vpop.f32.mrb[0].mxu0
        %v5463 = vadd.f32 0.0, %v5462
        %v5464 = vpop.f32.mrb[0].mxu0
        %v5465 = vpop.f32.mrb[0].mxu0
        %v5466 = vadd.f32 0.0, %v5465
        %v5467 = vpop.f32.mrb[0].mxu0
        %5468 = vmatprep.mubr.bf16.mxu0 0
        %5469 = vmatmul.mubr.bf16.gmra.mrb[0].mxu0 %v5278
        %v5470 = vpop.f32.mrb[0].mxu0
        %v5471 = vadd.f32 0.0, %v5470
        %v5472 = vpop.f32.mrb[0].mxu0
        %v5473 = vpop.f32.mrb[0].mxu0
        %v5474 = vadd.f32 0.0, %v5473
        %v5475 = vpop.f32.mrb[0].mxu0
        %5476 = vmatprep.mubr.bf16.mxu0 0
        %5477 = vmatmul.mubr.bf16.gmra.mrb[0].mxu0 %v5279
        %v5478 = vpop.f32.mrb[0].mxu0
        %v5479 = vadd.f32 0.0, %v5478
        %v5480 = vpop.f32.mrb[0].mxu0
        %v5481 = vpop.f32.mrb[0].mxu0
        %v5482 = vadd.f32 0.0, %v5481
        %v5483 = vpop.f32.mrb[0].mxu0
        %5484 = vmatprep.mubr.bf16.mxu0 0
        %5485 = vmatmul.mubr.bf16.gmra.mrb[0].mxu0 %v5280
        %v5486 = vpop.f32.mrb[0].mxu0
        %v5487 = vadd.f32 0.0, %v5486
        %v5488 = vpop.f32.mrb[0].mxu0
        %v5489 = vpop.f32.mrb[0].mxu0
        %v5490 = vadd.f32 0.0, %v5489
        %v5491 = vpop.f32.mrb[0].mxu0
        %5492 = vmatprep.mubr.bf16.mxu0 0
        %5493 = vmatmul.mubr.bf16.gmra.mrb[0].mxu0 %v5281
        %v5494 = vpop.f32.mrb[0].mxu0
        %v5495 = vadd.f32 0.0, %v5494
        %v5496 = vpop.f32.mrb[0].mxu0
        %v5497 = vpop.f32.mrb[0].mxu0
        %v5498 = vadd.f32 0.0, %v5497
        %v5499 = vpop.f32.mrb[0].mxu0
        %5500 = vmatprep.mubr.bf16.mxu0 0
        %5501 = vmatmul.mubr.bf16.gmra.mrb[0].mxu0 %v5282
        %v5502 = vpop.f32.mrb[0].mxu0
        %v5503 = vadd.f32 0.0, %v5502
        %v5504 = vpop.f32.mrb[0].mxu0
        %v5505 = vpop.f32.mrb[0].mxu0
        %v5506 = vadd.f32 0.0, %v5505
        %v5507 = vpop.f32.mrb[0].mxu0
        %5508 = vdwg.mxu0
        %v5509 = vadd.f32 %v5203, %v5383
        %v5510 = vadd.f32 %v5204, %v5386
        %v5511 = vadd.f32 %v5205, %v5391
        %v5512 = vadd.f32 %v5206, %v5394
        %v5513 = vadd.f32 %v5207, %v5399
        %v5514 = vadd.f32 %v5208, %v5402
        %v5515 = vadd.f32 %v5209, %v5407
        %v5516 = vadd.f32 %v5210, %v5410
        %v5517 = vadd.f32 %v5211, %v5415
        %v5518 = vadd.f32 %v5212, %v5418
        %v5519 = vadd.f32 %v5213, %v5423
        %v5520 = vadd.f32 %v5214, %v5426
        %v5521 = vadd.f32 %v5215, %v5431
        %v5522 = vadd.f32 %v5216, %v5434
        %v5523 = vadd.f32 %v5217, %v5439
        %v5524 = vadd.f32 %v5218, %v5442
        %v5525 = vadd.f32 %v5219, %v5447
        %v5526 = vadd.f32 %v5220, %v5450
        %v5527 = vadd.f32 %v5221, %v5455
        %v5528 = vadd.f32 %v5222, %v5458
        %v5529 = vadd.f32 %v5223, %v5463
        %v5530 = vadd.f32 %v5224, %v5466
        %v5531 = vadd.f32 %v5225, %v5471
        %v5532 = vadd.f32 %v5226, %v5474
        %v5533 = vadd.f32 %v5227, %v5479
        %v5534 = vadd.f32 %v5228, %v5482
        %v5535 = vadd.f32 %v5229, %v5487
        %v5536 = vadd.f32 %v5230, %v5490
        %v5537 = vadd.f32 %v5231, %v5495
        %v5538 = vadd.f32 %v5232, %v5498
        %v5539 = vadd.f32 %v5233, %v5503
        %v5540 = vadd.f32 %v5234, %v5506
        %v5541 = vld [vmem:[%s1496 + $0x2] sm:$0xff]
        %v5542 = vld [vmem:[%s1496 + $0xa] sm:$0xff]
        %v5543 = vld [vmem:[%s1496 + $0x1a] sm:$0xff]
        %v5544 = vld [vmem:[%s1496 + $0x22] sm:$0xff]
        %v5545 = vld [vmem:[%s1496 + $0x32] sm:$0xff]
        %v5546 = vld [vmem:[%s1496 + $0x3a] sm:$0xff]
        %v5547 = vld [vmem:[%s1496 + $0x4a] sm:$0xff]
        %v5548 = vld [vmem:[%s1496 + $0x52] sm:$0xff]
        %v5549 = vld [vmem:[%s1496 + $0x62] sm:$0xff]
        %v5550 = vld [vmem:[%s1496 + $0x6a] sm:$0xff]
        %v5551 = vld [vmem:[%s1496 + $0x7a] sm:$0xff]
        %v5552 = vld [vmem:[%s1496 + $0x82] sm:$0xff]
        %v5553 = vld [vmem:[%s1496 + $0x92] sm:$0xff]
        %v5554 = vld [vmem:[%s1496 + $0x9a] sm:$0xff]
        %v5555 = vld [vmem:[%s1496 + $0xaa] sm:$0xff]
        %v5556 = vld [vmem:[%s1496 + $0xb2] sm:$0xff]
        %v5557 = vld [vmem:[%s1496 + $0xc2] sm:$0xff]
        %v5558 = vld [vmem:[%s1496 + $0xca] sm:$0xff]
        %v5559 = vld [vmem:[%s1496 + $0xda] sm:$0xff]
        %v5560 = vld [vmem:[%s1496 + $0xe2] sm:$0xff]
        %v5561 = vld [vmem:[%s1496 + $0xf2] sm:$0xff]
        %v5562 = vld [vmem:[%s1496 + $0xfa] sm:$0xff]
        %v5563 = vld [vmem:[%s1496 + $0x10a] sm:$0xff]
        %v5564 = vld [vmem:[%s1496 + $0x112] sm:$0xff]
        %v5565 = vld [vmem:[%s1496 + $0x122] sm:$0xff]
        %v5566 = vld [vmem:[%s1496 + $0x12a] sm:$0xff]
        %v5567 = vld [vmem:[%s1496 + $0x13a] sm:$0xff]
        %v5568 = vld [vmem:[%s1496 + $0x142] sm:$0xff]
        %v5569 = vld [vmem:[%s1496 + $0x152] sm:$0xff]
        %v5570 = vld [vmem:[%s1496 + $0x15a] sm:$0xff]
        %v5571 = vld [vmem:[%s1496 + $0x16a] sm:$0xff]
        %v5572 = vld [vmem:[%s1496 + $0x172] sm:$0xff]
        %v5573 = vpack.c.bf16 %v5542, %v5541
        %v5574 = vpack.c.bf16 %v5544, %v5543
        %v5575 = vpack.c.bf16 %v5546, %v5545
        %v5576 = vpack.c.bf16 %v5548, %v5547
        %v5577 = vpack.c.bf16 %v5550, %v5549
        %v5578 = vpack.c.bf16 %v5552, %v5551
        %v5579 = vpack.c.bf16 %v5554, %v5553
        %v5580 = vpack.c.bf16 %v5556, %v5555
        %v5581 = vpack.c.bf16 %v5558, %v5557
        %v5582 = vpack.c.bf16 %v5560, %v5559
        %v5583 = vpack.c.bf16 %v5562, %v5561
        %v5584 = vpack.c.bf16 %v5564, %v5563
        %v5585 = vpack.c.bf16 %v5566, %v5565
        %v5586 = vpack.c.bf16 %v5568, %v5567
        %v5587 = vpack.c.bf16 %v5570, %v5569
        %v5588 = vpack.c.bf16 %v5572, %v5571
        %s5589 = scalar_lea.vmem %s2, 896
        %v5590 = vld [vmem:[%s5589] sm:$0xf]
        %v5591 = vld [vmem:[%s5589 + $0x4] sm:$0xf]
        %v5592 = vld [vmem:[%s5589 + $0x8] sm:$0xf]
        %v5593 = vld [vmem:[%s5589 + $0xc] sm:$0xf]
        %v5594 = vld [vmem:[%s5589 + $0x10] sm:$0xf]
        %v5595 = vld [vmem:[%s5589 + $0x14] sm:$0xf]
        %v5596 = vld [vmem:[%s5589 + $0x18] sm:$0xf]
        %v5597 = vld [vmem:[%s5589 + $0x1c] sm:$0xf]
        %v5598 = vld [vmem:[%s5589 + $0x20] sm:$0xf]
        %v5599 = vld [vmem:[%s5589 + $0x24] sm:$0xf]
        %v5600 = vld [vmem:[%s5589 + $0x28] sm:$0xf]
        %v5601 = vld [vmem:[%s5589 + $0x2c] sm:$0xf]
        %v5602 = vld [vmem:[%s5589 + $0x30] sm:$0xf]
        %v5603 = vld [vmem:[%s5589 + $0x34] sm:$0xf]
        %v5604 = vld [vmem:[%s5589 + $0x38] sm:$0xf]
        %v5605 = vld [vmem:[%s5589 + $0x3c] sm:$0xf]
        %v5622 = vunpack.c.l.b16 %v5590
        %v5623 = vunpack.c.l.b16 %v5591
        %v5624 = vunpack.c.l.b16 %v5592
        %v5625 = vunpack.c.l.b16 %v5593
        %v5626 = vunpack.c.l.b16 %v5594
        %v5627 = vunpack.c.l.b16 %v5595
        %v5628 = vunpack.c.l.b16 %v5596
        %v5629 = vunpack.c.l.b16 %v5597
        %v5630 = vunpack.c.l.b16 %v5598
        %v5631 = vunpack.c.l.b16 %v5599
        %v5632 = vunpack.c.l.b16 %v5600
        %v5633 = vunpack.c.l.b16 %v5601
        %v5634 = vunpack.c.l.b16 %v5602
        %v5635 = vunpack.c.l.b16 %v5603
        %v5636 = vunpack.c.l.b16 %v5604
        %v5637 = vunpack.c.l.b16 %v5605
        %v5638 = vpack.c.b16 %v5623, %v5622
        %v5639 = vpack.c.b16 %v5625, %v5624
        %v5640 = vpack.c.b16 %v5627, %v5626
        %v5641 = vpack.c.b16 %v5629, %v5628
        %v5642 = vpack.c.b16 %v5631, %v5630
        %v5643 = vpack.c.b16 %v5633, %v5632
        %v5644 = vpack.c.b16 %v5635, %v5634
        %v5645 = vpack.c.b16 %v5637, %v5636
        %5654 = vmatprep.subr.bf16.mxu0 0
        %5655 = vmatpush1.bf16.msra.mxu0 %v5638
        %5656 = vmatprep.subr.bf16.mxu0 0
        %5657 = vmatpush1.bf16.msra.mxu0 %v5639
        %5658 = vmatprep.subr.bf16.mxu0 0
        %5659 = vmatpush1.bf16.msra.mxu0 %v5640
        %5660 = vmatprep.subr.bf16.mxu0 0
        %5661 = vmatpush1.bf16.msra.mxu0 %v5641
        %5662 = vmatprep.subr.bf16.mxu0 0
        %5663 = vmatpush1.bf16.msra.mxu0 %v5642
        %5664 = vmatprep.subr.bf16.mxu0 0
        %5665 = vmatpush1.bf16.msra.mxu0 %v5643
        %5666 = vmatprep.subr.bf16.mxu0 0
        %5667 = vmatpush1.bf16.msra.mxu0 %v5644
        %5668 = vmatprep.subr.bf16.mxu0 0
        %5669 = vmatpush1.bf16.msra.mxu0 %v5645
        %5670 = vmatprep.subr.bf16.mxu0 0
        %5671 = vmatpush1.bf16.msra.mxu0 0
        %5672 = vmatprep.subr.bf16.mxu0 0
        %5673 = vmatpush1.bf16.msra.mxu0 0
        %5674 = vmatprep.subr.bf16.mxu0 0
        %5675 = vmatpush1.bf16.msra.mxu0 0
        %5676 = vmatprep.subr.bf16.mxu0 0
        %5677 = vmatpush1.bf16.msra.mxu0 0
        %5678 = vmatprep.subr.bf16.mxu0 0
        %5679 = vmatpush1.bf16.msra.mxu0 0
        %5680 = vmatprep.subr.bf16.mxu0 0
        %5681 = vmatpush1.bf16.msra.mxu0 0
        %5682 = vmatprep.subr.bf16.mxu0 0
        %5683 = vmatpush1.bf16.msra.mxu0 0
        %5684 = vmatprep.subr.bf16.mxu0 0
        %5685 = vmatpush1.bf16.msra.mxu0 0
        %5686 = vmatprep.mubr.bf16.mxu0 0
        %5687 = vmatmul.mubr.bf16.gmra.mrb[0].mxu0 %v5573
        %v5688 = vpop.f32.mrb[0].mxu0
        %v5689 = vadd.f32 0.0, %v5688
        %v5690 = vpop.f32.mrb[0].mxu0
        %v5691 = vpop.f32.mrb[0].mxu0
        %v5692 = vadd.f32 0.0, %v5691
        %v5693 = vpop.f32.mrb[0].mxu0
        %5694 = vmatprep.mubr.bf16.mxu0 0
        %5695 = vmatmul.mubr.bf16.gmra.mrb[0].mxu0 %v5574
        %v5696 = vpop.f32.mrb[0].mxu0
        %v5697 = vadd.f32 0.0, %v5696
        %v5698 = vpop.f32.mrb[0].mxu0
        %v5699 = vpop.f32.mrb[0].mxu0
        %v5700 = vadd.f32 0.0, %v5699
        %v5701 = vpop.f32.mrb[0].mxu0
        %5702 = vmatprep.mubr.bf16.mxu0 0
        %5703 = vmatmul.mubr.bf16.gmra.mrb[0].mxu0 %v5575
        %v5704 = vpop.f32.mrb[0].mxu0
        %v5705 = vadd.f32 0.0, %v5704
        %v5706 = vpop.f32.mrb[0].mxu0
        %v5707 = vpop.f32.mrb[0].mxu0
        %v5708 = vadd.f32 0.0, %v5707
        %v5709 = vpop.f32.mrb[0].mxu0
        %5710 = vmatprep.mubr.bf16.mxu0 0
        %5711 = vmatmul.mubr.bf16.gmra.mrb[0].mxu0 %v5576
        %v5712 = vpop.f32.mrb[0].mxu0
        %v5713 = vadd.f32 0.0, %v5712
        %v5714 = vpop.f32.mrb[0].mxu0
        %v5715 = vpop.f32.mrb[0].mxu0
        %v5716 = vadd.f32 0.0, %v5715
        %v5717 = vpop.f32.mrb[0].mxu0
        %5718 = vmatprep.mubr.bf16.mxu0 0
        %5719 = vmatmul.mubr.bf16.gmra.mrb[0].mxu0 %v5577
        %v5720 = vpop.f32.mrb[0].mxu0
        %v5721 = vadd.f32 0.0, %v5720
        %v5722 = vpop.f32.mrb[0].mxu0
        %v5723 = vpop.f32.mrb[0].mxu0
        %v5724 = vadd.f32 0.0, %v5723
        %v5725 = vpop.f32.mrb[0].mxu0
        %5726 = vmatprep.mubr.bf16.mxu0 0
        %5727 = vmatmul.mubr.bf16.gmra.mrb[0].mxu0 %v5578
        %v5728 = vpop.f32.mrb[0].mxu0
        %v5729 = vadd.f32 0.0, %v5728
        %v5730 = vpop.f32.mrb[0].mxu0
        %v5731 = vpop.f32.mrb[0].mxu0
        %v5732 = vadd.f32 0.0, %v5731
        %v5733 = vpop.f32.mrb[0].mxu0
        %5734 = vmatprep.mubr.bf16.mxu0 0
        %5735 = vmatmul.mubr.bf16.gmra.mrb[0].mxu0 %v5579
        %v5736 = vpop.f32.mrb[0].mxu0
        %v5737 = vadd.f32 0.0, %v5736
        %v5738 = vpop.f32.mrb[0].mxu0
        %v5739 = vpop.f32.mrb[0].mxu0
        %v5740 = vadd.f32 0.0, %v5739
        %v5741 = vpop.f32.mrb[0].mxu0
        %5742 = vmatprep.mubr.bf16.mxu0 0
        %5743 = vmatmul.mubr.bf16.gmra.mrb[0].mxu0 %v5580
        %v5744 = vpop.f32.mrb[0].mxu0
        %v5745 = vadd.f32 0.0, %v5744
        %v5746 = vpop.f32.mrb[0].mxu0
        %v5747 = vpop.f32.mrb[0].mxu0
        %v5748 = vadd.f32 0.0, %v5747
        %v5749 = vpop.f32.mrb[0].mxu0
        %5750 = vmatprep.mubr.bf16.mxu0 0
        %5751 = vmatmul.mubr.bf16.gmra.mrb[0].mxu0 %v5581
        %v5752 = vpop.f32.mrb[0].mxu0
        %v5753 = vadd.f32 0.0, %v5752
        %v5754 = vpop.f32.mrb[0].mxu0
        %v5755 = vpop.f32.mrb[0].mxu0
        %v5756 = vadd.f32 0.0, %v5755
        %v5757 = vpop.f32.mrb[0].mxu0
        %5758 = vmatprep.mubr.bf16.mxu0 0
        %5759 = vmatmul.mubr.bf16.gmra.mrb[0].mxu0 %v5582
        %v5760 = vpop.f32.mrb[0].mxu0
        %v5761 = vadd.f32 0.0, %v5760
        %v5762 = vpop.f32.mrb[0].mxu0
        %v5763 = vpop.f32.mrb[0].mxu0
        %v5764 = vadd.f32 0.0, %v5763
        %v5765 = vpop.f32.mrb[0].mxu0
        %5766 = vmatprep.mubr.bf16.mxu0 0
        %5767 = vmatmul.mubr.bf16.gmra.mrb[0].mxu0 %v5583
        %v5768 = vpop.f32.mrb[0].mxu0
        %v5769 = vadd.f32 0.0, %v5768
        %v5770 = vpop.f32.mrb[0].mxu0
        %v5771 = vpop.f32.mrb[0].mxu0
        %v5772 = vadd.f32 0.0, %v5771
        %v5773 = vpop.f32.mrb[0].mxu0
        %5774 = vmatprep.mubr.bf16.mxu0 0
        %5775 = vmatmul.mubr.bf16.gmra.mrb[0].mxu0 %v5584
        %v5776 = vpop.f32.mrb[0].mxu0
        %v5777 = vadd.f32 0.0, %v5776
        %v5778 = vpop.f32.mrb[0].mxu0
        %v5779 = vpop.f32.mrb[0].mxu0
        %v5780 = vadd.f32 0.0, %v5779
        %v5781 = vpop.f32.mrb[0].mxu0
        %5782 = vmatprep.mubr.bf16.mxu0 0
        %5783 = vmatmul.mubr.bf16.gmra.mrb[0].mxu0 %v5585
        %v5784 = vpop.f32.mrb[0].mxu0
        %v5785 = vadd.f32 0.0, %v5784
        %v5786 = vpop.f32.mrb[0].mxu0
        %v5787 = vpop.f32.mrb[0].mxu0
        %v5788 = vadd.f32 0.0, %v5787
        %v5789 = vpop.f32.mrb[0].mxu0
        %5790 = vmatprep.mubr.bf16.mxu0 0
        %5791 = vmatmul.mubr.bf16.gmra.mrb[0].mxu0 %v5586
        %v5792 = vpop.f32.mrb[0].mxu0
        %v5793 = vadd.f32 0.0, %v5792
        %v5794 = vpop.f32.mrb[0].mxu0
        %v5795 = vpop.f32.mrb[0].mxu0
        %v5796 = vadd.f32 0.0, %v5795
        %v5797 = vpop.f32.mrb[0].mxu0
        %5798 = vmatprep.mubr.bf16.mxu0 0
        %5799 = vmatmul.mubr.bf16.gmra.mrb[0].mxu0 %v5587
        %v5800 = vpop.f32.mrb[0].mxu0
        %v5801 = vadd.f32 0.0, %v5800
        %v5802 = vpop.f32.mrb[0].mxu0
        %v5803 = vpop.f32.mrb[0].mxu0
        %v5804 = vadd.f32 0.0, %v5803
        %v5805 = vpop.f32.mrb[0].mxu0
        %5806 = vmatprep.mubr.bf16.mxu0 0
        %5807 = vmatmul.mubr.bf16.gmra.mrb[0].mxu0 %v5588
        %v5808 = vpop.f32.mrb[0].mxu0
        %v5809 = vadd.f32 0.0, %v5808
        %v5810 = vpop.f32.mrb[0].mxu0
        %v5811 = vpop.f32.mrb[0].mxu0
        %v5812 = vadd.f32 0.0, %v5811
        %v5813 = vpop.f32.mrb[0].mxu0
        %5814 = vdwg.mxu0
        %v5815 = vadd.f32 %v5509, %v5689
        %v5816 = vadd.f32 %v5510, %v5692
        %v5817 = vadd.f32 %v5511, %v5697
        %v5818 = vadd.f32 %v5512, %v5700
        %v5819 = vadd.f32 %v5513, %v5705
        %v5820 = vadd.f32 %v5514, %v5708
        %v5821 = vadd.f32 %v5515, %v5713
        %v5822 = vadd.f32 %v5516, %v5716
        %v5823 = vadd.f32 %v5517, %v5721
        %v5824 = vadd.f32 %v5518, %v5724
        %v5825 = vadd.f32 %v5519, %v5729
        %v5826 = vadd.f32 %v5520, %v5732
        %v5827 = vadd.f32 %v5521, %v5737
        %v5828 = vadd.f32 %v5522, %v5740
        %v5829 = vadd.f32 %v5523, %v5745
        %v5830 = vadd.f32 %v5524, %v5748
        %v5831 = vadd.f32 %v5525, %v5753
        %v5832 = vadd.f32 %v5526, %v5756
        %v5833 = vadd.f32 %v5527, %v5761
        %v5834 = vadd.f32 %v5528, %v5764
        %v5835 = vadd.f32 %v5529, %v5769
        %v5836 = vadd.f32 %v5530, %v5772
        %v5837 = vadd.f32 %v5531, %v5777
        %v5838 = vadd.f32 %v5532, %v5780
        %v5839 = vadd.f32 %v5533, %v5785
        %v5840 = vadd.f32 %v5534, %v5788
        %v5841 = vadd.f32 %v5535, %v5793
        %v5842 = vadd.f32 %v5536, %v5796
        %v5843 = vadd.f32 %v5537, %v5801
        %v5844 = vadd.f32 %v5538, %v5804
        %v5845 = vadd.f32 %v5539, %v5809
        %v5846 = vadd.f32 %v5540, %v5812
        %v5847 = vld [vmem:[%s2415] sm:$0xff]
        %v5848 = vld [vmem:[%s2415 + $0x8] sm:$0xff]
        %v5849 = vld [vmem:[%s2415 + $0x18] sm:$0xff]
        %v5850 = vld [vmem:[%s2415 + $0x20] sm:$0xff]
        %v5851 = vld [vmem:[%s2415 + $0x30] sm:$0xff]
        %v5852 = vld [vmem:[%s2415 + $0x38] sm:$0xff]
        %v5853 = vld [vmem:[%s2415 + $0x48] sm:$0xff]
        %v5854 = vld [vmem:[%s2415 + $0x50] sm:$0xff]
        %v5855 = vld [vmem:[%s2415 + $0x60] sm:$0xff]
        %v5856 = vld [vmem:[%s2415 + $0x68] sm:$0xff]
        %v5857 = vld [vmem:[%s2415 + $0x78] sm:$0xff]
        %v5858 = vld [vmem:[%s2415 + $0x80] sm:$0xff]
        %v5859 = vld [vmem:[%s2415 + $0x90] sm:$0xff]
        %v5860 = vld [vmem:[%s2415 + $0x98] sm:$0xff]
        %v5861 = vld [vmem:[%s2415 + $0xa8] sm:$0xff]
        %v5862 = vld [vmem:[%s2415 + $0xb0] sm:$0xff]
        %v5863 = vld [vmem:[%s2415 + $0xc0] sm:$0xff]
        %v5864 = vld [vmem:[%s2415 + $0xc8] sm:$0xff]
        %v5865 = vld [vmem:[%s2415 + $0xd8] sm:$0xff]
        %v5866 = vld [vmem:[%s2415 + $0xe0] sm:$0xff]
        %v5867 = vld [vmem:[%s2415 + $0xf0] sm:$0xff]
        %v5868 = vld [vmem:[%s2415 + $0xf8] sm:$0xff]
        %v5869 = vld [vmem:[%s2415 + $0x108] sm:$0xff]
        %v5870 = vld [vmem:[%s2415 + $0x110] sm:$0xff]
        %v5871 = vld [vmem:[%s2415 + $0x120] sm:$0xff]
        %v5872 = vld [vmem:[%s2415 + $0x128] sm:$0xff]
        %v5873 = vld [vmem:[%s2415 + $0x138] sm:$0xff]
        %v5874 = vld [vmem:[%s2415 + $0x140] sm:$0xff]
        %v5875 = vld [vmem:[%s2415 + $0x150] sm:$0xff]
        %v5876 = vld [vmem:[%s2415 + $0x158] sm:$0xff]
        %v5877 = vld [vmem:[%s2415 + $0x168] sm:$0xff]
        %v5878 = vld [vmem:[%s2415 + $0x170] sm:$0xff]
        %v5879 = vpack.c.bf16 %v5848, %v5847
        %v5880 = vpack.c.bf16 %v5850, %v5849
        %v5881 = vpack.c.bf16 %v5852, %v5851
        %v5882 = vpack.c.bf16 %v5854, %v5853
        %v5883 = vpack.c.bf16 %v5856, %v5855
        %v5884 = vpack.c.bf16 %v5858, %v5857
        %v5885 = vpack.c.bf16 %v5860, %v5859
        %v5886 = vpack.c.bf16 %v5862, %v5861
        %v5887 = vpack.c.bf16 %v5864, %v5863
        %v5888 = vpack.c.bf16 %v5866, %v5865
        %v5889 = vpack.c.bf16 %v5868, %v5867
        %v5890 = vpack.c.bf16 %v5870, %v5869
        %v5891 = vpack.c.bf16 %v5872, %v5871
        %v5892 = vpack.c.bf16 %v5874, %v5873
        %v5893 = vpack.c.bf16 %v5876, %v5875
        %v5894 = vpack.c.bf16 %v5878, %v5877
        %s5895 = scalar_lea.vmem %s2, 960
        %v5896 = vld [vmem:[%s5895] sm:$0xf]
        %v5897 = vld [vmem:[%s5895 + $0x4] sm:$0xf]
        %v5898 = vld [vmem:[%s5895 + $0x8] sm:$0xf]
        %v5899 = vld [vmem:[%s5895 + $0xc] sm:$0xf]
        %v5900 = vld [vmem:[%s5895 + $0x10] sm:$0xf]
        %v5901 = vld [vmem:[%s5895 + $0x14] sm:$0xf]
        %v5902 = vld [vmem:[%s5895 + $0x18] sm:$0xf]
        %v5903 = vld [vmem:[%s5895 + $0x1c] sm:$0xf]
        %v5904 = vld [vmem:[%s5895 + $0x20] sm:$0xf]
        %v5905 = vld [vmem:[%s5895 + $0x24] sm:$0xf]
        %v5906 = vld [vmem:[%s5895 + $0x28] sm:$0xf]
        %v5907 = vld [vmem:[%s5895 + $0x2c] sm:$0xf]
        %v5908 = vld [vmem:[%s5895 + $0x30] sm:$0xf]
        %v5909 = vld [vmem:[%s5895 + $0x34] sm:$0xf]
        %v5910 = vld [vmem:[%s5895 + $0x38] sm:$0xf]
        %v5911 = vld [vmem:[%s5895 + $0x3c] sm:$0xf]
        %v5928 = vunpack.c.l.b16 %v5896
        %v5929 = vunpack.c.l.b16 %v5897
        %v5930 = vunpack.c.l.b16 %v5898
        %v5931 = vunpack.c.l.b16 %v5899
        %v5932 = vunpack.c.l.b16 %v5900
        %v5933 = vunpack.c.l.b16 %v5901
        %v5934 = vunpack.c.l.b16 %v5902
        %v5935 = vunpack.c.l.b16 %v5903
        %v5936 = vunpack.c.l.b16 %v5904
        %v5937 = vunpack.c.l.b16 %v5905
        %v5938 = vunpack.c.l.b16 %v5906
        %v5939 = vunpack.c.l.b16 %v5907
        %v5940 = vunpack.c.l.b16 %v5908
        %v5941 = vunpack.c.l.b16 %v5909
        %v5942 = vunpack.c.l.b16 %v5910
        %v5943 = vunpack.c.l.b16 %v5911
        %v5944 = vpack.c.b16 %v5929, %v5928
        %v5945 = vpack.c.b16 %v5931, %v5930
        %v5946 = vpack.c.b16 %v5933, %v5932
        %v5947 = vpack.c.b16 %v5935, %v5934
        %v5948 = vpack.c.b16 %v5937, %v5936
        %v5949 = vpack.c.b16 %v5939, %v5938
        %v5950 = vpack.c.b16 %v5941, %v5940
        %v5951 = vpack.c.b16 %v5943, %v5942
        %5960 = vmatprep.subr.bf16.mxu0 0
        %5961 = vmatpush1.bf16.msra.mxu0 %v5944
        %5962 = vmatprep.subr.bf16.mxu0 0
        %5963 = vmatpush1.bf16.msra.mxu0 %v5945
        %5964 = vmatprep.subr.bf16.mxu0 0
        %5965 = vmatpush1.bf16.msra.mxu0 %v5946
        %5966 = vmatprep.subr.bf16.mxu0 0
        %5967 = vmatpush1.bf16.msra.mxu0 %v5947
        %5968 = vmatprep.subr.bf16.mxu0 0
        %5969 = vmatpush1.bf16.msra.mxu0 %v5948
        %5970 = vmatprep.subr.bf16.mxu0 0
        %5971 = vmatpush1.bf16.msra.mxu0 %v5949
        %5972 = vmatprep.subr.bf16.mxu0 0
        %5973 = vmatpush1.bf16.msra.mxu0 %v5950
        %5974 = vmatprep.subr.bf16.mxu0 0
        %5975 = vmatpush1.bf16.msra.mxu0 %v5951
        %5976 = vmatprep.subr.bf16.mxu0 0
        %5977 = vmatpush1.bf16.msra.mxu0 0
        %5978 = vmatprep.subr.bf16.mxu0 0
        %5979 = vmatpush1.bf16.msra.mxu0 0
        %5980 = vmatprep.subr.bf16.mxu0 0
        %5981 = vmatpush1.bf16.msra.mxu0 0
        %5982 = vmatprep.subr.bf16.mxu0 0
        %5983 = vmatpush1.bf16.msra.mxu0 0
        %5984 = vmatprep.subr.bf16.mxu0 0
        %5985 = vmatpush1.bf16.msra.mxu0 0
        %5986 = vmatprep.subr.bf16.mxu0 0
        %5987 = vmatpush1.bf16.msra.mxu0 0
        %5988 = vmatprep.subr.bf16.mxu0 0
        %5989 = vmatpush1.bf16.msra.mxu0 0
        %5990 = vmatprep.subr.bf16.mxu0 0
        %5991 = vmatpush1.bf16.msra.mxu0 0
        %5992 = vmatprep.mubr.bf16.mxu0 0
        %5993 = vmatmul.mubr.bf16.gmra.mrb[0].mxu0 %v5879
        %v5994 = vpop.f32.mrb[0].mxu0
        %v5995 = vadd.f32 0.0, %v5994
        %v5996 = vpop.f32.mrb[0].mxu0
        %v5997 = vpop.f32.mrb[0].mxu0
        %v5998 = vadd.f32 0.0, %v5997
        %v5999 = vpop.f32.mrb[0].mxu0
        %6000 = vmatprep.mubr.bf16.mxu0 0
        %6001 = vmatmul.mubr.bf16.gmra.mrb[0].mxu0 %v5880
        %v6002 = vpop.f32.mrb[0].mxu0
        %v6003 = vadd.f32 0.0, %v6002
        %v6004 = vpop.f32.mrb[0].mxu0
        %v6005 = vpop.f32.mrb[0].mxu0
        %v6006 = vadd.f32 0.0, %v6005
        %v6007 = vpop.f32.mrb[0].mxu0
        %6008 = vmatprep.mubr.bf16.mxu0 0
        %6009 = vmatmul.mubr.bf16.gmra.mrb[0].mxu0 %v5881
        %v6010 = vpop.f32.mrb[0].mxu0
        %v6011 = vadd.f32 0.0, %v6010
        %v6012 = vpop.f32.mrb[0].mxu0
        %v6013 = vpop.f32.mrb[0].mxu0
        %v6014 = vadd.f32 0.0, %v6013
        %v6015 = vpop.f32.mrb[0].mxu0
        %6016 = vmatprep.mubr.bf16.mxu0 0
        %6017 = vmatmul.mubr.bf16.gmra.mrb[0].mxu0 %v5882
        %v6018 = vpop.f32.mrb[0].mxu0
        %v6019 = vadd.f32 0.0, %v6018
        %v6020 = vpop.f32.mrb[0].mxu0
        %v6021 = vpop.f32.mrb[0].mxu0
        %v6022 = vadd.f32 0.0, %v6021
        %v6023 = vpop.f32.mrb[0].mxu0
        %6024 = vmatprep.mubr.bf16.mxu0 0
        %6025 = vmatmul.mubr.bf16.gmra.mrb[0].mxu0 %v5883
        %v6026 = vpop.f32.mrb[0].mxu0
        %v6027 = vadd.f32 0.0, %v6026
        %v6028 = vpop.f32.mrb[0].mxu0
        %v6029 = vpop.f32.mrb[0].mxu0
        %v6030 = vadd.f32 0.0, %v6029
        %v6031 = vpop.f32.mrb[0].mxu0
        %6032 = vmatprep.mubr.bf16.mxu0 0
        %6033 = vmatmul.mubr.bf16.gmra.mrb[0].mxu0 %v5884
        %v6034 = vpop.f32.mrb[0].mxu0
        %v6035 = vadd.f32 0.0, %v6034
        %v6036 = vpop.f32.mrb[0].mxu0
        %v6037 = vpop.f32.mrb[0].mxu0
        %v6038 = vadd.f32 0.0, %v6037
        %v6039 = vpop.f32.mrb[0].mxu0
        %6040 = vmatprep.mubr.bf16.mxu0 0
        %6041 = vmatmul.mubr.bf16.gmra.mrb[0].mxu0 %v5885
        %v6042 = vpop.f32.mrb[0].mxu0
        %v6043 = vadd.f32 0.0, %v6042
        %v6044 = vpop.f32.mrb[0].mxu0
        %v6045 = vpop.f32.mrb[0].mxu0
        %v6046 = vadd.f32 0.0, %v6045
        %v6047 = vpop.f32.mrb[0].mxu0
        %6048 = vmatprep.mubr.bf16.mxu0 0
        %6049 = vmatmul.mubr.bf16.gmra.mrb[0].mxu0 %v5886
        %v6050 = vpop.f32.mrb[0].mxu0
        %v6051 = vadd.f32 0.0, %v6050
        %v6052 = vpop.f32.mrb[0].mxu0
        %v6053 = vpop.f32.mrb[0].mxu0
        %v6054 = vadd.f32 0.0, %v6053
        %v6055 = vpop.f32.mrb[0].mxu0
        %6056 = vmatprep.mubr.bf16.mxu0 0
        %6057 = vmatmul.mubr.bf16.gmra.mrb[0].mxu0 %v5887
        %v6058 = vpop.f32.mrb[0].mxu0
        %v6059 = vadd.f32 0.0, %v6058
        %v6060 = vpop.f32.mrb[0].mxu0
        %v6061 = vpop.f32.mrb[0].mxu0
        %v6062 = vadd.f32 0.0, %v6061
        %v6063 = vpop.f32.mrb[0].mxu0
        %6064 = vmatprep.mubr.bf16.mxu0 0
        %6065 = vmatmul.mubr.bf16.gmra.mrb[0].mxu0 %v5888
        %v6066 = vpop.f32.mrb[0].mxu0
        %v6067 = vadd.f32 0.0, %v6066
        %v6068 = vpop.f32.mrb[0].mxu0
        %v6069 = vpop.f32.mrb[0].mxu0
        %v6070 = vadd.f32 0.0, %v6069
        %v6071 = vpop.f32.mrb[0].mxu0
        %6072 = vmatprep.mubr.bf16.mxu0 0
        %6073 = vmatmul.mubr.bf16.gmra.mrb[0].mxu0 %v5889
        %v6074 = vpop.f32.mrb[0].mxu0
        %v6075 = vadd.f32 0.0, %v6074
        %v6076 = vpop.f32.mrb[0].mxu0
        %v6077 = vpop.f32.mrb[0].mxu0
        %v6078 = vadd.f32 0.0, %v6077
        %v6079 = vpop.f32.mrb[0].mxu0
        %6080 = vmatprep.mubr.bf16.mxu0 0
        %6081 = vmatmul.mubr.bf16.gmra.mrb[0].mxu0 %v5890
        %v6082 = vpop.f32.mrb[0].mxu0
        %v6083 = vadd.f32 0.0, %v6082
        %v6084 = vpop.f32.mrb[0].mxu0
        %v6085 = vpop.f32.mrb[0].mxu0
        %v6086 = vadd.f32 0.0, %v6085
        %v6087 = vpop.f32.mrb[0].mxu0
        %6088 = vmatprep.mubr.bf16.mxu0 0
        %6089 = vmatmul.mubr.bf16.gmra.mrb[0].mxu0 %v5891
        %v6090 = vpop.f32.mrb[0].mxu0
        %v6091 = vadd.f32 0.0, %v6090
        %v6092 = vpop.f32.mrb[0].mxu0
        %v6093 = vpop.f32.mrb[0].mxu0
        %v6094 = vadd.f32 0.0, %v6093
        %v6095 = vpop.f32.mrb[0].mxu0
        %6096 = vmatprep.mubr.bf16.mxu0 0
        %6097 = vmatmul.mubr.bf16.gmra.mrb[0].mxu0 %v5892
        %v6098 = vpop.f32.mrb[0].mxu0
        %v6099 = vadd.f32 0.0, %v6098
        %v6100 = vpop.f32.mrb[0].mxu0
        %v6101 = vpop.f32.mrb[0].mxu0
        %v6102 = vadd.f32 0.0, %v6101
        %v6103 = vpop.f32.mrb[0].mxu0
        %6104 = vmatprep.mubr.bf16.mxu0 0
        %6105 = vmatmul.mubr.bf16.gmra.mrb[0].mxu0 %v5893
        %v6106 = vpop.f32.mrb[0].mxu0
        %v6107 = vadd.f32 0.0, %v6106
        %v6108 = vpop.f32.mrb[0].mxu0
        %v6109 = vpop.f32.mrb[0].mxu0
        %v6110 = vadd.f32 0.0, %v6109
        %v6111 = vpop.f32.mrb[0].mxu0
        %6112 = vmatprep.mubr.bf16.mxu0 0
        %6113 = vmatmul.mubr.bf16.gmra.mrb[0].mxu0 %v5894
        %v6114 = vpop.f32.mrb[0].mxu0
        %v6115 = vadd.f32 0.0, %v6114
        %v6116 = vpop.f32.mrb[0].mxu0
        %v6117 = vpop.f32.mrb[0].mxu0
        %v6118 = vadd.f32 0.0, %v6117
        %v6119 = vpop.f32.mrb[0].mxu0
        %6120 = vdwg.mxu0
        %v6121 = vadd.f32 %v5815, %v5995
        %v6122 = vadd.f32 %v5816, %v5998
        %v6123 = vadd.f32 %v5817, %v6003
        %v6124 = vadd.f32 %v5818, %v6006
        %v6125 = vadd.f32 %v5819, %v6011
        %v6126 = vadd.f32 %v5820, %v6014
        %v6127 = vadd.f32 %v5821, %v6019
        %v6128 = vadd.f32 %v5822, %v6022
        %v6129 = vadd.f32 %v5823, %v6027
        %v6130 = vadd.f32 %v5824, %v6030
        %v6131 = vadd.f32 %v5825, %v6035
        %v6132 = vadd.f32 %v5826, %v6038
        %v6133 = vadd.f32 %v5827, %v6043
        %v6134 = vadd.f32 %v5828, %v6046
        %v6135 = vadd.f32 %v5829, %v6051
        %v6136 = vadd.f32 %v5830, %v6054
        %v6137 = vadd.f32 %v5831, %v6059
        %v6138 = vadd.f32 %v5832, %v6062
        %v6139 = vadd.f32 %v5833, %v6067
        %v6140 = vadd.f32 %v5834, %v6070
        %v6141 = vadd.f32 %v5835, %v6075
        %v6142 = vadd.f32 %v5836, %v6078
        %v6143 = vadd.f32 %v5837, %v6083
        %v6144 = vadd.f32 %v5838, %v6086
        %v6145 = vadd.f32 %v5839, %v6091
        %v6146 = vadd.f32 %v5840, %v6094
        %v6147 = vadd.f32 %v5841, %v6099
        %v6148 = vadd.f32 %v5842, %v6102
        %v6149 = vadd.f32 %v5843, %v6107
        %v6150 = vadd.f32 %v5844, %v6110
        %v6151 = vadd.f32 %v5845, %v6115
        %v6152 = vadd.f32 %v5846, %v6118
        %v6153 = vld [vmem:[%s2415 + $0x1] sm:$0xff]
        %v6154 = vld [vmem:[%s2415 + $0x9] sm:$0xff]
        %v6155 = vld [vmem:[%s2415 + $0x19] sm:$0xff]
        %v6156 = vld [vmem:[%s2415 + $0x21] sm:$0xff]
        %v6157 = vld [vmem:[%s2415 + $0x31] sm:$0xff]
        %v6158 = vld [vmem:[%s2415 + $0x39] sm:$0xff]
        %v6159 = vld [vmem:[%s2415 + $0x49] sm:$0xff]
        %v6160 = vld [vmem:[%s2415 + $0x51] sm:$0xff]
        %v6161 = vld [vmem:[%s2415 + $0x61] sm:$0xff]
        %v6162 = vld [vmem:[%s2415 + $0x69] sm:$0xff]
        %v6163 = vld [vmem:[%s2415 + $0x79] sm:$0xff]
        %v6164 = vld [vmem:[%s2415 + $0x81] sm:$0xff]
        %v6165 = vld [vmem:[%s2415 + $0x91] sm:$0xff]
        %v6166 = vld [vmem:[%s2415 + $0x99] sm:$0xff]
        %v6167 = vld [vmem:[%s2415 + $0xa9] sm:$0xff]
        %v6168 = vld [vmem:[%s2415 + $0xb1] sm:$0xff]
        %v6169 = vld [vmem:[%s2415 + $0xc1] sm:$0xff]
        %v6170 = vld [vmem:[%s2415 + $0xc9] sm:$0xff]
        %v6171 = vld [vmem:[%s2415 + $0xd9] sm:$0xff]
        %v6172 = vld [vmem:[%s2415 + $0xe1] sm:$0xff]
        %v6173 = vld [vmem:[%s2415 + $0xf1] sm:$0xff]
        %v6174 = vld [vmem:[%s2415 + $0xf9] sm:$0xff]
        %v6175 = vld [vmem:[%s2415 + $0x109] sm:$0xff]
        %v6176 = vld [vmem:[%s2415 + $0x111] sm:$0xff]
        %v6177 = vld [vmem:[%s2415 + $0x121] sm:$0xff]
        %v6178 = vld [vmem:[%s2415 + $0x129] sm:$0xff]
        %v6179 = vld [vmem:[%s2415 + $0x139] sm:$0xff]
        %v6180 = vld [vmem:[%s2415 + $0x141] sm:$0xff]
        %v6181 = vld [vmem:[%s2415 + $0x151] sm:$0xff]
        %v6182 = vld [vmem:[%s2415 + $0x159] sm:$0xff]
        %v6183 = vld [vmem:[%s2415 + $0x169] sm:$0xff]
        %v6184 = vld [vmem:[%s2415 + $0x171] sm:$0xff]
        %v6185 = vpack.c.bf16 %v6154, %v6153
        %v6186 = vpack.c.bf16 %v6156, %v6155
        %v6187 = vpack.c.bf16 %v6158, %v6157
        %v6188 = vpack.c.bf16 %v6160, %v6159
        %v6189 = vpack.c.bf16 %v6162, %v6161
        %v6190 = vpack.c.bf16 %v6164, %v6163
        %v6191 = vpack.c.bf16 %v6166, %v6165
        %v6192 = vpack.c.bf16 %v6168, %v6167
        %v6193 = vpack.c.bf16 %v6170, %v6169
        %v6194 = vpack.c.bf16 %v6172, %v6171
        %v6195 = vpack.c.bf16 %v6174, %v6173
        %v6196 = vpack.c.bf16 %v6176, %v6175
        %v6197 = vpack.c.bf16 %v6178, %v6177
        %v6198 = vpack.c.bf16 %v6180, %v6179
        %v6199 = vpack.c.bf16 %v6182, %v6181
        %v6200 = vpack.c.bf16 %v6184, %v6183
        %s6201 = scalar_lea.vmem %s2, 1024
        %v6202 = vld [vmem:[%s6201] sm:$0xf]
        %v6203 = vld [vmem:[%s6201 + $0x4] sm:$0xf]
        %v6204 = vld [vmem:[%s6201 + $0x8] sm:$0xf]
        %v6205 = vld [vmem:[%s6201 + $0xc] sm:$0xf]
        %v6206 = vld [vmem:[%s6201 + $0x10] sm:$0xf]
        %v6207 = vld [vmem:[%s6201 + $0x14] sm:$0xf]
        %v6208 = vld [vmem:[%s6201 + $0x18] sm:$0xf]
        %v6209 = vld [vmem:[%s6201 + $0x1c] sm:$0xf]
        %v6210 = vld [vmem:[%s6201 + $0x20] sm:$0xf]
        %v6211 = vld [vmem:[%s6201 + $0x24] sm:$0xf]
        %v6212 = vld [vmem:[%s6201 + $0x28] sm:$0xf]
        %v6213 = vld [vmem:[%s6201 + $0x2c] sm:$0xf]
        %v6214 = vld [vmem:[%s6201 + $0x30] sm:$0xf]
        %v6215 = vld [vmem:[%s6201 + $0x34] sm:$0xf]
        %v6216 = vld [vmem:[%s6201 + $0x38] sm:$0xf]
        %v6217 = vld [vmem:[%s6201 + $0x3c] sm:$0xf]
        %v6234 = vunpack.c.l.b16 %v6202
        %v6235 = vunpack.c.l.b16 %v6203
        %v6236 = vunpack.c.l.b16 %v6204
        %v6237 = vunpack.c.l.b16 %v6205
        %v6238 = vunpack.c.l.b16 %v6206
        %v6239 = vunpack.c.l.b16 %v6207
        %v6240 = vunpack.c.l.b16 %v6208
        %v6241 = vunpack.c.l.b16 %v6209
        %v6242 = vunpack.c.l.b16 %v6210
        %v6243 = vunpack.c.l.b16 %v6211
        %v6244 = vunpack.c.l.b16 %v6212
        %v6245 = vunpack.c.l.b16 %v6213
        %v6246 = vunpack.c.l.b16 %v6214
        %v6247 = vunpack.c.l.b16 %v6215
        %v6248 = vunpack.c.l.b16 %v6216
        %v6249 = vunpack.c.l.b16 %v6217
        %v6250 = vpack.c.b16 %v6235, %v6234
        %v6251 = vpack.c.b16 %v6237, %v6236
        %v6252 = vpack.c.b16 %v6239, %v6238
        %v6253 = vpack.c.b16 %v6241, %v6240
        %v6254 = vpack.c.b16 %v6243, %v6242
        %v6255 = vpack.c.b16 %v6245, %v6244
        %v6256 = vpack.c.b16 %v6247, %v6246
        %v6257 = vpack.c.b16 %v6249, %v6248
        %6266 = vmatprep.subr.bf16.mxu0 0
        %6267 = vmatpush1.bf16.msra.mxu0 %v6250
        %6268 = vmatprep.subr.bf16.mxu0 0
        %6269 = vmatpush1.bf16.msra.mxu0 %v6251
        %6270 = vmatprep.subr.bf16.mxu0 0
        %6271 = vmatpush1.bf16.msra.mxu0 %v6252
        %6272 = vmatprep.subr.bf16.mxu0 0
        %6273 = vmatpush1.bf16.msra.mxu0 %v6253
        %6274 = vmatprep.subr.bf16.mxu0 0
        %6275 = vmatpush1.bf16.msra.mxu0 %v6254
        %6276 = vmatprep.subr.bf16.mxu0 0
        %6277 = vmatpush1.bf16.msra.mxu0 %v6255
        %6278 = vmatprep.subr.bf16.mxu0 0
        %6279 = vmatpush1.bf16.msra.mxu0 %v6256
        %6280 = vmatprep.subr.bf16.mxu0 0
        %6281 = vmatpush1.bf16.msra.mxu0 %v6257
        %6282 = vmatprep.subr.bf16.mxu0 0
        %6283 = vmatpush1.bf16.msra.mxu0 0
        %6284 = vmatprep.subr.bf16.mxu0 0
        %6285 = vmatpush1.bf16.msra.mxu0 0
        %6286 = vmatprep.subr.bf16.mxu0 0
        %6287 = vmatpush1.bf16.msra.mxu0 0
        %6288 = vmatprep.subr.bf16.mxu0 0
        %6289 = vmatpush1.bf16.msra.mxu0 0
        %6290 = vmatprep.subr.bf16.mxu0 0
        %6291 = vmatpush1.bf16.msra.mxu0 0
        %6292 = vmatprep.subr.bf16.mxu0 0
        %6293 = vmatpush1.bf16.msra.mxu0 0
        %6294 = vmatprep.subr.bf16.mxu0 0
        %6295 = vmatpush1.bf16.msra.mxu0 0
        %6296 = vmatprep.subr.bf16.mxu0 0
        %6297 = vmatpush1.bf16.msra.mxu0 0
        %6298 = vmatprep.mubr.bf16.mxu0 0
        %6299 = vmatmul.mubr.bf16.gmra.mrb[0].mxu0 %v6185
        %v6300 = vpop.f32.mrb[0].mxu0
        %v6301 = vadd.f32 0.0, %v6300
        %v6302 = vpop.f32.mrb[0].mxu0
        %v6303 = vpop.f32.mrb[0].mxu0
        %v6304 = vadd.f32 0.0, %v6303
        %v6305 = vpop.f32.mrb[0].mxu0
        %6306 = vmatprep.mubr.bf16.mxu0 0
        %6307 = vmatmul.mubr.bf16.gmra.mrb[0].mxu0 %v6186
        %v6308 = vpop.f32.mrb[0].mxu0
        %v6309 = vadd.f32 0.0, %v6308
        %v6310 = vpop.f32.mrb[0].mxu0
        %v6311 = vpop.f32.mrb[0].mxu0
        %v6312 = vadd.f32 0.0, %v6311
        %v6313 = vpop.f32.mrb[0].mxu0
        %6314 = vmatprep.mubr.bf16.mxu0 0
        %6315 = vmatmul.mubr.bf16.gmra.mrb[0].mxu0 %v6187
        %v6316 = vpop.f32.mrb[0].mxu0
        %v6317 = vadd.f32 0.0, %v6316
        %v6318 = vpop.f32.mrb[0].mxu0
        %v6319 = vpop.f32.mrb[0].mxu0
        %v6320 = vadd.f32 0.0, %v6319
        %v6321 = vpop.f32.mrb[0].mxu0
        %6322 = vmatprep.mubr.bf16.mxu0 0
        %6323 = vmatmul.mubr.bf16.gmra.mrb[0].mxu0 %v6188
        %v6324 = vpop.f32.mrb[0].mxu0
        %v6325 = vadd.f32 0.0, %v6324
        %v6326 = vpop.f32.mrb[0].mxu0
        %v6327 = vpop.f32.mrb[0].mxu0
        %v6328 = vadd.f32 0.0, %v6327
        %v6329 = vpop.f32.mrb[0].mxu0
        %6330 = vmatprep.mubr.bf16.mxu0 0
        %6331 = vmatmul.mubr.bf16.gmra.mrb[0].mxu0 %v6189
        %v6332 = vpop.f32.mrb[0].mxu0
        %v6333 = vadd.f32 0.0, %v6332
        %v6334 = vpop.f32.mrb[0].mxu0
        %v6335 = vpop.f32.mrb[0].mxu0
        %v6336 = vadd.f32 0.0, %v6335
        %v6337 = vpop.f32.mrb[0].mxu0
        %6338 = vmatprep.mubr.bf16.mxu0 0
        %6339 = vmatmul.mubr.bf16.gmra.mrb[0].mxu0 %v6190
        %v6340 = vpop.f32.mrb[0].mxu0
        %v6341 = vadd.f32 0.0, %v6340
        %v6342 = vpop.f32.mrb[0].mxu0
        %v6343 = vpop.f32.mrb[0].mxu0
        %v6344 = vadd.f32 0.0, %v6343
        %v6345 = vpop.f32.mrb[0].mxu0
        %6346 = vmatprep.mubr.bf16.mxu0 0
        %6347 = vmatmul.mubr.bf16.gmra.mrb[0].mxu0 %v6191
        %v6348 = vpop.f32.mrb[0].mxu0
        %v6349 = vadd.f32 0.0, %v6348
        %v6350 = vpop.f32.mrb[0].mxu0
        %v6351 = vpop.f32.mrb[0].mxu0
        %v6352 = vadd.f32 0.0, %v6351
        %v6353 = vpop.f32.mrb[0].mxu0
        %6354 = vmatprep.mubr.bf16.mxu0 0
        %6355 = vmatmul.mubr.bf16.gmra.mrb[0].mxu0 %v6192
        %v6356 = vpop.f32.mrb[0].mxu0
        %v6357 = vadd.f32 0.0, %v6356
        %v6358 = vpop.f32.mrb[0].mxu0
        %v6359 = vpop.f32.mrb[0].mxu0
        %v6360 = vadd.f32 0.0, %v6359
        %v6361 = vpop.f32.mrb[0].mxu0
        %6362 = vmatprep.mubr.bf16.mxu0 0
        %6363 = vmatmul.mubr.bf16.gmra.mrb[0].mxu0 %v6193
        %v6364 = vpop.f32.mrb[0].mxu0
        %v6365 = vadd.f32 0.0, %v6364
        %v6366 = vpop.f32.mrb[0].mxu0
        %v6367 = vpop.f32.mrb[0].mxu0
        %v6368 = vadd.f32 0.0, %v6367
        %v6369 = vpop.f32.mrb[0].mxu0
        %6370 = vmatprep.mubr.bf16.mxu0 0
        %6371 = vmatmul.mubr.bf16.gmra.mrb[0].mxu0 %v6194
        %v6372 = vpop.f32.mrb[0].mxu0
        %v6373 = vadd.f32 0.0, %v6372
        %v6374 = vpop.f32.mrb[0].mxu0
        %v6375 = vpop.f32.mrb[0].mxu0
        %v6376 = vadd.f32 0.0, %v6375
        %v6377 = vpop.f32.mrb[0].mxu0
        %6378 = vmatprep.mubr.bf16.mxu0 0
        %6379 = vmatmul.mubr.bf16.gmra.mrb[0].mxu0 %v6195
        %v6380 = vpop.f32.mrb[0].mxu0
        %v6381 = vadd.f32 0.0, %v6380
        %v6382 = vpop.f32.mrb[0].mxu0
        %v6383 = vpop.f32.mrb[0].mxu0
        %v6384 = vadd.f32 0.0, %v6383
        %v6385 = vpop.f32.mrb[0].mxu0
        %6386 = vmatprep.mubr.bf16.mxu0 0
        %6387 = vmatmul.mubr.bf16.gmra.mrb[0].mxu0 %v6196
        %v6388 = vpop.f32.mrb[0].mxu0
        %v6389 = vadd.f32 0.0, %v6388
        %v6390 = vpop.f32.mrb[0].mxu0
        %v6391 = vpop.f32.mrb[0].mxu0
        %v6392 = vadd.f32 0.0, %v6391
        %v6393 = vpop.f32.mrb[0].mxu0
        %6394 = vmatprep.mubr.bf16.mxu0 0
        %6395 = vmatmul.mubr.bf16.gmra.mrb[0].mxu0 %v6197
        %v6396 = vpop.f32.mrb[0].mxu0
        %v6397 = vadd.f32 0.0, %v6396
        %v6398 = vpop.f32.mrb[0].mxu0
        %v6399 = vpop.f32.mrb[0].mxu0
        %v6400 = vadd.f32 0.0, %v6399
        %v6401 = vpop.f32.mrb[0].mxu0
        %6402 = vmatprep.mubr.bf16.mxu0 0
        %6403 = vmatmul.mubr.bf16.gmra.mrb[0].mxu0 %v6198
        %v6404 = vpop.f32.mrb[0].mxu0
        %v6405 = vadd.f32 0.0, %v6404
        %v6406 = vpop.f32.mrb[0].mxu0
        %v6407 = vpop.f32.mrb[0].mxu0
        %v6408 = vadd.f32 0.0, %v6407
        %v6409 = vpop.f32.mrb[0].mxu0
        %6410 = vmatprep.mubr.bf16.mxu0 0
        %6411 = vmatmul.mubr.bf16.gmra.mrb[0].mxu0 %v6199
        %v6412 = vpop.f32.mrb[0].mxu0
        %v6413 = vadd.f32 0.0, %v6412
        %v6414 = vpop.f32.mrb[0].mxu0
        %v6415 = vpop.f32.mrb[0].mxu0
        %v6416 = vadd.f32 0.0, %v6415
        %v6417 = vpop.f32.mrb[0].mxu0
        %6418 = vmatprep.mubr.bf16.mxu0 0
        %6419 = vmatmul.mubr.bf16.gmra.mrb[0].mxu0 %v6200
        %v6420 = vpop.f32.mrb[0].mxu0
        %v6421 = vadd.f32 0.0, %v6420
        %v6422 = vpop.f32.mrb[0].mxu0
        %v6423 = vpop.f32.mrb[0].mxu0
        %v6424 = vadd.f32 0.0, %v6423
        %v6425 = vpop.f32.mrb[0].mxu0
        %6426 = vdwg.mxu0
        %v6427 = vadd.f32 %v6121, %v6301
        %v6428 = vadd.f32 %v6122, %v6304
        %v6429 = vadd.f32 %v6123, %v6309
        %v6430 = vadd.f32 %v6124, %v6312
        %v6431 = vadd.f32 %v6125, %v6317
        %v6432 = vadd.f32 %v6126, %v6320
        %v6433 = vadd.f32 %v6127, %v6325
        %v6434 = vadd.f32 %v6128, %v6328
        %v6435 = vadd.f32 %v6129, %v6333
        %v6436 = vadd.f32 %v6130, %v6336
        %v6437 = vadd.f32 %v6131, %v6341
        %v6438 = vadd.f32 %v6132, %v6344
        %v6439 = vadd.f32 %v6133, %v6349
        %v6440 = vadd.f32 %v6134, %v6352
        %v6441 = vadd.f32 %v6135, %v6357
        %v6442 = vadd.f32 %v6136, %v6360
        %v6443 = vadd.f32 %v6137, %v6365
        %v6444 = vadd.f32 %v6138, %v6368
        %v6445 = vadd.f32 %v6139, %v6373
        %v6446 = vadd.f32 %v6140, %v6376
        %v6447 = vadd.f32 %v6141, %v6381
        %v6448 = vadd.f32 %v6142, %v6384
        %v6449 = vadd.f32 %v6143, %v6389
        %v6450 = vadd.f32 %v6144, %v6392
        %v6451 = vadd.f32 %v6145, %v6397
        %v6452 = vadd.f32 %v6146, %v6400
        %v6453 = vadd.f32 %v6147, %v6405
        %v6454 = vadd.f32 %v6148, %v6408
        %v6455 = vadd.f32 %v6149, %v6413
        %v6456 = vadd.f32 %v6150, %v6416
        %v6457 = vadd.f32 %v6151, %v6421
        %v6458 = vadd.f32 %v6152, %v6424
        %v6459 = vld [vmem:[%s2415 + $0x2] sm:$0xff]
        %v6460 = vld [vmem:[%s2415 + $0xa] sm:$0xff]
        %v6461 = vld [vmem:[%s2415 + $0x1a] sm:$0xff]
        %v6462 = vld [vmem:[%s2415 + $0x22] sm:$0xff]
        %v6463 = vld [vmem:[%s2415 + $0x32] sm:$0xff]
        %v6464 = vld [vmem:[%s2415 + $0x3a] sm:$0xff]
        %v6465 = vld [vmem:[%s2415 + $0x4a] sm:$0xff]
        %v6466 = vld [vmem:[%s2415 + $0x52] sm:$0xff]
        %v6467 = vld [vmem:[%s2415 + $0x62] sm:$0xff]
        %v6468 = vld [vmem:[%s2415 + $0x6a] sm:$0xff]
        %v6469 = vld [vmem:[%s2415 + $0x7a] sm:$0xff]
        %v6470 = vld [vmem:[%s2415 + $0x82] sm:$0xff]
        %v6471 = vld [vmem:[%s2415 + $0x92] sm:$0xff]
        %v6472 = vld [vmem:[%s2415 + $0x9a] sm:$0xff]
        %v6473 = vld [vmem:[%s2415 + $0xaa] sm:$0xff]
        %v6474 = vld [vmem:[%s2415 + $0xb2] sm:$0xff]
        %v6475 = vld [vmem:[%s2415 + $0xc2] sm:$0xff]
        %v6476 = vld [vmem:[%s2415 + $0xca] sm:$0xff]
        %v6477 = vld [vmem:[%s2415 + $0xda] sm:$0xff]
        %v6478 = vld [vmem:[%s2415 + $0xe2] sm:$0xff]
        %v6479 = vld [vmem:[%s2415 + $0xf2] sm:$0xff]
        %v6480 = vld [vmem:[%s2415 + $0xfa] sm:$0xff]
        %v6481 = vld [vmem:[%s2415 + $0x10a] sm:$0xff]
        %v6482 = vld [vmem:[%s2415 + $0x112] sm:$0xff]
        %v6483 = vld [vmem:[%s2415 + $0x122] sm:$0xff]
        %v6484 = vld [vmem:[%s2415 + $0x12a] sm:$0xff]
        %v6485 = vld [vmem:[%s2415 + $0x13a] sm:$0xff]
        %v6486 = vld [vmem:[%s2415 + $0x142] sm:$0xff]
        %v6487 = vld [vmem:[%s2415 + $0x152] sm:$0xff]
        %v6488 = vld [vmem:[%s2415 + $0x15a] sm:$0xff]
        %v6489 = vld [vmem:[%s2415 + $0x16a] sm:$0xff]
        %v6490 = vld [vmem:[%s2415 + $0x172] sm:$0xff]
        %v6491 = vpack.c.bf16 %v6460, %v6459
        %v6492 = vpack.c.bf16 %v6462, %v6461
        %v6493 = vpack.c.bf16 %v6464, %v6463
        %v6494 = vpack.c.bf16 %v6466, %v6465
        %v6495 = vpack.c.bf16 %v6468, %v6467
        %v6496 = vpack.c.bf16 %v6470, %v6469
        %v6497 = vpack.c.bf16 %v6472, %v6471
        %v6498 = vpack.c.bf16 %v6474, %v6473
        %v6499 = vpack.c.bf16 %v6476, %v6475
        %v6500 = vpack.c.bf16 %v6478, %v6477
        %v6501 = vpack.c.bf16 %v6480, %v6479
        %v6502 = vpack.c.bf16 %v6482, %v6481
        %v6503 = vpack.c.bf16 %v6484, %v6483
        %v6504 = vpack.c.bf16 %v6486, %v6485
        %v6505 = vpack.c.bf16 %v6488, %v6487
        %v6506 = vpack.c.bf16 %v6490, %v6489
        %s6507 = scalar_lea.vmem %s2, 1088
        %v6508 = vld [vmem:[%s6507] sm:$0xf]
        %v6509 = vld [vmem:[%s6507 + $0x4] sm:$0xf]
        %v6510 = vld [vmem:[%s6507 + $0x8] sm:$0xf]
        %v6511 = vld [vmem:[%s6507 + $0xc] sm:$0xf]
        %v6512 = vld [vmem:[%s6507 + $0x10] sm:$0xf]
        %v6513 = vld [vmem:[%s6507 + $0x14] sm:$0xf]
        %v6514 = vld [vmem:[%s6507 + $0x18] sm:$0xf]
        %v6515 = vld [vmem:[%s6507 + $0x1c] sm:$0xf]
        %v6516 = vld [vmem:[%s6507 + $0x20] sm:$0xf]
        %v6517 = vld [vmem:[%s6507 + $0x24] sm:$0xf]
        %v6518 = vld [vmem:[%s6507 + $0x28] sm:$0xf]
        %v6519 = vld [vmem:[%s6507 + $0x2c] sm:$0xf]
        %v6520 = vld [vmem:[%s6507 + $0x30] sm:$0xf]
        %v6521 = vld [vmem:[%s6507 + $0x34] sm:$0xf]
        %v6522 = vld [vmem:[%s6507 + $0x38] sm:$0xf]
        %v6523 = vld [vmem:[%s6507 + $0x3c] sm:$0xf]
        %v6540 = vunpack.c.l.b16 %v6508
        %v6541 = vunpack.c.l.b16 %v6509
        %v6542 = vunpack.c.l.b16 %v6510
        %v6543 = vunpack.c.l.b16 %v6511
        %v6544 = vunpack.c.l.b16 %v6512
        %v6545 = vunpack.c.l.b16 %v6513
        %v6546 = vunpack.c.l.b16 %v6514
        %v6547 = vunpack.c.l.b16 %v6515
        %v6548 = vunpack.c.l.b16 %v6516
        %v6549 = vunpack.c.l.b16 %v6517
        %v6550 = vunpack.c.l.b16 %v6518
        %v6551 = vunpack.c.l.b16 %v6519
        %v6552 = vunpack.c.l.b16 %v6520
        %v6553 = vunpack.c.l.b16 %v6521
        %v6554 = vunpack.c.l.b16 %v6522
        %v6555 = vunpack.c.l.b16 %v6523
        %v6556 = vpack.c.b16 %v6541, %v6540
        %v6557 = vpack.c.b16 %v6543, %v6542
        %v6558 = vpack.c.b16 %v6545, %v6544
        %v6559 = vpack.c.b16 %v6547, %v6546
        %v6560 = vpack.c.b16 %v6549, %v6548
        %v6561 = vpack.c.b16 %v6551, %v6550
        %v6562 = vpack.c.b16 %v6553, %v6552
        %v6563 = vpack.c.b16 %v6555, %v6554
        %6572 = vmatprep.subr.bf16.mxu0 0
        %6573 = vmatpush1.bf16.msra.mxu0 %v6556
        %6574 = vmatprep.subr.bf16.mxu0 0
        %6575 = vmatpush1.bf16.msra.mxu0 %v6557
        %6576 = vmatprep.subr.bf16.mxu0 0
        %6577 = vmatpush1.bf16.msra.mxu0 %v6558
        %6578 = vmatprep.subr.bf16.mxu0 0
        %6579 = vmatpush1.bf16.msra.mxu0 %v6559
        %6580 = vmatprep.subr.bf16.mxu0 0
        %6581 = vmatpush1.bf16.msra.mxu0 %v6560
        %6582 = vmatprep.subr.bf16.mxu0 0
        %6583 = vmatpush1.bf16.msra.mxu0 %v6561
        %6584 = vmatprep.subr.bf16.mxu0 0
        %6585 = vmatpush1.bf16.msra.mxu0 %v6562
        %6586 = vmatprep.subr.bf16.mxu0 0
        %6587 = vmatpush1.bf16.msra.mxu0 %v6563
        %6588 = vmatprep.subr.bf16.mxu0 0
        %6589 = vmatpush1.bf16.msra.mxu0 0
        %6590 = vmatprep.subr.bf16.mxu0 0
        %6591 = vmatpush1.bf16.msra.mxu0 0
        %6592 = vmatprep.subr.bf16.mxu0 0
        %6593 = vmatpush1.bf16.msra.mxu0 0
        %6594 = vmatprep.subr.bf16.mxu0 0
        %6595 = vmatpush1.bf16.msra.mxu0 0
        %6596 = vmatprep.subr.bf16.mxu0 0
        %6597 = vmatpush1.bf16.msra.mxu0 0
        %6598 = vmatprep.subr.bf16.mxu0 0
        %6599 = vmatpush1.bf16.msra.mxu0 0
        %6600 = vmatprep.subr.bf16.mxu0 0
        %6601 = vmatpush1.bf16.msra.mxu0 0
        %6602 = vmatprep.subr.bf16.mxu0 0
        %6603 = vmatpush1.bf16.msra.mxu0 0
        %6604 = vmatprep.mubr.bf16.mxu0 0
        %6605 = vmatmul.mubr.bf16.gmra.mrb[0].mxu0 %v6491
        %v6606 = vpop.f32.mrb[0].mxu0
        %v6607 = vadd.f32 0.0, %v6606
        %v6608 = vpop.f32.mrb[0].mxu0
        %v6609 = vpop.f32.mrb[0].mxu0
        %v6610 = vadd.f32 0.0, %v6609
        %v6611 = vpop.f32.mrb[0].mxu0
        %6612 = vmatprep.mubr.bf16.mxu0 0
        %6613 = vmatmul.mubr.bf16.gmra.mrb[0].mxu0 %v6492
        %v6614 = vpop.f32.mrb[0].mxu0
        %v6615 = vadd.f32 0.0, %v6614
        %v6616 = vpop.f32.mrb[0].mxu0
        %v6617 = vpop.f32.mrb[0].mxu0
        %v6618 = vadd.f32 0.0, %v6617
        %v6619 = vpop.f32.mrb[0].mxu0
        %6620 = vmatprep.mubr.bf16.mxu0 0
        %6621 = vmatmul.mubr.bf16.gmra.mrb[0].mxu0 %v6493
        %v6622 = vpop.f32.mrb[0].mxu0
        %v6623 = vadd.f32 0.0, %v6622
        %v6624 = vpop.f32.mrb[0].mxu0
        %v6625 = vpop.f32.mrb[0].mxu0
        %v6626 = vadd.f32 0.0, %v6625
        %v6627 = vpop.f32.mrb[0].mxu0
        %6628 = vmatprep.mubr.bf16.mxu0 0
        %6629 = vmatmul.mubr.bf16.gmra.mrb[0].mxu0 %v6494
        %v6630 = vpop.f32.mrb[0].mxu0
        %v6631 = vadd.f32 0.0, %v6630
        %v6632 = vpop.f32.mrb[0].mxu0
        %v6633 = vpop.f32.mrb[0].mxu0
        %v6634 = vadd.f32 0.0, %v6633
        %v6635 = vpop.f32.mrb[0].mxu0
        %6636 = vmatprep.mubr.bf16.mxu0 0
        %6637 = vmatmul.mubr.bf16.gmra.mrb[0].mxu0 %v6495
        %v6638 = vpop.f32.mrb[0].mxu0
        %v6639 = vadd.f32 0.0, %v6638
        %v6640 = vpop.f32.mrb[0].mxu0
        %v6641 = vpop.f32.mrb[0].mxu0
        %v6642 = vadd.f32 0.0, %v6641
        %v6643 = vpop.f32.mrb[0].mxu0
        %6644 = vmatprep.mubr.bf16.mxu0 0
        %6645 = vmatmul.mubr.bf16.gmra.mrb[0].mxu0 %v6496
        %v6646 = vpop.f32.mrb[0].mxu0
        %v6647 = vadd.f32 0.0, %v6646
        %v6648 = vpop.f32.mrb[0].mxu0
        %v6649 = vpop.f32.mrb[0].mxu0
        %v6650 = vadd.f32 0.0, %v6649
        %v6651 = vpop.f32.mrb[0].mxu0
        %6652 = vmatprep.mubr.bf16.mxu0 0
        %6653 = vmatmul.mubr.bf16.gmra.mrb[0].mxu0 %v6497
        %v6654 = vpop.f32.mrb[0].mxu0
        %v6655 = vadd.f32 0.0, %v6654
        %v6656 = vpop.f32.mrb[0].mxu0
        %v6657 = vpop.f32.mrb[0].mxu0
        %v6658 = vadd.f32 0.0, %v6657
        %v6659 = vpop.f32.mrb[0].mxu0
        %6660 = vmatprep.mubr.bf16.mxu0 0
        %6661 = vmatmul.mubr.bf16.gmra.mrb[0].mxu0 %v6498
        %v6662 = vpop.f32.mrb[0].mxu0
        %v6663 = vadd.f32 0.0, %v6662
        %v6664 = vpop.f32.mrb[0].mxu0
        %v6665 = vpop.f32.mrb[0].mxu0
        %v6666 = vadd.f32 0.0, %v6665
        %v6667 = vpop.f32.mrb[0].mxu0
        %6668 = vmatprep.mubr.bf16.mxu0 0
        %6669 = vmatmul.mubr.bf16.gmra.mrb[0].mxu0 %v6499
        %v6670 = vpop.f32.mrb[0].mxu0
        %v6671 = vadd.f32 0.0, %v6670
        %v6672 = vpop.f32.mrb[0].mxu0
        %v6673 = vpop.f32.mrb[0].mxu0
        %v6674 = vadd.f32 0.0, %v6673
        %v6675 = vpop.f32.mrb[0].mxu0
        %6676 = vmatprep.mubr.bf16.mxu0 0
        %6677 = vmatmul.mubr.bf16.gmra.mrb[0].mxu0 %v6500
        %v6678 = vpop.f32.mrb[0].mxu0
        %v6679 = vadd.f32 0.0, %v6678
        %v6680 = vpop.f32.mrb[0].mxu0
        %v6681 = vpop.f32.mrb[0].mxu0
        %v6682 = vadd.f32 0.0, %v6681
        %v6683 = vpop.f32.mrb[0].mxu0
        %6684 = vmatprep.mubr.bf16.mxu0 0
        %6685 = vmatmul.mubr.bf16.gmra.mrb[0].mxu0 %v6501
        %v6686 = vpop.f32.mrb[0].mxu0
        %v6687 = vadd.f32 0.0, %v6686
        %v6688 = vpop.f32.mrb[0].mxu0
        %v6689 = vpop.f32.mrb[0].mxu0
        %v6690 = vadd.f32 0.0, %v6689
        %v6691 = vpop.f32.mrb[0].mxu0
        %6692 = vmatprep.mubr.bf16.mxu0 0
        %6693 = vmatmul.mubr.bf16.gmra.mrb[0].mxu0 %v6502
        %v6694 = vpop.f32.mrb[0].mxu0
        %v6695 = vadd.f32 0.0, %v6694
        %v6696 = vpop.f32.mrb[0].mxu0
        %v6697 = vpop.f32.mrb[0].mxu0
        %v6698 = vadd.f32 0.0, %v6697
        %v6699 = vpop.f32.mrb[0].mxu0
        %6700 = vmatprep.mubr.bf16.mxu0 0
        %6701 = vmatmul.mubr.bf16.gmra.mrb[0].mxu0 %v6503
        %v6702 = vpop.f32.mrb[0].mxu0
        %v6703 = vadd.f32 0.0, %v6702
        %v6704 = vpop.f32.mrb[0].mxu0
        %v6705 = vpop.f32.mrb[0].mxu0
        %v6706 = vadd.f32 0.0, %v6705
        %v6707 = vpop.f32.mrb[0].mxu0
        %6708 = vmatprep.mubr.bf16.mxu0 0
        %6709 = vmatmul.mubr.bf16.gmra.mrb[0].mxu0 %v6504
        %v6710 = vpop.f32.mrb[0].mxu0
        %v6711 = vadd.f32 0.0, %v6710
        %v6712 = vpop.f32.mrb[0].mxu0
        %v6713 = vpop.f32.mrb[0].mxu0
        %v6714 = vadd.f32 0.0, %v6713
        %v6715 = vpop.f32.mrb[0].mxu0
        %6716 = vmatprep.mubr.bf16.mxu0 0
        %6717 = vmatmul.mubr.bf16.gmra.mrb[0].mxu0 %v6505
        %v6718 = vpop.f32.mrb[0].mxu0
        %v6719 = vadd.f32 0.0, %v6718
        %v6720 = vpop.f32.mrb[0].mxu0
        %v6721 = vpop.f32.mrb[0].mxu0
        %v6722 = vadd.f32 0.0, %v6721
        %v6723 = vpop.f32.mrb[0].mxu0
        %6724 = vmatprep.mubr.bf16.mxu0 0
        %6725 = vmatmul.mubr.bf16.gmra.mrb[0].mxu0 %v6506
        %v6726 = vpop.f32.mrb[0].mxu0
        %v6727 = vadd.f32 0.0, %v6726
        %v6728 = vpop.f32.mrb[0].mxu0
        %v6729 = vpop.f32.mrb[0].mxu0
        %v6730 = vadd.f32 0.0, %v6729
        %v6731 = vpop.f32.mrb[0].mxu0
        %6732 = vdwg.mxu0
        %v6733 = vadd.f32 %v6427, %v6607
        %v6734 = vadd.f32 %v6428, %v6610
        %v6735 = vadd.f32 %v6429, %v6615
        %v6736 = vadd.f32 %v6430, %v6618
        %v6737 = vadd.f32 %v6431, %v6623
        %v6738 = vadd.f32 %v6432, %v6626
        %v6739 = vadd.f32 %v6433, %v6631
        %v6740 = vadd.f32 %v6434, %v6634
        %v6741 = vadd.f32 %v6435, %v6639
        %v6742 = vadd.f32 %v6436, %v6642
        %v6743 = vadd.f32 %v6437, %v6647
        %v6744 = vadd.f32 %v6438, %v6650
        %v6745 = vadd.f32 %v6439, %v6655
        %v6746 = vadd.f32 %v6440, %v6658
        %v6747 = vadd.f32 %v6441, %v6663
        %v6748 = vadd.f32 %v6442, %v6666
        %v6749 = vadd.f32 %v6443, %v6671
        %v6750 = vadd.f32 %v6444, %v6674
        %v6751 = vadd.f32 %v6445, %v6679
        %v6752 = vadd.f32 %v6446, %v6682
        %v6753 = vadd.f32 %v6447, %v6687
        %v6754 = vadd.f32 %v6448, %v6690
        %v6755 = vadd.f32 %v6449, %v6695
        %v6756 = vadd.f32 %v6450, %v6698
        %v6757 = vadd.f32 %v6451, %v6703
        %v6758 = vadd.f32 %v6452, %v6706
        %v6759 = vadd.f32 %v6453, %v6711
        %v6760 = vadd.f32 %v6454, %v6714
        %v6761 = vadd.f32 %v6455, %v6719
        %v6762 = vadd.f32 %v6456, %v6722
        %v6763 = vadd.f32 %v6457, %v6727
        %v6764 = vadd.f32 %v6458, %v6730
        %v6765 = vmul.f32 %v4006, %v4006
        %s6766 = scalar_lea.vmem %s3, 128
        %v6767 = vld [vmem:[%s6766] sm:$0xff]
        %v6768 = vld [vmem:[%s6766 + $0x8] sm:$0xff]
        %v6769 = vld [vmem:[%s6766 + $0x10] sm:$0xff]
        %v6770 = vld [vmem:[%s6766 + $0x18] sm:$0xff]
        %v6771 = vld [vmem:[%s6766 + $0x20] sm:$0xff]
        %v6772 = vld [vmem:[%s6766 + $0x28] sm:$0xff]
        %v6773 = vld [vmem:[%s6766 + $0x30] sm:$0xff]
        %v6774 = vld [vmem:[%s6766 + $0x38] sm:$0xff]
        %v6775 = vld [vmem:[%s6766 + $0x40] sm:$0xff]
        %v6776 = vld [vmem:[%s6766 + $0x48] sm:$0xff]
        %v6777 = vld [vmem:[%s6766 + $0x50] sm:$0xff]
        %v6778 = vld [vmem:[%s6766 + $0x58] sm:$0xff]
        %v6779 = vld [vmem:[%s6766 + $0x60] sm:$0xff]
        %v6780 = vld [vmem:[%s6766 + $0x68] sm:$0xff]
        %v6781 = vld [vmem:[%s6766 + $0x70] sm:$0xff]
        %v6782 = vld [vmem:[%s6766 + $0x78] sm:$0xff]
        %6783 = vmatprep.subr.mxu0 0.0
        %6784 = vmatpush1.msra.mxu0 %v6767
        %6785 = vmatprep.subr.mxu0 0.0
        %6786 = vmatpush1.msra.mxu0 %v6768
        %6787 = vmatprep.subr.mxu0 0.0
        %6788 = vmatpush1.msra.mxu0 %v6769
        %6789 = vmatprep.subr.mxu0 0.0
        %6790 = vmatpush1.msra.mxu0 %v6770
        %6791 = vmatprep.subr.mxu0 0.0
        %6792 = vmatpush1.msra.mxu0 %v6771
        %6793 = vmatprep.subr.mxu0 0.0
        %6794 = vmatpush1.msra.mxu0 %v6772
        %6795 = vmatprep.subr.mxu0 0.0
        %6796 = vmatpush1.msra.mxu0 %v6773
        %6797 = vmatprep.subr.mxu0 0.0
        %6798 = vmatpush1.msra.mxu0 %v6774
        %6799 = vmatprep.subr.mxu0 0.0
        %6800 = vmatpush1.msra.mxu0 %v6775
        %6801 = vmatprep.subr.mxu0 0.0
        %6802 = vmatpush1.msra.mxu0 %v6776
        %6803 = vmatprep.subr.mxu0 0.0
        %6804 = vmatpush1.msra.mxu0 %v6777
        %6805 = vmatprep.subr.mxu0 0.0
        %6806 = vmatpush1.msra.mxu0 %v6778
        %6807 = vmatprep.subr.mxu0 0.0
        %6808 = vmatpush1.msra.mxu0 %v6779
        %6809 = vmatprep.subr.mxu0 0.0
        %6810 = vmatpush1.msra.mxu0 %v6780
        %6811 = vmatprep.subr.mxu0 0.0
        %6812 = vmatpush1.msra.mxu0 %v6781
        %6813 = vmatprep.subr.mxu0 0.0
        %6814 = vmatpush1.msra.mxu0 %v6782
        %6815 = vmatprep.subr.mxu0 0.0
        %6816 = vmatpush1.msra.mxu0 0.0
        %6817 = vmatprep.subr.mxu0 0.0
        %6818 = vmatpush1.msra.mxu0 0.0
        %6819 = vmatprep.subr.mxu0 0.0
        %6820 = vmatpush1.msra.mxu0 0.0
        %6821 = vmatprep.subr.mxu0 0.0
        %6822 = vmatpush1.msra.mxu0 0.0
        %6823 = vmatprep.subr.mxu0 0.0
        %6824 = vmatpush1.msra.mxu0 0.0
        %6825 = vmatprep.subr.mxu0 0.0
        %6826 = vmatpush1.msra.mxu0 0.0
        %6827 = vmatprep.subr.mxu0 0.0
        %6828 = vmatpush1.msra.mxu0 0.0
        %6829 = vmatprep.subr.mxu0 0.0
        %6830 = vmatpush1.msra.mxu0 0.0
        %6831 = vmatprep.subr.mxu0 0.0
        %6832 = vmatpush1.msra.mxu0 0.0
        %6833 = vmatprep.subr.mxu0 0.0
        %6834 = vmatpush1.msra.mxu0 0.0
        %6835 = vmatprep.subr.mxu0 0.0
        %6836 = vmatpush1.msra.mxu0 0.0
        %6837 = vmatprep.subr.mxu0 0.0
        %6838 = vmatpush1.msra.mxu0 0.0
        %6839 = vmatprep.subr.mxu0 0.0
        %6840 = vmatpush1.msra.mxu0 0.0
        %6841 = vmatprep.subr.mxu0 0.0
        %6842 = vmatpush1.msra.mxu0 0.0
        %6843 = vmatprep.subr.mxu0 0.0
        %6844 = vmatpush1.msra.mxu0 0.0
        %6845 = vmatprep.subr.mxu0 0.0
        %6846 = vmatpush1.msra.mxu0 0.0
        %6847 = vmatprep.mubr.f32.mxu0 0.0
        %6848 = vmatmul.mubr.f32.gmra.mrb[0].mxu0 %v6765
        %v6849 = vpop.f32.mrb[0].mxu0
        %v6850 = vadd.f32 1e-08, %v6849
        %v6851 = vpop.f32.mrb[0].mxu0
        %6852 = vdwg.mxu0
        %v6853 = vrsqrt.pop %v6850
        %v6854 = vlaneseq
        %v6855 = vshrl.u32 %v6854, 7
        %v6856 = vsub.s32 0, %v6855
        %v6857 = vrot.slane %v6853, %v6856
        %v6858 = vmul.f32 %v6733, %v6857
        %v6859 = vmul.f32 %v6734, %v6857
        %v6860 = vmul.f32 %v6735, %v6857
        %v6861 = vmul.f32 %v6736, %v6857
        %v6862 = vmul.f32 %v6737, %v6857
        %v6863 = vmul.f32 %v6738, %v6857
        %v6864 = vmul.f32 %v6739, %v6857
        %v6865 = vmul.f32 %v6740, %v6857
        %v6866 = vmul.f32 %v6741, %v6857
        %v6867 = vmul.f32 %v6742, %v6857
        %v6868 = vmul.f32 %v6743, %v6857
        %v6869 = vmul.f32 %v6744, %v6857
        %v6870 = vmul.f32 %v6745, %v6857
        %v6871 = vmul.f32 %v6746, %v6857
        %v6872 = vmul.f32 %v6747, %v6857
        %v6873 = vmul.f32 %v6748, %v6857
        %v6874 = vmul.f32 %v6749, %v6857
        %v6875 = vmul.f32 %v6750, %v6857
        %v6876 = vmul.f32 %v6751, %v6857
        %v6877 = vmul.f32 %v6752, %v6857
        %v6878 = vmul.f32 %v6753, %v6857
        %v6879 = vmul.f32 %v6754, %v6857
        %v6880 = vmul.f32 %v6755, %v6857
        %v6881 = vmul.f32 %v6756, %v6857
        %v6882 = vmul.f32 %v6757, %v6857
        %v6883 = vmul.f32 %v6758, %v6857
        %v6884 = vmul.f32 %v6759, %v6857
        %v6885 = vmul.f32 %v6760, %v6857
        %v6886 = vmul.f32 %v6761, %v6857
        %v6887 = vmul.f32 %v6762, %v6857
        %v6888 = vmul.f32 %v6763, %v6857
        %v6889 = vmul.f32 %v6764, %v6857
        %s6890 = scalar_lea.vmem %s7, 256
        %v6891 = vld [vmem:[%s6890] sm:$0xff]
        %v6892 = vld [vmem:[%s6890 + $0x8] sm:$0xff]
        %v6893 = vld [vmem:[%s6890 + $0x10] sm:$0xff]
        %v6894 = vld [vmem:[%s6890 + $0x18] sm:$0xff]
        %v6895 = vld [vmem:[%s6890 + $0x20] sm:$0xff]
        %v6896 = vld [vmem:[%s6890 + $0x28] sm:$0xff]
        %v6897 = vld [vmem:[%s6890 + $0x30] sm:$0xff]
        %v6898 = vld [vmem:[%s6890 + $0x38] sm:$0xff]
        %v6899 = vld [vmem:[%s6890 + $0x40] sm:$0xff]
        %v6900 = vld [vmem:[%s6890 + $0x48] sm:$0xff]
        %v6901 = vld [vmem:[%s6890 + $0x50] sm:$0xff]
        %v6902 = vld [vmem:[%s6890 + $0x58] sm:$0xff]
        %v6903 = vld [vmem:[%s6890 + $0x60] sm:$0xff]
        %v6904 = vld [vmem:[%s6890 + $0x68] sm:$0xff]
        %v6905 = vld [vmem:[%s6890 + $0x70] sm:$0xff]
        %v6906 = vld [vmem:[%s6890 + $0x78] sm:$0xff]
        %v6907 = vld [vmem:[%s6890 + $0x80] sm:$0xff]
        %v6908 = vld [vmem:[%s6890 + $0x88] sm:$0xff]
        %v6909 = vld [vmem:[%s6890 + $0x90] sm:$0xff]
        %v6910 = vld [vmem:[%s6890 + $0x98] sm:$0xff]
        %v6911 = vld [vmem:[%s6890 + $0xa0] sm:$0xff]
        %v6912 = vld [vmem:[%s6890 + $0xa8] sm:$0xff]
        %v6913 = vld [vmem:[%s6890 + $0xb0] sm:$0xff]
        %v6914 = vld [vmem:[%s6890 + $0xb8] sm:$0xff]
        %v6915 = vld [vmem:[%s6890 + $0xc0] sm:$0xff]
        %v6916 = vld [vmem:[%s6890 + $0xc8] sm:$0xff]
        %v6917 = vld [vmem:[%s6890 + $0xd0] sm:$0xff]
        %v6918 = vld [vmem:[%s6890 + $0xd8] sm:$0xff]
        %v6919 = vld [vmem:[%s6890 + $0xe0] sm:$0xff]
        %v6920 = vld [vmem:[%s6890 + $0xe8] sm:$0xff]
        %v6921 = vld [vmem:[%s6890 + $0xf0] sm:$0xff]
        %v6922 = vld [vmem:[%s6890 + $0xf8] sm:$0xff]
        %6924 = vset.pattern.permute.xlu0 0
        %6925 = vperm.xlu0 %6924, %v6891
        %v6926 = vpop.permute.xlu0 %6925
        %6929 = vset.pattern.permute.xlu0 0
        %6930 = vperm.xlu0 %6929, %v6892
        %v6931 = vpop.permute.xlu0 %6930
        %6934 = vset.pattern.permute.xlu0 0
        %6935 = vperm.xlu0 %6934, %v6893
        %v6936 = vpop.permute.xlu0 %6935
        %6939 = vset.pattern.permute.xlu0 0
        %6940 = vperm.xlu0 %6939, %v6894
        %v6941 = vpop.permute.xlu0 %6940
        %6944 = vset.pattern.permute.xlu0 0
        %6945 = vperm.xlu0 %6944, %v6895
        %v6946 = vpop.permute.xlu0 %6945
        %6949 = vset.pattern.permute.xlu0 0
        %6950 = vperm.xlu0 %6949, %v6896
        %v6951 = vpop.permute.xlu0 %6950
        %6954 = vset.pattern.permute.xlu0 0
        %6955 = vperm.xlu0 %6954, %v6897
        %v6956 = vpop.permute.xlu0 %6955
        %6959 = vset.pattern.permute.xlu0 0
        %6960 = vperm.xlu0 %6959, %v6898
        %v6961 = vpop.permute.xlu0 %6960
        %6964 = vset.pattern.permute.xlu0 0
        %6965 = vperm.xlu0 %6964, %v6899
        %v6966 = vpop.permute.xlu0 %6965
        %6969 = vset.pattern.permute.xlu0 0
        %6970 = vperm.xlu0 %6969, %v6900
        %v6971 = vpop.permute.xlu0 %6970
        %6974 = vset.pattern.permute.xlu0 0
        %6975 = vperm.xlu0 %6974, %v6901
        %v6976 = vpop.permute.xlu0 %6975
        %6979 = vset.pattern.permute.xlu0 0
        %6980 = vperm.xlu0 %6979, %v6902
        %v6981 = vpop.permute.xlu0 %6980
        %6984 = vset.pattern.permute.xlu0 0
        %6985 = vperm.xlu0 %6984, %v6903
        %v6986 = vpop.permute.xlu0 %6985
        %6989 = vset.pattern.permute.xlu0 0
        %6990 = vperm.xlu0 %6989, %v6904
        %v6991 = vpop.permute.xlu0 %6990
        %6994 = vset.pattern.permute.xlu0 0
        %6995 = vperm.xlu0 %6994, %v6905
        %v6996 = vpop.permute.xlu0 %6995
        %6999 = vset.pattern.permute.xlu0 0
        %7000 = vperm.xlu0 %6999, %v6906
        %v7001 = vpop.permute.xlu0 %7000
        %7004 = vset.pattern.permute.xlu0 0
        %7005 = vperm.xlu0 %7004, %v6907
        %v7006 = vpop.permute.xlu0 %7005
        %7009 = vset.pattern.permute.xlu0 0
        %7010 = vperm.xlu0 %7009, %v6908
        %v7011 = vpop.permute.xlu0 %7010
        %7014 = vset.pattern.permute.xlu0 0
        %7015 = vperm.xlu0 %7014, %v6909
        %v7016 = vpop.permute.xlu0 %7015
        %7019 = vset.pattern.permute.xlu0 0
        %7020 = vperm.xlu0 %7019, %v6910
        %v7021 = vpop.permute.xlu0 %7020
        %7024 = vset.pattern.permute.xlu0 0
        %7025 = vperm.xlu0 %7024, %v6911
        %v7026 = vpop.permute.xlu0 %7025
        %7029 = vset.pattern.permute.xlu0 0
        %7030 = vperm.xlu0 %7029, %v6912
        %v7031 = vpop.permute.xlu0 %7030
        %7034 = vset.pattern.permute.xlu0 0
        %7035 = vperm.xlu0 %7034, %v6913
        %v7036 = vpop.permute.xlu0 %7035
        %7039 = vset.pattern.permute.xlu0 0
        %7040 = vperm.xlu0 %7039, %v6914
        %v7041 = vpop.permute.xlu0 %7040
        %7044 = vset.pattern.permute.xlu0 0
        %7045 = vperm.xlu0 %7044, %v6915
        %v7046 = vpop.permute.xlu0 %7045
        %7049 = vset.pattern.permute.xlu0 0
        %7050 = vperm.xlu0 %7049, %v6916
        %v7051 = vpop.permute.xlu0 %7050
        %7054 = vset.pattern.permute.xlu0 0
        %7055 = vperm.xlu0 %7054, %v6917
        %v7056 = vpop.permute.xlu0 %7055
        %7059 = vset.pattern.permute.xlu0 0
        %7060 = vperm.xlu0 %7059, %v6918
        %v7061 = vpop.permute.xlu0 %7060
        %7064 = vset.pattern.permute.xlu0 0
        %7065 = vperm.xlu0 %7064, %v6919
        %v7066 = vpop.permute.xlu0 %7065
        %7069 = vset.pattern.permute.xlu0 0
        %7070 = vperm.xlu0 %7069, %v6920
        %v7071 = vpop.permute.xlu0 %7070
        %7074 = vset.pattern.permute.xlu0 0
        %7075 = vperm.xlu0 %7074, %v6921
        %v7076 = vpop.permute.xlu0 %7075
        %7079 = vset.pattern.permute.xlu0 0
        %7080 = vperm.xlu0 %7079, %v6922
        %v7081 = vpop.permute.xlu0 %7080
        %v7083 = vadd.f32 %v6858, %v6926
        %v7084 = vadd.f32 %v6859, %v6931
        %v7085 = vadd.f32 %v6860, %v6936
        %v7086 = vadd.f32 %v6861, %v6941
        %v7087 = vadd.f32 %v6862, %v6946
        %v7088 = vadd.f32 %v6863, %v6951
        %v7089 = vadd.f32 %v6864, %v6956
        %v7090 = vadd.f32 %v6865, %v6961
        %v7091 = vadd.f32 %v6866, %v6966
        %v7092 = vadd.f32 %v6867, %v6971
        %v7093 = vadd.f32 %v6868, %v6976
        %v7094 = vadd.f32 %v6869, %v6981
        %v7095 = vadd.f32 %v6870, %v6986
        %v7096 = vadd.f32 %v6871, %v6991
        %v7097 = vadd.f32 %v6872, %v6996
        %v7098 = vadd.f32 %v6873, %v7001
        %v7099 = vadd.f32 %v6874, %v7006
        %v7100 = vadd.f32 %v6875, %v7011
        %v7101 = vadd.f32 %v6876, %v7016
        %v7102 = vadd.f32 %v6877, %v7021
        %v7103 = vadd.f32 %v6878, %v7026
        %v7104 = vadd.f32 %v6879, %v7031
        %v7105 = vadd.f32 %v6880, %v7036
        %v7106 = vadd.f32 %v6881, %v7041
        %v7107 = vadd.f32 %v6882, %v7046
        %v7108 = vadd.f32 %v6883, %v7051
        %v7109 = vadd.f32 %v6884, %v7056
        %v7110 = vadd.f32 %v6885, %v7061
        %v7111 = vadd.f32 %v6886, %v7066
        %v7112 = vadd.f32 %v6887, %v7071
        %v7113 = vadd.f32 %v6888, %v7076
        %v7114 = vadd.f32 %v6889, %v7081
        %s7115 = scalar_lea.vmem %s6, 1
        %v7116 = vld [vmem:[%s7115] sm:$0x1]
        %v7118 = vlaneseq
        %v7119 = vshrl.u32 %v7118, 7
        %v7120 = vsub.s32 0, %v7119
        %v7121 = vrot.slane %v7116, %v7120
        %v7123 = vadd.f32 %v7083, %v7121
        %v7124 = vadd.f32 %v7084, %v7121
        %v7125 = vadd.f32 %v7085, %v7121
        %v7126 = vadd.f32 %v7086, %v7121
        %v7127 = vadd.f32 %v7087, %v7121
        %v7128 = vadd.f32 %v7088, %v7121
        %v7129 = vadd.f32 %v7089, %v7121
        %v7130 = vadd.f32 %v7090, %v7121
        %v7131 = vadd.f32 %v7091, %v7121
        %v7132 = vadd.f32 %v7092, %v7121
        %v7133 = vadd.f32 %v7093, %v7121
        %v7134 = vadd.f32 %v7094, %v7121
        %v7135 = vadd.f32 %v7095, %v7121
        %v7136 = vadd.f32 %v7096, %v7121
        %v7137 = vadd.f32 %v7097, %v7121
        %v7138 = vadd.f32 %v7098, %v7121
        %v7139 = vadd.f32 %v7099, %v7121
        %v7140 = vadd.f32 %v7100, %v7121
        %v7141 = vadd.f32 %v7101, %v7121
        %v7142 = vadd.f32 %v7102, %v7121
        %v7143 = vadd.f32 %v7103, %v7121
        %v7144 = vadd.f32 %v7104, %v7121
        %v7145 = vadd.f32 %v7105, %v7121
        %v7146 = vadd.f32 %v7106, %v7121
        %v7147 = vadd.f32 %v7107, %v7121
        %v7148 = vadd.f32 %v7108, %v7121
        %v7149 = vadd.f32 %v7109, %v7121
        %v7150 = vadd.f32 %v7110, %v7121
        %v7151 = vadd.f32 %v7111, %v7121
        %v7152 = vadd.f32 %v7112, %v7121
        %v7153 = vadd.f32 %v7113, %v7121
        %v7154 = vadd.f32 %v7114, %v7121
        %vm7155 = vcmp.ge.f32.partialorder %v7123, 0.0
        %vm7156 = vcmp.ge.f32.partialorder %v7124, 0.0
        %vm7157 = vcmp.ge.f32.partialorder %v7125, 0.0
        %vm7158 = vcmp.ge.f32.partialorder %v7126, 0.0
        %vm7159 = vcmp.ge.f32.partialorder %v7127, 0.0
        %vm7160 = vcmp.ge.f32.partialorder %v7128, 0.0
        %vm7161 = vcmp.ge.f32.partialorder %v7129, 0.0
        %vm7162 = vcmp.ge.f32.partialorder %v7130, 0.0
        %vm7163 = vcmp.ge.f32.partialorder %v7131, 0.0
        %vm7164 = vcmp.ge.f32.partialorder %v7132, 0.0
        %vm7165 = vcmp.ge.f32.partialorder %v7133, 0.0
        %vm7166 = vcmp.ge.f32.partialorder %v7134, 0.0
        %vm7167 = vcmp.ge.f32.partialorder %v7135, 0.0
        %vm7168 = vcmp.ge.f32.partialorder %v7136, 0.0
        %vm7169 = vcmp.ge.f32.partialorder %v7137, 0.0
        %vm7170 = vcmp.ge.f32.partialorder %v7138, 0.0
        %vm7171 = vcmp.ge.f32.partialorder %v7139, 0.0
        %vm7172 = vcmp.ge.f32.partialorder %v7140, 0.0
        %vm7173 = vcmp.ge.f32.partialorder %v7141, 0.0
        %vm7174 = vcmp.ge.f32.partialorder %v7142, 0.0
        %vm7175 = vcmp.ge.f32.partialorder %v7143, 0.0
        %vm7176 = vcmp.ge.f32.partialorder %v7144, 0.0
        %vm7177 = vcmp.ge.f32.partialorder %v7145, 0.0
        %vm7178 = vcmp.ge.f32.partialorder %v7146, 0.0
        %vm7179 = vcmp.ge.f32.partialorder %v7147, 0.0
        %vm7180 = vcmp.ge.f32.partialorder %v7148, 0.0
        %vm7181 = vcmp.ge.f32.partialorder %v7149, 0.0
        %vm7182 = vcmp.ge.f32.partialorder %v7150, 0.0
        %vm7183 = vcmp.ge.f32.partialorder %v7151, 0.0
        %vm7184 = vcmp.ge.f32.partialorder %v7152, 0.0
        %vm7185 = vcmp.ge.f32.partialorder %v7153, 0.0
        %vm7186 = vcmp.ge.f32.partialorder %v7154, 0.0
        %v7187 = vmul.f32 %v7123, 0.2
        %v7188 = vmul.f32 %v7124, 0.2
        %v7189 = vmul.f32 %v7125, 0.2
        %v7190 = vmul.f32 %v7126, 0.2
        %v7191 = vmul.f32 %v7127, 0.2
        %v7192 = vmul.f32 %v7128, 0.2
        %v7193 = vmul.f32 %v7129, 0.2
        %v7194 = vmul.f32 %v7130, 0.2
        %v7195 = vmul.f32 %v7131, 0.2
        %v7196 = vmul.f32 %v7132, 0.2
        %v7197 = vmul.f32 %v7133, 0.2
        %v7198 = vmul.f32 %v7134, 0.2
        %v7199 = vmul.f32 %v7135, 0.2
        %v7200 = vmul.f32 %v7136, 0.2
        %v7201 = vmul.f32 %v7137, 0.2
        %v7202 = vmul.f32 %v7138, 0.2
        %v7203 = vmul.f32 %v7139, 0.2
        %v7204 = vmul.f32 %v7140, 0.2
        %v7205 = vmul.f32 %v7141, 0.2
        %v7206 = vmul.f32 %v7142, 0.2
        %v7207 = vmul.f32 %v7143, 0.2
        %v7208 = vmul.f32 %v7144, 0.2
        %v7209 = vmul.f32 %v7145, 0.2
        %v7210 = vmul.f32 %v7146, 0.2
        %v7211 = vmul.f32 %v7147, 0.2
        %v7212 = vmul.f32 %v7148, 0.2
        %v7213 = vmul.f32 %v7149, 0.2
        %v7214 = vmul.f32 %v7150, 0.2
        %v7215 = vmul.f32 %v7151, 0.2
        %v7216 = vmul.f32 %v7152, 0.2
        %v7217 = vmul.f32 %v7153, 0.2
        %v7218 = vmul.f32 %v7154, 0.2
        %v7219 = vsel %vm7155, %v7123, %v7187
        %v7220 = vsel %vm7156, %v7124, %v7188
        %v7221 = vsel %vm7157, %v7125, %v7189
        %v7222 = vsel %vm7158, %v7126, %v7190
        %v7223 = vsel %vm7159, %v7127, %v7191
        %v7224 = vsel %vm7160, %v7128, %v7192
        %v7225 = vsel %vm7161, %v7129, %v7193
        %v7226 = vsel %vm7162, %v7130, %v7194
        %v7227 = vsel %vm7163, %v7131, %v7195
        %v7228 = vsel %vm7164, %v7132, %v7196
        %v7229 = vsel %vm7165, %v7133, %v7197
        %v7230 = vsel %vm7166, %v7134, %v7198
        %v7231 = vsel %vm7167, %v7135, %v7199
        %v7232 = vsel %vm7168, %v7136, %v7200
        %v7233 = vsel %vm7169, %v7137, %v7201
        %v7234 = vsel %vm7170, %v7138, %v7202
        %v7235 = vsel %vm7171, %v7139, %v7203
        %v7236 = vsel %vm7172, %v7140, %v7204
        %v7237 = vsel %vm7173, %v7141, %v7205
        %v7238 = vsel %vm7174, %v7142, %v7206
        %v7239 = vsel %vm7175, %v7143, %v7207
        %v7240 = vsel %vm7176, %v7144, %v7208
        %v7241 = vsel %vm7177, %v7145, %v7209
        %v7242 = vsel %vm7178, %v7146, %v7210
        %v7243 = vsel %vm7179, %v7147, %v7211
        %v7244 = vsel %vm7180, %v7148, %v7212
        %v7245 = vsel %vm7181, %v7149, %v7213
        %v7246 = vsel %vm7182, %v7150, %v7214
        %v7247 = vsel %vm7183, %v7151, %v7215
        %v7248 = vsel %vm7184, %v7152, %v7216
        %v7249 = vsel %vm7185, %v7153, %v7217
        %v7250 = vsel %vm7186, %v7154, %v7218
        %v7251 = vmul.f32 %v7219, 1.4142135
        %v7252 = vmul.f32 %v7220, 1.4142135
        %v7253 = vmul.f32 %v7221, 1.4142135
        %v7254 = vmul.f32 %v7222, 1.4142135
        %v7255 = vmul.f32 %v7223, 1.4142135
        %v7256 = vmul.f32 %v7224, 1.4142135
        %v7257 = vmul.f32 %v7225, 1.4142135
        %v7258 = vmul.f32 %v7226, 1.4142135
        %v7259 = vmul.f32 %v7227, 1.4142135
        %v7260 = vmul.f32 %v7228, 1.4142135
        %v7261 = vmul.f32 %v7229, 1.4142135
        %v7262 = vmul.f32 %v7230, 1.4142135
        %v7263 = vmul.f32 %v7231, 1.4142135
        %v7264 = vmul.f32 %v7232, 1.4142135
        %v7265 = vmul.f32 %v7233, 1.4142135
        %v7266 = vmul.f32 %v7234, 1.4142135
        %v7267 = vmul.f32 %v7235, 1.4142135
        %v7268 = vmul.f32 %v7236, 1.4142135
        %v7269 = vmul.f32 %v7237, 1.4142135
        %v7270 = vmul.f32 %v7238, 1.4142135
        %v7271 = vmul.f32 %v7239, 1.4142135
        %v7272 = vmul.f32 %v7240, 1.4142135
        %v7273 = vmul.f32 %v7241, 1.4142135
        %v7274 = vmul.f32 %v7242, 1.4142135
        %v7275 = vmul.f32 %v7243, 1.4142135
        %v7276 = vmul.f32 %v7244, 1.4142135
        %v7277 = vmul.f32 %v7245, 1.4142135
        %v7278 = vmul.f32 %v7246, 1.4142135
        %v7279 = vmul.f32 %v7247, 1.4142135
        %v7280 = vmul.f32 %v7248, 1.4142135
        %v7281 = vmul.f32 %v7249, 1.4142135
        %v7282 = vmul.f32 %v7250, 1.4142135
        %v7283 = vmax.f32 %v7251, -256.0
        %v7284 = vmax.f32 %v7252, -256.0
        %v7285 = vmax.f32 %v7253, -256.0
        %v7286 = vmax.f32 %v7254, -256.0
        %v7287 = vmax.f32 %v7255, -256.0
        %v7288 = vmax.f32 %v7256, -256.0
        %v7289 = vmax.f32 %v7257, -256.0
        %v7290 = vmax.f32 %v7258, -256.0
        %v7291 = vmax.f32 %v7259, -256.0
        %v7292 = vmax.f32 %v7260, -256.0
        %v7293 = vmax.f32 %v7261, -256.0
        %v7294 = vmax.f32 %v7262, -256.0
        %v7295 = vmax.f32 %v7263, -256.0
        %v7296 = vmax.f32 %v7264, -256.0
        %v7297 = vmax.f32 %v7265, -256.0
        %v7298 = vmax.f32 %v7266, -256.0
        %v7299 = vmax.f32 %v7267, -256.0
        %v7300 = vmax.f32 %v7268, -256.0
        %v7301 = vmax.f32 %v7269, -256.0
        %v7302 = vmax.f32 %v7270, -256.0
        %v7303 = vmax.f32 %v7271, -256.0
        %v7304 = vmax.f32 %v7272, -256.0
        %v7305 = vmax.f32 %v7273, -256.0
        %v7306 = vmax.f32 %v7274, -256.0
        %v7307 = vmax.f32 %v7275, -256.0
        %v7308 = vmax.f32 %v7276, -256.0
        %v7309 = vmax.f32 %v7277, -256.0
        %v7310 = vmax.f32 %v7278, -256.0
        %v7311 = vmax.f32 %v7279, -256.0
        %v7312 = vmax.f32 %v7280, -256.0
        %v7313 = vmax.f32 %v7281, -256.0
        %v7314 = vmax.f32 %v7282, -256.0
        %v7315 = vmin.f32 %v7283, 256.0
        %v7316 = vmin.f32 %v7284, 256.0
        %v7317 = vmin.f32 %v7285, 256.0
        %v7318 = vmin.f32 %v7286, 256.0
        %v7319 = vmin.f32 %v7287, 256.0
        %v7320 = vmin.f32 %v7288, 256.0
        %v7321 = vmin.f32 %v7289, 256.0
        %v7322 = vmin.f32 %v7290, 256.0
        %v7323 = vmin.f32 %v7291, 256.0
        %v7324 = vmin.f32 %v7292, 256.0
        %v7325 = vmin.f32 %v7293, 256.0
        %v7326 = vmin.f32 %v7294, 256.0
        %v7327 = vmin.f32 %v7295, 256.0
        %v7328 = vmin.f32 %v7296, 256.0
        %v7329 = vmin.f32 %v7297, 256.0
        %v7330 = vmin.f32 %v7298, 256.0
        %v7331 = vmin.f32 %v7299, 256.0
        %v7332 = vmin.f32 %v7300, 256.0
        %v7333 = vmin.f32 %v7301, 256.0
        %v7334 = vmin.f32 %v7302, 256.0
        %v7335 = vmin.f32 %v7303, 256.0
        %v7336 = vmin.f32 %v7304, 256.0
        %v7337 = vmin.f32 %v7305, 256.0
        %v7338 = vmin.f32 %v7306, 256.0
        %v7339 = vmin.f32 %v7307, 256.0
        %v7340 = vmin.f32 %v7308, 256.0
        %v7341 = vmin.f32 %v7309, 256.0
        %v7342 = vmin.f32 %v7310, 256.0
        %v7343 = vmin.f32 %v7311, 256.0
        %v7344 = vmin.f32 %v7312, 256.0
        %v7345 = vmin.f32 %v7313, 256.0
        %v7346 = vmin.f32 %v7314, 256.0
        %7347 = vst [vmem:[%s369] sm:$0xff] %v7315
        %7348 = vst [vmem:[%s369 + $0x8] sm:$0xff] %v7316
        %7349 = vst [vmem:[%s369 + $0x10] sm:$0xff] %v7317
        %7350 = vst [vmem:[%s369 + $0x18] sm:$0xff] %v7318
        %7351 = vst [vmem:[%s369 + $0x20] sm:$0xff] %v7319
        %7352 = vst [vmem:[%s369 + $0x28] sm:$0xff] %v7320
        %7353 = vst [vmem:[%s369 + $0x30] sm:$0xff] %v7321
        %7354 = vst [vmem:[%s369 + $0x38] sm:$0xff] %v7322
        %7355 = vst [vmem:[%s369 + $0x40] sm:$0xff] %v7323
        %7356 = vst [vmem:[%s369 + $0x48] sm:$0xff] %v7324
        %7357 = vst [vmem:[%s369 + $0x50] sm:$0xff] %v7325
        %7358 = vst [vmem:[%s369 + $0x58] sm:$0xff] %v7326
        %7359 = vst [vmem:[%s369 + $0x60] sm:$0xff] %v7327
        %7360 = vst [vmem:[%s369 + $0x68] sm:$0xff] %v7328
        %7361 = vst [vmem:[%s369 + $0x70] sm:$0xff] %v7329
        %7362 = vst [vmem:[%s369 + $0x78] sm:$0xff] %v7330
        %7363 = vst [vmem:[%s369 + $0x80] sm:$0xff] %v7331
        %7364 = vst [vmem:[%s369 + $0x88] sm:$0xff] %v7332
        %7365 = vst [vmem:[%s369 + $0x90] sm:$0xff] %v7333
        %7366 = vst [vmem:[%s369 + $0x98] sm:$0xff] %v7334
        %7367 = vst [vmem:[%s369 + $0xa0] sm:$0xff] %v7335
        %7368 = vst [vmem:[%s369 + $0xa8] sm:$0xff] %v7336
        %7369 = vst [vmem:[%s369 + $0xb0] sm:$0xff] %v7337
        %7370 = vst [vmem:[%s369 + $0xb8] sm:$0xff] %v7338
        %7371 = vst [vmem:[%s369 + $0xc0] sm:$0xff] %v7339
        %7372 = vst [vmem:[%s369 + $0xc8] sm:$0xff] %v7340
        %7373 = vst [vmem:[%s369 + $0xd0] sm:$0xff] %v7341
        %7374 = vst [vmem:[%s369 + $0xd8] sm:$0xff] %v7342
        %7375 = vst [vmem:[%s369 + $0xe0] sm:$0xff] %v7343
        %7376 = vst [vmem:[%s369 + $0xe8] sm:$0xff] %v7344
        %7377 = vst [vmem:[%s369 + $0xf0] sm:$0xff] %v7345
        %7378 = vst [vmem:[%s369 + $0xf8] sm:$0xff] %v7346
        %s7379 = scalar_lea.vmem %s4, 256
        %v7380 = vld [vmem:[%s7379] sm:$0xff]
        %v7381 = vld [vmem:[%s7379 + $0x8] sm:$0xff]
        %v7382 = vld [vmem:[%s7379 + $0x10] sm:$0xff]
        %v7383 = vld [vmem:[%s7379 + $0x18] sm:$0xff]
        %v7384 = vld [vmem:[%s7379 + $0x20] sm:$0xff]
        %v7385 = vld [vmem:[%s7379 + $0x28] sm:$0xff]
        %v7386 = vld [vmem:[%s7379 + $0x30] sm:$0xff]
        %v7387 = vld [vmem:[%s7379 + $0x38] sm:$0xff]
        %v7388 = vld [vmem:[%s7379 + $0x40] sm:$0xff]
        %v7389 = vld [vmem:[%s7379 + $0x48] sm:$0xff]
        %v7390 = vld [vmem:[%s7379 + $0x50] sm:$0xff]
        %v7391 = vld [vmem:[%s7379 + $0x58] sm:$0xff]
        %v7392 = vld [vmem:[%s7379 + $0x60] sm:$0xff]
        %v7393 = vld [vmem:[%s7379 + $0x68] sm:$0xff]
        %v7394 = vld [vmem:[%s7379 + $0x70] sm:$0xff]
        %v7395 = vld [vmem:[%s7379 + $0x78] sm:$0xff]
        %v7396 = vrot.slane %v387, 2
        %7398 = vmatprep.subr.mxu0 0.0
        %7399 = vmatpush1.msra.mxu0 %v7380
        %7400 = vmatprep.subr.mxu0 0.0
        %7401 = vmatpush1.msra.mxu0 %v7381
        %7402 = vmatprep.subr.mxu0 0.0
        %7403 = vmatpush1.msra.mxu0 %v7382
        %7404 = vmatprep.subr.mxu0 0.0
        %7405 = vmatpush1.msra.mxu0 %v7383
        %7406 = vmatprep.subr.mxu0 0.0
        %7407 = vmatpush1.msra.mxu0 %v7384
        %7408 = vmatprep.subr.mxu0 0.0
        %7409 = vmatpush1.msra.mxu0 %v7385
        %7410 = vmatprep.subr.mxu0 0.0
        %7411 = vmatpush1.msra.mxu0 %v7386
        %7412 = vmatprep.subr.mxu0 0.0
        %7413 = vmatpush1.msra.mxu0 %v7387
        %7414 = vmatprep.subr.mxu0 0.0
        %7415 = vmatpush1.msra.mxu0 %v7388
        %7416 = vmatprep.subr.mxu0 0.0
        %7417 = vmatpush1.msra.mxu0 %v7389
        %7418 = vmatprep.subr.mxu0 0.0
        %7419 = vmatpush1.msra.mxu0 %v7390
        %7420 = vmatprep.subr.mxu0 0.0
        %7421 = vmatpush1.msra.mxu0 %v7391
        %7422 = vmatprep.subr.mxu0 0.0
        %7423 = vmatpush1.msra.mxu0 %v7392
        %7424 = vmatprep.subr.mxu0 0.0
        %7425 = vmatpush1.msra.mxu0 %v7393
        %7426 = vmatprep.subr.mxu0 0.0
        %7427 = vmatpush1.msra.mxu0 %v7394
        %7428 = vmatprep.subr.mxu0 0.0
        %7429 = vmatpush1.msra.mxu0 %v7395
        %7430 = vmatprep.subr.mxu0 0.0
        %7431 = vmatpush1.msra.mxu0 0.0
        %7432 = vmatprep.subr.mxu0 0.0
        %7433 = vmatpush1.msra.mxu0 0.0
        %7434 = vmatprep.subr.mxu0 0.0
        %7435 = vmatpush1.msra.mxu0 0.0
        %7436 = vmatprep.subr.mxu0 0.0
        %7437 = vmatpush1.msra.mxu0 0.0
        %7438 = vmatprep.subr.mxu0 0.0
        %7439 = vmatpush1.msra.mxu0 0.0
        %7440 = vmatprep.subr.mxu0 0.0
        %7441 = vmatpush1.msra.mxu0 0.0
        %7442 = vmatprep.subr.mxu0 0.0
        %7443 = vmatpush1.msra.mxu0 0.0
        %7444 = vmatprep.subr.mxu0 0.0
        %7445 = vmatpush1.msra.mxu0 0.0
        %7446 = vmatprep.subr.mxu0 0.0
        %7447 = vmatpush1.msra.mxu0 0.0
        %7448 = vmatprep.subr.mxu0 0.0
        %7449 = vmatpush1.msra.mxu0 0.0
        %7450 = vmatprep.subr.mxu0 0.0
        %7451 = vmatpush1.msra.mxu0 0.0
        %7452 = vmatprep.subr.mxu0 0.0
        %7453 = vmatpush1.msra.mxu0 0.0
        %7454 = vmatprep.subr.mxu0 0.0
        %7455 = vmatpush1.msra.mxu0 0.0
        %7456 = vmatprep.subr.mxu0 0.0
        %7457 = vmatpush1.msra.mxu0 0.0
        %7458 = vmatprep.subr.mxu0 0.0
        %7459 = vmatpush1.msra.mxu0 0.0
        %7460 = vmatprep.subr.mxu0 0.0
        %7461 = vmatpush1.msra.mxu0 0.0
        %7462 = vmatprep.mubr.f32.mxu0 0.0
        %7463 = vmatmul.mubr.f32.gmra.mrb[0].mxu0 %v7396
        %v7464 = vpop.f32.mrb[0].mxu0
        %v7465 = vadd.f32 0.0, %v7464
        %v7466 = vpop.f32.mrb[0].mxu0
        %7467 = vdwg.mxu0
        %v7468 = vmul.f32 %v7465, 0.25
        %s7469 = scalar_lea.vmem %s5, 2
        %v7470 = vld [vmem:[%s7469] sm:$0x1]
        %v7471 = vadd.f32 %v7468, %v7470
        %v7472 = vmul.f32 %v7471, 0.25
        %v7473 = vlaneseq
        %v7474 = vshrl.u32 %v7473, 7
        %v7475 = vsub.s32 0, %v7474
        %v7476 = vrot.slane %v7472, %v7475
        %v7477 = vmul.f32 %v7315, %v7476
        %v7478 = vmul.f32 %v7316, %v7476
        %v7479 = vmul.f32 %v7317, %v7476
        %v7480 = vmul.f32 %v7318, %v7476
        %v7481 = vmul.f32 %v7319, %v7476
        %v7482 = vmul.f32 %v7320, %v7476
        %v7483 = vmul.f32 %v7321, %v7476
        %v7484 = vmul.f32 %v7322, %v7476
        %v7485 = vmul.f32 %v7323, %v7476
        %v7486 = vmul.f32 %v7324, %v7476
        %v7487 = vmul.f32 %v7325, %v7476
        %v7488 = vmul.f32 %v7326, %v7476
        %v7489 = vmul.f32 %v7327, %v7476
        %v7490 = vmul.f32 %v7328, %v7476
        %v7491 = vmul.f32 %v7329, %v7476
        %v7492 = vmul.f32 %v7330, %v7476
        %v7493 = vmul.f32 %v7331, %v7476
        %v7494 = vmul.f32 %v7332, %v7476
        %v7495 = vmul.f32 %v7333, %v7476
        %v7496 = vmul.f32 %v7334, %v7476
        %v7497 = vmul.f32 %v7335, %v7476
        %v7498 = vmul.f32 %v7336, %v7476
        %v7499 = vmul.f32 %v7337, %v7476
        %v7500 = vmul.f32 %v7338, %v7476
        %v7501 = vmul.f32 %v7339, %v7476
        %v7502 = vmul.f32 %v7340, %v7476
        %v7503 = vmul.f32 %v7341, %v7476
        %v7504 = vmul.f32 %v7342, %v7476
        %v7505 = vmul.f32 %v7343, %v7476
        %v7506 = vmul.f32 %v7344, %v7476
        %v7507 = vmul.f32 %v7345, %v7476
        %v7508 = vmul.f32 %v7346, %v7476
        %v7509 = vpack.c.bf16 %v7478, %v7477
        %v7510 = vpack.c.bf16 %v7480, %v7479
        %v7511 = vpack.c.bf16 %v7482, %v7481
        %v7512 = vpack.c.bf16 %v7484, %v7483
        %v7513 = vpack.c.bf16 %v7486, %v7485
        %v7514 = vpack.c.bf16 %v7488, %v7487
        %v7515 = vpack.c.bf16 %v7490, %v7489
        %v7516 = vpack.c.bf16 %v7492, %v7491
        %v7517 = vpack.c.bf16 %v7494, %v7493
        %v7518 = vpack.c.bf16 %v7496, %v7495
        %v7519 = vpack.c.bf16 %v7498, %v7497
        %v7520 = vpack.c.bf16 %v7500, %v7499
        %v7521 = vpack.c.bf16 %v7502, %v7501
        %v7522 = vpack.c.bf16 %v7504, %v7503
        %v7523 = vpack.c.bf16 %v7506, %v7505
        %v7524 = vpack.c.bf16 %v7508, %v7507
        %v7525 = vld [vmem:[%s8] sm:$0xf]
        %v7526 = vld [vmem:[%s8 + $0x4] sm:$0xf]
        %v7527 = vld [vmem:[%s8 + $0x8] sm:$0xf]
        %v7528 = vld [vmem:[%s8 + $0xc] sm:$0xf]
        %v7529 = vld [vmem:[%s8 + $0x10] sm:$0xf]
        %v7530 = vld [vmem:[%s8 + $0x14] sm:$0xf]
        %v7531 = vld [vmem:[%s8 + $0x18] sm:$0xf]
        %v7532 = vld [vmem:[%s8 + $0x1c] sm:$0xf]
        %v7533 = vld [vmem:[%s8 + $0x20] sm:$0xf]
        %v7534 = vld [vmem:[%s8 + $0x24] sm:$0xf]
        %v7535 = vld [vmem:[%s8 + $0x28] sm:$0xf]
        %v7536 = vld [vmem:[%s8 + $0x2c] sm:$0xf]
        %v7537 = vld [vmem:[%s8 + $0x30] sm:$0xf]
        %v7538 = vld [vmem:[%s8 + $0x34] sm:$0xf]
        %v7539 = vld [vmem:[%s8 + $0x38] sm:$0xf]
        %v7540 = vld [vmem:[%s8 + $0x3c] sm:$0xf]
        %s7541 = scalar_lea.vmem %s6, 2
        %v7542 = vld [vmem:[%s7541] sm:$0x1]
        %v7544 = vlaneseq
        %v7545 = vshrl.u32 %v7544, 7
        %v7546 = vsub.s32 0, %v7545
        %v7547 = vrot.slane %v7542, %v7546
        %v7565 = vunpack.c.l.b16 %v7525
        %v7566 = vunpack.c.l.b16 %v7526
        %v7567 = vunpack.c.l.b16 %v7527
        %v7568 = vunpack.c.l.b16 %v7528
        %v7569 = vunpack.c.l.b16 %v7529
        %v7570 = vunpack.c.l.b16 %v7530
        %v7571 = vunpack.c.l.b16 %v7531
        %v7572 = vunpack.c.l.b16 %v7532
        %v7573 = vunpack.c.l.b16 %v7533
        %v7574 = vunpack.c.l.b16 %v7534
        %v7575 = vunpack.c.l.b16 %v7535
        %v7576 = vunpack.c.l.b16 %v7536
        %v7577 = vunpack.c.l.b16 %v7537
        %v7578 = vunpack.c.l.b16 %v7538
        %v7579 = vunpack.c.l.b16 %v7539
        %v7580 = vunpack.c.l.b16 %v7540
        %v7581 = vpack.c.b16 %v7566, %v7565
        %v7582 = vpack.c.b16 %v7568, %v7567
        %v7583 = vpack.c.b16 %v7570, %v7569
        %v7584 = vpack.c.b16 %v7572, %v7571
        %v7585 = vpack.c.b16 %v7574, %v7573
        %v7586 = vpack.c.b16 %v7576, %v7575
        %v7587 = vpack.c.b16 %v7578, %v7577
        %v7588 = vpack.c.b16 %v7580, %v7579
        %7597 = vmatprep.subr.bf16.mxu0 0
        %7598 = vmatpush1.bf16.msra.mxu0 %v7581
        %7599 = vmatprep.subr.bf16.mxu0 0
        %7600 = vmatpush1.bf16.msra.mxu0 %v7582
        %7601 = vmatprep.subr.bf16.mxu0 0
        %7602 = vmatpush1.bf16.msra.mxu0 %v7583
        %7603 = vmatprep.subr.bf16.mxu0 0
        %7604 = vmatpush1.bf16.msra.mxu0 %v7584
        %7605 = vmatprep.subr.bf16.mxu0 0
        %7606 = vmatpush1.bf16.msra.mxu0 %v7585
        %7607 = vmatprep.subr.bf16.mxu0 0
        %7608 = vmatpush1.bf16.msra.mxu0 %v7586
        %7609 = vmatprep.subr.bf16.mxu0 0
        %7610 = vmatpush1.bf16.msra.mxu0 %v7587
        %7611 = vmatprep.subr.bf16.mxu0 0
        %7612 = vmatpush1.bf16.msra.mxu0 %v7588
        %7613 = vmatprep.subr.bf16.mxu0 0
        %7614 = vmatpush1.bf16.msra.mxu0 0
        %7615 = vmatprep.subr.bf16.mxu0 0
        %7616 = vmatpush1.bf16.msra.mxu0 0
        %7617 = vmatprep.subr.bf16.mxu0 0
        %7618 = vmatpush1.bf16.msra.mxu0 0
        %7619 = vmatprep.subr.bf16.mxu0 0
        %7620 = vmatpush1.bf16.msra.mxu0 0
        %7621 = vmatprep.subr.bf16.mxu0 0
        %7622 = vmatpush1.bf16.msra.mxu0 0
        %7623 = vmatprep.subr.bf16.mxu0 0
        %7624 = vmatpush1.bf16.msra.mxu0 0
        %7625 = vmatprep.subr.bf16.mxu0 0
        %7626 = vmatpush1.bf16.msra.mxu0 0
        %7627 = vmatprep.subr.bf16.mxu0 0
        %7628 = vmatpush1.bf16.msra.mxu0 0
        %7629 = vmatprep.mubr.bf16.mxu0 0
        %7630 = vmatmul.mubr.bf16.gmra.mrb[0].mxu0 %v7509
        %v7631 = vpop.f32.mrb[0].mxu0
        %v7632 = vadd.f32 %v7547, %v7631
        %v7633 = vpop.f32.mrb[0].mxu0
        %v7634 = vpop.f32.mrb[0].mxu0
        %v7635 = vadd.f32 %v7547, %v7634
        %v7636 = vpop.f32.mrb[0].mxu0
        %7637 = vmatprep.mubr.bf16.mxu0 0
        %7638 = vmatmul.mubr.bf16.gmra.mrb[0].mxu0 %v7510
        %v7639 = vpop.f32.mrb[0].mxu0
        %v7640 = vadd.f32 %v7547, %v7639
        %v7641 = vpop.f32.mrb[0].mxu0
        %v7642 = vpop.f32.mrb[0].mxu0
        %v7643 = vadd.f32 %v7547, %v7642
        %v7644 = vpop.f32.mrb[0].mxu0
        %7645 = vmatprep.mubr.bf16.mxu0 0
        %7646 = vmatmul.mubr.bf16.gmra.mrb[0].mxu0 %v7511
        %v7647 = vpop.f32.mrb[0].mxu0
        %v7648 = vadd.f32 %v7547, %v7647
        %v7649 = vpop.f32.mrb[0].mxu0
        %v7650 = vpop.f32.mrb[0].mxu0
        %v7651 = vadd.f32 %v7547, %v7650
        %v7652 = vpop.f32.mrb[0].mxu0
        %7653 = vmatprep.mubr.bf16.mxu0 0
        %7654 = vmatmul.mubr.bf16.gmra.mrb[0].mxu0 %v7512
        %v7655 = vpop.f32.mrb[0].mxu0
        %v7656 = vadd.f32 %v7547, %v7655
        %v7657 = vpop.f32.mrb[0].mxu0
        %v7658 = vpop.f32.mrb[0].mxu0
        %v7659 = vadd.f32 %v7547, %v7658
        %v7660 = vpop.f32.mrb[0].mxu0
        %7661 = vmatprep.mubr.bf16.mxu0 0
        %7662 = vmatmul.mubr.bf16.gmra.mrb[0].mxu0 %v7513
        %v7663 = vpop.f32.mrb[0].mxu0
        %v7664 = vadd.f32 %v7547, %v7663
        %v7665 = vpop.f32.mrb[0].mxu0
        %v7666 = vpop.f32.mrb[0].mxu0
        %v7667 = vadd.f32 %v7547, %v7666
        %v7668 = vpop.f32.mrb[0].mxu0
        %7669 = vmatprep.mubr.bf16.mxu0 0
        %7670 = vmatmul.mubr.bf16.gmra.mrb[0].mxu0 %v7514
        %v7671 = vpop.f32.mrb[0].mxu0
        %v7672 = vadd.f32 %v7547, %v7671
        %v7673 = vpop.f32.mrb[0].mxu0
        %v7674 = vpop.f32.mrb[0].mxu0
        %v7675 = vadd.f32 %v7547, %v7674
        %v7676 = vpop.f32.mrb[0].mxu0
        %7677 = vmatprep.mubr.bf16.mxu0 0
        %7678 = vmatmul.mubr.bf16.gmra.mrb[0].mxu0 %v7515
        %v7679 = vpop.f32.mrb[0].mxu0
        %v7680 = vadd.f32 %v7547, %v7679
        %v7681 = vpop.f32.mrb[0].mxu0
        %v7682 = vpop.f32.mrb[0].mxu0
        %v7683 = vadd.f32 %v7547, %v7682
        %v7684 = vpop.f32.mrb[0].mxu0
        %7685 = vmatprep.mubr.bf16.mxu0 0
        %7686 = vmatmul.mubr.bf16.gmra.mrb[0].mxu0 %v7516
        %v7687 = vpop.f32.mrb[0].mxu0
        %v7688 = vadd.f32 %v7547, %v7687
        %v7689 = vpop.f32.mrb[0].mxu0
        %v7690 = vpop.f32.mrb[0].mxu0
        %v7691 = vadd.f32 %v7547, %v7690
        %v7692 = vpop.f32.mrb[0].mxu0
        %7693 = vmatprep.mubr.bf16.mxu0 0
        %7694 = vmatmul.mubr.bf16.gmra.mrb[0].mxu0 %v7517
        %v7695 = vpop.f32.mrb[0].mxu0
        %v7696 = vadd.f32 %v7547, %v7695
        %v7697 = vpop.f32.mrb[0].mxu0
        %v7698 = vpop.f32.mrb[0].mxu0
        %v7699 = vadd.f32 %v7547, %v7698
        %v7700 = vpop.f32.mrb[0].mxu0
        %7701 = vmatprep.mubr.bf16.mxu0 0
        %7702 = vmatmul.mubr.bf16.gmra.mrb[0].mxu0 %v7518
        %v7703 = vpop.f32.mrb[0].mxu0
        %v7704 = vadd.f32 %v7547, %v7703
        %v7705 = vpop.f32.mrb[0].mxu0
        %v7706 = vpop.f32.mrb[0].mxu0
        %v7707 = vadd.f32 %v7547, %v7706
        %v7708 = vpop.f32.mrb[0].mxu0
        %7709 = vmatprep.mubr.bf16.mxu0 0
        %7710 = vmatmul.mubr.bf16.gmra.mrb[0].mxu0 %v7519
        %v7711 = vpop.f32.mrb[0].mxu0
        %v7712 = vadd.f32 %v7547, %v7711
        %v7713 = vpop.f32.mrb[0].mxu0
        %v7714 = vpop.f32.mrb[0].mxu0
        %v7715 = vadd.f32 %v7547, %v7714
        %v7716 = vpop.f32.mrb[0].mxu0
        %7717 = vmatprep.mubr.bf16.mxu0 0
        %7718 = vmatmul.mubr.bf16.gmra.mrb[0].mxu0 %v7520
        %v7719 = vpop.f32.mrb[0].mxu0
        %v7720 = vadd.f32 %v7547, %v7719
        %v7721 = vpop.f32.mrb[0].mxu0
        %v7722 = vpop.f32.mrb[0].mxu0
        %v7723 = vadd.f32 %v7547, %v7722
        %v7724 = vpop.f32.mrb[0].mxu0
        %7725 = vmatprep.mubr.bf16.mxu0 0
        %7726 = vmatmul.mubr.bf16.gmra.mrb[0].mxu0 %v7521
        %v7727 = vpop.f32.mrb[0].mxu0
        %v7728 = vadd.f32 %v7547, %v7727
        %v7729 = vpop.f32.mrb[0].mxu0
        %v7730 = vpop.f32.mrb[0].mxu0
        %v7731 = vadd.f32 %v7547, %v7730
        %v7732 = vpop.f32.mrb[0].mxu0
        %7733 = vmatprep.mubr.bf16.mxu0 0
        %7734 = vmatmul.mubr.bf16.gmra.mrb[0].mxu0 %v7522
        %v7735 = vpop.f32.mrb[0].mxu0
        %v7736 = vadd.f32 %v7547, %v7735
        %v7737 = vpop.f32.mrb[0].mxu0
        %v7738 = vpop.f32.mrb[0].mxu0
        %v7739 = vadd.f32 %v7547, %v7738
        %v7740 = vpop.f32.mrb[0].mxu0
        %7741 = vmatprep.mubr.bf16.mxu0 0
        %7742 = vmatmul.mubr.bf16.gmra.mrb[0].mxu0 %v7523
        %v7743 = vpop.f32.mrb[0].mxu0
        %v7744 = vadd.f32 %v7547, %v7743
        %v7745 = vpop.f32.mrb[0].mxu0
        %v7746 = vpop.f32.mrb[0].mxu0
        %v7747 = vadd.f32 %v7547, %v7746
        %v7748 = vpop.f32.mrb[0].mxu0
        %7749 = vmatprep.mubr.bf16.mxu0 0
        %7750 = vmatmul.mubr.bf16.gmra.mrb[0].mxu0 %v7524
        %v7751 = vpop.f32.mrb[0].mxu0
        %v7752 = vadd.f32 %v7547, %v7751
        %v7753 = vpop.f32.mrb[0].mxu0
        %v7754 = vpop.f32.mrb[0].mxu0
        %v7755 = vadd.f32 %v7547, %v7754
        %v7756 = vpop.f32.mrb[0].mxu0
        %7757 = vdwg.mxu0
        %v7758 = vmax.f32 %v7632, -256.0
        %v7759 = vmax.f32 %v7635, -256.0
        %v7760 = vmax.f32 %v7640, -256.0
        %v7761 = vmax.f32 %v7643, -256.0
        %v7762 = vmax.f32 %v7648, -256.0
        %v7763 = vmax.f32 %v7651, -256.0
        %v7764 = vmax.f32 %v7656, -256.0
        %v7765 = vmax.f32 %v7659, -256.0
        %v7766 = vmax.f32 %v7664, -256.0
        %v7767 = vmax.f32 %v7667, -256.0
        %v7768 = vmax.f32 %v7672, -256.0
        %v7769 = vmax.f32 %v7675, -256.0
        %v7770 = vmax.f32 %v7680, -256.0
        %v7771 = vmax.f32 %v7683, -256.0
        %v7772 = vmax.f32 %v7688, -256.0
        %v7773 = vmax.f32 %v7691, -256.0
        %v7774 = vmax.f32 %v7696, -256.0
        %v7775 = vmax.f32 %v7699, -256.0
        %v7776 = vmax.f32 %v7704, -256.0
        %v7777 = vmax.f32 %v7707, -256.0
        %v7778 = vmax.f32 %v7712, -256.0
        %v7779 = vmax.f32 %v7715, -256.0
        %v7780 = vmax.f32 %v7720, -256.0
        %v7781 = vmax.f32 %v7723, -256.0
        %v7782 = vmax.f32 %v7728, -256.0
        %v7783 = vmax.f32 %v7731, -256.0
        %v7784 = vmax.f32 %v7736, -256.0
        %v7785 = vmax.f32 %v7739, -256.0
        %v7786 = vmax.f32 %v7744, -256.0
        %v7787 = vmax.f32 %v7747, -256.0
        %v7788 = vmax.f32 %v7752, -256.0
        %v7789 = vmax.f32 %v7755, -256.0
        %v7790 = vmin.f32 %v7758, 256.0
        %v7791 = vmin.f32 %v7759, 256.0
        %v7792 = vmin.f32 %v7760, 256.0
        %v7793 = vmin.f32 %v7761, 256.0
        %v7794 = vmin.f32 %v7762, 256.0
        %v7795 = vmin.f32 %v7763, 256.0
        %v7796 = vmin.f32 %v7764, 256.0
        %v7797 = vmin.f32 %v7765, 256.0
        %v7798 = vmin.f32 %v7766, 256.0
        %v7799 = vmin.f32 %v7767, 256.0
        %v7800 = vmin.f32 %v7768, 256.0
        %v7801 = vmin.f32 %v7769, 256.0
        %v7802 = vmin.f32 %v7770, 256.0
        %v7803 = vmin.f32 %v7771, 256.0
        %v7804 = vmin.f32 %v7772, 256.0
        %v7805 = vmin.f32 %v7773, 256.0
        %v7806 = vmin.f32 %v7774, 256.0
        %v7807 = vmin.f32 %v7775, 256.0
        %v7808 = vmin.f32 %v7776, 256.0
        %v7809 = vmin.f32 %v7777, 256.0
        %v7810 = vmin.f32 %v7778, 256.0
        %v7811 = vmin.f32 %v7779, 256.0
        %v7812 = vmin.f32 %v7780, 256.0
        %v7813 = vmin.f32 %v7781, 256.0
        %v7814 = vmin.f32 %v7782, 256.0
        %v7815 = vmin.f32 %v7783, 256.0
        %v7816 = vmin.f32 %v7784, 256.0
        %v7817 = vmin.f32 %v7785, 256.0
        %v7818 = vmin.f32 %v7786, 256.0
        %v7819 = vmin.f32 %v7787, 256.0
        %v7820 = vmin.f32 %v7788, 256.0
        %v7821 = vmin.f32 %v7789, 256.0
        %7822 = vst [vmem:[%s376] sm:$0xff] %v7790
        %7823 = vst [vmem:[%s376 + $0x8] sm:$0xff] %v7791
        %7824 = vst [vmem:[%s376 + $0x10] sm:$0xff] %v7792
        %7825 = vst [vmem:[%s376 + $0x18] sm:$0xff] %v7793
        %7826 = vst [vmem:[%s376 + $0x20] sm:$0xff] %v7794
        %7827 = vst [vmem:[%s376 + $0x28] sm:$0xff] %v7795
        %7828 = vst [vmem:[%s376 + $0x30] sm:$0xff] %v7796
        %7829 = vst [vmem:[%s376 + $0x38] sm:$0xff] %v7797
        %7830 = vst [vmem:[%s376 + $0x40] sm:$0xff] %v7798
        %7831 = vst [vmem:[%s376 + $0x48] sm:$0xff] %v7799
        %7832 = vst [vmem:[%s376 + $0x50] sm:$0xff] %v7800
        %7833 = vst [vmem:[%s376 + $0x58] sm:$0xff] %v7801
        %7834 = vst [vmem:[%s376 + $0x60] sm:$0xff] %v7802
        %7835 = vst [vmem:[%s376 + $0x68] sm:$0xff] %v7803
        %7836 = vst [vmem:[%s376 + $0x70] sm:$0xff] %v7804
        %7837 = vst [vmem:[%s376 + $0x78] sm:$0xff] %v7805
        %7838 = vst [vmem:[%s376 + $0x80] sm:$0xff] %v7806
        %7839 = vst [vmem:[%s376 + $0x88] sm:$0xff] %v7807
        %7840 = vst [vmem:[%s376 + $0x90] sm:$0xff] %v7808
        %7841 = vst [vmem:[%s376 + $0x98] sm:$0xff] %v7809
        %7842 = vst [vmem:[%s376 + $0xa0] sm:$0xff] %v7810
        %7843 = vst [vmem:[%s376 + $0xa8] sm:$0xff] %v7811
        %7844 = vst [vmem:[%s376 + $0xb0] sm:$0xff] %v7812
        %7845 = vst [vmem:[%s376 + $0xb8] sm:$0xff] %v7813
        %7846 = vst [vmem:[%s376 + $0xc0] sm:$0xff] %v7814
        %7847 = vst [vmem:[%s376 + $0xc8] sm:$0xff] %v7815
        %7848 = vst [vmem:[%s376 + $0xd0] sm:$0xff] %v7816
        %7849 = vst [vmem:[%s376 + $0xd8] sm:$0xff] %v7817
        %7850 = vst [vmem:[%s376 + $0xe0] sm:$0xff] %v7818
        %7851 = vst [vmem:[%s376 + $0xe8] sm:$0xff] %v7819
        %7852 = vst [vmem:[%s376 + $0xf0] sm:$0xff] %v7820
        %7853 = vst [vmem:[%s376 + $0xf8] sm:$0xff] %v7821
        %s7854 = sand.u32 %s235, 1
        %s7855 = scalar_lea.sflag [#allocation4], %s7854
        %s7856 = sand.u32 %s235, 1
        %s7857 = smul.addr %s7856, 256
        %s7858 = scalar_lea.vmem [#allocation3], %s7857
        %s7859 = sand.u32 %s261, 1
        %s7860 = scalar_lea.sflag [#allocation6], %s7859
        %s7861 = sand.u32 %s261, 1
        %s7862 = smul.addr %s7861, 256
        %s7863 = scalar_lea.vmem [#allocation5], %s7862
        // Predicated region
        $region57: #{tpu_custom_call.1} parent=55 // pred_check
          %p7864 = pneg %p245
        $region58: #{tpu_custom_call.1} parent=55 // pred_check_branch
          %7866 = sbr.rel (%p7864) target = $region60
        $region59: #{tpu_custom_call.1} parent=55 // pred_region
          %s7868 = ssub.s32 4096, 4096
          %7869 = vsyncadd %s7855, %s7868
          %s7870 = smul.addr %s28, 32
          %s7871 = smul.addr %s7870, 128
          %s7872 = scalar_lea.hbm %s9, %s7871
          %s7873 = sshll.u32 %s7858, 4
          %s7874 = int_to_ptr.vmem [resolvable:$true] %s7873
          %7879 = dma.vmem_to_hbm [thread:$0]  %s7874, 4096, %s7872, %s7855, 128, 128, 8
        $region60: #{tpu_custom_call.1} parent=55 // pred_fallthru
          _
        // Predicated region
        $region61: #{tpu_custom_call.1} parent=55 // pred_check
          %p7880 = pneg %p271
        $region62: #{tpu_custom_call.1} parent=55 // pred_check_branch
          %7882 = sbr.rel (%p7880) target = $region64
        $region63: #{tpu_custom_call.1} parent=55 // pred_region
          %s7884 = ssub.s32 4096, 4096
          %7885 = vsyncadd %s7860, %s7884
          %s7886 = smul.addr %s28, 32
          %s7887 = smul.addr %s7886, 128
          %s7888 = scalar_lea.hbm %s10, %s7887
          %s7889 = sshll.u32 %s7863, 4
          %s7890 = int_to_ptr.vmem [resolvable:$true] %s7889
          %7895 = dma.vmem_to_hbm [thread:$0]  %s7890, 4096, %s7888, %s7860, 128, 128, 8
        $region64: #{tpu_custom_call.1} parent=55 // pred_fallthru
          _
      $region56: #{tpu_custom_call.1} parent=5 // pred_fallthru
        _
      %p7896 = scmp.le.s32.totalorder 2, %s23
      // Predicated region
      $region65: #{tpu_custom_call.1} parent=5 // pred_check
        %p7897 = pneg %p7896
      $region66: #{tpu_custom_call.1} parent=5 // pred_check_branch
        %7899 = sbr.rel (%p7897) target = $region68
      $region67: #{tpu_custom_call.1} parent=5 // pred_region
        %s7900 = ssub.s32 %s23, 2
        // Predicated region
        $region69: #{tpu_custom_call.1} parent=67 // pred_check
          %p7901 = pneg %p251
        $region70: #{tpu_custom_call.1} parent=67 // pred_check_branch
          %7903 = sbr.rel (%p7901) target = $region72
        $region71: #{tpu_custom_call.1} parent=67 // pred_region
          %s7904 = sand.u32 %s236, 1
          %s7905 = scalar_lea.sflag [#allocation4], %s7904
          %s7906 = sand.u32 %s236, 1
          %s7907 = smul.addr %s7906, 256
          %s7908 = scalar_lea.vmem [#allocation3], %s7907
          %7909 = dma.done %s7905, 4096
        $region72: #{tpu_custom_call.1} parent=67 // pred_fallthru
          _
        // Predicated region
        $region73: #{tpu_custom_call.1} parent=67 // pred_check
          %p7910 = pneg %p277
        $region74: #{tpu_custom_call.1} parent=67 // pred_check_branch
          %7912 = sbr.rel (%p7910) target = $region76
        $region75: #{tpu_custom_call.1} parent=67 // pred_region
          %s7913 = sand.u32 %s262, 1
          %s7914 = scalar_lea.sflag [#allocation6], %s7913
          %s7915 = sand.u32 %s262, 1
          %s7916 = smul.addr %s7915, 256
          %s7917 = scalar_lea.vmem [#allocation5], %s7916
          %7918 = dma.done %s7914, 4096
        $region76: #{tpu_custom_call.1} parent=67 // pred_fallthru
          _
      $region68: #{tpu_custom_call.1} parent=5 // pred_fallthru
        _
    $region6: #{tpu_custom_call.1} parent=1 // loop_footer
      %s27 = sadd.s32 1, %s23
    $region7: #{tpu_custom_call.1} parent=1 // loop_footer_branch
      %22 = sbr.rel target = $region3
    $region8: #{tpu_custom_call.1} parent=1 // loop_exit
      _
    %7919 = vsyncpa [#allocation4], 1
    %s7920 = scalar_lea.sflag [#allocation4], 1
    %7921 = vsyncpa %s7920, 1
    %7922 = vsyncpa [#allocation6], 1
    %s7923 = scalar_lea.sflag [#allocation6], 1
    %7924 = vsyncpa %s7923, 1

</llo_original>
